<compile_context>
chip_gen: v7x
topology: tpu7x:2x2x1
jax: 0.10.0
libtpu: 0.0.40
codegen_flags: <defaults>
</compile_context>

<pallas_src>
from functools import partial

import numpy as np
import jax
import jax.numpy as jnp
from jax.experimental import pallas as pl
from jax.experimental.pallas import tpu as pltpu

LANE = 128                      # lane-dense final output width (>= n_actions)
_VMEM_LIMIT = 32 * 1024 * 1024


# ----------------------------------------------------------------------------
# Fused kernel: one batch element per grid step, everything stays in VMEM.
# ----------------------------------------------------------------------------
def _dqn_kernel(x_ref, s1_ref, w1_ref, b1_ref, s2_ref, w2_ref, b2_ref,
                s3_ref, w3_ref, b3_ref, wf1_ref, bf1_ref, wf2_ref, bf2_ref,
                o_ref):
    f32 = jnp.float32
    bf16 = jnp.bfloat16

    def conv_relu(act, s_ref, w_ref, b_ref):
        """act: (rows_in, Cin) bf16.  Conv = sum_k (one-hot select_k @ act) @ W_k.
        Only 2-D matmuls; the one-hot gather copies rows exactly (no rounding)."""
        n_pos, rows_out, _ = s_ref.shape
        oc = w_ref.shape[2]
        acc = jnp.zeros((rows_out, oc), f32)
        for k in range(n_pos):                          # static unroll (<= 16)
            g = jnp.dot(s_ref[k], act, preferred_element_type=f32)
            acc = acc + jnp.dot(g.astype(bf16), w_ref[k],
                                preferred_element_type=f32)
        return jnp.maximum(acc + b_ref[...], 0.0).astype(bf16)

    a1 = conv_relu(x_ref[0], s1_ref, w1_ref, b1_ref)    # (h1*w1, 32)
    a2 = conv_relu(a1, s2_ref, w2_ref, b2_ref)          # (h2*w2, 64)
    a3 = conv_relu(a2, s3_ref, w3_ref, b3_ref)          # (h3*w3, 64)

    # fc1 as a sum over spatial positions: avoids an in-kernel flatten/reshape.
    hidden = wf1_ref.shape[2]
    acc = jnp.zeros((1, hidden), f32)
    for m in range(wf1_ref.shape[0]):
        acc = acc + jnp.dot(a3[m:m + 1, :], wf1_ref[m],
                            preferred_element_type=f32)
    h = jnp.maximum(acc + bf1_ref[...], 0.0).astype(bf16)          # (1, 512)

    q = jnp.dot(h, wf2_ref[...], preferred_element_type=f32) + bf2_ref[...]
    o_ref[0] = q.astype(o_ref.dtype)                                # (1, 128)


def dqn_pallas(x_s2d, pp):
    """x_s2d: (B, Hq*Wq, 16*C) bf16 space-to-depth input.  Returns (B, 1, 128) f32."""
    B, rows, chans = x_s2d.shape
    consts = [pp["s1"], pp["w1"], pp["b1"], pp["s2"], pp["w2"], pp["b2"],
              pp["s3"], pp["w3"], pp["b3"], pp["wf1"], pp["bf1"],
              pp["wf2"], pp["bf2"]]
    in_specs = [pl.BlockSpec((1, rows, chans), lambda b: (b, 0, 0))]
    for c in consts:                                    # resident constants
        in_specs.append(pl.BlockSpec(c.shape, lambda b, nd=c.ndim: (0,) * nd))
    return pl.pallas_call(
        _dqn_kernel,
        out_shape=jax.ShapeDtypeStruct((B, 1, LANE), jnp.float32),
        grid=(B,),
        in_specs=in_specs,
        out_specs=pl.BlockSpec((1, 1, LANE), lambda b: (b, 0, 0)),
        compiler_params=pltpu.CompilerParams(
            dimension_semantics=("parallel",),          # batch across v7x's 2 TCs
            vmem_limit_bytes=_VMEM_LIMIT,
        ),
    )(x_s2d, *consts)


# ----------------------------------------------------------------------------
# One-time host-side parameter preparation (layout permutes, selection matrices)
# ----------------------------------------------------------------------------
def conv_out_dims(H, W):
    h1, w1 = (H - 8) // 4 + 1, (W - 8) // 4 + 1
    h2, w2 = (h1 - 4) // 2 + 1, (w1 - 4) // 2 + 1
    h3, w3 = h2 - 2, w2 - 2
    return (h1, w1), (h2, w2), (h3, w3)


def _one_hot_select(ih, iw, kh, kw, stride, oh, ow):
    """(kh*kw, oh*ow, ih*iw) one-hot row-selection matrices (bf16, exact 0/1)."""
    s = np.zeros((kh * kw, oh * ow, ih * iw), np.float32)
    for a in range(kh):
        for b in range(kw):
            for i in range(oh):
                for j in range(ow):
                    s[a * kw + b, i * ow + j,
                      (i * stride + a) * iw + (j * stride + b)] = 1.0
    return jnp.asarray(s, jnp.bfloat16)


def prepare_params(params, input_dims):
    C, H, W = input_dims
    assert H % 4 == 0 and W % 4 == 0, "conv1 space-to-depth needs H, W % 4 == 0"
    (h1, w1), (h2, w2), (h3, w3) = conv_out_dims(H, W)
    Hq, Wq = H // 4, W // 4
    pp = {}

    # conv1 (8x8 s4) expressed as a 2x2 stride-1 conv on the s2d input (16*C ch).
    # s2d channel index = (r*4+q)*C + c for kh = 4a+r, kw = 4b+q.
    wc1 = params["conv1_w"].reshape(32, C, 2, 4, 2, 4)        # (oc, c, a, r, b, q)
    wc1 = wc1.transpose(2, 4, 3, 5, 1, 0).reshape(4, 16 * C, 32)
    pp["w1"] = wc1.astype(jnp.bfloat16)
    pp["b1"] = params["conv1_b"].reshape(1, 32).astype(jnp.float32)
    pp["s1"] = _one_hot_select(Hq, Wq, 2, 2, 1, h1, w1)

    # conv2: 4x4 stride 2 (real Cin = 32, no padding)
    pp["w2"] = params["conv2_w"].transpose(2, 3, 1, 0).reshape(16, 32, 64).astype(jnp.bfloat16)
    pp["b2"] = params["conv2_b"].reshape(1, 64).astype(jnp.float32)
    pp["s2"] = _one_hot_select(h1, w1, 4, 4, 2, h2, w2)

    # conv3: 3x3 stride 1 (real Cin = 64)
    pp["w3"] = params["conv3_w"].transpose(2, 3, 1, 0).reshape(9, 64, 64).astype(jnp.bfloat16)
    pp["b3"] = params["conv3_b"].reshape(1, 64).astype(jnp.float32)
    pp["s3"] = _one_hot_select(h2, w2, 3, 3, 1, h3, w3)

    # fc1: PyTorch flatten order is (c, h, w); stack per spatial position (h*w3+w)
    # so the kernel can sum (1,64)@(64,512) without flattening the activation.
    wf1 = params["fc1_w"].reshape(512, 64, h3, w3).transpose(2, 3, 1, 0)
    pp["wf1"] = wf1.reshape(h3 * w3, 64, 512).astype(jnp.bfloat16)
    pp["bf1"] = params["fc1_b"].reshape(1, 512).astype(jnp.float32)

    # fc2: pad n_actions up to a lane-dense 128 (padded cols are zero, sliced off)
    n_act = params["fc2_w"].shape[0]
    pp["wf2"] = jnp.pad(params["fc2_w"].T, ((0, 0), (0, LANE - n_act))).astype(jnp.bfloat16)
    pp["bf2"] = jnp.pad(params["fc2_b"].reshape(1, -1),
                        ((0, 0), (0, LANE - n_act))).astype(jnp.float32)
    return pp


# ----------------------------------------------------------------------------
# DeepQNetwork forward
# ----------------------------------------------------------------------------
def dqn_forward(pp, state, n_actions):
    """state: (B, C, H, W) f32 (PyTorch layout) -> (B, n_actions) f32."""
    B, C, H, W = state.shape
    x = jnp.transpose(state, (0, 2, 3, 1)).astype(jnp.bfloat16)     # NHWC, bf16
    Hq, Wq = H // 4, W // 4
    # Space-to-depth(4): one tiny input-only layout op; no patch matrices in HBM.
    x = x.reshape(B, Hq, 4, Wq, 4, C).transpose(0, 1, 3, 2, 4, 5)
    x = x.reshape(B, Hq * Wq, 16 * C)
    q = dqn_pallas(x, pp)                                           # (B, 1, 128)
    return q.reshape(B, LANE)[:, :n_actions]


# ----------------------------------------------------------------------------
# Reference (PyTorch semantics, matching bf16 quantization points)
# ----------------------------------------------------------------------------
def dqn_reference(params, state):
    bf = lambda t: t.astype(jnp.bfloat16).astype(jnp.float32)

    def conv(x, w, b, s):
        y = jax.lax.conv_general_dilated(
            x, bf(w), window_strides=(s, s), padding="VALID",
            dimension_numbers=("NCHW", "OIHW", "NCHW"))
        return bf(jax.nn.relu(y + b.reshape(1, -1, 1, 1)))

    c1 = conv(bf(state), params["conv1_w"], params["conv1_b"], 4)
    c2 = conv(c1, params["conv2_w"], params["conv2_b"], 2)
    c3 = conv(c2, params["conv3_w"], params["conv3_b"], 1)
    flat = c3.reshape(c3.shape[0], -1)
    h = bf(jax.nn.relu(flat @ bf(params["fc1_w"]).T + params["fc1_b"]))
    return h @ bf(params["fc2_w"]).T + params["fc2_b"]


def init_params(key, input_dims, n_actions):
    C, H, W = input_dims
    (_, _), (_, _), (h3, w3) = conv_out_dims(H, W)
    fc_in = 64 * h3 * w3
    keys = jax.random.split(key, 10)

    def u(k, shape, fan_in):
        bound = 1.0 / jnp.sqrt(fan_in)
        return jax.random.uniform(k, shape, jnp.float32, -bound, bound)

    return {
        "conv1_w": u(keys[0], (32, C, 8, 8), C * 64),
        "conv1_b": u(keys[1], (32,), C * 64),
        "conv2_w": u(keys[2], (64, 32, 4, 4), 32 * 16),
        "conv2_b": u(keys[3], (64,), 32 * 16),
        "conv3_w": u(keys[4], (64, 64, 3, 3), 64 * 9),
        "conv3_b": u(keys[5], (64,), 64 * 9),
        "fc1_w": u(keys[6], (512, fc_in), fc_in),      # PyTorch Linear: (out, in)
        "fc1_b": u(keys[7], (512,), fc_in),
        "fc2_w": u(keys[8], (n_actions, 512), 512),
        "fc2_b": u(keys[9], (n_actions,), 512),
    }


if __name__ == "__main__":
    key = jax.random.PRNGKey(0)
    batch, input_dims, n_actions = 2, (4, 44, 44), 6

    pkey, xkey = jax.random.split(key)
    params = init_params(pkey, input_dims, n_actions)
    state = jax.random.uniform(xkey, (batch,) + input_dims, jnp.float32)

    pp = prepare_params(params, input_dims)            # one-time host-side prep
    fwd = jax.jit(partial(dqn_forward, n_actions=n_actions))
    actions = jax.block_until_ready(fwd(pp, state))

    ref = dqn_reference(params, state)
    assert actions.shape == (batch, n_actions)
    assert jnp.allclose(actions, ref, atol=1e-2, rtol=1e-2), "mismatch vs reference"

    print("KERNEL_OK")
</pallas_src>

<mosaic_0001>
module attributes {stable_mosaic.version = 11 : i64} {
  func.func @_dqn_kernel(%arg0: i32, %arg1: memref<1x121x64xbf16, #tpu.memory_space<vmem>>, %arg2: memref<4x100x121xbf16, #tpu.memory_space<vmem>>, %arg3: memref<4x64x32xbf16, #tpu.memory_space<vmem>>, %arg4: memref<1x32xf32, #tpu.memory_space<vmem>>, %arg5: memref<16x16x100xbf16, #tpu.memory_space<vmem>>, %arg6: memref<16x32x64xbf16, #tpu.memory_space<vmem>>, %arg7: memref<1x64xf32, #tpu.memory_space<vmem>>, %arg8: memref<9x4x16xbf16, #tpu.memory_space<vmem>>, %arg9: memref<9x64x64xbf16, #tpu.memory_space<vmem>>, %arg10: memref<1x64xf32, #tpu.memory_space<vmem>>, %arg11: memref<4x64x512xbf16, #tpu.memory_space<vmem>>, %arg12: memref<1x512xf32, #tpu.memory_space<vmem>>, %arg13: memref<512x128xbf16, #tpu.memory_space<vmem>>, %arg14: memref<1x128xf32, #tpu.memory_space<vmem>>, %arg15: memref<1x1x128xf32, #tpu.memory_space<vmem>>) attributes {dimension_semantics = [#tpu.dimension_semantics<parallel>], iteration_bounds = array<i64: 2>, scalar_prefetch = 0 : i64, scratch_operands = 0 : i64, tpu.core_type = #tpu.core_type<tc>, window_params = [{transform_indices = @transform_0, window_bounds = array<i64: 1, 121, 64>}, {pipeline_mode = #tpu.pipeline_mode<synchronous>, transform_indices = @transform_1, window_bounds = array<i64: 4, 100, 121>}, {pipeline_mode = #tpu.pipeline_mode<synchronous>, transform_indices = @transform_2, window_bounds = array<i64: 4, 64, 32>}, {pipeline_mode = #tpu.pipeline_mode<synchronous>, transform_indices = @transform_3, window_bounds = array<i64: 1, 32>}, {pipeline_mode = #tpu.pipeline_mode<synchronous>, transform_indices = @transform_4, window_bounds = array<i64: 16, 16, 100>}, {pipeline_mode = #tpu.pipeline_mode<synchronous>, transform_indices = @transform_5, window_bounds = array<i64: 16, 32, 64>}, {pipeline_mode = #tpu.pipeline_mode<synchronous>, transform_indices = @transform_6, window_bounds = array<i64: 1, 64>}, {pipeline_mode = #tpu.pipeline_mode<synchronous>, transform_indices = @transform_7, window_bounds = array<i64: 9, 4, 16>}, {pipeline_mode = #tpu.pipeline_mode<synchronous>, transform_indices = @transform_8, window_bounds = array<i64: 9, 64, 64>}, {pipeline_mode = #tpu.pipeline_mode<synchronous>, transform_indices = @transform_9, window_bounds = array<i64: 1, 64>}, {pipeline_mode = #tpu.pipeline_mode<synchronous>, transform_indices = @transform_10, window_bounds = array<i64: 4, 64, 512>}, {pipeline_mode = #tpu.pipeline_mode<synchronous>, transform_indices = @transform_11, window_bounds = array<i64: 1, 512>}, {pipeline_mode = #tpu.pipeline_mode<synchronous>, transform_indices = @transform_12, window_bounds = array<i64: 512, 128>}, {pipeline_mode = #tpu.pipeline_mode<synchronous>, transform_indices = @transform_13, window_bounds = array<i64: 1, 128>}, {transform_indices = @transform_14, window_bounds = array<i64: 1, 1, 128>}]} {
    %c0 = arith.constant 0 : index
    %c0_0 = arith.constant 0 : index
    %c0_1 = arith.constant 0 : index
    %0 = vector.load %arg1[%c0, %c0_0, %c0_1] : memref<1x121x64xbf16, #tpu.memory_space<vmem>>, vector<1x121x64xbf16>
    %1 = vector.shape_cast %0 : vector<1x121x64xbf16> to vector<121x64xbf16>
    %cst = arith.constant 0.000000e+00 : f32
    %2 = vector.broadcast %cst : f32 to vector<100x32xf32>
    %c0_2 = arith.constant 0 : index
    %c0_3 = arith.constant 0 : index
    %c0_4 = arith.constant 0 : index
    %3 = vector.load %arg2[%c0_2, %c0_3, %c0_4] : memref<4x100x121xbf16, #tpu.memory_space<vmem>>, vector<1x100x121xbf16>
    %4 = vector.shape_cast %3 : vector<1x100x121xbf16> to vector<100x121xbf16>
    %cst_5 = arith.constant dense<0.000000e+00> : vector<100x64xf32>
    %5 = tpu.matmul %4, %1, %cst_5 {dimension_numbers = #tpu.dot_dimension_numbers<[1], [0], [0], [1], [0, 0, 1, 1], [], []>} : vector<100x121xbf16>, vector<121x64xbf16>, vector<100x64xf32> -> vector<100x64xf32>
    %6 = arith.truncf %5 : vector<100x64xf32> to vector<100x64xbf16>
    %c0_6 = arith.constant 0 : index
    %c0_7 = arith.constant 0 : index
    %c0_8 = arith.constant 0 : index
    %7 = vector.load %arg3[%c0_6, %c0_7, %c0_8] : memref<4x64x32xbf16, #tpu.memory_space<vmem>>, vector<1x64x32xbf16>
    %8 = vector.shape_cast %7 : vector<1x64x32xbf16> to vector<64x32xbf16>
    %cst_9 = arith.constant dense<0.000000e+00> : vector<100x32xf32>
    %9 = tpu.matmul %6, %8, %cst_9 {dimension_numbers = #tpu.dot_dimension_numbers<[1], [0], [0], [1], [0, 0, 1, 1], [], []>} : vector<100x64xbf16>, vector<64x32xbf16>, vector<100x32xf32> -> vector<100x32xf32>
    %10 = arith.addf %2, %9 : vector<100x32xf32>
    %c1 = arith.constant 1 : index
    %c0_10 = arith.constant 0 : index
    %c0_11 = arith.constant 0 : index
    %11 = vector.load %arg2[%c1, %c0_10, %c0_11] : memref<4x100x121xbf16, #tpu.memory_space<vmem>>, vector<1x100x121xbf16>
    %12 = vector.shape_cast %11 : vector<1x100x121xbf16> to vector<100x121xbf16>
    %cst_12 = arith.constant dense<0.000000e+00> : vector<100x64xf32>
    %13 = tpu.matmul %12, %1, %cst_12 {dimension_numbers = #tpu.dot_dimension_numbers<[1], [0], [0], [1], [0, 0, 1, 1], [], []>} : vector<100x121xbf16>, vector<121x64xbf16>, vector<100x64xf32> -> vector<100x64xf32>
    %14 = arith.truncf %13 : vector<100x64xf32> to vector<100x64xbf16>
    %c1_13 = arith.constant 1 : index
    %c0_14 = arith.constant 0 : index
    %c0_15 = arith.constant 0 : index
    %15 = vector.load %arg3[%c1_13, %c0_14, %c0_15] : memref<4x64x32xbf16, #tpu.memory_space<vmem>>, vector<1x64x32xbf16>
    %16 = vector.shape_cast %15 : vector<1x64x32xbf16> to vector<64x32xbf16>
    %cst_16 = arith.constant dense<0.000000e+00> : vector<100x32xf32>
    %17 = tpu.matmul %14, %16, %cst_16 {dimension_numbers = #tpu.dot_dimension_numbers<[1], [0], [0], [1], [0, 0, 1, 1], [], []>} : vector<100x64xbf16>, vector<64x32xbf16>, vector<100x32xf32> -> vector<100x32xf32>
    %18 = arith.addf %10, %17 : vector<100x32xf32>
    %c2 = arith.constant 2 : index
    %c0_17 = arith.constant 0 : index
    %c0_18 = arith.constant 0 : index
    %19 = vector.load %arg2[%c2, %c0_17, %c0_18] : memref<4x100x121xbf16, #tpu.memory_space<vmem>>, vector<1x100x121xbf16>
    %20 = vector.shape_cast %19 : vector<1x100x121xbf16> to vector<100x121xbf16>
    %cst_19 = arith.constant dense<0.000000e+00> : vector<100x64xf32>
    %21 = tpu.matmul %20, %1, %cst_19 {dimension_numbers = #tpu.dot_dimension_numbers<[1], [0], [0], [1], [0, 0, 1, 1], [], []>} : vector<100x121xbf16>, vector<121x64xbf16>, vector<100x64xf32> -> vector<100x64xf32>
    %22 = arith.truncf %21 : vector<100x64xf32> to vector<100x64xbf16>
    %c2_20 = arith.constant 2 : index
    %c0_21 = arith.constant 0 : index
    %c0_22 = arith.constant 0 : index
    %23 = vector.load %arg3[%c2_20, %c0_21, %c0_22] : memref<4x64x32xbf16, #tpu.memory_space<vmem>>, vector<1x64x32xbf16>
    %24 = vector.shape_cast %23 : vector<1x64x32xbf16> to vector<64x32xbf16>
    %cst_23 = arith.constant dense<0.000000e+00> : vector<100x32xf32>
    %25 = tpu.matmul %22, %24, %cst_23 {dimension_numbers = #tpu.dot_dimension_numbers<[1], [0], [0], [1], [0, 0, 1, 1], [], []>} : vector<100x64xbf16>, vector<64x32xbf16>, vector<100x32xf32> -> vector<100x32xf32>
    %26 = arith.addf %18, %25 : vector<100x32xf32>
    %c3 = arith.constant 3 : index
    %c0_24 = arith.constant 0 : index
    %c0_25 = arith.constant 0 : index
    %27 = vector.load %arg2[%c3, %c0_24, %c0_25] : memref<4x100x121xbf16, #tpu.memory_space<vmem>>, vector<1x100x121xbf16>
    %28 = vector.shape_cast %27 : vector<1x100x121xbf16> to vector<100x121xbf16>
    %cst_26 = arith.constant dense<0.000000e+00> : vector<100x64xf32>
    %29 = tpu.matmul %28, %1, %cst_26 {dimension_numbers = #tpu.dot_dimension_numbers<[1], [0], [0], [1], [0, 0, 1, 1], [], []>} : vector<100x121xbf16>, vector<121x64xbf16>, vector<100x64xf32> -> vector<100x64xf32>
    %30 = arith.truncf %29 : vector<100x64xf32> to vector<100x64xbf16>
    %c3_27 = arith.constant 3 : index
    %c0_28 = arith.constant 0 : index
    %c0_29 = arith.constant 0 : index
    %31 = vector.load %arg3[%c3_27, %c0_28, %c0_29] : memref<4x64x32xbf16, #tpu.memory_space<vmem>>, vector<1x64x32xbf16>
    %32 = vector.shape_cast %31 : vector<1x64x32xbf16> to vector<64x32xbf16>
    %cst_30 = arith.constant dense<0.000000e+00> : vector<100x32xf32>
    %33 = tpu.matmul %30, %32, %cst_30 {dimension_numbers = #tpu.dot_dimension_numbers<[1], [0], [0], [1], [0, 0, 1, 1], [], []>} : vector<100x64xbf16>, vector<64x32xbf16>, vector<100x32xf32> -> vector<100x32xf32>
    %34 = arith.addf %26, %33 : vector<100x32xf32>
    %c0_31 = arith.constant 0 : index
    %c0_32 = arith.constant 0 : index
    %35 = vector.load %arg4[%c0_31, %c0_32] : memref<1x32xf32, #tpu.memory_space<vmem>>, vector<1x32xf32>
    %36 = vector.broadcast %35 : vector<1x32xf32> to vector<100x32xf32>
    %37 = arith.addf %34, %36 : vector<100x32xf32>
    %cst_33 = arith.constant 0.000000e+00 : f32
    %38 = vector.broadcast %cst_33 : f32 to vector<100x32xf32>
    %39 = arith.maximumf %37, %38 : vector<100x32xf32>
    %40 = arith.truncf %39 : vector<100x32xf32> to vector<100x32xbf16>
    %cst_34 = arith.constant 0.000000e+00 : f32
    %41 = vector.broadcast %cst_34 : f32 to vector<16x64xf32>
    %c0_35 = arith.constant 0 : index
    %c0_36 = arith.constant 0 : index
    %c0_37 = arith.constant 0 : index
    %42 = vector.load %arg5[%c0_35, %c0_36, %c0_37] : memref<16x16x100xbf16, #tpu.memory_space<vmem>>, vector<1x16x100xbf16>
    %43 = vector.shape_cast %42 : vector<1x16x100xbf16> to vector<16x100xbf16>
    %cst_38 = arith.constant dense<0.000000e+00> : vector<16x32xf32>
    %44 = tpu.matmul %43, %40, %cst_38 {dimension_numbers = #tpu.dot_dimension_numbers<[1], [0], [0], [1], [0, 0, 1, 1], [], []>} : vector<16x100xbf16>, vector<100x32xbf16>, vector<16x32xf32> -> vector<16x32xf32>
    %45 = arith.truncf %44 : vector<16x32xf32> to vector<16x32xbf16>
    %c0_39 = arith.constant 0 : index
    %c0_40 = arith.constant 0 : index
    %c0_41 = arith.constant 0 : index
    %46 = vector.load %arg6[%c0_39, %c0_40, %c0_41] : memref<16x32x64xbf16, #tpu.memory_space<vmem>>, vector<1x32x64xbf16>
    %47 = vector.shape_cast %46 : vector<1x32x64xbf16> to vector<32x64xbf16>
    %cst_42 = arith.constant dense<0.000000e+00> : vector<16x64xf32>
    %48 = tpu.matmul %45, %47, %cst_42 {dimension_numbers = #tpu.dot_dimension_numbers<[1], [0], [0], [1], [0, 0, 1, 1], [], []>} : vector<16x32xbf16>, vector<32x64xbf16>, vector<16x64xf32> -> vector<16x64xf32>
    %49 = arith.addf %41, %48 : vector<16x64xf32>
    %c1_43 = arith.constant 1 : index
    %c0_44 = arith.constant 0 : index
    %c0_45 = arith.constant 0 : index
    %50 = vector.load %arg5[%c1_43, %c0_44, %c0_45] : memref<16x16x100xbf16, #tpu.memory_space<vmem>>, vector<1x16x100xbf16>
    %51 = vector.shape_cast %50 : vector<1x16x100xbf16> to vector<16x100xbf16>
    %cst_46 = arith.constant dense<0.000000e+00> : vector<16x32xf32>
    %52 = tpu.matmul %51, %40, %cst_46 {dimension_numbers = #tpu.dot_dimension_numbers<[1], [0], [0], [1], [0, 0, 1, 1], [], []>} : vector<16x100xbf16>, vector<100x32xbf16>, vector<16x32xf32> -> vector<16x32xf32>
    %53 = arith.truncf %52 : vector<16x32xf32> to vector<16x32xbf16>
    %c1_47 = arith.constant 1 : index
    %c0_48 = arith.constant 0 : index
    %c0_49 = arith.constant 0 : index
    %54 = vector.load %arg6[%c1_47, %c0_48, %c0_49] : memref<16x32x64xbf16, #tpu.memory_space<vmem>>, vector<1x32x64xbf16>
    %55 = vector.shape_cast %54 : vector<1x32x64xbf16> to vector<32x64xbf16>
    %cst_50 = arith.constant dense<0.000000e+00> : vector<16x64xf32>
    %56 = tpu.matmul %53, %55, %cst_50 {dimension_numbers = #tpu.dot_dimension_numbers<[1], [0], [0], [1], [0, 0, 1, 1], [], []>} : vector<16x32xbf16>, vector<32x64xbf16>, vector<16x64xf32> -> vector<16x64xf32>
    %57 = arith.addf %49, %56 : vector<16x64xf32>
    %c2_51 = arith.constant 2 : index
    %c0_52 = arith.constant 0 : index
    %c0_53 = arith.constant 0 : index
    %58 = vector.load %arg5[%c2_51, %c0_52, %c0_53] : memref<16x16x100xbf16, #tpu.memory_space<vmem>>, vector<1x16x100xbf16>
    %59 = vector.shape_cast %58 : vector<1x16x100xbf16> to vector<16x100xbf16>
    %cst_54 = arith.constant dense<0.000000e+00> : vector<16x32xf32>
    %60 = tpu.matmul %59, %40, %cst_54 {dimension_numbers = #tpu.dot_dimension_numbers<[1], [0], [0], [1], [0, 0, 1, 1], [], []>} : vector<16x100xbf16>, vector<100x32xbf16>, vector<16x32xf32> -> vector<16x32xf32>
    %61 = arith.truncf %60 : vector<16x32xf32> to vector<16x32xbf16>
    %c2_55 = arith.constant 2 : index
    %c0_56 = arith.constant 0 : index
    %c0_57 = arith.constant 0 : index
    %62 = vector.load %arg6[%c2_55, %c0_56, %c0_57] : memref<16x32x64xbf16, #tpu.memory_space<vmem>>, vector<1x32x64xbf16>
    %63 = vector.shape_cast %62 : vector<1x32x64xbf16> to vector<32x64xbf16>
    %cst_58 = arith.constant dense<0.000000e+00> : vector<16x64xf32>
    %64 = tpu.matmul %61, %63, %cst_58 {dimension_numbers = #tpu.dot_dimension_numbers<[1], [0], [0], [1], [0, 0, 1, 1], [], []>} : vector<16x32xbf16>, vector<32x64xbf16>, vector<16x64xf32> -> vector<16x64xf32>
    %65 = arith.addf %57, %64 : vector<16x64xf32>
    %c3_59 = arith.constant 3 : index
    %c0_60 = arith.constant 0 : index
    %c0_61 = arith.constant 0 : index
    %66 = vector.load %arg5[%c3_59, %c0_60, %c0_61] : memref<16x16x100xbf16, #tpu.memory_space<vmem>>, vector<1x16x100xbf16>
    %67 = vector.shape_cast %66 : vector<1x16x100xbf16> to vector<16x100xbf16>
    %cst_62 = arith.constant dense<0.000000e+00> : vector<16x32xf32>
    %68 = tpu.matmul %67, %40, %cst_62 {dimension_numbers = #tpu.dot_dimension_numbers<[1], [0], [0], [1], [0, 0, 1, 1], [], []>} : vector<16x100xbf16>, vector<100x32xbf16>, vector<16x32xf32> -> vector<16x32xf32>
    %69 = arith.truncf %68 : vector<16x32xf32> to vector<16x32xbf16>
    %c3_63 = arith.constant 3 : index
    %c0_64 = arith.constant 0 : index
    %c0_65 = arith.constant 0 : index
    %70 = vector.load %arg6[%c3_63, %c0_64, %c0_65] : memref<16x32x64xbf16, #tpu.memory_space<vmem>>, vector<1x32x64xbf16>
    %71 = vector.shape_cast %70 : vector<1x32x64xbf16> to vector<32x64xbf16>
    %cst_66 = arith.constant dense<0.000000e+00> : vector<16x64xf32>
    %72 = tpu.matmul %69, %71, %cst_66 {dimension_numbers = #tpu.dot_dimension_numbers<[1], [0], [0], [1], [0, 0, 1, 1], [], []>} : vector<16x32xbf16>, vector<32x64xbf16>, vector<16x64xf32> -> vector<16x64xf32>
    %73 = arith.addf %65, %72 : vector<16x64xf32>
    %c4 = arith.constant 4 : index
    %c0_67 = arith.constant 0 : index
    %c0_68 = arith.constant 0 : index
    %74 = vector.load %arg5[%c4, %c0_67, %c0_68] : memref<16x16x100xbf16, #tpu.memory_space<vmem>>, vector<1x16x100xbf16>
    %75 = vector.shape_cast %74 : vector<1x16x100xbf16> to vector<16x100xbf16>
    %cst_69 = arith.constant dense<0.000000e+00> : vector<16x32xf32>
    %76 = tpu.matmul %75, %40, %cst_69 {dimension_numbers = #tpu.dot_dimension_numbers<[1], [0], [0], [1], [0, 0, 1, 1], [], []>} : vector<16x100xbf16>, vector<100x32xbf16>, vector<16x32xf32> -> vector<16x32xf32>
    %77 = arith.truncf %76 : vector<16x32xf32> to vector<16x32xbf16>
    %c4_70 = arith.constant 4 : index
    %c0_71 = arith.constant 0 : index
    %c0_72 = arith.constant 0 : index
    %78 = vector.load %arg6[%c4_70, %c0_71, %c0_72] : memref<16x32x64xbf16, #tpu.memory_space<vmem>>, vector<1x32x64xbf16>
    %79 = vector.shape_cast %78 : vector<1x32x64xbf16> to vector<32x64xbf16>
    %cst_73 = arith.constant dense<0.000000e+00> : vector<16x64xf32>
    %80 = tpu.matmul %77, %79, %cst_73 {dimension_numbers = #tpu.dot_dimension_numbers<[1], [0], [0], [1], [0, 0, 1, 1], [], []>} : vector<16x32xbf16>, vector<32x64xbf16>, vector<16x64xf32> -> vector<16x64xf32>
    %81 = arith.addf %73, %80 : vector<16x64xf32>
    %c5 = arith.constant 5 : index
    %c0_74 = arith.constant 0 : index
    %c0_75 = arith.constant 0 : index
    %82 = vector.load %arg5[%c5, %c0_74, %c0_75] : memref<16x16x100xbf16, #tpu.memory_space<vmem>>, vector<1x16x100xbf16>
    %83 = vector.shape_cast %82 : vector<1x16x100xbf16> to vector<16x100xbf16>
    %cst_76 = arith.constant dense<0.000000e+00> : vector<16x32xf32>
    %84 = tpu.matmul %83, %40, %cst_76 {dimension_numbers = #tpu.dot_dimension_numbers<[1], [0], [0], [1], [0, 0, 1, 1], [], []>} : vector<16x100xbf16>, vector<100x32xbf16>, vector<16x32xf32> -> vector<16x32xf32>
    %85 = arith.truncf %84 : vector<16x32xf32> to vector<16x32xbf16>
    %c5_77 = arith.constant 5 : index
    %c0_78 = arith.constant 0 : index
    %c0_79 = arith.constant 0 : index
    %86 = vector.load %arg6[%c5_77, %c0_78, %c0_79] : memref<16x32x64xbf16, #tpu.memory_space<vmem>>, vector<1x32x64xbf16>
    %87 = vector.shape_cast %86 : vector<1x32x64xbf16> to vector<32x64xbf16>
    %cst_80 = arith.constant dense<0.000000e+00> : vector<16x64xf32>
    %88 = tpu.matmul %85, %87, %cst_80 {dimension_numbers = #tpu.dot_dimension_numbers<[1], [0], [0], [1], [0, 0, 1, 1], [], []>} : vector<16x32xbf16>, vector<32x64xbf16>, vector<16x64xf32> -> vector<16x64xf32>
    %89 = arith.addf %81, %88 : vector<16x64xf32>
    %c6 = arith.constant 6 : index
    %c0_81 = arith.constant 0 : index
    %c0_82 = arith.constant 0 : index
    %90 = vector.load %arg5[%c6, %c0_81, %c0_82] : memref<16x16x100xbf16, #tpu.memory_space<vmem>>, vector<1x16x100xbf16>
    %91 = vector.shape_cast %90 : vector<1x16x100xbf16> to vector<16x100xbf16>
    %cst_83 = arith.constant dense<0.000000e+00> : vector<16x32xf32>
    %92 = tpu.matmul %91, %40, %cst_83 {dimension_numbers = #tpu.dot_dimension_numbers<[1], [0], [0], [1], [0, 0, 1, 1], [], []>} : vector<16x100xbf16>, vector<100x32xbf16>, vector<16x32xf32> -> vector<16x32xf32>
    %93 = arith.truncf %92 : vector<16x32xf32> to vector<16x32xbf16>
    %c6_84 = arith.constant 6 : index
    %c0_85 = arith.constant 0 : index
    %c0_86 = arith.constant 0 : index
    %94 = vector.load %arg6[%c6_84, %c0_85, %c0_86] : memref<16x32x64xbf16, #tpu.memory_space<vmem>>, vector<1x32x64xbf16>
    %95 = vector.shape_cast %94 : vector<1x32x64xbf16> to vector<32x64xbf16>
    %cst_87 = arith.constant dense<0.000000e+00> : vector<16x64xf32>
    %96 = tpu.matmul %93, %95, %cst_87 {dimension_numbers = #tpu.dot_dimension_numbers<[1], [0], [0], [1], [0, 0, 1, 1], [], []>} : vector<16x32xbf16>, vector<32x64xbf16>, vector<16x64xf32> -> vector<16x64xf32>
    %97 = arith.addf %89, %96 : vector<16x64xf32>
    %c7 = arith.constant 7 : index
    %c0_88 = arith.constant 0 : index
    %c0_89 = arith.constant 0 : index
    %98 = vector.load %arg5[%c7, %c0_88, %c0_89] : memref<16x16x100xbf16, #tpu.memory_space<vmem>>, vector<1x16x100xbf16>
    %99 = vector.shape_cast %98 : vector<1x16x100xbf16> to vector<16x100xbf16>
    %cst_90 = arith.constant dense<0.000000e+00> : vector<16x32xf32>
    %100 = tpu.matmul %99, %40, %cst_90 {dimension_numbers = #tpu.dot_dimension_numbers<[1], [0], [0], [1], [0, 0, 1, 1], [], []>} : vector<16x100xbf16>, vector<100x32xbf16>, vector<16x32xf32> -> vector<16x32xf32>
    %101 = arith.truncf %100 : vector<16x32xf32> to vector<16x32xbf16>
    %c7_91 = arith.constant 7 : index
    %c0_92 = arith.constant 0 : index
    %c0_93 = arith.constant 0 : index
    %102 = vector.load %arg6[%c7_91, %c0_92, %c0_93] : memref<16x32x64xbf16, #tpu.memory_space<vmem>>, vector<1x32x64xbf16>
    %103 = vector.shape_cast %102 : vector<1x32x64xbf16> to vector<32x64xbf16>
    %cst_94 = arith.constant dense<0.000000e+00> : vector<16x64xf32>
    %104 = tpu.matmul %101, %103, %cst_94 {dimension_numbers = #tpu.dot_dimension_numbers<[1], [0], [0], [1], [0, 0, 1, 1], [], []>} : vector<16x32xbf16>, vector<32x64xbf16>, vector<16x64xf32> -> vector<16x64xf32>
    %105 = arith.addf %97, %104 : vector<16x64xf32>
    %c8 = arith.constant 8 : index
    %c0_95 = arith.constant 0 : index
    %c0_96 = arith.constant 0 : index
    %106 = vector.load %arg5[%c8, %c0_95, %c0_96] : memref<16x16x100xbf16, #tpu.memory_space<vmem>>, vector<1x16x100xbf16>
    %107 = vector.shape_cast %106 : vector<1x16x100xbf16> to vector<16x100xbf16>
    %cst_97 = arith.constant dense<0.000000e+00> : vector<16x32xf32>
    %108 = tpu.matmul %107, %40, %cst_97 {dimension_numbers = #tpu.dot_dimension_numbers<[1], [0], [0], [1], [0, 0, 1, 1], [], []>} : vector<16x100xbf16>, vector<100x32xbf16>, vector<16x32xf32> -> vector<16x32xf32>
    %109 = arith.truncf %108 : vector<16x32xf32> to vector<16x32xbf16>
    %c8_98 = arith.constant 8 : index
    %c0_99 = arith.constant 0 : index
    %c0_100 = arith.constant 0 : index
    %110 = vector.load %arg6[%c8_98, %c0_99, %c0_100] : memref<16x32x64xbf16, #tpu.memory_space<vmem>>, vector<1x32x64xbf16>
    %111 = vector.shape_cast %110 : vector<1x32x64xbf16> to vector<32x64xbf16>
    %cst_101 = arith.constant dense<0.000000e+00> : vector<16x64xf32>
    %112 = tpu.matmul %109, %111, %cst_101 {dimension_numbers = #tpu.dot_dimension_numbers<[1], [0], [0], [1], [0, 0, 1, 1], [], []>} : vector<16x32xbf16>, vector<32x64xbf16>, vector<16x64xf32> -> vector<16x64xf32>
    %113 = arith.addf %105, %112 : vector<16x64xf32>
    %c9 = arith.constant 9 : index
    %c0_102 = arith.constant 0 : index
    %c0_103 = arith.constant 0 : index
    %114 = vector.load %arg5[%c9, %c0_102, %c0_103] : memref<16x16x100xbf16, #tpu.memory_space<vmem>>, vector<1x16x100xbf16>
    %115 = vector.shape_cast %114 : vector<1x16x100xbf16> to vector<16x100xbf16>
    %cst_104 = arith.constant dense<0.000000e+00> : vector<16x32xf32>
    %116 = tpu.matmul %115, %40, %cst_104 {dimension_numbers = #tpu.dot_dimension_numbers<[1], [0], [0], [1], [0, 0, 1, 1], [], []>} : vector<16x100xbf16>, vector<100x32xbf16>, vector<16x32xf32> -> vector<16x32xf32>
    %117 = arith.truncf %116 : vector<16x32xf32> to vector<16x32xbf16>
    %c9_105 = arith.constant 9 : index
    %c0_106 = arith.constant 0 : index
    %c0_107 = arith.constant 0 : index
    %118 = vector.load %arg6[%c9_105, %c0_106, %c0_107] : memref<16x32x64xbf16, #tpu.memory_space<vmem>>, vector<1x32x64xbf16>
    %119 = vector.shape_cast %118 : vector<1x32x64xbf16> to vector<32x64xbf16>
    %cst_108 = arith.constant dense<0.000000e+00> : vector<16x64xf32>
    %120 = tpu.matmul %117, %119, %cst_108 {dimension_numbers = #tpu.dot_dimension_numbers<[1], [0], [0], [1], [0, 0, 1, 1], [], []>} : vector<16x32xbf16>, vector<32x64xbf16>, vector<16x64xf32> -> vector<16x64xf32>
    %121 = arith.addf %113, %120 : vector<16x64xf32>
    %c10 = arith.constant 10 : index
    %c0_109 = arith.constant 0 : index
    %c0_110 = arith.constant 0 : index
    %122 = vector.load %arg5[%c10, %c0_109, %c0_110] : memref<16x16x100xbf16, #tpu.memory_space<vmem>>, vector<1x16x100xbf16>
    %123 = vector.shape_cast %122 : vector<1x16x100xbf16> to vector<16x100xbf16>
    %cst_111 = arith.constant dense<0.000000e+00> : vector<16x32xf32>
    %124 = tpu.matmul %123, %40, %cst_111 {dimension_numbers = #tpu.dot_dimension_numbers<[1], [0], [0], [1], [0, 0, 1, 1], [], []>} : vector<16x100xbf16>, vector<100x32xbf16>, vector<16x32xf32> -> vector<16x32xf32>
    %125 = arith.truncf %124 : vector<16x32xf32> to vector<16x32xbf16>
    %c10_112 = arith.constant 10 : index
    %c0_113 = arith.constant 0 : index
    %c0_114 = arith.constant 0 : index
    %126 = vector.load %arg6[%c10_112, %c0_113, %c0_114] : memref<16x32x64xbf16, #tpu.memory_space<vmem>>, vector<1x32x64xbf16>
    %127 = vector.shape_cast %126 : vector<1x32x64xbf16> to vector<32x64xbf16>
    %cst_115 = arith.constant dense<0.000000e+00> : vector<16x64xf32>
    %128 = tpu.matmul %125, %127, %cst_115 {dimension_numbers = #tpu.dot_dimension_numbers<[1], [0], [0], [1], [0, 0, 1, 1], [], []>} : vector<16x32xbf16>, vector<32x64xbf16>, vector<16x64xf32> -> vector<16x64xf32>
    %129 = arith.addf %121, %128 : vector<16x64xf32>
    %c11 = arith.constant 11 : index
    %c0_116 = arith.constant 0 : index
    %c0_117 = arith.constant 0 : index
    %130 = vector.load %arg5[%c11, %c0_116, %c0_117] : memref<16x16x100xbf16, #tpu.memory_space<vmem>>, vector<1x16x100xbf16>
    %131 = vector.shape_cast %130 : vector<1x16x100xbf16> to vector<16x100xbf16>
    %cst_118 = arith.constant dense<0.000000e+00> : vector<16x32xf32>
    %132 = tpu.matmul %131, %40, %cst_118 {dimension_numbers = #tpu.dot_dimension_numbers<[1], [0], [0], [1], [0, 0, 1, 1], [], []>} : vector<16x100xbf16>, vector<100x32xbf16>, vector<16x32xf32> -> vector<16x32xf32>
    %133 = arith.truncf %132 : vector<16x32xf32> to vector<16x32xbf16>
    %c11_119 = arith.constant 11 : index
    %c0_120 = arith.constant 0 : index
    %c0_121 = arith.constant 0 : index
    %134 = vector.load %arg6[%c11_119, %c0_120, %c0_121] : memref<16x32x64xbf16, #tpu.memory_space<vmem>>, vector<1x32x64xbf16>
    %135 = vector.shape_cast %134 : vector<1x32x64xbf16> to vector<32x64xbf16>
    %cst_122 = arith.constant dense<0.000000e+00> : vector<16x64xf32>
    %136 = tpu.matmul %133, %135, %cst_122 {dimension_numbers = #tpu.dot_dimension_numbers<[1], [0], [0], [1], [0, 0, 1, 1], [], []>} : vector<16x32xbf16>, vector<32x64xbf16>, vector<16x64xf32> -> vector<16x64xf32>
    %137 = arith.addf %129, %136 : vector<16x64xf32>
    %c12 = arith.constant 12 : index
    %c0_123 = arith.constant 0 : index
    %c0_124 = arith.constant 0 : index
    %138 = vector.load %arg5[%c12, %c0_123, %c0_124] : memref<16x16x100xbf16, #tpu.memory_space<vmem>>, vector<1x16x100xbf16>
    %139 = vector.shape_cast %138 : vector<1x16x100xbf16> to vector<16x100xbf16>
    %cst_125 = arith.constant dense<0.000000e+00> : vector<16x32xf32>
    %140 = tpu.matmul %139, %40, %cst_125 {dimension_numbers = #tpu.dot_dimension_numbers<[1], [0], [0], [1], [0, 0, 1, 1], [], []>} : vector<16x100xbf16>, vector<100x32xbf16>, vector<16x32xf32> -> vector<16x32xf32>
    %141 = arith.truncf %140 : vector<16x32xf32> to vector<16x32xbf16>
    %c12_126 = arith.constant 12 : index
    %c0_127 = arith.constant 0 : index
    %c0_128 = arith.constant 0 : index
    %142 = vector.load %arg6[%c12_126, %c0_127, %c0_128] : memref<16x32x64xbf16, #tpu.memory_space<vmem>>, vector<1x32x64xbf16>
    %143 = vector.shape_cast %142 : vector<1x32x64xbf16> to vector<32x64xbf16>
    %cst_129 = arith.constant dense<0.000000e+00> : vector<16x64xf32>
    %144 = tpu.matmul %141, %143, %cst_129 {dimension_numbers = #tpu.dot_dimension_numbers<[1], [0], [0], [1], [0, 0, 1, 1], [], []>} : vector<16x32xbf16>, vector<32x64xbf16>, vector<16x64xf32> -> vector<16x64xf32>
    %145 = arith.addf %137, %144 : vector<16x64xf32>
    %c13 = arith.constant 13 : index
    %c0_130 = arith.constant 0 : index
    %c0_131 = arith.constant 0 : index
    %146 = vector.load %arg5[%c13, %c0_130, %c0_131] : memref<16x16x100xbf16, #tpu.memory_space<vmem>>, vector<1x16x100xbf16>
    %147 = vector.shape_cast %146 : vector<1x16x100xbf16> to vector<16x100xbf16>
    %cst_132 = arith.constant dense<0.000000e+00> : vector<16x32xf32>
    %148 = tpu.matmul %147, %40, %cst_132 {dimension_numbers = #tpu.dot_dimension_numbers<[1], [0], [0], [1], [0, 0, 1, 1], [], []>} : vector<16x100xbf16>, vector<100x32xbf16>, vector<16x32xf32> -> vector<16x32xf32>
    %149 = arith.truncf %148 : vector<16x32xf32> to vector<16x32xbf16>
    %c13_133 = arith.constant 13 : index
    %c0_134 = arith.constant 0 : index
    %c0_135 = arith.constant 0 : index
    %150 = vector.load %arg6[%c13_133, %c0_134, %c0_135] : memref<16x32x64xbf16, #tpu.memory_space<vmem>>, vector<1x32x64xbf16>
    %151 = vector.shape_cast %150 : vector<1x32x64xbf16> to vector<32x64xbf16>
    %cst_136 = arith.constant dense<0.000000e+00> : vector<16x64xf32>
    %152 = tpu.matmul %149, %151, %cst_136 {dimension_numbers = #tpu.dot_dimension_numbers<[1], [0], [0], [1], [0, 0, 1, 1], [], []>} : vector<16x32xbf16>, vector<32x64xbf16>, vector<16x64xf32> -> vector<16x64xf32>
    %153 = arith.addf %145, %152 : vector<16x64xf32>
    %c14 = arith.constant 14 : index
    %c0_137 = arith.constant 0 : index
    %c0_138 = arith.constant 0 : index
    %154 = vector.load %arg5[%c14, %c0_137, %c0_138] : memref<16x16x100xbf16, #tpu.memory_space<vmem>>, vector<1x16x100xbf16>
    %155 = vector.shape_cast %154 : vector<1x16x100xbf16> to vector<16x100xbf16>
    %cst_139 = arith.constant dense<0.000000e+00> : vector<16x32xf32>
    %156 = tpu.matmul %155, %40, %cst_139 {dimension_numbers = #tpu.dot_dimension_numbers<[1], [0], [0], [1], [0, 0, 1, 1], [], []>} : vector<16x100xbf16>, vector<100x32xbf16>, vector<16x32xf32> -> vector<16x32xf32>
    %157 = arith.truncf %156 : vector<16x32xf32> to vector<16x32xbf16>
    %c14_140 = arith.constant 14 : index
    %c0_141 = arith.constant 0 : index
    %c0_142 = arith.constant 0 : index
    %158 = vector.load %arg6[%c14_140, %c0_141, %c0_142] : memref<16x32x64xbf16, #tpu.memory_space<vmem>>, vector<1x32x64xbf16>
    %159 = vector.shape_cast %158 : vector<1x32x64xbf16> to vector<32x64xbf16>
    %cst_143 = arith.constant dense<0.000000e+00> : vector<16x64xf32>
    %160 = tpu.matmul %157, %159, %cst_143 {dimension_numbers = #tpu.dot_dimension_numbers<[1], [0], [0], [1], [0, 0, 1, 1], [], []>} : vector<16x32xbf16>, vector<32x64xbf16>, vector<16x64xf32> -> vector<16x64xf32>
    %161 = arith.addf %153, %160 : vector<16x64xf32>
    %c15 = arith.constant 15 : index
    %c0_144 = arith.constant 0 : index
    %c0_145 = arith.constant 0 : index
    %162 = vector.load %arg5[%c15, %c0_144, %c0_145] : memref<16x16x100xbf16, #tpu.memory_space<vmem>>, vector<1x16x100xbf16>
    %163 = vector.shape_cast %162 : vector<1x16x100xbf16> to vector<16x100xbf16>
    %cst_146 = arith.constant dense<0.000000e+00> : vector<16x32xf32>
    %164 = tpu.matmul %163, %40, %cst_146 {dimension_numbers = #tpu.dot_dimension_numbers<[1], [0], [0], [1], [0, 0, 1, 1], [], []>} : vector<16x100xbf16>, vector<100x32xbf16>, vector<16x32xf32> -> vector<16x32xf32>
    %165 = arith.truncf %164 : vector<16x32xf32> to vector<16x32xbf16>
    %c15_147 = arith.constant 15 : index
    %c0_148 = arith.constant 0 : index
    %c0_149 = arith.constant 0 : index
    %166 = vector.load %arg6[%c15_147, %c0_148, %c0_149] : memref<16x32x64xbf16, #tpu.memory_space<vmem>>, vector<1x32x64xbf16>
    %167 = vector.shape_cast %166 : vector<1x32x64xbf16> to vector<32x64xbf16>
    %cst_150 = arith.constant dense<0.000000e+00> : vector<16x64xf32>
    %168 = tpu.matmul %165, %167, %cst_150 {dimension_numbers = #tpu.dot_dimension_numbers<[1], [0], [0], [1], [0, 0, 1, 1], [], []>} : vector<16x32xbf16>, vector<32x64xbf16>, vector<16x64xf32> -> vector<16x64xf32>
    %169 = arith.addf %161, %168 : vector<16x64xf32>
    %c0_151 = arith.constant 0 : index
    %c0_152 = arith.constant 0 : index
    %170 = vector.load %arg7[%c0_151, %c0_152] : memref<1x64xf32, #tpu.memory_space<vmem>>, vector<1x64xf32>
    %171 = vector.broadcast %170 : vector<1x64xf32> to vector<16x64xf32>
    %172 = arith.addf %169, %171 : vector<16x64xf32>
    %cst_153 = arith.constant 0.000000e+00 : f32
    %173 = vector.broadcast %cst_153 : f32 to vector<16x64xf32>
    %174 = arith.maximumf %172, %173 : vector<16x64xf32>
    %175 = arith.truncf %174 : vector<16x64xf32> to vector<16x64xbf16>
    %cst_154 = arith.constant 0.000000e+00 : f32
    %176 = vector.broadcast %cst_154 : f32 to vector<4x64xf32>
    %c0_155 = arith.constant 0 : index
    %c0_156 = arith.constant 0 : index
    %c0_157 = arith.constant 0 : index
    %177 = vector.load %arg8[%c0_155, %c0_156, %c0_157] : memref<9x4x16xbf16, #tpu.memory_space<vmem>>, vector<1x4x16xbf16>
    %178 = vector.shape_cast %177 : vector<1x4x16xbf16> to vector<4x16xbf16>
    %cst_158 = arith.constant dense<0.000000e+00> : vector<4x64xf32>
    %179 = tpu.matmul %178, %175, %cst_158 {dimension_numbers = #tpu.dot_dimension_numbers<[1], [0], [0], [1], [0, 0, 1, 1], [], []>} : vector<4x16xbf16>, vector<16x64xbf16>, vector<4x64xf32> -> vector<4x64xf32>
    %180 = arith.truncf %179 : vector<4x64xf32> to vector<4x64xbf16>
    %c0_159 = arith.constant 0 : index
    %c0_160 = arith.constant 0 : index
    %c0_161 = arith.constant 0 : index
    %181 = vector.load %arg9[%c0_159, %c0_160, %c0_161] : memref<9x64x64xbf16, #tpu.memory_space<vmem>>, vector<1x64x64xbf16>
    %182 = vector.shape_cast %181 : vector<1x64x64xbf16> to vector<64x64xbf16>
    %cst_162 = arith.constant dense<0.000000e+00> : vector<4x64xf32>
    %183 = tpu.matmul %180, %182, %cst_162 {dimension_numbers = #tpu.dot_dimension_numbers<[1], [0], [0], [1], [0, 0, 1, 1], [], []>} : vector<4x64xbf16>, vector<64x64xbf16>, vector<4x64xf32> -> vector<4x64xf32>
    %184 = arith.addf %176, %183 : vector<4x64xf32>
    %c1_163 = arith.constant 1 : index
    %c0_164 = arith.constant 0 : index
    %c0_165 = arith.constant 0 : index
    %185 = vector.load %arg8[%c1_163, %c0_164, %c0_165] : memref<9x4x16xbf16, #tpu.memory_space<vmem>>, vector<1x4x16xbf16>
    %186 = vector.shape_cast %185 : vector<1x4x16xbf16> to vector<4x16xbf16>
    %cst_166 = arith.constant dense<0.000000e+00> : vector<4x64xf32>
    %187 = tpu.matmul %186, %175, %cst_166 {dimension_numbers = #tpu.dot_dimension_numbers<[1], [0], [0], [1], [0, 0, 1, 1], [], []>} : vector<4x16xbf16>, vector<16x64xbf16>, vector<4x64xf32> -> vector<4x64xf32>
    %188 = arith.truncf %187 : vector<4x64xf32> to vector<4x64xbf16>
    %c1_167 = arith.constant 1 : index
    %c0_168 = arith.constant 0 : index
    %c0_169 = arith.constant 0 : index
    %189 = vector.load %arg9[%c1_167, %c0_168, %c0_169] : memref<9x64x64xbf16, #tpu.memory_space<vmem>>, vector<1x64x64xbf16>
    %190 = vector.shape_cast %189 : vector<1x64x64xbf16> to vector<64x64xbf16>
    %cst_170 = arith.constant dense<0.000000e+00> : vector<4x64xf32>
    %191 = tpu.matmul %188, %190, %cst_170 {dimension_numbers = #tpu.dot_dimension_numbers<[1], [0], [0], [1], [0, 0, 1, 1], [], []>} : vector<4x64xbf16>, vector<64x64xbf16>, vector<4x64xf32> -> vector<4x64xf32>
    %192 = arith.addf %184, %191 : vector<4x64xf32>
    %c2_171 = arith.constant 2 : index
    %c0_172 = arith.constant 0 : index
    %c0_173 = arith.constant 0 : index
    %193 = vector.load %arg8[%c2_171, %c0_172, %c0_173] : memref<9x4x16xbf16, #tpu.memory_space<vmem>>, vector<1x4x16xbf16>
    %194 = vector.shape_cast %193 : vector<1x4x16xbf16> to vector<4x16xbf16>
    %cst_174 = arith.constant dense<0.000000e+00> : vector<4x64xf32>
    %195 = tpu.matmul %194, %175, %cst_174 {dimension_numbers = #tpu.dot_dimension_numbers<[1], [0], [0], [1], [0, 0, 1, 1], [], []>} : vector<4x16xbf16>, vector<16x64xbf16>, vector<4x64xf32> -> vector<4x64xf32>
    %196 = arith.truncf %195 : vector<4x64xf32> to vector<4x64xbf16>
    %c2_175 = arith.constant 2 : index
    %c0_176 = arith.constant 0 : index
    %c0_177 = arith.constant 0 : index
    %197 = vector.load %arg9[%c2_175, %c0_176, %c0_177] : memref<9x64x64xbf16, #tpu.memory_space<vmem>>, vector<1x64x64xbf16>
    %198 = vector.shape_cast %197 : vector<1x64x64xbf16> to vector<64x64xbf16>
    %cst_178 = arith.constant dense<0.000000e+00> : vector<4x64xf32>
    %199 = tpu.matmul %196, %198, %cst_178 {dimension_numbers = #tpu.dot_dimension_numbers<[1], [0], [0], [1], [0, 0, 1, 1], [], []>} : vector<4x64xbf16>, vector<64x64xbf16>, vector<4x64xf32> -> vector<4x64xf32>
    %200 = arith.addf %192, %199 : vector<4x64xf32>
    %c3_179 = arith.constant 3 : index
    %c0_180 = arith.constant 0 : index
    %c0_181 = arith.constant 0 : index
    %201 = vector.load %arg8[%c3_179, %c0_180, %c0_181] : memref<9x4x16xbf16, #tpu.memory_space<vmem>>, vector<1x4x16xbf16>
    %202 = vector.shape_cast %201 : vector<1x4x16xbf16> to vector<4x16xbf16>
    %cst_182 = arith.constant dense<0.000000e+00> : vector<4x64xf32>
    %203 = tpu.matmul %202, %175, %cst_182 {dimension_numbers = #tpu.dot_dimension_numbers<[1], [0], [0], [1], [0, 0, 1, 1], [], []>} : vector<4x16xbf16>, vector<16x64xbf16>, vector<4x64xf32> -> vector<4x64xf32>
    %204 = arith.truncf %203 : vector<4x64xf32> to vector<4x64xbf16>
    %c3_183 = arith.constant 3 : index
    %c0_184 = arith.constant 0 : index
    %c0_185 = arith.constant 0 : index
    %205 = vector.load %arg9[%c3_183, %c0_184, %c0_185] : memref<9x64x64xbf16, #tpu.memory_space<vmem>>, vector<1x64x64xbf16>
    %206 = vector.shape_cast %205 : vector<1x64x64xbf16> to vector<64x64xbf16>
    %cst_186 = arith.constant dense<0.000000e+00> : vector<4x64xf32>
    %207 = tpu.matmul %204, %206, %cst_186 {dimension_numbers = #tpu.dot_dimension_numbers<[1], [0], [0], [1], [0, 0, 1, 1], [], []>} : vector<4x64xbf16>, vector<64x64xbf16>, vector<4x64xf32> -> vector<4x64xf32>
    %208 = arith.addf %200, %207 : vector<4x64xf32>
    %c4_187 = arith.constant 4 : index
    %c0_188 = arith.constant 0 : index
    %c0_189 = arith.constant 0 : index
    %209 = vector.load %arg8[%c4_187, %c0_188, %c0_189] : memref<9x4x16xbf16, #tpu.memory_space<vmem>>, vector<1x4x16xbf16>
    %210 = vector.shape_cast %209 : vector<1x4x16xbf16> to vector<4x16xbf16>
    %cst_190 = arith.constant dense<0.000000e+00> : vector<4x64xf32>
    %211 = tpu.matmul %210, %175, %cst_190 {dimension_numbers = #tpu.dot_dimension_numbers<[1], [0], [0], [1], [0, 0, 1, 1], [], []>} : vector<4x16xbf16>, vector<16x64xbf16>, vector<4x64xf32> -> vector<4x64xf32>
    %212 = arith.truncf %211 : vector<4x64xf32> to vector<4x64xbf16>
    %c4_191 = arith.constant 4 : index
    %c0_192 = arith.constant 0 : index
    %c0_193 = arith.constant 0 : index
    %213 = vector.load %arg9[%c4_191, %c0_192, %c0_193] : memref<9x64x64xbf16, #tpu.memory_space<vmem>>, vector<1x64x64xbf16>
    %214 = vector.shape_cast %213 : vector<1x64x64xbf16> to vector<64x64xbf16>
    %cst_194 = arith.constant dense<0.000000e+00> : vector<4x64xf32>
    %215 = tpu.matmul %212, %214, %cst_194 {dimension_numbers = #tpu.dot_dimension_numbers<[1], [0], [0], [1], [0, 0, 1, 1], [], []>} : vector<4x64xbf16>, vector<64x64xbf16>, vector<4x64xf32> -> vector<4x64xf32>
    %216 = arith.addf %208, %215 : vector<4x64xf32>
    %c5_195 = arith.constant 5 : index
    %c0_196 = arith.constant 0 : index
    %c0_197 = arith.constant 0 : index
    %217 = vector.load %arg8[%c5_195, %c0_196, %c0_197] : memref<9x4x16xbf16, #tpu.memory_space<vmem>>, vector<1x4x16xbf16>
    %218 = vector.shape_cast %217 : vector<1x4x16xbf16> to vector<4x16xbf16>
    %cst_198 = arith.constant dense<0.000000e+00> : vector<4x64xf32>
    %219 = tpu.matmul %218, %175, %cst_198 {dimension_numbers = #tpu.dot_dimension_numbers<[1], [0], [0], [1], [0, 0, 1, 1], [], []>} : vector<4x16xbf16>, vector<16x64xbf16>, vector<4x64xf32> -> vector<4x64xf32>
    %220 = arith.truncf %219 : vector<4x64xf32> to vector<4x64xbf16>
    %c5_199 = arith.constant 5 : index
    %c0_200 = arith.constant 0 : index
    %c0_201 = arith.constant 0 : index
    %221 = vector.load %arg9[%c5_199, %c0_200, %c0_201] : memref<9x64x64xbf16, #tpu.memory_space<vmem>>, vector<1x64x64xbf16>
    %222 = vector.shape_cast %221 : vector<1x64x64xbf16> to vector<64x64xbf16>
    %cst_202 = arith.constant dense<0.000000e+00> : vector<4x64xf32>
    %223 = tpu.matmul %220, %222, %cst_202 {dimension_numbers = #tpu.dot_dimension_numbers<[1], [0], [0], [1], [0, 0, 1, 1], [], []>} : vector<4x64xbf16>, vector<64x64xbf16>, vector<4x64xf32> -> vector<4x64xf32>
    %224 = arith.addf %216, %223 : vector<4x64xf32>
    %c6_203 = arith.constant 6 : index
    %c0_204 = arith.constant 0 : index
    %c0_205 = arith.constant 0 : index
    %225 = vector.load %arg8[%c6_203, %c0_204, %c0_205] : memref<9x4x16xbf16, #tpu.memory_space<vmem>>, vector<1x4x16xbf16>
    %226 = vector.shape_cast %225 : vector<1x4x16xbf16> to vector<4x16xbf16>
    %cst_206 = arith.constant dense<0.000000e+00> : vector<4x64xf32>
    %227 = tpu.matmul %226, %175, %cst_206 {dimension_numbers = #tpu.dot_dimension_numbers<[1], [0], [0], [1], [0, 0, 1, 1], [], []>} : vector<4x16xbf16>, vector<16x64xbf16>, vector<4x64xf32> -> vector<4x64xf32>
    %228 = arith.truncf %227 : vector<4x64xf32> to vector<4x64xbf16>
    %c6_207 = arith.constant 6 : index
    %c0_208 = arith.constant 0 : index
    %c0_209 = arith.constant 0 : index
    %229 = vector.load %arg9[%c6_207, %c0_208, %c0_209] : memref<9x64x64xbf16, #tpu.memory_space<vmem>>, vector<1x64x64xbf16>
    %230 = vector.shape_cast %229 : vector<1x64x64xbf16> to vector<64x64xbf16>
    %cst_210 = arith.constant dense<0.000000e+00> : vector<4x64xf32>
    %231 = tpu.matmul %228, %230, %cst_210 {dimension_numbers = #tpu.dot_dimension_numbers<[1], [0], [0], [1], [0, 0, 1, 1], [], []>} : vector<4x64xbf16>, vector<64x64xbf16>, vector<4x64xf32> -> vector<4x64xf32>
    %232 = arith.addf %224, %231 : vector<4x64xf32>
    %c7_211 = arith.constant 7 : index
    %c0_212 = arith.constant 0 : index
    %c0_213 = arith.constant 0 : index
    %233 = vector.load %arg8[%c7_211, %c0_212, %c0_213] : memref<9x4x16xbf16, #tpu.memory_space<vmem>>, vector<1x4x16xbf16>
    %234 = vector.shape_cast %233 : vector<1x4x16xbf16> to vector<4x16xbf16>
    %cst_214 = arith.constant dense<0.000000e+00> : vector<4x64xf32>
    %235 = tpu.matmul %234, %175, %cst_214 {dimension_numbers = #tpu.dot_dimension_numbers<[1], [0], [0], [1], [0, 0, 1, 1], [], []>} : vector<4x16xbf16>, vector<16x64xbf16>, vector<4x64xf32> -> vector<4x64xf32>
    %236 = arith.truncf %235 : vector<4x64xf32> to vector<4x64xbf16>
    %c7_215 = arith.constant 7 : index
    %c0_216 = arith.constant 0 : index
    %c0_217 = arith.constant 0 : index
    %237 = vector.load %arg9[%c7_215, %c0_216, %c0_217] : memref<9x64x64xbf16, #tpu.memory_space<vmem>>, vector<1x64x64xbf16>
    %238 = vector.shape_cast %237 : vector<1x64x64xbf16> to vector<64x64xbf16>
    %cst_218 = arith.constant dense<0.000000e+00> : vector<4x64xf32>
    %239 = tpu.matmul %236, %238, %cst_218 {dimension_numbers = #tpu.dot_dimension_numbers<[1], [0], [0], [1], [0, 0, 1, 1], [], []>} : vector<4x64xbf16>, vector<64x64xbf16>, vector<4x64xf32> -> vector<4x64xf32>
    %240 = arith.addf %232, %239 : vector<4x64xf32>
    %c8_219 = arith.constant 8 : index
    %c0_220 = arith.constant 0 : index
    %c0_221 = arith.constant 0 : index
    %241 = vector.load %arg8[%c8_219, %c0_220, %c0_221] : memref<9x4x16xbf16, #tpu.memory_space<vmem>>, vector<1x4x16xbf16>
    %242 = vector.shape_cast %241 : vector<1x4x16xbf16> to vector<4x16xbf16>
    %cst_222 = arith.constant dense<0.000000e+00> : vector<4x64xf32>
    %243 = tpu.matmul %242, %175, %cst_222 {dimension_numbers = #tpu.dot_dimension_numbers<[1], [0], [0], [1], [0, 0, 1, 1], [], []>} : vector<4x16xbf16>, vector<16x64xbf16>, vector<4x64xf32> -> vector<4x64xf32>
    %244 = arith.truncf %243 : vector<4x64xf32> to vector<4x64xbf16>
    %c8_223 = arith.constant 8 : index
    %c0_224 = arith.constant 0 : index
    %c0_225 = arith.constant 0 : index
    %245 = vector.load %arg9[%c8_223, %c0_224, %c0_225] : memref<9x64x64xbf16, #tpu.memory_space<vmem>>, vector<1x64x64xbf16>
    %246 = vector.shape_cast %245 : vector<1x64x64xbf16> to vector<64x64xbf16>
    %cst_226 = arith.constant dense<0.000000e+00> : vector<4x64xf32>
    %247 = tpu.matmul %244, %246, %cst_226 {dimension_numbers = #tpu.dot_dimension_numbers<[1], [0], [0], [1], [0, 0, 1, 1], [], []>} : vector<4x64xbf16>, vector<64x64xbf16>, vector<4x64xf32> -> vector<4x64xf32>
    %248 = arith.addf %240, %247 : vector<4x64xf32>
    %c0_227 = arith.constant 0 : index
    %c0_228 = arith.constant 0 : index
    %249 = vector.load %arg10[%c0_227, %c0_228] : memref<1x64xf32, #tpu.memory_space<vmem>>, vector<1x64xf32>
    %250 = vector.broadcast %249 : vector<1x64xf32> to vector<4x64xf32>
    %251 = arith.addf %248, %250 : vector<4x64xf32>
    %cst_229 = arith.constant 0.000000e+00 : f32
    %252 = vector.broadcast %cst_229 : f32 to vector<4x64xf32>
    %253 = arith.maximumf %251, %252 : vector<4x64xf32>
    %254 = arith.truncf %253 : vector<4x64xf32> to vector<4x64xbf16>
    %cst_230 = arith.constant 0.000000e+00 : f32
    %255 = vector.broadcast %cst_230 : f32 to vector<1x512xf32>
    %256 = vector.extract_strided_slice %254 {offsets = [0, 0], sizes = [1, 64], strides = [1, 1]} : vector<4x64xbf16> to vector<1x64xbf16>
    %c0_231 = arith.constant 0 : index
    %c0_232 = arith.constant 0 : index
    %c0_233 = arith.constant 0 : index
    %257 = vector.load %arg11[%c0_231, %c0_232, %c0_233] : memref<4x64x512xbf16, #tpu.memory_space<vmem>>, vector<1x64x512xbf16>
    %258 = vector.shape_cast %257 : vector<1x64x512xbf16> to vector<64x512xbf16>
    %cst_234 = arith.constant dense<0.000000e+00> : vector<1x512xf32>
    %259 = tpu.matmul %256, %258, %cst_234 {dimension_numbers = #tpu.dot_dimension_numbers<[1], [0], [0], [1], [0, 0, 1, 1], [], []>} : vector<1x64xbf16>, vector<64x512xbf16>, vector<1x512xf32> -> vector<1x512xf32>
    %260 = arith.addf %255, %259 : vector<1x512xf32>
    %261 = vector.extract_strided_slice %254 {offsets = [1, 0], sizes = [1, 64], strides = [1, 1]} : vector<4x64xbf16> to vector<1x64xbf16>
    %c1_235 = arith.constant 1 : index
    %c0_236 = arith.constant 0 : index
    %c0_237 = arith.constant 0 : index
    %262 = vector.load %arg11[%c1_235, %c0_236, %c0_237] : memref<4x64x512xbf16, #tpu.memory_space<vmem>>, vector<1x64x512xbf16>
    %263 = vector.shape_cast %262 : vector<1x64x512xbf16> to vector<64x512xbf16>
    %cst_238 = arith.constant dense<0.000000e+00> : vector<1x512xf32>
    %264 = tpu.matmul %261, %263, %cst_238 {dimension_numbers = #tpu.dot_dimension_numbers<[1], [0], [0], [1], [0, 0, 1, 1], [], []>} : vector<1x64xbf16>, vector<64x512xbf16>, vector<1x512xf32> -> vector<1x512xf32>
    %265 = arith.addf %260, %264 : vector<1x512xf32>
    %266 = vector.extract_strided_slice %254 {offsets = [2, 0], sizes = [1, 64], strides = [1, 1]} : vector<4x64xbf16> to vector<1x64xbf16>
    %c2_239 = arith.constant 2 : index
    %c0_240 = arith.constant 0 : index
    %c0_241 = arith.constant 0 : index
    %267 = vector.load %arg11[%c2_239, %c0_240, %c0_241] : memref<4x64x512xbf16, #tpu.memory_space<vmem>>, vector<1x64x512xbf16>
    %268 = vector.shape_cast %267 : vector<1x64x512xbf16> to vector<64x512xbf16>
    %cst_242 = arith.constant dense<0.000000e+00> : vector<1x512xf32>
    %269 = tpu.matmul %266, %268, %cst_242 {dimension_numbers = #tpu.dot_dimension_numbers<[1], [0], [0], [1], [0, 0, 1, 1], [], []>} : vector<1x64xbf16>, vector<64x512xbf16>, vector<1x512xf32> -> vector<1x512xf32>
    %270 = arith.addf %265, %269 : vector<1x512xf32>
    %271 = vector.extract_strided_slice %254 {offsets = [3, 0], sizes = [1, 64], strides = [1, 1]} : vector<4x64xbf16> to vector<1x64xbf16>
    %c3_243 = arith.constant 3 : index
    %c0_244 = arith.constant 0 : index
    %c0_245 = arith.constant 0 : index
    %272 = vector.load %arg11[%c3_243, %c0_244, %c0_245] : memref<4x64x512xbf16, #tpu.memory_space<vmem>>, vector<1x64x512xbf16>
    %273 = vector.shape_cast %272 : vector<1x64x512xbf16> to vector<64x512xbf16>
    %cst_246 = arith.constant dense<0.000000e+00> : vector<1x512xf32>
    %274 = tpu.matmul %271, %273, %cst_246 {dimension_numbers = #tpu.dot_dimension_numbers<[1], [0], [0], [1], [0, 0, 1, 1], [], []>} : vector<1x64xbf16>, vector<64x512xbf16>, vector<1x512xf32> -> vector<1x512xf32>
    %275 = arith.addf %270, %274 : vector<1x512xf32>
    %c0_247 = arith.constant 0 : index
    %c0_248 = arith.constant 0 : index
    %276 = vector.load %arg12[%c0_247, %c0_248] : memref<1x512xf32, #tpu.memory_space<vmem>>, vector<1x512xf32>
    %277 = arith.addf %275, %276 : vector<1x512xf32>
    %cst_249 = arith.constant 0.000000e+00 : f32
    %278 = vector.broadcast %cst_249 : f32 to vector<1x512xf32>
    %279 = arith.maximumf %277, %278 : vector<1x512xf32>
    %280 = arith.truncf %279 : vector<1x512xf32> to vector<1x512xbf16>
    %c0_250 = arith.constant 0 : index
    %c0_251 = arith.constant 0 : index
    %281 = vector.load %arg13[%c0_250, %c0_251] : memref<512x128xbf16, #tpu.memory_space<vmem>>, vector<512x128xbf16>
    %cst_252 = arith.constant dense<0.000000e+00> : vector<1x128xf32>
    %282 = tpu.matmul %280, %281, %cst_252 {dimension_numbers = #tpu.dot_dimension_numbers<[1], [0], [0], [1], [0, 0, 1, 1], [], []>} : vector<1x512xbf16>, vector<512x128xbf16>, vector<1x128xf32> -> vector<1x128xf32>
    %c0_253 = arith.constant 0 : index
    %c0_254 = arith.constant 0 : index
    %283 = vector.load %arg14[%c0_253, %c0_254] : memref<1x128xf32, #tpu.memory_space<vmem>>, vector<1x128xf32>
    %284 = arith.addf %282, %283 : vector<1x128xf32>
    %c0_255 = arith.constant 0 : index
    %c0_256 = arith.constant 0 : index
    %c0_257 = arith.constant 0 : index
    %285 = vector.load %arg15[%c0_255, %c0_256, %c0_257] : memref<1x1x128xf32, #tpu.memory_space<vmem>>, vector<1x1x128xf32>
    %286 = vector.shape_cast %285 : vector<1x1x128xf32> to vector<1x128xf32>
    %287 = vector.shape_cast %284 : vector<1x128xf32> to vector<1x1x128xf32>
    tpu.vector_store %arg15[%c0_255, %c0_256, %c0_257], %287 {strides = array<i32>} : memref<1x1x128xf32, #tpu.memory_space<vmem>>, vector<1x1x128xf32>,
    return
  }
  func.func @transform_0(%arg0: i32) -> (i32, i32, i32) {
    %c0_i32 = arith.constant 0 : i32
    %c0_i32_0 = arith.constant 0 : i32
    %c0_i32_1 = arith.constant 0 : i32
    return %arg0, %c0_i32, %c0_i32_0 : i32, i32, i32
  }
  func.func @transform_1(%arg0: i32) -> (i32, i32, i32) {
    %c0_i32 = arith.constant 0 : i32
    %c0_i32_0 = arith.constant 0 : i32
    %c0_i32_1 = arith.constant 0 : i32
    %c0_i32_2 = arith.constant 0 : i32
    return %c0_i32, %c0_i32_0, %c0_i32_1 : i32, i32, i32
  }
  func.func @transform_2(%arg0: i32) -> (i32, i32, i32) {
    %c0_i32 = arith.constant 0 : i32
    %c0_i32_0 = arith.constant 0 : i32
    %c0_i32_1 = arith.constant 0 : i32
    %c0_i32_2 = arith.constant 0 : i32
    return %c0_i32, %c0_i32_0, %c0_i32_1 : i32, i32, i32
  }
  func.func @transform_3(%arg0: i32) -> (i32, i32) {
    %c0_i32 = arith.constant 0 : i32
    %c0_i32_0 = arith.constant 0 : i32
    %c0_i32_1 = arith.constant 0 : i32
    return %c0_i32, %c0_i32_0 : i32, i32
  }
  func.func @transform_4(%arg0: i32) -> (i32, i32, i32) {
    %c0_i32 = arith.constant 0 : i32
    %c0_i32_0 = arith.constant 0 : i32
    %c0_i32_1 = arith.constant 0 : i32
    %c0_i32_2 = arith.constant 0 : i32
    return %c0_i32, %c0_i32_0, %c0_i32_1 : i32, i32, i32
  }
  func.func @transform_5(%arg0: i32) -> (i32, i32, i32) {
    %c0_i32 = arith.constant 0 : i32
    %c0_i32_0 = arith.constant 0 : i32
    %c0_i32_1 = arith.constant 0 : i32
    %c0_i32_2 = arith.constant 0 : i32
    return %c0_i32, %c0_i32_0, %c0_i32_1 : i32, i32, i32
  }
  func.func @transform_6(%arg0: i32) -> (i32, i32) {
    %c0_i32 = arith.constant 0 : i32
    %c0_i32_0 = arith.constant 0 : i32
    %c0_i32_1 = arith.constant 0 : i32
    return %c0_i32, %c0_i32_0 : i32, i32
  }
  func.func @transform_7(%arg0: i32) -> (i32, i32, i32) {
    %c0_i32 = arith.constant 0 : i32
    %c0_i32_0 = arith.constant 0 : i32
    %c0_i32_1 = arith.constant 0 : i32
    %c0_i32_2 = arith.constant 0 : i32
    return %c0_i32, %c0_i32_0, %c0_i32_1 : i32, i32, i32
  }
  func.func @transform_8(%arg0: i32) -> (i32, i32, i32) {
    %c0_i32 = arith.constant 0 : i32
    %c0_i32_0 = arith.constant 0 : i32
    %c0_i32_1 = arith.constant 0 : i32
    %c0_i32_2 = arith.constant 0 : i32
    return %c0_i32, %c0_i32_0, %c0_i32_1 : i32, i32, i32
  }
  func.func @transform_9(%arg0: i32) -> (i32, i32) {
    %c0_i32 = arith.constant 0 : i32
    %c0_i32_0 = arith.constant 0 : i32
    %c0_i32_1 = arith.constant 0 : i32
    return %c0_i32, %c0_i32_0 : i32, i32
  }
  func.func @transform_10(%arg0: i32) -> (i32, i32, i32) {
    %c0_i32 = arith.constant 0 : i32
    %c0_i32_0 = arith.constant 0 : i32
    %c0_i32_1 = arith.constant 0 : i32
    %c0_i32_2 = arith.constant 0 : i32
    return %c0_i32, %c0_i32_0, %c0_i32_1 : i32, i32, i32
  }
  func.func @transform_11(%arg0: i32) -> (i32, i32) {
    %c0_i32 = arith.constant 0 : i32
    %c0_i32_0 = arith.constant 0 : i32
    %c0_i32_1 = arith.constant 0 : i32
    return %c0_i32, %c0_i32_0 : i32, i32
  }
  func.func @transform_12(%arg0: i32) -> (i32, i32) {
    %c0_i32 = arith.constant 0 : i32
    %c0_i32_0 = arith.constant 0 : i32
    %c0_i32_1 = arith.constant 0 : i32
    return %c0_i32, %c0_i32_0 : i32, i32
  }
  func.func @transform_13(%arg0: i32) -> (i32, i32) {
    %c0_i32 = arith.constant 0 : i32
    %c0_i32_0 = arith.constant 0 : i32
    %c0_i32_1 = arith.constant 0 : i32
    return %c0_i32, %c0_i32_0 : i32, i32
  }
  func.func @transform_14(%arg0: i32) -> (i32, i32, i32) {
    %c0_i32 = arith.constant 0 : i32
    %c0_i32_0 = arith.constant 0 : i32
    %c0_i32_1 = arith.constant 0 : i32
    return %arg0, %c0_i32, %c0_i32_0 : i32, i32, i32
  }
}

</mosaic_0001>

<llo_original>
// kernel: dqn_forward.1
$region0: #{dqn_forward.1}
  #allocation0 [shape = 'u32[]', space=smem, size = 0x4, offset = 0x4, fixed_abs, tag = 'smem constant byte address 0x4 - core index']
  #allocation1 [shape = 'u32[144,128]{1,0:T(1,128)}', space=vmem, size = 0x12000, scoped, tag = 'internal scratch']
  %s0 = inlined_call_operand.vmem [shape: bf16[2,121,64], index: 0, kind: input, shape index: {}]
  %s1 = inlined_call_operand.vmem [shape: bf16[4,100,121], index: 1, kind: input, shape index: {}]
  %s2 = inlined_call_operand.vmem [shape: bf16[4,64,32], index: 2, kind: input, shape index: {}]
  %s3 = inlined_call_operand.vmem [shape: f32[1,32], index: 3, kind: input, shape index: {}]
  %s4 = inlined_call_operand.vmem [shape: bf16[16,16,100], index: 4, kind: input, shape index: {}]
  %s5 = inlined_call_operand.vmem [shape: bf16[16,32,64], index: 5, kind: input, shape index: {}]
  %s6 = inlined_call_operand.vmem [shape: f32[1,64], index: 6, kind: input, shape index: {}]
  %s7 = inlined_call_operand.vmem [shape: bf16[9,4,16], index: 7, kind: input, shape index: {}]
  %s8 = inlined_call_operand.vmem [shape: bf16[9,64,64], index: 8, kind: input, shape index: {}]
  %s9 = inlined_call_operand.vmem [shape: f32[1,64], index: 9, kind: input, shape index: {}]
  %s10 = inlined_call_operand.vmem [shape: bf16[4,64,512], index: 10, kind: input, shape index: {}]
  %s11 = inlined_call_operand.vmem [shape: f32[1,512], index: 11, kind: input, shape index: {}]
  %s12 = inlined_call_operand.vmem [shape: bf16[512,128], index: 12, kind: input, shape index: {}]
  %s13 = inlined_call_operand.vmem [shape: f32[1,128], index: 13, kind: input, shape index: {}]
  %s14 = inlined_call_operand.hbm [shape: f32[2,1,128], index: 14, kind: output, shape index: {}]
  %s15 = sld [smem:[#allocation0]]
  $region89: #{dqn_forward.1} parent=0
    _
  %s17 = ssub.s32 1, %s15
  %s18 = scalar_select 0, %s17, %s15
  $region1: #{dqn_forward.1} parent=0
    #allocation2 [shape = 'u8[1024]{0}', space=vmem, size = 0x400, scoped, tag = 'output window, operand 0']
    #allocation3 [shape = 's32[2]{0}', space=sflag, size = 0x8, scoped, tag = 'scoped memory for dqn_forward.1']
    %19 = vsyncpa [#allocation3], 0
    %s20 = scalar_lea.sflag [#allocation3], 1
    %21 = vsyncpa %s20, 0
    loop: start=0, step=1, limit=4
    $region2: #{dqn_forward.1} parent=1 // loop_pre_header
      _
    $region3: #{dqn_forward.1} parent=1 // loop_header
      %s23 = sphi 0, %s27
      %p24 = scmp.ge.s32.totalorder %s23, 4
      %s33 = sphi 0, %s35
      %s36 = sphi 0, %s33
      %s37 = sphi 0, %s36
      %s53 = sphi 0, %s37
      %s57 = sphi 0, %s57
      %s59 = sphi 0, %s57
      %s60 = sphi 0, %s59
      %s74 = sphi 0, %s60
      %s78 = sphi 0, %s78
      %s80 = sphi 0, %s78
      %s81 = sphi 0, %s80
      %s95 = sphi 0, %s81
      %s99 = sphi 0, %s99
      %s101 = sphi 0, %s99
      %s102 = sphi 0, %s101
      %s116 = sphi 0, %s102
      %s120 = sphi 0, %s120
      %s122 = sphi 0, %s120
      %s123 = sphi 0, %s122
      %s137 = sphi 0, %s123
      %s141 = sphi 0, %s141
      %s143 = sphi 0, %s141
      %s144 = sphi 0, %s143
      %s158 = sphi 0, %s144
      %s162 = sphi 0, %s162
      %s164 = sphi 0, %s162
      %s165 = sphi 0, %s164
      %s179 = sphi 0, %s165
      %s183 = sphi 0, %s183
      %s185 = sphi 0, %s183
      %s186 = sphi 0, %s185
      %s200 = sphi 0, %s186
      %s204 = sphi 0, %s204
      %s206 = sphi 0, %s204
      %s207 = sphi 0, %s206
      %s221 = sphi 0, %s207
      %s225 = sphi 0, %s225
      %s227 = sphi 0, %s225
      %s228 = sphi 0, %s227
      %s242 = sphi 0, %s228
      %s246 = sphi 0, %s246
      %s248 = sphi 0, %s246
      %s249 = sphi 0, %s248
      %s263 = sphi 0, %s249
      %s267 = sphi 0, %s267
      %s269 = sphi 0, %s267
      %s270 = sphi 0, %s269
      %s284 = sphi 0, %s270
      %s288 = sphi 0, %s288
      %s290 = sphi 0, %s288
      %s291 = sphi 0, %s290
      %s305 = sphi 0, %s291
      %s309 = sphi 0, %s309
      %s311 = sphi 0, %s309
      %s312 = sphi 0, %s311
      %s326 = sphi 0, %s312
      %s332 = sphi 0, %s334
      %s335 = sphi 0, %s332
      %s336 = sphi 0, %s335
      %s352 = sphi 0, %s336
    $region4: #{dqn_forward.1} parent=1 // loop_header_branch
      %26 = sbr.rel (%p24) target = $region8
    $region5: #{dqn_forward.1} parent=1 // loop_body
      %s28 = ssub.s32 %s23, 1
      %s29 = ssub.s32 %s23, 2
      %s30 = sadd.s32 %s23, 1
      %s31 = ssub.s32 %s23, %s30
      %p32 = scmp.eq.s32.totalorder %s31, 0
      %s34 = sadd.s32 %s33, 1
      %s35 = scalar_select %p32, %s33, %s34
      %p38 = pneg %p32
      %p39 = scmp.eq.s32.totalorder %s23, 1
      %p40 = por %p38, %p39
      %p41 = scmp.ne.s32.totalorder %s33, %s36
      %p42 = scmp.eq.s32.totalorder %s23, 0
      %p43 = por %p41, %p42
      %p44 = scmp.ne.s32.totalorder %s33, %s36
      %p45 = scmp.eq.s32.totalorder %s28, 1
      %p46 = por %p44, %p45
      %p47 = scmp.ne.s32.totalorder %s36, %s37
      %p48 = scmp.eq.s32.totalorder %s28, 0
      %p49 = por %p47, %p48
      %p50 = scmp.ne.s32.totalorder %s36, %s37
      %p51 = scmp.eq.s32.totalorder %s29, 1
      %p52 = por %p50, %p51
      %p54 = scmp.ne.s32.totalorder %s37, %s53
      %p55 = scmp.eq.s32.totalorder %s29, 0
      %p56 = por %p54, %p55
      %s58 = sadd.s32 %s57, 1
      %p61 = scmp.eq.s32.totalorder %s23, 1
      %p62 = scmp.ne.s32.totalorder %s57, %s59
      %p63 = scmp.eq.s32.totalorder %s23, 0
      %p64 = por %p62, %p63
      %p65 = scmp.ne.s32.totalorder %s57, %s59
      %p66 = scmp.eq.s32.totalorder %s28, 1
      %p67 = por %p65, %p66
      %p68 = scmp.ne.s32.totalorder %s59, %s60
      %p69 = scmp.eq.s32.totalorder %s28, 0
      %p70 = por %p68, %p69
      %p71 = scmp.ne.s32.totalorder %s59, %s60
      %p72 = scmp.eq.s32.totalorder %s29, 1
      %p73 = por %p71, %p72
      %p75 = scmp.ne.s32.totalorder %s60, %s74
      %p76 = scmp.eq.s32.totalorder %s29, 0
      %p77 = por %p75, %p76
      %s79 = sadd.s32 %s78, 1
      %p82 = scmp.eq.s32.totalorder %s23, 1
      %p83 = scmp.ne.s32.totalorder %s78, %s80
      %p84 = scmp.eq.s32.totalorder %s23, 0
      %p85 = por %p83, %p84
      %p86 = scmp.ne.s32.totalorder %s78, %s80
      %p87 = scmp.eq.s32.totalorder %s28, 1
      %p88 = por %p86, %p87
      %p89 = scmp.ne.s32.totalorder %s80, %s81
      %p90 = scmp.eq.s32.totalorder %s28, 0
      %p91 = por %p89, %p90
      %p92 = scmp.ne.s32.totalorder %s80, %s81
      %p93 = scmp.eq.s32.totalorder %s29, 1
      %p94 = por %p92, %p93
      %p96 = scmp.ne.s32.totalorder %s81, %s95
      %p97 = scmp.eq.s32.totalorder %s29, 0
      %p98 = por %p96, %p97
      %s100 = sadd.s32 %s99, 1
      %p103 = scmp.eq.s32.totalorder %s23, 1
      %p104 = scmp.ne.s32.totalorder %s99, %s101
      %p105 = scmp.eq.s32.totalorder %s23, 0
      %p106 = por %p104, %p105
      %p107 = scmp.ne.s32.totalorder %s99, %s101
      %p108 = scmp.eq.s32.totalorder %s28, 1
      %p109 = por %p107, %p108
      %p110 = scmp.ne.s32.totalorder %s101, %s102
      %p111 = scmp.eq.s32.totalorder %s28, 0
      %p112 = por %p110, %p111
      %p113 = scmp.ne.s32.totalorder %s101, %s102
      %p114 = scmp.eq.s32.totalorder %s29, 1
      %p115 = por %p113, %p114
      %p117 = scmp.ne.s32.totalorder %s102, %s116
      %p118 = scmp.eq.s32.totalorder %s29, 0
      %p119 = por %p117, %p118
      %s121 = sadd.s32 %s120, 1
      %p124 = scmp.eq.s32.totalorder %s23, 1
      %p125 = scmp.ne.s32.totalorder %s120, %s122
      %p126 = scmp.eq.s32.totalorder %s23, 0
      %p127 = por %p125, %p126
      %p128 = scmp.ne.s32.totalorder %s120, %s122
      %p129 = scmp.eq.s32.totalorder %s28, 1
      %p130 = por %p128, %p129
      %p131 = scmp.ne.s32.totalorder %s122, %s123
      %p132 = scmp.eq.s32.totalorder %s28, 0
      %p133 = por %p131, %p132
      %p134 = scmp.ne.s32.totalorder %s122, %s123
      %p135 = scmp.eq.s32.totalorder %s29, 1
      %p136 = por %p134, %p135
      %p138 = scmp.ne.s32.totalorder %s123, %s137
      %p139 = scmp.eq.s32.totalorder %s29, 0
      %p140 = por %p138, %p139
      %s142 = sadd.s32 %s141, 1
      %p145 = scmp.eq.s32.totalorder %s23, 1
      %p146 = scmp.ne.s32.totalorder %s141, %s143
      %p147 = scmp.eq.s32.totalorder %s23, 0
      %p148 = por %p146, %p147
      %p149 = scmp.ne.s32.totalorder %s141, %s143
      %p150 = scmp.eq.s32.totalorder %s28, 1
      %p151 = por %p149, %p150
      %p152 = scmp.ne.s32.totalorder %s143, %s144
      %p153 = scmp.eq.s32.totalorder %s28, 0
      %p154 = por %p152, %p153
      %p155 = scmp.ne.s32.totalorder %s143, %s144
      %p156 = scmp.eq.s32.totalorder %s29, 1
      %p157 = por %p155, %p156
      %p159 = scmp.ne.s32.totalorder %s144, %s158
      %p160 = scmp.eq.s32.totalorder %s29, 0
      %p161 = por %p159, %p160
      %s163 = sadd.s32 %s162, 1
      %p166 = scmp.eq.s32.totalorder %s23, 1
      %p167 = scmp.ne.s32.totalorder %s162, %s164
      %p168 = scmp.eq.s32.totalorder %s23, 0
      %p169 = por %p167, %p168
      %p170 = scmp.ne.s32.totalorder %s162, %s164
      %p171 = scmp.eq.s32.totalorder %s28, 1
      %p172 = por %p170, %p171
      %p173 = scmp.ne.s32.totalorder %s164, %s165
      %p174 = scmp.eq.s32.totalorder %s28, 0
      %p175 = por %p173, %p174
      %p176 = scmp.ne.s32.totalorder %s164, %s165
      %p177 = scmp.eq.s32.totalorder %s29, 1
      %p178 = por %p176, %p177
      %p180 = scmp.ne.s32.totalorder %s165, %s179
      %p181 = scmp.eq.s32.totalorder %s29, 0
      %p182 = por %p180, %p181
      %s184 = sadd.s32 %s183, 1
      %p187 = scmp.eq.s32.totalorder %s23, 1
      %p188 = scmp.ne.s32.totalorder %s183, %s185
      %p189 = scmp.eq.s32.totalorder %s23, 0
      %p190 = por %p188, %p189
      %p191 = scmp.ne.s32.totalorder %s183, %s185
      %p192 = scmp.eq.s32.totalorder %s28, 1
      %p193 = por %p191, %p192
      %p194 = scmp.ne.s32.totalorder %s185, %s186
      %p195 = scmp.eq.s32.totalorder %s28, 0
      %p196 = por %p194, %p195
      %p197 = scmp.ne.s32.totalorder %s185, %s186
      %p198 = scmp.eq.s32.totalorder %s29, 1
      %p199 = por %p197, %p198
      %p201 = scmp.ne.s32.totalorder %s186, %s200
      %p202 = scmp.eq.s32.totalorder %s29, 0
      %p203 = por %p201, %p202
      %s205 = sadd.s32 %s204, 1
      %p208 = scmp.eq.s32.totalorder %s23, 1
      %p209 = scmp.ne.s32.totalorder %s204, %s206
      %p210 = scmp.eq.s32.totalorder %s23, 0
      %p211 = por %p209, %p210
      %p212 = scmp.ne.s32.totalorder %s204, %s206
      %p213 = scmp.eq.s32.totalorder %s28, 1
      %p214 = por %p212, %p213
      %p215 = scmp.ne.s32.totalorder %s206, %s207
      %p216 = scmp.eq.s32.totalorder %s28, 0
      %p217 = por %p215, %p216
      %p218 = scmp.ne.s32.totalorder %s206, %s207
      %p219 = scmp.eq.s32.totalorder %s29, 1
      %p220 = por %p218, %p219
      %p222 = scmp.ne.s32.totalorder %s207, %s221
      %p223 = scmp.eq.s32.totalorder %s29, 0
      %p224 = por %p222, %p223
      %s226 = sadd.s32 %s225, 1
      %p229 = scmp.eq.s32.totalorder %s23, 1
      %p230 = scmp.ne.s32.totalorder %s225, %s227
      %p231 = scmp.eq.s32.totalorder %s23, 0
      %p232 = por %p230, %p231
      %p233 = scmp.ne.s32.totalorder %s225, %s227
      %p234 = scmp.eq.s32.totalorder %s28, 1
      %p235 = por %p233, %p234
      %p236 = scmp.ne.s32.totalorder %s227, %s228
      %p237 = scmp.eq.s32.totalorder %s28, 0
      %p238 = por %p236, %p237
      %p239 = scmp.ne.s32.totalorder %s227, %s228
      %p240 = scmp.eq.s32.totalorder %s29, 1
      %p241 = por %p239, %p240
      %p243 = scmp.ne.s32.totalorder %s228, %s242
      %p244 = scmp.eq.s32.totalorder %s29, 0
      %p245 = por %p243, %p244
      %s247 = sadd.s32 %s246, 1
      %p250 = scmp.eq.s32.totalorder %s23, 1
      %p251 = scmp.ne.s32.totalorder %s246, %s248
      %p252 = scmp.eq.s32.totalorder %s23, 0
      %p253 = por %p251, %p252
      %p254 = scmp.ne.s32.totalorder %s246, %s248
      %p255 = scmp.eq.s32.totalorder %s28, 1
      %p256 = por %p254, %p255
      %p257 = scmp.ne.s32.totalorder %s248, %s249
      %p258 = scmp.eq.s32.totalorder %s28, 0
      %p259 = por %p257, %p258
      %p260 = scmp.ne.s32.totalorder %s248, %s249
      %p261 = scmp.eq.s32.totalorder %s29, 1
      %p262 = por %p260, %p261
      %p264 = scmp.ne.s32.totalorder %s249, %s263
      %p265 = scmp.eq.s32.totalorder %s29, 0
      %p266 = por %p264, %p265
      %s268 = sadd.s32 %s267, 1
      %p271 = scmp.eq.s32.totalorder %s23, 1
      %p272 = scmp.ne.s32.totalorder %s267, %s269
      %p273 = scmp.eq.s32.totalorder %s23, 0
      %p274 = por %p272, %p273
      %p275 = scmp.ne.s32.totalorder %s267, %s269
      %p276 = scmp.eq.s32.totalorder %s28, 1
      %p277 = por %p275, %p276
      %p278 = scmp.ne.s32.totalorder %s269, %s270
      %p279 = scmp.eq.s32.totalorder %s28, 0
      %p280 = por %p278, %p279
      %p281 = scmp.ne.s32.totalorder %s269, %s270
      %p282 = scmp.eq.s32.totalorder %s29, 1
      %p283 = por %p281, %p282
      %p285 = scmp.ne.s32.totalorder %s270, %s284
      %p286 = scmp.eq.s32.totalorder %s29, 0
      %p287 = por %p285, %p286
      %s289 = sadd.s32 %s288, 1
      %p292 = scmp.eq.s32.totalorder %s23, 1
      %p293 = scmp.ne.s32.totalorder %s288, %s290
      %p294 = scmp.eq.s32.totalorder %s23, 0
      %p295 = por %p293, %p294
      %p296 = scmp.ne.s32.totalorder %s288, %s290
      %p297 = scmp.eq.s32.totalorder %s28, 1
      %p298 = por %p296, %p297
      %p299 = scmp.ne.s32.totalorder %s290, %s291
      %p300 = scmp.eq.s32.totalorder %s28, 0
      %p301 = por %p299, %p300
      %p302 = scmp.ne.s32.totalorder %s290, %s291
      %p303 = scmp.eq.s32.totalorder %s29, 1
      %p304 = por %p302, %p303
      %p306 = scmp.ne.s32.totalorder %s291, %s305
      %p307 = scmp.eq.s32.totalorder %s29, 0
      %p308 = por %p306, %p307
      %s310 = sadd.s32 %s309, 1
      %p313 = scmp.eq.s32.totalorder %s23, 1
      %p314 = scmp.ne.s32.totalorder %s309, %s311
      %p315 = scmp.eq.s32.totalorder %s23, 0
      %p316 = por %p314, %p315
      %p317 = scmp.ne.s32.totalorder %s309, %s311
      %p318 = scmp.eq.s32.totalorder %s28, 1
      %p319 = por %p317, %p318
      %p320 = scmp.ne.s32.totalorder %s311, %s312
      %p321 = scmp.eq.s32.totalorder %s28, 0
      %p322 = por %p320, %p321
      %p323 = scmp.ne.s32.totalorder %s311, %s312
      %p324 = scmp.eq.s32.totalorder %s29, 1
      %p325 = por %p323, %p324
      %p327 = scmp.ne.s32.totalorder %s312, %s326
      %p328 = scmp.eq.s32.totalorder %s29, 0
      %p329 = por %p327, %p328
      %s330 = ssub.s32 %s23, %s30
      %p331 = scmp.eq.s32.totalorder %s330, 0
      %s333 = sadd.s32 %s332, 1
      %s334 = scalar_select %p331, %s332, %s333
      %p337 = pneg %p331
      %p338 = scmp.eq.s32.totalorder %s23, 1
      %p339 = por %p337, %p338
      %p340 = scmp.ne.s32.totalorder %s332, %s335
      %p341 = scmp.eq.s32.totalorder %s23, 0
      %p342 = por %p340, %p341
      %p343 = scmp.ne.s32.totalorder %s332, %s335
      %p344 = scmp.eq.s32.totalorder %s28, 1
      %p345 = por %p343, %p344
      %p346 = scmp.ne.s32.totalorder %s335, %s336
      %p347 = scmp.eq.s32.totalorder %s28, 0
      %p348 = por %p346, %p347
      %p349 = scmp.ne.s32.totalorder %s335, %s336
      %p350 = scmp.eq.s32.totalorder %s29, 1
      %p351 = por %p349, %p350
      %p353 = scmp.ne.s32.totalorder %s336, %s352
      %p354 = scmp.eq.s32.totalorder %s29, 0
      %p355 = por %p353, %p354
      %p356 = scmp.le.s32.totalorder 1, %s23
      %p357 = scmp.lt.s32.totalorder %s23, 3
      %p358 = pnand %p356, %p357
      %p359 = pneg %p358
      // Predicated region
      $region9: #{dqn_forward.1} parent=5 // pred_check
        _
      $region10: #{dqn_forward.1} parent=5 // pred_check_branch
        %361 = sbr.rel (%p358) target = $region12
      $region11: #{dqn_forward.1} parent=5 // pred_region
        %s362 = ssub.s32 %s23, 1
        // Predicated region
        $region13: #{dqn_forward.1} parent=11 // pred_check
          %p363 = pneg %p70
        $region14: #{dqn_forward.1} parent=11 // pred_check_branch
          %365 = sbr.rel (%p363) target = $region16
        $region15: #{dqn_forward.1} parent=11 // pred_region
          _
        $region16: #{dqn_forward.1} parent=11 // pred_fallthru
          _
        // Predicated region
        $region17: #{dqn_forward.1} parent=11 // pred_check
          %p366 = pneg %p91
        $region18: #{dqn_forward.1} parent=11 // pred_check_branch
          %368 = sbr.rel (%p366) target = $region20
        $region19: #{dqn_forward.1} parent=11 // pred_region
          _
        $region20: #{dqn_forward.1} parent=11 // pred_fallthru
          _
        // Predicated region
        $region21: #{dqn_forward.1} parent=11 // pred_check
          %p369 = pneg %p112
        $region22: #{dqn_forward.1} parent=11 // pred_check_branch
          %371 = sbr.rel (%p369) target = $region24
        $region23: #{dqn_forward.1} parent=11 // pred_region
          _
        $region24: #{dqn_forward.1} parent=11 // pred_fallthru
          _
        // Predicated region
        $region25: #{dqn_forward.1} parent=11 // pred_check
          %p372 = pneg %p133
        $region26: #{dqn_forward.1} parent=11 // pred_check_branch
          %374 = sbr.rel (%p372) target = $region28
        $region27: #{dqn_forward.1} parent=11 // pred_region
          _
        $region28: #{dqn_forward.1} parent=11 // pred_fallthru
          _
        // Predicated region
        $region29: #{dqn_forward.1} parent=11 // pred_check
          %p375 = pneg %p154
        $region30: #{dqn_forward.1} parent=11 // pred_check_branch
          %377 = sbr.rel (%p375) target = $region32
        $region31: #{dqn_forward.1} parent=11 // pred_region
          _
        $region32: #{dqn_forward.1} parent=11 // pred_fallthru
          _
        // Predicated region
        $region33: #{dqn_forward.1} parent=11 // pred_check
          %p378 = pneg %p175
        $region34: #{dqn_forward.1} parent=11 // pred_check_branch
          %380 = sbr.rel (%p378) target = $region36
        $region35: #{dqn_forward.1} parent=11 // pred_region
          _
        $region36: #{dqn_forward.1} parent=11 // pred_fallthru
          _
        // Predicated region
        $region37: #{dqn_forward.1} parent=11 // pred_check
          %p381 = pneg %p196
        $region38: #{dqn_forward.1} parent=11 // pred_check_branch
          %383 = sbr.rel (%p381) target = $region40
        $region39: #{dqn_forward.1} parent=11 // pred_region
          _
        $region40: #{dqn_forward.1} parent=11 // pred_fallthru
          _
        // Predicated region
        $region41: #{dqn_forward.1} parent=11 // pred_check
          %p384 = pneg %p217
        $region42: #{dqn_forward.1} parent=11 // pred_check_branch
          %386 = sbr.rel (%p384) target = $region44
        $region43: #{dqn_forward.1} parent=11 // pred_region
          _
        $region44: #{dqn_forward.1} parent=11 // pred_fallthru
          _
        // Predicated region
        $region45: #{dqn_forward.1} parent=11 // pred_check
          %p387 = pneg %p238
        $region46: #{dqn_forward.1} parent=11 // pred_check_branch
          %389 = sbr.rel (%p387) target = $region48
        $region47: #{dqn_forward.1} parent=11 // pred_region
          _
        $region48: #{dqn_forward.1} parent=11 // pred_fallthru
          _
        // Predicated region
        $region49: #{dqn_forward.1} parent=11 // pred_check
          %p390 = pneg %p259
        $region50: #{dqn_forward.1} parent=11 // pred_check_branch
          %392 = sbr.rel (%p390) target = $region52
        $region51: #{dqn_forward.1} parent=11 // pred_region
          _
        $region52: #{dqn_forward.1} parent=11 // pred_fallthru
          _
        // Predicated region
        $region53: #{dqn_forward.1} parent=11 // pred_check
          %p393 = pneg %p280
        $region54: #{dqn_forward.1} parent=11 // pred_check_branch
          %395 = sbr.rel (%p393) target = $region56
        $region55: #{dqn_forward.1} parent=11 // pred_region
          _
        $region56: #{dqn_forward.1} parent=11 // pred_fallthru
          _
        // Predicated region
        $region57: #{dqn_forward.1} parent=11 // pred_check
          %p396 = pneg %p301
        $region58: #{dqn_forward.1} parent=11 // pred_check_branch
          %398 = sbr.rel (%p396) target = $region60
        $region59: #{dqn_forward.1} parent=11 // pred_region
          _
        $region60: #{dqn_forward.1} parent=11 // pred_fallthru
          _
        // Predicated region
        $region61: #{dqn_forward.1} parent=11 // pred_check
          %p399 = pneg %p322
        $region62: #{dqn_forward.1} parent=11 // pred_check_branch
          %401 = sbr.rel (%p399) target = $region64
        $region63: #{dqn_forward.1} parent=11 // pred_region
          _
        $region64: #{dqn_forward.1} parent=11 // pred_fallthru
          _
      $region12: #{dqn_forward.1} parent=5 // pred_fallthru
        _
      %p402 = scmp.lt.s32.totalorder %s23, 2
      // Predicated region
      $region65: #{dqn_forward.1} parent=5 // pred_check
        %p403 = pneg %p402
      $region66: #{dqn_forward.1} parent=5 // pred_check_branch
        %405 = sbr.rel (%p403) target = $region68
      $region67: #{dqn_forward.1} parent=5 // pred_region
        // Predicated region
        $region69: #{dqn_forward.1} parent=67 // pred_check
          %p406 = pneg %p43
        $region70: #{dqn_forward.1} parent=67 // pred_check_branch
          %408 = sbr.rel (%p406) target = $region72
        $region71: #{dqn_forward.1} parent=67 // pred_region
          %p409 = scmp.lt.s32.totalorder %s23, 1
          %s410 = scalar_select %p409, %s23, 1
          %s411 = smul.addr %s410, 16
          %s412 = smul.addr %s411, 4
          %s413 = scalar_lea.vmem %s0, %s412
        $region72: #{dqn_forward.1} parent=67 // pred_fallthru
          _
      $region68: #{dqn_forward.1} parent=5 // pred_fallthru
        _
      %p414 = scmp.le.s32.totalorder 1, %s23
      %p415 = scmp.lt.s32.totalorder %s23, 3
      %p416 = pnand %p414, %p415
      %p417 = pneg %p416
      // Predicated region
      $region73: #{dqn_forward.1} parent=5 // pred_check
        _
      $region74: #{dqn_forward.1} parent=5 // pred_check_branch
        %419 = sbr.rel (%p416) target = $region76
      $region75: #{dqn_forward.1} parent=5 // pred_region
        %s420 = ssub.s32 %s23, 1
        %p421 = scmp.lt.s32.totalorder %s28, 1
        %s422 = scalar_select %p421, %s28, 1
        %s423 = smul.addr %s422, 16
        %s424 = smul.addr %s423, 4
        %s425 = scalar_lea.vmem %s0, %s424
        %p426 = pneg %p49
        %p427 = pneg %p46
        %p428 = pneg %p70
        %p429 = pneg %p67
        %p430 = pneg %p91
        %p431 = pneg %p88
        %p432 = pneg %p112
        %p433 = pneg %p109
        %p434 = pneg %p133
        %p435 = pneg %p130
        %p436 = pneg %p154
        %p437 = pneg %p151
        %p438 = pneg %p175
        %p439 = pneg %p172
        %p440 = pneg %p196
        %p441 = pneg %p193
        %p442 = pneg %p217
        %p443 = pneg %p214
        %p444 = pneg %p238
        %p445 = pneg %p235
        %p446 = pneg %p259
        %p447 = pneg %p256
        %p448 = pneg %p280
        %p449 = pneg %p277
        %p450 = pneg %p301
        %p451 = pneg %p298
        %p452 = pneg %p322
        %p453 = pneg %p319
        %p454 = pneg %p348
        %p455 = pneg %p345
        %s456 = sand.u32 %s335, 1
        %s457 = scalar_lea.sflag [#allocation3], %s456
        %s458 = sand.u32 %s335, 1
        %s459 = scalar_lea.vmem [#allocation2], %s458
        %p460 = scmp.lt.s32.totalorder %s28, 1
        %s461 = scalar_select %p460, %s28, 1
        %s462 = smul.addr %s461, 16
        %s463 = smul.addr %s462, 4
        %s464 = scalar_lea.vmem %s0, %s463
        %v466 = vld [vmem:[%s464] sm:$0xf]
        %v467 = vld [vmem:[%s464 + $0x4] sm:$0xf]
        %v468 = vld [vmem:[%s464 + $0x8] sm:$0xf]
        %v469 = vld [vmem:[%s464 + $0xc] sm:$0xf]
        %v470 = vld [vmem:[%s464 + $0x10] sm:$0xf]
        %v471 = vld [vmem:[%s464 + $0x14] sm:$0xf]
        %v472 = vld [vmem:[%s464 + $0x18] sm:$0xf]
        %v473 = vld [vmem:[%s464 + $0x1c] sm:$0xf]
        %v474 = vld [vmem:[%s464 + $0x20] sm:$0xf]
        %v475 = vld [vmem:[%s464 + $0x24] sm:$0xf]
        %v476 = vld [vmem:[%s464 + $0x28] sm:$0xf]
        %v477 = vld [vmem:[%s464 + $0x2c] sm:$0xf]
        %v478 = vld [vmem:[%s464 + $0x30] sm:$0xf]
        %v479 = vld [vmem:[%s464 + $0x34] sm:$0xf]
        %v480 = vld [vmem:[%s464 + $0x38] sm:$0xf]
        %v481 = vld [vmem:[%s464 + $0x3c] sm:$0x1]
        %v482 = vld [vmem:[%s1] sm:$0xf]
        %v483 = vld [vmem:[%s1 + $0x4] sm:$0xf]
        %v484 = vld [vmem:[%s1 + $0x8] sm:$0xf]
        %v485 = vld [vmem:[%s1 + $0xc] sm:$0xf]
        %v486 = vld [vmem:[%s1 + $0x10] sm:$0xf]
        %v487 = vld [vmem:[%s1 + $0x14] sm:$0xf]
        %v488 = vld [vmem:[%s1 + $0x18] sm:$0xf]
        %v489 = vld [vmem:[%s1 + $0x1c] sm:$0xf]
        %v490 = vld [vmem:[%s1 + $0x20] sm:$0xf]
        %v491 = vld [vmem:[%s1 + $0x24] sm:$0xf]
        %v492 = vld [vmem:[%s1 + $0x28] sm:$0xf]
        %v493 = vld [vmem:[%s1 + $0x2c] sm:$0xf]
        %v494 = vld [vmem:[%s1 + $0x30] sm:$0x3]
        %v508 = vunpack.c.l.b16 %v482
        %v509 = vunpack.c.l.b16 %v483
        %v510 = vunpack.c.l.b16 %v484
        %v511 = vunpack.c.l.b16 %v485
        %v512 = vunpack.c.l.b16 %v486
        %v513 = vunpack.c.l.b16 %v487
        %v514 = vunpack.c.l.b16 %v488
        %v515 = vunpack.c.l.b16 %v489
        %v516 = vunpack.c.l.b16 %v490
        %v517 = vunpack.c.l.b16 %v491
        %v518 = vunpack.c.l.b16 %v492
        %v519 = vunpack.c.l.b16 %v493
        %v520 = vunpack.c.l.b16 %v494
        %v521 = vpack.c.b16 %v509, %v508
        %v522 = vpack.c.b16 %v511, %v510
        %v523 = vpack.c.b16 %v513, %v512
        %v524 = vpack.c.b16 %v515, %v514
        %v525 = vpack.c.b16 %v517, %v516
        %v526 = vpack.c.b16 %v519, %v518
        %v527 = vpack.c.b16 %v520, %v520
        %v544 = vunpack.c.l.b16 %v466
        %v545 = vunpack.c.l.b16 %v467
        %v546 = vunpack.c.l.b16 %v468
        %v547 = vunpack.c.l.b16 %v469
        %v548 = vunpack.c.l.b16 %v470
        %v549 = vunpack.c.l.b16 %v471
        %v550 = vunpack.c.l.b16 %v472
        %v551 = vunpack.c.l.b16 %v473
        %v552 = vunpack.c.l.b16 %v474
        %v553 = vunpack.c.l.b16 %v475
        %v554 = vunpack.c.l.b16 %v476
        %v555 = vunpack.c.l.b16 %v477
        %v556 = vunpack.c.l.b16 %v478
        %v557 = vunpack.c.l.b16 %v479
        %v558 = vunpack.c.l.b16 %v480
        %v559 = vunpack.c.l.b16 %v481
        %v560 = vpack.c.b16 %v545, %v544
        %v561 = vpack.c.b16 %v547, %v546
        %v562 = vpack.c.b16 %v549, %v548
        %v563 = vpack.c.b16 %v551, %v550
        %v564 = vpack.c.b16 %v553, %v552
        %v565 = vpack.c.b16 %v555, %v554
        %v566 = vpack.c.b16 %v557, %v556
        %v567 = vpack.c.b16 %v559, %v558
        %vm575 = vcmask 990208
        %v577 = vsel %vm575, %v521, 0
        %v580 = vsel %vm575, %v522, 0
        %v583 = vsel %vm575, %v523, 0
        %v586 = vsel %vm575, %v524, 0
        %v589 = vsel %vm575, %v525, 0
        %v592 = vsel %vm575, %v526, 0
        %v595 = vsel %vm575, %v527, 0
        %vm597 = vcmask 1043456
        %vm598 = vcmask 1044480
        %v599 = vsel %vm597, 4294967295, 65535
        %v600 = vsel %vm598, %v599, 0
        %v602 = vand.u32 %v567, %v600
        %604 = vmatprep.subr.bf16.mxu0 0
        %605 = vmatpush1.bf16.msra.mxu0 %v560
        %606 = vmatprep.subr.bf16.mxu0 0
        %607 = vmatpush1.bf16.msra.mxu0 %v561
        %608 = vmatprep.subr.bf16.mxu0 0
        %609 = vmatpush1.bf16.msra.mxu0 %v562
        %610 = vmatprep.subr.bf16.mxu0 0
        %611 = vmatpush1.bf16.msra.mxu0 %v563
        %612 = vmatprep.subr.bf16.mxu0 0
        %613 = vmatpush1.bf16.msra.mxu0 %v564
        %614 = vmatprep.subr.bf16.mxu0 0
        %615 = vmatpush1.bf16.msra.mxu0 %v565
        %616 = vmatprep.subr.bf16.mxu0 0
        %617 = vmatpush1.bf16.msra.mxu0 %v566
        %618 = vmatprep.subr.bf16.mxu0 0
        %619 = vmatpush1.bf16.msra.mxu0 %v602
        %620 = vmatprep.subr.bf16.mxu0 0
        %621 = vmatpush1.bf16.msra.mxu0 0
        %622 = vmatprep.subr.bf16.mxu0 0
        %623 = vmatpush1.bf16.msra.mxu0 0
        %624 = vmatprep.subr.bf16.mxu0 0
        %625 = vmatpush1.bf16.msra.mxu0 0
        %626 = vmatprep.subr.bf16.mxu0 0
        %627 = vmatpush1.bf16.msra.mxu0 0
        %628 = vmatprep.subr.bf16.mxu0 0
        %629 = vmatpush1.bf16.msra.mxu0 0
        %630 = vmatprep.subr.bf16.mxu0 0
        %631 = vmatpush1.bf16.msra.mxu0 0
        %632 = vmatprep.subr.bf16.mxu0 0
        %633 = vmatpush1.bf16.msra.mxu0 0
        %634 = vmatprep.subr.bf16.mxu0 0
        %635 = vmatpush1.bf16.msra.mxu0 0
        %636 = vmatprep.mubr.bf16.mxu0 0
        %637 = vmatmul.mubr.bf16.gmra.mrb[0].mxu0 %v577
        %v638 = vpop.f32.mrb[0].mxu0
        %v639 = vadd.f32 0.0, %v638
        %v640 = vpop.f32.mrb[0].mxu0
        %v641 = vpop.f32.mrb[0].mxu0
        %v642 = vadd.f32 0.0, %v641
        %v643 = vpop.f32.mrb[0].mxu0
        %644 = vmatprep.mubr.bf16.mxu0 0
        %645 = vmatmul.mubr.bf16.gmra.mrb[0].mxu0 %v580
        %v646 = vpop.f32.mrb[0].mxu0
        %v647 = vadd.f32 0.0, %v646
        %v648 = vpop.f32.mrb[0].mxu0
        %v649 = vpop.f32.mrb[0].mxu0
        %v650 = vadd.f32 0.0, %v649
        %v651 = vpop.f32.mrb[0].mxu0
        %652 = vmatprep.mubr.bf16.mxu0 0
        %653 = vmatmul.mubr.bf16.gmra.mrb[0].mxu0 %v583
        %v654 = vpop.f32.mrb[0].mxu0
        %v655 = vadd.f32 0.0, %v654
        %v656 = vpop.f32.mrb[0].mxu0
        %v657 = vpop.f32.mrb[0].mxu0
        %v658 = vadd.f32 0.0, %v657
        %v659 = vpop.f32.mrb[0].mxu0
        %660 = vmatprep.mubr.bf16.mxu0 0
        %661 = vmatmul.mubr.bf16.gmra.mrb[0].mxu0 %v586
        %v662 = vpop.f32.mrb[0].mxu0
        %v663 = vadd.f32 0.0, %v662
        %v664 = vpop.f32.mrb[0].mxu0
        %v665 = vpop.f32.mrb[0].mxu0
        %v666 = vadd.f32 0.0, %v665
        %v667 = vpop.f32.mrb[0].mxu0
        %668 = vmatprep.mubr.bf16.mxu0 0
        %669 = vmatmul.mubr.bf16.gmra.mrb[0].mxu0 %v589
        %v670 = vpop.f32.mrb[0].mxu0
        %v671 = vadd.f32 0.0, %v670
        %v672 = vpop.f32.mrb[0].mxu0
        %v673 = vpop.f32.mrb[0].mxu0
        %v674 = vadd.f32 0.0, %v673
        %v675 = vpop.f32.mrb[0].mxu0
        %676 = vmatprep.mubr.bf16.mxu0 0
        %677 = vmatmul.mubr.bf16.gmra.mrb[0].mxu0 %v592
        %v678 = vpop.f32.mrb[0].mxu0
        %v679 = vadd.f32 0.0, %v678
        %v680 = vpop.f32.mrb[0].mxu0
        %v681 = vpop.f32.mrb[0].mxu0
        %v682 = vadd.f32 0.0, %v681
        %v683 = vpop.f32.mrb[0].mxu0
        %684 = vmatprep.mubr.bf16.mxu0 0
        %685 = vmatmul.mubr.bf16.gmra.mrb[0].mxu0 %v595
        %v686 = vpop.f32.mrb[0].mxu0
        %v687 = vadd.f32 0.0, %v686
        %v688 = vpop.f32.mrb[0].mxu0
        %v689 = vpop.f32.mrb[0].mxu0
        %v690 = vpop.f32.mrb[0].mxu0
        %691 = vdwg.mxu0
        %v692 = vpack.c.bf16 %v642, %v639
        %v693 = vpack.c.bf16 %v650, %v647
        %v694 = vpack.c.bf16 %v658, %v655
        %v695 = vpack.c.bf16 %v666, %v663
        %v696 = vpack.c.bf16 %v674, %v671
        %v697 = vpack.c.bf16 %v682, %v679
        %v698 = vpack.c.bf16 %v687, %v687
        %v699 = vld [vmem:[%s2] sm:$0xf]
        %v700 = vld [vmem:[%s2 + $0x4] sm:$0xf]
        %v701 = vld [vmem:[%s2 + $0x8] sm:$0xf]
        %v702 = vld [vmem:[%s2 + $0xc] sm:$0xf]
        %v703 = vld [vmem:[%s2 + $0x10] sm:$0xf]
        %v704 = vld [vmem:[%s2 + $0x14] sm:$0xf]
        %v705 = vld [vmem:[%s2 + $0x18] sm:$0xf]
        %v706 = vld [vmem:[%s2 + $0x1c] sm:$0xf]
        %s707 = scalar_lea.vmem %s1, 52
        %v708 = vld [vmem:[%s707] sm:$0xf]
        %v709 = vld [vmem:[%s707 + $0x4] sm:$0xf]
        %v710 = vld [vmem:[%s707 + $0x8] sm:$0xf]
        %v711 = vld [vmem:[%s707 + $0xc] sm:$0xf]
        %v712 = vld [vmem:[%s707 + $0x10] sm:$0xf]
        %v713 = vld [vmem:[%s707 + $0x14] sm:$0xf]
        %v714 = vld [vmem:[%s707 + $0x18] sm:$0xf]
        %v715 = vld [vmem:[%s707 + $0x1c] sm:$0xf]
        %v716 = vld [vmem:[%s707 + $0x20] sm:$0xf]
        %v717 = vld [vmem:[%s707 + $0x24] sm:$0xf]
        %v718 = vld [vmem:[%s707 + $0x28] sm:$0xf]
        %v719 = vld [vmem:[%s707 + $0x2c] sm:$0xf]
        %v720 = vld [vmem:[%s707 + $0x30] sm:$0x3]
        %v734 = vunpack.c.l.b16 %v708
        %v735 = vunpack.c.l.b16 %v709
        %v736 = vunpack.c.l.b16 %v710
        %v737 = vunpack.c.l.b16 %v711
        %v738 = vunpack.c.l.b16 %v712
        %v739 = vunpack.c.l.b16 %v713
        %v740 = vunpack.c.l.b16 %v714
        %v741 = vunpack.c.l.b16 %v715
        %v742 = vunpack.c.l.b16 %v716
        %v743 = vunpack.c.l.b16 %v717
        %v744 = vunpack.c.l.b16 %v718
        %v745 = vunpack.c.l.b16 %v719
        %v746 = vunpack.c.l.b16 %v720
        %v747 = vpack.c.b16 %v735, %v734
        %v748 = vpack.c.b16 %v737, %v736
        %v749 = vpack.c.b16 %v739, %v738
        %v750 = vpack.c.b16 %v741, %v740
        %v751 = vpack.c.b16 %v743, %v742
        %v752 = vpack.c.b16 %v745, %v744
        %v753 = vpack.c.b16 %v746, %v746
        %v755 = vsel %vm575, %v747, 0
        %v758 = vsel %vm575, %v748, 0
        %v761 = vsel %vm575, %v749, 0
        %v764 = vsel %vm575, %v750, 0
        %v767 = vsel %vm575, %v751, 0
        %v770 = vsel %vm575, %v752, 0
        %v773 = vsel %vm575, %v753, 0
        %775 = vmatprep.subr.bf16.mxu0 0
        %776 = vmatpush1.bf16.msra.mxu0 %v560
        %777 = vmatprep.subr.bf16.mxu0 0
        %778 = vmatpush1.bf16.msra.mxu0 %v561
        %779 = vmatprep.subr.bf16.mxu0 0
        %780 = vmatpush1.bf16.msra.mxu0 %v562
        %781 = vmatprep.subr.bf16.mxu0 0
        %782 = vmatpush1.bf16.msra.mxu0 %v563
        %783 = vmatprep.subr.bf16.mxu0 0
        %784 = vmatpush1.bf16.msra.mxu0 %v564
        %785 = vmatprep.subr.bf16.mxu0 0
        %786 = vmatpush1.bf16.msra.mxu0 %v565
        %787 = vmatprep.subr.bf16.mxu0 0
        %788 = vmatpush1.bf16.msra.mxu0 %v566
        %789 = vmatprep.subr.bf16.mxu0 0
        %790 = vmatpush1.bf16.msra.mxu0 %v602
        %791 = vmatprep.subr.bf16.mxu0 0
        %792 = vmatpush1.bf16.msra.mxu0 0
        %793 = vmatprep.subr.bf16.mxu0 0
        %794 = vmatpush1.bf16.msra.mxu0 0
        %795 = vmatprep.subr.bf16.mxu0 0
        %796 = vmatpush1.bf16.msra.mxu0 0
        %797 = vmatprep.subr.bf16.mxu0 0
        %798 = vmatpush1.bf16.msra.mxu0 0
        %799 = vmatprep.subr.bf16.mxu0 0
        %800 = vmatpush1.bf16.msra.mxu0 0
        %801 = vmatprep.subr.bf16.mxu0 0
        %802 = vmatpush1.bf16.msra.mxu0 0
        %803 = vmatprep.subr.bf16.mxu0 0
        %804 = vmatpush1.bf16.msra.mxu0 0
        %805 = vmatprep.subr.bf16.mxu0 0
        %806 = vmatpush1.bf16.msra.mxu0 0
        %807 = vmatprep.mubr.bf16.mxu0 0
        %808 = vmatmul.mubr.bf16.gmra.mrb[0].mxu0 %v755
        %v809 = vpop.f32.mrb[0].mxu0
        %v810 = vadd.f32 0.0, %v809
        %v811 = vpop.f32.mrb[0].mxu0
        %v812 = vpop.f32.mrb[0].mxu0
        %v813 = vadd.f32 0.0, %v812
        %v814 = vpop.f32.mrb[0].mxu0
        %815 = vmatprep.mubr.bf16.mxu0 0
        %816 = vmatmul.mubr.bf16.gmra.mrb[0].mxu0 %v758
        %v817 = vpop.f32.mrb[0].mxu0
        %v818 = vadd.f32 0.0, %v817
        %v819 = vpop.f32.mrb[0].mxu0
        %v820 = vpop.f32.mrb[0].mxu0
        %v821 = vadd.f32 0.0, %v820
        %v822 = vpop.f32.mrb[0].mxu0
        %823 = vmatprep.mubr.bf16.mxu0 0
        %824 = vmatmul.mubr.bf16.gmra.mrb[0].mxu0 %v761
        %v825 = vpop.f32.mrb[0].mxu0
        %v826 = vadd.f32 0.0, %v825
        %v827 = vpop.f32.mrb[0].mxu0
        %v828 = vpop.f32.mrb[0].mxu0
        %v829 = vadd.f32 0.0, %v828
        %v830 = vpop.f32.mrb[0].mxu0
        %831 = vmatprep.mubr.bf16.mxu0 0
        %832 = vmatmul.mubr.bf16.gmra.mrb[0].mxu0 %v764
        %v833 = vpop.f32.mrb[0].mxu0
        %v834 = vadd.f32 0.0, %v833
        %v835 = vpop.f32.mrb[0].mxu0
        %v836 = vpop.f32.mrb[0].mxu0
        %v837 = vadd.f32 0.0, %v836
        %v838 = vpop.f32.mrb[0].mxu0
        %839 = vmatprep.mubr.bf16.mxu0 0
        %840 = vmatmul.mubr.bf16.gmra.mrb[0].mxu0 %v767
        %v841 = vpop.f32.mrb[0].mxu0
        %v842 = vadd.f32 0.0, %v841
        %v843 = vpop.f32.mrb[0].mxu0
        %v844 = vpop.f32.mrb[0].mxu0
        %v845 = vadd.f32 0.0, %v844
        %v846 = vpop.f32.mrb[0].mxu0
        %847 = vmatprep.mubr.bf16.mxu0 0
        %848 = vmatmul.mubr.bf16.gmra.mrb[0].mxu0 %v770
        %v849 = vpop.f32.mrb[0].mxu0
        %v850 = vadd.f32 0.0, %v849
        %v851 = vpop.f32.mrb[0].mxu0
        %v852 = vpop.f32.mrb[0].mxu0
        %v853 = vadd.f32 0.0, %v852
        %v854 = vpop.f32.mrb[0].mxu0
        %855 = vmatprep.mubr.bf16.mxu0 0
        %856 = vmatmul.mubr.bf16.gmra.mrb[0].mxu0 %v773
        %v857 = vpop.f32.mrb[0].mxu0
        %v858 = vadd.f32 0.0, %v857
        %v859 = vpop.f32.mrb[0].mxu0
        %v860 = vpop.f32.mrb[0].mxu0
        %v861 = vpop.f32.mrb[0].mxu0
        %862 = vdwg.mxu0
        %v863 = vpack.c.bf16 %v813, %v810
        %v864 = vpack.c.bf16 %v821, %v818
        %v865 = vpack.c.bf16 %v829, %v826
        %v866 = vpack.c.bf16 %v837, %v834
        %v867 = vpack.c.bf16 %v845, %v842
        %v868 = vpack.c.bf16 %v853, %v850
        %v869 = vpack.c.bf16 %v858, %v858
        %s870 = scalar_lea.vmem %s2, 32
        %v871 = vld [vmem:[%s870] sm:$0xf]
        %v872 = vld [vmem:[%s870 + $0x4] sm:$0xf]
        %v873 = vld [vmem:[%s870 + $0x8] sm:$0xf]
        %v874 = vld [vmem:[%s870 + $0xc] sm:$0xf]
        %v875 = vld [vmem:[%s870 + $0x10] sm:$0xf]
        %v876 = vld [vmem:[%s870 + $0x14] sm:$0xf]
        %v877 = vld [vmem:[%s870 + $0x18] sm:$0xf]
        %v878 = vld [vmem:[%s870 + $0x1c] sm:$0xf]
        %v887 = vunpack.c.l.b16 %v871
        %v888 = vunpack.c.l.b16 %v872
        %v889 = vunpack.c.l.b16 %v873
        %v890 = vunpack.c.l.b16 %v874
        %v891 = vunpack.c.l.b16 %v875
        %v892 = vunpack.c.l.b16 %v876
        %v893 = vunpack.c.l.b16 %v877
        %v894 = vunpack.c.l.b16 %v878
        %v895 = vpack.c.b16 %v888, %v887
        %v896 = vpack.c.b16 %v890, %v889
        %v897 = vpack.c.b16 %v892, %v891
        %v898 = vpack.c.b16 %v894, %v893
        %vm903 = vcmask 523264
        %v905 = vsel %vm903, %v863, 0
        %v908 = vsel %vm903, %v864, 0
        %v911 = vsel %vm903, %v865, 0
        %v914 = vsel %vm903, %v866, 0
        %v917 = vsel %vm903, %v867, 0
        %v920 = vsel %vm903, %v868, 0
        %v923 = vsel %vm903, %v869, 0
        %925 = vmatprep.subr.bf16.mxu0 0
        %926 = vmatpush1.bf16.msra.mxu0 %v895
        %927 = vmatprep.subr.bf16.mxu0 0
        %928 = vmatpush1.bf16.msra.mxu0 %v896
        %929 = vmatprep.subr.bf16.mxu0 0
        %930 = vmatpush1.bf16.msra.mxu0 %v897
        %931 = vmatprep.subr.bf16.mxu0 0
        %932 = vmatpush1.bf16.msra.mxu0 %v898
        %933 = vmatprep.subr.bf16.mxu0 0
        %934 = vmatpush1.bf16.msra.mxu0 0
        %935 = vmatprep.subr.bf16.mxu0 0
        %936 = vmatpush1.bf16.msra.mxu0 0
        %937 = vmatprep.subr.bf16.mxu0 0
        %938 = vmatpush1.bf16.msra.mxu0 0
        %939 = vmatprep.subr.bf16.mxu0 0
        %940 = vmatpush1.bf16.msra.mxu0 0
        %941 = vmatprep.subr.bf16.mxu0 0
        %942 = vmatpush1.bf16.msra.mxu0 0
        %943 = vmatprep.subr.bf16.mxu0 0
        %944 = vmatpush1.bf16.msra.mxu0 0
        %945 = vmatprep.subr.bf16.mxu0 0
        %946 = vmatpush1.bf16.msra.mxu0 0
        %947 = vmatprep.subr.bf16.mxu0 0
        %948 = vmatpush1.bf16.msra.mxu0 0
        %949 = vmatprep.subr.bf16.mxu0 0
        %950 = vmatpush1.bf16.msra.mxu0 0
        %951 = vmatprep.subr.bf16.mxu0 0
        %952 = vmatpush1.bf16.msra.mxu0 0
        %953 = vmatprep.subr.bf16.mxu0 0
        %954 = vmatpush1.bf16.msra.mxu0 0
        %955 = vmatprep.subr.bf16.mxu0 0
        %956 = vmatpush1.bf16.msra.mxu0 0
        %957 = vmatprep.mubr.bf16.mxu0 0
        %958 = vmatmul.mubr.bf16.gmra.mrb[0].mxu0 %v905
        %v959 = vpop.f32.mrb[0].mxu0
        %v960 = vadd.f32 0.0, %v959
        %v961 = vpop.f32.mrb[0].mxu0
        %v962 = vpop.f32.mrb[0].mxu0
        %v963 = vadd.f32 0.0, %v962
        %v964 = vpop.f32.mrb[0].mxu0
        %965 = vmatprep.mubr.bf16.mxu0 0
        %966 = vmatmul.mubr.bf16.gmra.mrb[0].mxu0 %v908
        %v967 = vpop.f32.mrb[0].mxu0
        %v968 = vadd.f32 0.0, %v967
        %v969 = vpop.f32.mrb[0].mxu0
        %v970 = vpop.f32.mrb[0].mxu0
        %v971 = vadd.f32 0.0, %v970
        %v972 = vpop.f32.mrb[0].mxu0
        %973 = vmatprep.mubr.bf16.mxu0 0
        %974 = vmatmul.mubr.bf16.gmra.mrb[0].mxu0 %v911
        %v975 = vpop.f32.mrb[0].mxu0
        %v976 = vadd.f32 0.0, %v975
        %v977 = vpop.f32.mrb[0].mxu0
        %v978 = vpop.f32.mrb[0].mxu0
        %v979 = vadd.f32 0.0, %v978
        %v980 = vpop.f32.mrb[0].mxu0
        %981 = vmatprep.mubr.bf16.mxu0 0
        %982 = vmatmul.mubr.bf16.gmra.mrb[0].mxu0 %v914
        %v983 = vpop.f32.mrb[0].mxu0
        %v984 = vadd.f32 0.0, %v983
        %v985 = vpop.f32.mrb[0].mxu0
        %v986 = vpop.f32.mrb[0].mxu0
        %v987 = vadd.f32 0.0, %v986
        %v988 = vpop.f32.mrb[0].mxu0
        %989 = vmatprep.mubr.bf16.mxu0 0
        %990 = vmatmul.mubr.bf16.gmra.mrb[0].mxu0 %v917
        %v991 = vpop.f32.mrb[0].mxu0
        %v992 = vadd.f32 0.0, %v991
        %v993 = vpop.f32.mrb[0].mxu0
        %v994 = vpop.f32.mrb[0].mxu0
        %v995 = vadd.f32 0.0, %v994
        %v996 = vpop.f32.mrb[0].mxu0
        %997 = vmatprep.mubr.bf16.mxu0 0
        %998 = vmatmul.mubr.bf16.gmra.mrb[0].mxu0 %v920
        %v999 = vpop.f32.mrb[0].mxu0
        %v1000 = vadd.f32 0.0, %v999
        %v1001 = vpop.f32.mrb[0].mxu0
        %v1002 = vpop.f32.mrb[0].mxu0
        %v1003 = vadd.f32 0.0, %v1002
        %v1004 = vpop.f32.mrb[0].mxu0
        %1005 = vmatprep.mubr.bf16.mxu0 0
        %1006 = vmatmul.mubr.bf16.gmra.mrb[0].mxu0 %v923
        %v1007 = vpop.f32.mrb[0].mxu0
        %v1008 = vadd.f32 0.0, %v1007
        %v1009 = vpop.f32.mrb[0].mxu0
        %v1010 = vpop.f32.mrb[0].mxu0
        %v1011 = vpop.f32.mrb[0].mxu0
        %1012 = vdwg.mxu0
        %v1021 = vunpack.c.l.b16 %v699
        %v1022 = vunpack.c.l.b16 %v700
        %v1023 = vunpack.c.l.b16 %v701
        %v1024 = vunpack.c.l.b16 %v702
        %v1025 = vunpack.c.l.b16 %v703
        %v1026 = vunpack.c.l.b16 %v704
        %v1027 = vunpack.c.l.b16 %v705
        %v1028 = vunpack.c.l.b16 %v706
        %v1029 = vpack.c.b16 %v1022, %v1021
        %v1030 = vpack.c.b16 %v1024, %v1023
        %v1031 = vpack.c.b16 %v1026, %v1025
        %v1032 = vpack.c.b16 %v1028, %v1027
        %v1038 = vsel %vm903, %v692, 0
        %v1041 = vsel %vm903, %v693, 0
        %v1044 = vsel %vm903, %v694, 0
        %v1047 = vsel %vm903, %v695, 0
        %v1050 = vsel %vm903, %v696, 0
        %v1053 = vsel %vm903, %v697, 0
        %v1056 = vsel %vm903, %v698, 0
        %1058 = vmatprep.subr.bf16.mxu0 0
        %1059 = vmatpush1.bf16.msra.mxu0 %v1029
        %1060 = vmatprep.subr.bf16.mxu0 0
        %1061 = vmatpush1.bf16.msra.mxu0 %v1030
        %1062 = vmatprep.subr.bf16.mxu0 0
        %1063 = vmatpush1.bf16.msra.mxu0 %v1031
        %1064 = vmatprep.subr.bf16.mxu0 0
        %1065 = vmatpush1.bf16.msra.mxu0 %v1032
        %1066 = vmatprep.subr.bf16.mxu0 0
        %1067 = vmatpush1.bf16.msra.mxu0 0
        %1068 = vmatprep.subr.bf16.mxu0 0
        %1069 = vmatpush1.bf16.msra.mxu0 0
        %1070 = vmatprep.subr.bf16.mxu0 0
        %1071 = vmatpush1.bf16.msra.mxu0 0
        %1072 = vmatprep.subr.bf16.mxu0 0
        %1073 = vmatpush1.bf16.msra.mxu0 0
        %1074 = vmatprep.subr.bf16.mxu0 0
        %1075 = vmatpush1.bf16.msra.mxu0 0
        %1076 = vmatprep.subr.bf16.mxu0 0
        %1077 = vmatpush1.bf16.msra.mxu0 0
        %1078 = vmatprep.subr.bf16.mxu0 0
        %1079 = vmatpush1.bf16.msra.mxu0 0
        %1080 = vmatprep.subr.bf16.mxu0 0
        %1081 = vmatpush1.bf16.msra.mxu0 0
        %1082 = vmatprep.subr.bf16.mxu0 0
        %1083 = vmatpush1.bf16.msra.mxu0 0
        %1084 = vmatprep.subr.bf16.mxu0 0
        %1085 = vmatpush1.bf16.msra.mxu0 0
        %1086 = vmatprep.subr.bf16.mxu0 0
        %1087 = vmatpush1.bf16.msra.mxu0 0
        %1088 = vmatprep.subr.bf16.mxu0 0
        %1089 = vmatpush1.bf16.msra.mxu0 0
        %1090 = vmatprep.mubr.bf16.mxu0 0
        %1091 = vmatmul.mubr.bf16.gmra.mrb[0].mxu0 %v1038
        %v1092 = vpop.f32.mrb[0].mxu0
        %v1093 = vadd.f32 %v960, %v1092
        %v1094 = vpop.f32.mrb[0].mxu0
        %v1095 = vpop.f32.mrb[0].mxu0
        %v1096 = vadd.f32 %v963, %v1095
        %v1097 = vpop.f32.mrb[0].mxu0
        %1098 = vmatprep.mubr.bf16.mxu0 0
        %1099 = vmatmul.mubr.bf16.gmra.mrb[0].mxu0 %v1041
        %v1100 = vpop.f32.mrb[0].mxu0
        %v1101 = vadd.f32 %v968, %v1100
        %v1102 = vpop.f32.mrb[0].mxu0
        %v1103 = vpop.f32.mrb[0].mxu0
        %v1104 = vadd.f32 %v971, %v1103
        %v1105 = vpop.f32.mrb[0].mxu0
        %1106 = vmatprep.mubr.bf16.mxu0 0
        %1107 = vmatmul.mubr.bf16.gmra.mrb[0].mxu0 %v1044
        %v1108 = vpop.f32.mrb[0].mxu0
        %v1109 = vadd.f32 %v976, %v1108
        %v1110 = vpop.f32.mrb[0].mxu0
        %v1111 = vpop.f32.mrb[0].mxu0
        %v1112 = vadd.f32 %v979, %v1111
        %v1113 = vpop.f32.mrb[0].mxu0
        %1114 = vmatprep.mubr.bf16.mxu0 0
        %1115 = vmatmul.mubr.bf16.gmra.mrb[0].mxu0 %v1047
        %v1116 = vpop.f32.mrb[0].mxu0
        %v1117 = vadd.f32 %v984, %v1116
        %v1118 = vpop.f32.mrb[0].mxu0
        %v1119 = vpop.f32.mrb[0].mxu0
        %v1120 = vadd.f32 %v987, %v1119
        %v1121 = vpop.f32.mrb[0].mxu0
        %1122 = vmatprep.mubr.bf16.mxu0 0
        %1123 = vmatmul.mubr.bf16.gmra.mrb[0].mxu0 %v1050
        %v1124 = vpop.f32.mrb[0].mxu0
        %v1125 = vadd.f32 %v992, %v1124
        %v1126 = vpop.f32.mrb[0].mxu0
        %v1127 = vpop.f32.mrb[0].mxu0
        %v1128 = vadd.f32 %v995, %v1127
        %v1129 = vpop.f32.mrb[0].mxu0
        %1130 = vmatprep.mubr.bf16.mxu0 0
        %1131 = vmatmul.mubr.bf16.gmra.mrb[0].mxu0 %v1053
        %v1132 = vpop.f32.mrb[0].mxu0
        %v1133 = vadd.f32 %v1000, %v1132
        %v1134 = vpop.f32.mrb[0].mxu0
        %v1135 = vpop.f32.mrb[0].mxu0
        %v1136 = vadd.f32 %v1003, %v1135
        %v1137 = vpop.f32.mrb[0].mxu0
        %1138 = vmatprep.mubr.bf16.mxu0 0
        %1139 = vmatmul.mubr.bf16.gmra.mrb[0].mxu0 %v1056
        %v1140 = vpop.f32.mrb[0].mxu0
        %v1141 = vadd.f32 %v1008, %v1140
        %v1142 = vpop.f32.mrb[0].mxu0
        %v1143 = vpop.f32.mrb[0].mxu0
        %v1144 = vpop.f32.mrb[0].mxu0
        %1145 = vdwg.mxu0
        %s1146 = scalar_lea.vmem %s1, 104
        %v1147 = vld [vmem:[%s1146] sm:$0xf]
        %v1148 = vld [vmem:[%s1146 + $0x4] sm:$0xf]
        %v1149 = vld [vmem:[%s1146 + $0x8] sm:$0xf]
        %v1150 = vld [vmem:[%s1146 + $0xc] sm:$0xf]
        %v1151 = vld [vmem:[%s1146 + $0x10] sm:$0xf]
        %v1152 = vld [vmem:[%s1146 + $0x14] sm:$0xf]
        %v1153 = vld [vmem:[%s1146 + $0x18] sm:$0xf]
        %v1154 = vld [vmem:[%s1146 + $0x1c] sm:$0xf]
        %v1155 = vld [vmem:[%s1146 + $0x20] sm:$0xf]
        %v1156 = vld [vmem:[%s1146 + $0x24] sm:$0xf]
        %v1157 = vld [vmem:[%s1146 + $0x28] sm:$0xf]
        %v1158 = vld [vmem:[%s1146 + $0x2c] sm:$0xf]
        %v1159 = vld [vmem:[%s1146 + $0x30] sm:$0x3]
        %v1173 = vunpack.c.l.b16 %v1147
        %v1174 = vunpack.c.l.b16 %v1148
        %v1175 = vunpack.c.l.b16 %v1149
        %v1176 = vunpack.c.l.b16 %v1150
        %v1177 = vunpack.c.l.b16 %v1151
        %v1178 = vunpack.c.l.b16 %v1152
        %v1179 = vunpack.c.l.b16 %v1153
        %v1180 = vunpack.c.l.b16 %v1154
        %v1181 = vunpack.c.l.b16 %v1155
        %v1182 = vunpack.c.l.b16 %v1156
        %v1183 = vunpack.c.l.b16 %v1157
        %v1184 = vunpack.c.l.b16 %v1158
        %v1185 = vunpack.c.l.b16 %v1159
        %v1186 = vpack.c.b16 %v1174, %v1173
        %v1187 = vpack.c.b16 %v1176, %v1175
        %v1188 = vpack.c.b16 %v1178, %v1177
        %v1189 = vpack.c.b16 %v1180, %v1179
        %v1190 = vpack.c.b16 %v1182, %v1181
        %v1191 = vpack.c.b16 %v1184, %v1183
        %v1192 = vpack.c.b16 %v1185, %v1185
        %v1194 = vsel %vm575, %v1186, 0
        %v1197 = vsel %vm575, %v1187, 0
        %v1200 = vsel %vm575, %v1188, 0
        %v1203 = vsel %vm575, %v1189, 0
        %v1206 = vsel %vm575, %v1190, 0
        %v1209 = vsel %vm575, %v1191, 0
        %v1212 = vsel %vm575, %v1192, 0
        %1214 = vmatprep.subr.bf16.mxu0 0
        %1215 = vmatpush1.bf16.msra.mxu0 %v560
        %1216 = vmatprep.subr.bf16.mxu0 0
        %1217 = vmatpush1.bf16.msra.mxu0 %v561
        %1218 = vmatprep.subr.bf16.mxu0 0
        %1219 = vmatpush1.bf16.msra.mxu0 %v562
        %1220 = vmatprep.subr.bf16.mxu0 0
        %1221 = vmatpush1.bf16.msra.mxu0 %v563
        %1222 = vmatprep.subr.bf16.mxu0 0
        %1223 = vmatpush1.bf16.msra.mxu0 %v564
        %1224 = vmatprep.subr.bf16.mxu0 0
        %1225 = vmatpush1.bf16.msra.mxu0 %v565
        %1226 = vmatprep.subr.bf16.mxu0 0
        %1227 = vmatpush1.bf16.msra.mxu0 %v566
        %1228 = vmatprep.subr.bf16.mxu0 0
        %1229 = vmatpush1.bf16.msra.mxu0 %v602
        %1230 = vmatprep.subr.bf16.mxu0 0
        %1231 = vmatpush1.bf16.msra.mxu0 0
        %1232 = vmatprep.subr.bf16.mxu0 0
        %1233 = vmatpush1.bf16.msra.mxu0 0
        %1234 = vmatprep.subr.bf16.mxu0 0
        %1235 = vmatpush1.bf16.msra.mxu0 0
        %1236 = vmatprep.subr.bf16.mxu0 0
        %1237 = vmatpush1.bf16.msra.mxu0 0
        %1238 = vmatprep.subr.bf16.mxu0 0
        %1239 = vmatpush1.bf16.msra.mxu0 0
        %1240 = vmatprep.subr.bf16.mxu0 0
        %1241 = vmatpush1.bf16.msra.mxu0 0
        %1242 = vmatprep.subr.bf16.mxu0 0
        %1243 = vmatpush1.bf16.msra.mxu0 0
        %1244 = vmatprep.subr.bf16.mxu0 0
        %1245 = vmatpush1.bf16.msra.mxu0 0
        %1246 = vmatprep.mubr.bf16.mxu0 0
        %1247 = vmatmul.mubr.bf16.gmra.mrb[0].mxu0 %v1194
        %v1248 = vpop.f32.mrb[0].mxu0
        %v1249 = vadd.f32 0.0, %v1248
        %v1250 = vpop.f32.mrb[0].mxu0
        %v1251 = vpop.f32.mrb[0].mxu0
        %v1252 = vadd.f32 0.0, %v1251
        %v1253 = vpop.f32.mrb[0].mxu0
        %1254 = vmatprep.mubr.bf16.mxu0 0
        %1255 = vmatmul.mubr.bf16.gmra.mrb[0].mxu0 %v1197
        %v1256 = vpop.f32.mrb[0].mxu0
        %v1257 = vadd.f32 0.0, %v1256
        %v1258 = vpop.f32.mrb[0].mxu0
        %v1259 = vpop.f32.mrb[0].mxu0
        %v1260 = vadd.f32 0.0, %v1259
        %v1261 = vpop.f32.mrb[0].mxu0
        %1262 = vmatprep.mubr.bf16.mxu0 0
        %1263 = vmatmul.mubr.bf16.gmra.mrb[0].mxu0 %v1200
        %v1264 = vpop.f32.mrb[0].mxu0
        %v1265 = vadd.f32 0.0, %v1264
        %v1266 = vpop.f32.mrb[0].mxu0
        %v1267 = vpop.f32.mrb[0].mxu0
        %v1268 = vadd.f32 0.0, %v1267
        %v1269 = vpop.f32.mrb[0].mxu0
        %1270 = vmatprep.mubr.bf16.mxu0 0
        %1271 = vmatmul.mubr.bf16.gmra.mrb[0].mxu0 %v1203
        %v1272 = vpop.f32.mrb[0].mxu0
        %v1273 = vadd.f32 0.0, %v1272
        %v1274 = vpop.f32.mrb[0].mxu0
        %v1275 = vpop.f32.mrb[0].mxu0
        %v1276 = vadd.f32 0.0, %v1275
        %v1277 = vpop.f32.mrb[0].mxu0
        %1278 = vmatprep.mubr.bf16.mxu0 0
        %1279 = vmatmul.mubr.bf16.gmra.mrb[0].mxu0 %v1206
        %v1280 = vpop.f32.mrb[0].mxu0
        %v1281 = vadd.f32 0.0, %v1280
        %v1282 = vpop.f32.mrb[0].mxu0
        %v1283 = vpop.f32.mrb[0].mxu0
        %v1284 = vadd.f32 0.0, %v1283
        %v1285 = vpop.f32.mrb[0].mxu0
        %1286 = vmatprep.mubr.bf16.mxu0 0
        %1287 = vmatmul.mubr.bf16.gmra.mrb[0].mxu0 %v1209
        %v1288 = vpop.f32.mrb[0].mxu0
        %v1289 = vadd.f32 0.0, %v1288
        %v1290 = vpop.f32.mrb[0].mxu0
        %v1291 = vpop.f32.mrb[0].mxu0
        %v1292 = vadd.f32 0.0, %v1291
        %v1293 = vpop.f32.mrb[0].mxu0
        %1294 = vmatprep.mubr.bf16.mxu0 0
        %1295 = vmatmul.mubr.bf16.gmra.mrb[0].mxu0 %v1212
        %v1296 = vpop.f32.mrb[0].mxu0
        %v1297 = vadd.f32 0.0, %v1296
        %v1298 = vpop.f32.mrb[0].mxu0
        %v1299 = vpop.f32.mrb[0].mxu0
        %v1300 = vpop.f32.mrb[0].mxu0
        %1301 = vdwg.mxu0
        %v1302 = vpack.c.bf16 %v1252, %v1249
        %v1303 = vpack.c.bf16 %v1260, %v1257
        %v1304 = vpack.c.bf16 %v1268, %v1265
        %v1305 = vpack.c.bf16 %v1276, %v1273
        %v1306 = vpack.c.bf16 %v1284, %v1281
        %v1307 = vpack.c.bf16 %v1292, %v1289
        %v1308 = vpack.c.bf16 %v1297, %v1297
        %s1309 = scalar_lea.vmem %s2, 64
        %v1310 = vld [vmem:[%s1309] sm:$0xf]
        %v1311 = vld [vmem:[%s1309 + $0x4] sm:$0xf]
        %v1312 = vld [vmem:[%s1309 + $0x8] sm:$0xf]
        %v1313 = vld [vmem:[%s1309 + $0xc] sm:$0xf]
        %v1314 = vld [vmem:[%s1309 + $0x10] sm:$0xf]
        %v1315 = vld [vmem:[%s1309 + $0x14] sm:$0xf]
        %v1316 = vld [vmem:[%s1309 + $0x18] sm:$0xf]
        %v1317 = vld [vmem:[%s1309 + $0x1c] sm:$0xf]
        %v1326 = vunpack.c.l.b16 %v1310
        %v1327 = vunpack.c.l.b16 %v1311
        %v1328 = vunpack.c.l.b16 %v1312
        %v1329 = vunpack.c.l.b16 %v1313
        %v1330 = vunpack.c.l.b16 %v1314
        %v1331 = vunpack.c.l.b16 %v1315
        %v1332 = vunpack.c.l.b16 %v1316
        %v1333 = vunpack.c.l.b16 %v1317
        %v1334 = vpack.c.b16 %v1327, %v1326
        %v1335 = vpack.c.b16 %v1329, %v1328
        %v1336 = vpack.c.b16 %v1331, %v1330
        %v1337 = vpack.c.b16 %v1333, %v1332
        %v1343 = vsel %vm903, %v1302, 0
        %v1346 = vsel %vm903, %v1303, 0
        %v1349 = vsel %vm903, %v1304, 0
        %v1352 = vsel %vm903, %v1305, 0
        %v1355 = vsel %vm903, %v1306, 0
        %v1358 = vsel %vm903, %v1307, 0
        %v1361 = vsel %vm903, %v1308, 0
        %1363 = vmatprep.subr.bf16.mxu0 0
        %1364 = vmatpush1.bf16.msra.mxu0 %v1334
        %1365 = vmatprep.subr.bf16.mxu0 0
        %1366 = vmatpush1.bf16.msra.mxu0 %v1335
        %1367 = vmatprep.subr.bf16.mxu0 0
        %1368 = vmatpush1.bf16.msra.mxu0 %v1336
        %1369 = vmatprep.subr.bf16.mxu0 0
        %1370 = vmatpush1.bf16.msra.mxu0 %v1337
        %1371 = vmatprep.subr.bf16.mxu0 0
        %1372 = vmatpush1.bf16.msra.mxu0 0
        %1373 = vmatprep.subr.bf16.mxu0 0
        %1374 = vmatpush1.bf16.msra.mxu0 0
        %1375 = vmatprep.subr.bf16.mxu0 0
        %1376 = vmatpush1.bf16.msra.mxu0 0
        %1377 = vmatprep.subr.bf16.mxu0 0
        %1378 = vmatpush1.bf16.msra.mxu0 0
        %1379 = vmatprep.subr.bf16.mxu0 0
        %1380 = vmatpush1.bf16.msra.mxu0 0
        %1381 = vmatprep.subr.bf16.mxu0 0
        %1382 = vmatpush1.bf16.msra.mxu0 0
        %1383 = vmatprep.subr.bf16.mxu0 0
        %1384 = vmatpush1.bf16.msra.mxu0 0
        %1385 = vmatprep.subr.bf16.mxu0 0
        %1386 = vmatpush1.bf16.msra.mxu0 0
        %1387 = vmatprep.subr.bf16.mxu0 0
        %1388 = vmatpush1.bf16.msra.mxu0 0
        %1389 = vmatprep.subr.bf16.mxu0 0
        %1390 = vmatpush1.bf16.msra.mxu0 0
        %1391 = vmatprep.subr.bf16.mxu0 0
        %1392 = vmatpush1.bf16.msra.mxu0 0
        %1393 = vmatprep.subr.bf16.mxu0 0
        %1394 = vmatpush1.bf16.msra.mxu0 0
        %1395 = vmatprep.mubr.bf16.mxu0 0
        %1396 = vmatmul.mubr.bf16.gmra.mrb[0].mxu0 %v1343
        %v1397 = vpop.f32.mrb[0].mxu0
        %v1398 = vadd.f32 0.0, %v1397
        %v1399 = vpop.f32.mrb[0].mxu0
        %v1400 = vpop.f32.mrb[0].mxu0
        %v1401 = vadd.f32 0.0, %v1400
        %v1402 = vpop.f32.mrb[0].mxu0
        %1403 = vmatprep.mubr.bf16.mxu0 0
        %1404 = vmatmul.mubr.bf16.gmra.mrb[0].mxu0 %v1346
        %v1405 = vpop.f32.mrb[0].mxu0
        %v1406 = vadd.f32 0.0, %v1405
        %v1407 = vpop.f32.mrb[0].mxu0
        %v1408 = vpop.f32.mrb[0].mxu0
        %v1409 = vadd.f32 0.0, %v1408
        %v1410 = vpop.f32.mrb[0].mxu0
        %1411 = vmatprep.mubr.bf16.mxu0 0
        %1412 = vmatmul.mubr.bf16.gmra.mrb[0].mxu0 %v1349
        %v1413 = vpop.f32.mrb[0].mxu0
        %v1414 = vadd.f32 0.0, %v1413
        %v1415 = vpop.f32.mrb[0].mxu0
        %v1416 = vpop.f32.mrb[0].mxu0
        %v1417 = vadd.f32 0.0, %v1416
        %v1418 = vpop.f32.mrb[0].mxu0
        %1419 = vmatprep.mubr.bf16.mxu0 0
        %1420 = vmatmul.mubr.bf16.gmra.mrb[0].mxu0 %v1352
        %v1421 = vpop.f32.mrb[0].mxu0
        %v1422 = vadd.f32 0.0, %v1421
        %v1423 = vpop.f32.mrb[0].mxu0
        %v1424 = vpop.f32.mrb[0].mxu0
        %v1425 = vadd.f32 0.0, %v1424
        %v1426 = vpop.f32.mrb[0].mxu0
        %1427 = vmatprep.mubr.bf16.mxu0 0
        %1428 = vmatmul.mubr.bf16.gmra.mrb[0].mxu0 %v1355
        %v1429 = vpop.f32.mrb[0].mxu0
        %v1430 = vadd.f32 0.0, %v1429
        %v1431 = vpop.f32.mrb[0].mxu0
        %v1432 = vpop.f32.mrb[0].mxu0
        %v1433 = vadd.f32 0.0, %v1432
        %v1434 = vpop.f32.mrb[0].mxu0
        %1435 = vmatprep.mubr.bf16.mxu0 0
        %1436 = vmatmul.mubr.bf16.gmra.mrb[0].mxu0 %v1358
        %v1437 = vpop.f32.mrb[0].mxu0
        %v1438 = vadd.f32 0.0, %v1437
        %v1439 = vpop.f32.mrb[0].mxu0
        %v1440 = vpop.f32.mrb[0].mxu0
        %v1441 = vadd.f32 0.0, %v1440
        %v1442 = vpop.f32.mrb[0].mxu0
        %1443 = vmatprep.mubr.bf16.mxu0 0
        %1444 = vmatmul.mubr.bf16.gmra.mrb[0].mxu0 %v1361
        %v1445 = vpop.f32.mrb[0].mxu0
        %v1446 = vadd.f32 0.0, %v1445
        %v1447 = vpop.f32.mrb[0].mxu0
        %v1448 = vpop.f32.mrb[0].mxu0
        %v1449 = vpop.f32.mrb[0].mxu0
        %1450 = vdwg.mxu0
        %v1451 = vadd.f32 %v1093, %v1398
        %v1452 = vadd.f32 %v1096, %v1401
        %v1453 = vadd.f32 %v1101, %v1406
        %v1454 = vadd.f32 %v1104, %v1409
        %v1455 = vadd.f32 %v1109, %v1414
        %v1456 = vadd.f32 %v1112, %v1417
        %v1457 = vadd.f32 %v1117, %v1422
        %v1458 = vadd.f32 %v1120, %v1425
        %v1459 = vadd.f32 %v1125, %v1430
        %v1460 = vadd.f32 %v1128, %v1433
        %v1461 = vadd.f32 %v1133, %v1438
        %v1462 = vadd.f32 %v1136, %v1441
        %v1463 = vadd.f32 %v1141, %v1446
        %s1464 = scalar_lea.vmem %s1, 156
        %v1465 = vld [vmem:[%s1464] sm:$0xf]
        %v1466 = vld [vmem:[%s1464 + $0x4] sm:$0xf]
        %v1467 = vld [vmem:[%s1464 + $0x8] sm:$0xf]
        %v1468 = vld [vmem:[%s1464 + $0xc] sm:$0xf]
        %v1469 = vld [vmem:[%s1464 + $0x10] sm:$0xf]
        %v1470 = vld [vmem:[%s1464 + $0x14] sm:$0xf]
        %v1471 = vld [vmem:[%s1464 + $0x18] sm:$0xf]
        %v1472 = vld [vmem:[%s1464 + $0x1c] sm:$0xf]
        %v1473 = vld [vmem:[%s1464 + $0x20] sm:$0xf]
        %v1474 = vld [vmem:[%s1464 + $0x24] sm:$0xf]
        %v1475 = vld [vmem:[%s1464 + $0x28] sm:$0xf]
        %v1476 = vld [vmem:[%s1464 + $0x2c] sm:$0xf]
        %v1477 = vld [vmem:[%s1464 + $0x30] sm:$0x3]
        %v1491 = vunpack.c.l.b16 %v1465
        %v1492 = vunpack.c.l.b16 %v1466
        %v1493 = vunpack.c.l.b16 %v1467
        %v1494 = vunpack.c.l.b16 %v1468
        %v1495 = vunpack.c.l.b16 %v1469
        %v1496 = vunpack.c.l.b16 %v1470
        %v1497 = vunpack.c.l.b16 %v1471
        %v1498 = vunpack.c.l.b16 %v1472
        %v1499 = vunpack.c.l.b16 %v1473
        %v1500 = vunpack.c.l.b16 %v1474
        %v1501 = vunpack.c.l.b16 %v1475
        %v1502 = vunpack.c.l.b16 %v1476
        %v1503 = vunpack.c.l.b16 %v1477
        %v1504 = vpack.c.b16 %v1492, %v1491
        %v1505 = vpack.c.b16 %v1494, %v1493
        %v1506 = vpack.c.b16 %v1496, %v1495
        %v1507 = vpack.c.b16 %v1498, %v1497
        %v1508 = vpack.c.b16 %v1500, %v1499
        %v1509 = vpack.c.b16 %v1502, %v1501
        %v1510 = vpack.c.b16 %v1503, %v1503
        %v1512 = vsel %vm575, %v1504, 0
        %v1515 = vsel %vm575, %v1505, 0
        %v1518 = vsel %vm575, %v1506, 0
        %v1521 = vsel %vm575, %v1507, 0
        %v1524 = vsel %vm575, %v1508, 0
        %v1527 = vsel %vm575, %v1509, 0
        %v1530 = vsel %vm575, %v1510, 0
        %1532 = vmatprep.subr.bf16.mxu0 0
        %1533 = vmatpush1.bf16.msra.mxu0 %v560
        %1534 = vmatprep.subr.bf16.mxu0 0
        %1535 = vmatpush1.bf16.msra.mxu0 %v561
        %1536 = vmatprep.subr.bf16.mxu0 0
        %1537 = vmatpush1.bf16.msra.mxu0 %v562
        %1538 = vmatprep.subr.bf16.mxu0 0
        %1539 = vmatpush1.bf16.msra.mxu0 %v563
        %1540 = vmatprep.subr.bf16.mxu0 0
        %1541 = vmatpush1.bf16.msra.mxu0 %v564
        %1542 = vmatprep.subr.bf16.mxu0 0
        %1543 = vmatpush1.bf16.msra.mxu0 %v565
        %1544 = vmatprep.subr.bf16.mxu0 0
        %1545 = vmatpush1.bf16.msra.mxu0 %v566
        %1546 = vmatprep.subr.bf16.mxu0 0
        %1547 = vmatpush1.bf16.msra.mxu0 %v602
        %1548 = vmatprep.subr.bf16.mxu0 0
        %1549 = vmatpush1.bf16.msra.mxu0 0
        %1550 = vmatprep.subr.bf16.mxu0 0
        %1551 = vmatpush1.bf16.msra.mxu0 0
        %1552 = vmatprep.subr.bf16.mxu0 0
        %1553 = vmatpush1.bf16.msra.mxu0 0
        %1554 = vmatprep.subr.bf16.mxu0 0
        %1555 = vmatpush1.bf16.msra.mxu0 0
        %1556 = vmatprep.subr.bf16.mxu0 0
        %1557 = vmatpush1.bf16.msra.mxu0 0
        %1558 = vmatprep.subr.bf16.mxu0 0
        %1559 = vmatpush1.bf16.msra.mxu0 0
        %1560 = vmatprep.subr.bf16.mxu0 0
        %1561 = vmatpush1.bf16.msra.mxu0 0
        %1562 = vmatprep.subr.bf16.mxu0 0
        %1563 = vmatpush1.bf16.msra.mxu0 0
        %1564 = vmatprep.mubr.bf16.mxu0 0
        %1565 = vmatmul.mubr.bf16.gmra.mrb[0].mxu0 %v1512
        %v1566 = vpop.f32.mrb[0].mxu0
        %v1567 = vadd.f32 0.0, %v1566
        %v1568 = vpop.f32.mrb[0].mxu0
        %v1569 = vpop.f32.mrb[0].mxu0
        %v1570 = vadd.f32 0.0, %v1569
        %v1571 = vpop.f32.mrb[0].mxu0
        %1572 = vmatprep.mubr.bf16.mxu0 0
        %1573 = vmatmul.mubr.bf16.gmra.mrb[0].mxu0 %v1515
        %v1574 = vpop.f32.mrb[0].mxu0
        %v1575 = vadd.f32 0.0, %v1574
        %v1576 = vpop.f32.mrb[0].mxu0
        %v1577 = vpop.f32.mrb[0].mxu0
        %v1578 = vadd.f32 0.0, %v1577
        %v1579 = vpop.f32.mrb[0].mxu0
        %1580 = vmatprep.mubr.bf16.mxu0 0
        %1581 = vmatmul.mubr.bf16.gmra.mrb[0].mxu0 %v1518
        %v1582 = vpop.f32.mrb[0].mxu0
        %v1583 = vadd.f32 0.0, %v1582
        %v1584 = vpop.f32.mrb[0].mxu0
        %v1585 = vpop.f32.mrb[0].mxu0
        %v1586 = vadd.f32 0.0, %v1585
        %v1587 = vpop.f32.mrb[0].mxu0
        %1588 = vmatprep.mubr.bf16.mxu0 0
        %1589 = vmatmul.mubr.bf16.gmra.mrb[0].mxu0 %v1521
        %v1590 = vpop.f32.mrb[0].mxu0
        %v1591 = vadd.f32 0.0, %v1590
        %v1592 = vpop.f32.mrb[0].mxu0
        %v1593 = vpop.f32.mrb[0].mxu0
        %v1594 = vadd.f32 0.0, %v1593
        %v1595 = vpop.f32.mrb[0].mxu0
        %1596 = vmatprep.mubr.bf16.mxu0 0
        %1597 = vmatmul.mubr.bf16.gmra.mrb[0].mxu0 %v1524
        %v1598 = vpop.f32.mrb[0].mxu0
        %v1599 = vadd.f32 0.0, %v1598
        %v1600 = vpop.f32.mrb[0].mxu0
        %v1601 = vpop.f32.mrb[0].mxu0
        %v1602 = vadd.f32 0.0, %v1601
        %v1603 = vpop.f32.mrb[0].mxu0
        %1604 = vmatprep.mubr.bf16.mxu0 0
        %1605 = vmatmul.mubr.bf16.gmra.mrb[0].mxu0 %v1527
        %v1606 = vpop.f32.mrb[0].mxu0
        %v1607 = vadd.f32 0.0, %v1606
        %v1608 = vpop.f32.mrb[0].mxu0
        %v1609 = vpop.f32.mrb[0].mxu0
        %v1610 = vadd.f32 0.0, %v1609
        %v1611 = vpop.f32.mrb[0].mxu0
        %1612 = vmatprep.mubr.bf16.mxu0 0
        %1613 = vmatmul.mubr.bf16.gmra.mrb[0].mxu0 %v1530
        %v1614 = vpop.f32.mrb[0].mxu0
        %v1615 = vadd.f32 0.0, %v1614
        %v1616 = vpop.f32.mrb[0].mxu0
        %v1617 = vpop.f32.mrb[0].mxu0
        %v1618 = vpop.f32.mrb[0].mxu0
        %1619 = vdwg.mxu0
        %v1620 = vpack.c.bf16 %v1570, %v1567
        %v1621 = vpack.c.bf16 %v1578, %v1575
        %v1622 = vpack.c.bf16 %v1586, %v1583
        %v1623 = vpack.c.bf16 %v1594, %v1591
        %v1624 = vpack.c.bf16 %v1602, %v1599
        %v1625 = vpack.c.bf16 %v1610, %v1607
        %v1626 = vpack.c.bf16 %v1615, %v1615
        %s1627 = scalar_lea.vmem %s2, 96
        %v1628 = vld [vmem:[%s1627] sm:$0xf]
        %v1629 = vld [vmem:[%s1627 + $0x4] sm:$0xf]
        %v1630 = vld [vmem:[%s1627 + $0x8] sm:$0xf]
        %v1631 = vld [vmem:[%s1627 + $0xc] sm:$0xf]
        %v1632 = vld [vmem:[%s1627 + $0x10] sm:$0xf]
        %v1633 = vld [vmem:[%s1627 + $0x14] sm:$0xf]
        %v1634 = vld [vmem:[%s1627 + $0x18] sm:$0xf]
        %v1635 = vld [vmem:[%s1627 + $0x1c] sm:$0xf]
        %v1644 = vunpack.c.l.b16 %v1628
        %v1645 = vunpack.c.l.b16 %v1629
        %v1646 = vunpack.c.l.b16 %v1630
        %v1647 = vunpack.c.l.b16 %v1631
        %v1648 = vunpack.c.l.b16 %v1632
        %v1649 = vunpack.c.l.b16 %v1633
        %v1650 = vunpack.c.l.b16 %v1634
        %v1651 = vunpack.c.l.b16 %v1635
        %v1652 = vpack.c.b16 %v1645, %v1644
        %v1653 = vpack.c.b16 %v1647, %v1646
        %v1654 = vpack.c.b16 %v1649, %v1648
        %v1655 = vpack.c.b16 %v1651, %v1650
        %v1661 = vsel %vm903, %v1620, 0
        %v1664 = vsel %vm903, %v1621, 0
        %v1667 = vsel %vm903, %v1622, 0
        %v1670 = vsel %vm903, %v1623, 0
        %v1673 = vsel %vm903, %v1624, 0
        %v1676 = vsel %vm903, %v1625, 0
        %v1679 = vsel %vm903, %v1626, 0
        %1681 = vmatprep.subr.bf16.mxu0 0
        %1682 = vmatpush1.bf16.msra.mxu0 %v1652
        %1683 = vmatprep.subr.bf16.mxu0 0
        %1684 = vmatpush1.bf16.msra.mxu0 %v1653
        %1685 = vmatprep.subr.bf16.mxu0 0
        %1686 = vmatpush1.bf16.msra.mxu0 %v1654
        %1687 = vmatprep.subr.bf16.mxu0 0
        %1688 = vmatpush1.bf16.msra.mxu0 %v1655
        %1689 = vmatprep.subr.bf16.mxu0 0
        %1690 = vmatpush1.bf16.msra.mxu0 0
        %1691 = vmatprep.subr.bf16.mxu0 0
        %1692 = vmatpush1.bf16.msra.mxu0 0
        %1693 = vmatprep.subr.bf16.mxu0 0
        %1694 = vmatpush1.bf16.msra.mxu0 0
        %1695 = vmatprep.subr.bf16.mxu0 0
        %1696 = vmatpush1.bf16.msra.mxu0 0
        %1697 = vmatprep.subr.bf16.mxu0 0
        %1698 = vmatpush1.bf16.msra.mxu0 0
        %1699 = vmatprep.subr.bf16.mxu0 0
        %1700 = vmatpush1.bf16.msra.mxu0 0
        %1701 = vmatprep.subr.bf16.mxu0 0
        %1702 = vmatpush1.bf16.msra.mxu0 0
        %1703 = vmatprep.subr.bf16.mxu0 0
        %1704 = vmatpush1.bf16.msra.mxu0 0
        %1705 = vmatprep.subr.bf16.mxu0 0
        %1706 = vmatpush1.bf16.msra.mxu0 0
        %1707 = vmatprep.subr.bf16.mxu0 0
        %1708 = vmatpush1.bf16.msra.mxu0 0
        %1709 = vmatprep.subr.bf16.mxu0 0
        %1710 = vmatpush1.bf16.msra.mxu0 0
        %1711 = vmatprep.subr.bf16.mxu0 0
        %1712 = vmatpush1.bf16.msra.mxu0 0
        %1713 = vmatprep.mubr.bf16.mxu0 0
        %1714 = vmatmul.mubr.bf16.gmra.mrb[0].mxu0 %v1661
        %v1715 = vpop.f32.mrb[0].mxu0
        %v1716 = vadd.f32 0.0, %v1715
        %v1717 = vpop.f32.mrb[0].mxu0
        %v1718 = vpop.f32.mrb[0].mxu0
        %v1719 = vadd.f32 0.0, %v1718
        %v1720 = vpop.f32.mrb[0].mxu0
        %1721 = vmatprep.mubr.bf16.mxu0 0
        %1722 = vmatmul.mubr.bf16.gmra.mrb[0].mxu0 %v1664
        %v1723 = vpop.f32.mrb[0].mxu0
        %v1724 = vadd.f32 0.0, %v1723
        %v1725 = vpop.f32.mrb[0].mxu0
        %v1726 = vpop.f32.mrb[0].mxu0
        %v1727 = vadd.f32 0.0, %v1726
        %v1728 = vpop.f32.mrb[0].mxu0
        %1729 = vmatprep.mubr.bf16.mxu0 0
        %1730 = vmatmul.mubr.bf16.gmra.mrb[0].mxu0 %v1667
        %v1731 = vpop.f32.mrb[0].mxu0
        %v1732 = vadd.f32 0.0, %v1731
        %v1733 = vpop.f32.mrb[0].mxu0
        %v1734 = vpop.f32.mrb[0].mxu0
        %v1735 = vadd.f32 0.0, %v1734
        %v1736 = vpop.f32.mrb[0].mxu0
        %1737 = vmatprep.mubr.bf16.mxu0 0
        %1738 = vmatmul.mubr.bf16.gmra.mrb[0].mxu0 %v1670
        %v1739 = vpop.f32.mrb[0].mxu0
        %v1740 = vadd.f32 0.0, %v1739
        %v1741 = vpop.f32.mrb[0].mxu0
        %v1742 = vpop.f32.mrb[0].mxu0
        %v1743 = vadd.f32 0.0, %v1742
        %v1744 = vpop.f32.mrb[0].mxu0
        %1745 = vmatprep.mubr.bf16.mxu0 0
        %1746 = vmatmul.mubr.bf16.gmra.mrb[0].mxu0 %v1673
        %v1747 = vpop.f32.mrb[0].mxu0
        %v1748 = vadd.f32 0.0, %v1747
        %v1749 = vpop.f32.mrb[0].mxu0
        %v1750 = vpop.f32.mrb[0].mxu0
        %v1751 = vadd.f32 0.0, %v1750
        %v1752 = vpop.f32.mrb[0].mxu0
        %1753 = vmatprep.mubr.bf16.mxu0 0
        %1754 = vmatmul.mubr.bf16.gmra.mrb[0].mxu0 %v1676
        %v1755 = vpop.f32.mrb[0].mxu0
        %v1756 = vadd.f32 0.0, %v1755
        %v1757 = vpop.f32.mrb[0].mxu0
        %v1758 = vpop.f32.mrb[0].mxu0
        %v1759 = vadd.f32 0.0, %v1758
        %v1760 = vpop.f32.mrb[0].mxu0
        %1761 = vmatprep.mubr.bf16.mxu0 0
        %1762 = vmatmul.mubr.bf16.gmra.mrb[0].mxu0 %v1679
        %v1763 = vpop.f32.mrb[0].mxu0
        %v1764 = vadd.f32 0.0, %v1763
        %v1765 = vpop.f32.mrb[0].mxu0
        %v1766 = vpop.f32.mrb[0].mxu0
        %v1767 = vpop.f32.mrb[0].mxu0
        %1768 = vdwg.mxu0
        %v1769 = vadd.f32 %v1451, %v1716
        %v1770 = vadd.f32 %v1452, %v1719
        %v1771 = vadd.f32 %v1453, %v1724
        %v1772 = vadd.f32 %v1454, %v1727
        %v1773 = vadd.f32 %v1455, %v1732
        %v1774 = vadd.f32 %v1456, %v1735
        %v1775 = vadd.f32 %v1457, %v1740
        %v1776 = vadd.f32 %v1458, %v1743
        %v1777 = vadd.f32 %v1459, %v1748
        %v1778 = vadd.f32 %v1460, %v1751
        %v1779 = vadd.f32 %v1461, %v1756
        %v1780 = vadd.f32 %v1462, %v1759
        %v1781 = vadd.f32 %v1463, %v1764
        %v1782 = vld [vmem:[%s3] sm:$0x1]
        %v1784 = vlaneseq
        %v1785 = vshrl.u32 %v1784, 7
        %v1786 = vsub.s32 0, %v1785
        %v1787 = vrot.slane %v1782, %v1786
        %v1789 = vadd.f32 %v1769, %v1787
        %v1790 = vadd.f32 %v1770, %v1787
        %v1791 = vadd.f32 %v1771, %v1787
        %v1792 = vadd.f32 %v1772, %v1787
        %v1793 = vadd.f32 %v1773, %v1787
        %v1794 = vadd.f32 %v1774, %v1787
        %v1795 = vadd.f32 %v1775, %v1787
        %v1796 = vadd.f32 %v1776, %v1787
        %v1797 = vadd.f32 %v1777, %v1787
        %v1798 = vadd.f32 %v1778, %v1787
        %v1799 = vadd.f32 %v1779, %v1787
        %v1800 = vadd.f32 %v1780, %v1787
        %v1801 = vadd.f32 %v1781, %v1787
        %v1802 = vmax.f32 %v1789, 0.0
        %v1803 = vmax.f32 %v1790, 0.0
        %v1804 = vmax.f32 %v1791, 0.0
        %v1805 = vmax.f32 %v1792, 0.0
        %v1806 = vmax.f32 %v1793, 0.0
        %v1807 = vmax.f32 %v1794, 0.0
        %v1808 = vmax.f32 %v1795, 0.0
        %v1809 = vmax.f32 %v1796, 0.0
        %v1810 = vmax.f32 %v1797, 0.0
        %v1811 = vmax.f32 %v1798, 0.0
        %v1812 = vmax.f32 %v1799, 0.0
        %v1813 = vmax.f32 %v1800, 0.0
        %v1814 = vmax.f32 %v1801, 0.0
        %v1815 = vpack.c.bf16 %v1803, %v1802
        %v1816 = vpack.c.bf16 %v1805, %v1804
        %v1817 = vpack.c.bf16 %v1807, %v1806
        %v1818 = vpack.c.bf16 %v1809, %v1808
        %v1819 = vpack.c.bf16 %v1811, %v1810
        %v1820 = vpack.c.bf16 %v1813, %v1812
        %v1821 = vpack.c.bf16 %v1814, %v1814
        %v1822 = vld [vmem:[%s4] sm:$0xf]
        %v1823 = vld [vmem:[%s4 + $0x4] sm:$0xf]
        %v1826 = vunpack.c.l.b16 %v1822
        %v1827 = vunpack.c.l.b16 %v1823
        %v1828 = vpack.c.b16 %v1827, %v1826
        %vm1829 = vcmask 818176
        %v1831 = vsel %vm1829, %v1828, 0
        %vm1833 = vcmask 1041408
        %v1835 = vsel %vm1833, %v1821, 0
        %1837 = vmatprep.subr.bf16.mxu0 0
        %1838 = vmatpush1.bf16.msra.mxu0 %v1815
        %1839 = vmatprep.subr.bf16.mxu0 0
        %1840 = vmatpush1.bf16.msra.mxu0 %v1816
        %1841 = vmatprep.subr.bf16.mxu0 0
        %1842 = vmatpush1.bf16.msra.mxu0 %v1817
        %1843 = vmatprep.subr.bf16.mxu0 0
        %1844 = vmatpush1.bf16.msra.mxu0 %v1818
        %1845 = vmatprep.subr.bf16.mxu0 0
        %1846 = vmatpush1.bf16.msra.mxu0 %v1819
        %1847 = vmatprep.subr.bf16.mxu0 0
        %1848 = vmatpush1.bf16.msra.mxu0 %v1820
        %1849 = vmatprep.subr.bf16.mxu0 0
        %1850 = vmatpush1.bf16.msra.mxu0 %v1835
        %1851 = vmatprep.subr.bf16.mxu0 0
        %1852 = vmatpush1.bf16.msra.mxu0 0
        %1853 = vmatprep.subr.bf16.mxu0 0
        %1854 = vmatpush1.bf16.msra.mxu0 0
        %1855 = vmatprep.subr.bf16.mxu0 0
        %1856 = vmatpush1.bf16.msra.mxu0 0
        %1857 = vmatprep.subr.bf16.mxu0 0
        %1858 = vmatpush1.bf16.msra.mxu0 0
        %1859 = vmatprep.subr.bf16.mxu0 0
        %1860 = vmatpush1.bf16.msra.mxu0 0
        %1861 = vmatprep.subr.bf16.mxu0 0
        %1862 = vmatpush1.bf16.msra.mxu0 0
        %1863 = vmatprep.subr.bf16.mxu0 0
        %1864 = vmatpush1.bf16.msra.mxu0 0
        %1865 = vmatprep.subr.bf16.mxu0 0
        %1866 = vmatpush1.bf16.msra.mxu0 0
        %1867 = vmatprep.subr.bf16.mxu0 0
        %1868 = vmatpush1.bf16.msra.mxu0 0
        %1869 = vmatprep.mubr.bf16.mxu0 0
        %1870 = vmatmul.mubr.bf16.gmra.mrb[0].mxu0 %v1831
        %v1871 = vpop.f32.mrb[0].mxu0
        %v1872 = vadd.f32 0.0, %v1871
        %v1873 = vpop.f32.mrb[0].mxu0
        %v1874 = vpop.f32.mrb[0].mxu0
        %v1875 = vadd.f32 0.0, %v1874
        %v1876 = vpop.f32.mrb[0].mxu0
        %1877 = vdwg.mxu0
        %v1878 = vpack.c.bf16 %v1875, %v1872
        %v1879 = vld [vmem:[%s5] sm:$0xf]
        %v1880 = vld [vmem:[%s5 + $0x4] sm:$0xf]
        %v1881 = vld [vmem:[%s5 + $0x8] sm:$0xf]
        %v1882 = vld [vmem:[%s5 + $0xc] sm:$0xf]
        %s1883 = scalar_lea.vmem %s4, 8
        %v1884 = vld [vmem:[%s1883] sm:$0xf]
        %v1885 = vld [vmem:[%s1883 + $0x4] sm:$0xf]
        %v1888 = vunpack.c.l.b16 %v1884
        %v1889 = vunpack.c.l.b16 %v1885
        %v1890 = vpack.c.b16 %v1889, %v1888
        %v1892 = vsel %vm1829, %v1890, 0
        %1894 = vmatprep.subr.bf16.mxu0 0
        %1895 = vmatpush1.bf16.msra.mxu0 %v1815
        %1896 = vmatprep.subr.bf16.mxu0 0
        %1897 = vmatpush1.bf16.msra.mxu0 %v1816
        %1898 = vmatprep.subr.bf16.mxu0 0
        %1899 = vmatpush1.bf16.msra.mxu0 %v1817
        %1900 = vmatprep.subr.bf16.mxu0 0
        %1901 = vmatpush1.bf16.msra.mxu0 %v1818
        %1902 = vmatprep.subr.bf16.mxu0 0
        %1903 = vmatpush1.bf16.msra.mxu0 %v1819
        %1904 = vmatprep.subr.bf16.mxu0 0
        %1905 = vmatpush1.bf16.msra.mxu0 %v1820
        %1906 = vmatprep.subr.bf16.mxu0 0
        %1907 = vmatpush1.bf16.msra.mxu0 %v1835
        %1908 = vmatprep.subr.bf16.mxu0 0
        %1909 = vmatpush1.bf16.msra.mxu0 0
        %1910 = vmatprep.subr.bf16.mxu0 0
        %1911 = vmatpush1.bf16.msra.mxu0 0
        %1912 = vmatprep.subr.bf16.mxu0 0
        %1913 = vmatpush1.bf16.msra.mxu0 0
        %1914 = vmatprep.subr.bf16.mxu0 0
        %1915 = vmatpush1.bf16.msra.mxu0 0
        %1916 = vmatprep.subr.bf16.mxu0 0
        %1917 = vmatpush1.bf16.msra.mxu0 0
        %1918 = vmatprep.subr.bf16.mxu0 0
        %1919 = vmatpush1.bf16.msra.mxu0 0
        %1920 = vmatprep.subr.bf16.mxu0 0
        %1921 = vmatpush1.bf16.msra.mxu0 0
        %1922 = vmatprep.subr.bf16.mxu0 0
        %1923 = vmatpush1.bf16.msra.mxu0 0
        %1924 = vmatprep.subr.bf16.mxu0 0
        %1925 = vmatpush1.bf16.msra.mxu0 0
        %1926 = vmatprep.mubr.bf16.mxu0 0
        %1927 = vmatmul.mubr.bf16.gmra.mrb[0].mxu0 %v1892
        %v1928 = vpop.f32.mrb[0].mxu0
        %v1929 = vadd.f32 0.0, %v1928
        %v1930 = vpop.f32.mrb[0].mxu0
        %v1931 = vpop.f32.mrb[0].mxu0
        %v1932 = vadd.f32 0.0, %v1931
        %v1933 = vpop.f32.mrb[0].mxu0
        %1934 = vdwg.mxu0
        %v1935 = vpack.c.bf16 %v1932, %v1929
        %s1936 = scalar_lea.vmem %s5, 16
        %v1937 = vld [vmem:[%s1936] sm:$0xf]
        %v1938 = vld [vmem:[%s1936 + $0x4] sm:$0xf]
        %v1939 = vld [vmem:[%s1936 + $0x8] sm:$0xf]
        %v1940 = vld [vmem:[%s1936 + $0xc] sm:$0xf]
        %v1945 = vunpack.c.l.b16 %v1937
        %v1946 = vunpack.c.l.b16 %v1938
        %v1947 = vunpack.c.l.b16 %v1939
        %v1948 = vunpack.c.l.b16 %v1940
        %v1949 = vpack.c.b16 %v1946, %v1945
        %v1950 = vpack.c.b16 %v1948, %v1947
        %vm1953 = vcmask 261120
        %v1955 = vsel %vm1953, %v1935, 0
        %1957 = vmatprep.subr.bf16.mxu0 0
        %1958 = vmatpush1.bf16.msra.mxu0 %v1949
        %1959 = vmatprep.subr.bf16.mxu0 0
        %1960 = vmatpush1.bf16.msra.mxu0 %v1950
        %1961 = vmatprep.subr.bf16.mxu0 0
        %1962 = vmatpush1.bf16.msra.mxu0 0
        %1963 = vmatprep.subr.bf16.mxu0 0
        %1964 = vmatpush1.bf16.msra.mxu0 0
        %1965 = vmatprep.subr.bf16.mxu0 0
        %1966 = vmatpush1.bf16.msra.mxu0 0
        %1967 = vmatprep.subr.bf16.mxu0 0
        %1968 = vmatpush1.bf16.msra.mxu0 0
        %1969 = vmatprep.subr.bf16.mxu0 0
        %1970 = vmatpush1.bf16.msra.mxu0 0
        %1971 = vmatprep.subr.bf16.mxu0 0
        %1972 = vmatpush1.bf16.msra.mxu0 0
        %1973 = vmatprep.subr.bf16.mxu0 0
        %1974 = vmatpush1.bf16.msra.mxu0 0
        %1975 = vmatprep.subr.bf16.mxu0 0
        %1976 = vmatpush1.bf16.msra.mxu0 0
        %1977 = vmatprep.subr.bf16.mxu0 0
        %1978 = vmatpush1.bf16.msra.mxu0 0
        %1979 = vmatprep.subr.bf16.mxu0 0
        %1980 = vmatpush1.bf16.msra.mxu0 0
        %1981 = vmatprep.subr.bf16.mxu0 0
        %1982 = vmatpush1.bf16.msra.mxu0 0
        %1983 = vmatprep.subr.bf16.mxu0 0
        %1984 = vmatpush1.bf16.msra.mxu0 0
        %1985 = vmatprep.subr.bf16.mxu0 0
        %1986 = vmatpush1.bf16.msra.mxu0 0
        %1987 = vmatprep.subr.bf16.mxu0 0
        %1988 = vmatpush1.bf16.msra.mxu0 0
        %1989 = vmatprep.mubr.bf16.mxu0 0
        %1990 = vmatmul.mubr.bf16.gmra.mrb[0].mxu0 %v1955
        %v1991 = vpop.f32.mrb[0].mxu0
        %v1992 = vadd.f32 0.0, %v1991
        %v1993 = vpop.f32.mrb[0].mxu0
        %v1994 = vpop.f32.mrb[0].mxu0
        %v1995 = vadd.f32 0.0, %v1994
        %v1996 = vpop.f32.mrb[0].mxu0
        %1997 = vdwg.mxu0
        %v2002 = vunpack.c.l.b16 %v1879
        %v2003 = vunpack.c.l.b16 %v1880
        %v2004 = vunpack.c.l.b16 %v1881
        %v2005 = vunpack.c.l.b16 %v1882
        %v2006 = vpack.c.b16 %v2003, %v2002
        %v2007 = vpack.c.b16 %v2005, %v2004
        %v2011 = vsel %vm1953, %v1878, 0
        %2013 = vmatprep.subr.bf16.mxu0 0
        %2014 = vmatpush1.bf16.msra.mxu0 %v2006
        %2015 = vmatprep.subr.bf16.mxu0 0
        %2016 = vmatpush1.bf16.msra.mxu0 %v2007
        %2017 = vmatprep.subr.bf16.mxu0 0
        %2018 = vmatpush1.bf16.msra.mxu0 0
        %2019 = vmatprep.subr.bf16.mxu0 0
        %2020 = vmatpush1.bf16.msra.mxu0 0
        %2021 = vmatprep.subr.bf16.mxu0 0
        %2022 = vmatpush1.bf16.msra.mxu0 0
        %2023 = vmatprep.subr.bf16.mxu0 0
        %2024 = vmatpush1.bf16.msra.mxu0 0
        %2025 = vmatprep.subr.bf16.mxu0 0
        %2026 = vmatpush1.bf16.msra.mxu0 0
        %2027 = vmatprep.subr.bf16.mxu0 0
        %2028 = vmatpush1.bf16.msra.mxu0 0
        %2029 = vmatprep.subr.bf16.mxu0 0
        %2030 = vmatpush1.bf16.msra.mxu0 0
        %2031 = vmatprep.subr.bf16.mxu0 0
        %2032 = vmatpush1.bf16.msra.mxu0 0
        %2033 = vmatprep.subr.bf16.mxu0 0
        %2034 = vmatpush1.bf16.msra.mxu0 0
        %2035 = vmatprep.subr.bf16.mxu0 0
        %2036 = vmatpush1.bf16.msra.mxu0 0
        %2037 = vmatprep.subr.bf16.mxu0 0
        %2038 = vmatpush1.bf16.msra.mxu0 0
        %2039 = vmatprep.subr.bf16.mxu0 0
        %2040 = vmatpush1.bf16.msra.mxu0 0
        %2041 = vmatprep.subr.bf16.mxu0 0
        %2042 = vmatpush1.bf16.msra.mxu0 0
        %2043 = vmatprep.subr.bf16.mxu0 0
        %2044 = vmatpush1.bf16.msra.mxu0 0
        %2045 = vmatprep.mubr.bf16.mxu0 0
        %2046 = vmatmul.mubr.bf16.gmra.mrb[0].mxu0 %v2011
        %v2047 = vpop.f32.mrb[0].mxu0
        %v2048 = vadd.f32 %v1992, %v2047
        %v2049 = vpop.f32.mrb[0].mxu0
        %v2050 = vpop.f32.mrb[0].mxu0
        %v2051 = vadd.f32 %v1995, %v2050
        %v2052 = vpop.f32.mrb[0].mxu0
        %2053 = vdwg.mxu0
        %s2054 = scalar_lea.vmem %s4, 16
        %v2055 = vld [vmem:[%s2054] sm:$0xf]
        %v2056 = vld [vmem:[%s2054 + $0x4] sm:$0xf]
        %v2059 = vunpack.c.l.b16 %v2055
        %v2060 = vunpack.c.l.b16 %v2056
        %v2061 = vpack.c.b16 %v2060, %v2059
        %v2063 = vsel %vm1829, %v2061, 0
        %2065 = vmatprep.subr.bf16.mxu0 0
        %2066 = vmatpush1.bf16.msra.mxu0 %v1815
        %2067 = vmatprep.subr.bf16.mxu0 0
        %2068 = vmatpush1.bf16.msra.mxu0 %v1816
        %2069 = vmatprep.subr.bf16.mxu0 0
        %2070 = vmatpush1.bf16.msra.mxu0 %v1817
        %2071 = vmatprep.subr.bf16.mxu0 0
        %2072 = vmatpush1.bf16.msra.mxu0 %v1818
        %2073 = vmatprep.subr.bf16.mxu0 0
        %2074 = vmatpush1.bf16.msra.mxu0 %v1819
        %2075 = vmatprep.subr.bf16.mxu0 0
        %2076 = vmatpush1.bf16.msra.mxu0 %v1820
        %2077 = vmatprep.subr.bf16.mxu0 0
        %2078 = vmatpush1.bf16.msra.mxu0 %v1835
        %2079 = vmatprep.subr.bf16.mxu0 0
        %2080 = vmatpush1.bf16.msra.mxu0 0
        %2081 = vmatprep.subr.bf16.mxu0 0
        %2082 = vmatpush1.bf16.msra.mxu0 0
        %2083 = vmatprep.subr.bf16.mxu0 0
        %2084 = vmatpush1.bf16.msra.mxu0 0
        %2085 = vmatprep.subr.bf16.mxu0 0
        %2086 = vmatpush1.bf16.msra.mxu0 0
        %2087 = vmatprep.subr.bf16.mxu0 0
        %2088 = vmatpush1.bf16.msra.mxu0 0
        %2089 = vmatprep.subr.bf16.mxu0 0
        %2090 = vmatpush1.bf16.msra.mxu0 0
        %2091 = vmatprep.subr.bf16.mxu0 0
        %2092 = vmatpush1.bf16.msra.mxu0 0
        %2093 = vmatprep.subr.bf16.mxu0 0
        %2094 = vmatpush1.bf16.msra.mxu0 0
        %2095 = vmatprep.subr.bf16.mxu0 0
        %2096 = vmatpush1.bf16.msra.mxu0 0
        %2097 = vmatprep.mubr.bf16.mxu0 0
        %2098 = vmatmul.mubr.bf16.gmra.mrb[0].mxu0 %v2063
        %v2099 = vpop.f32.mrb[0].mxu0
        %v2100 = vadd.f32 0.0, %v2099
        %v2101 = vpop.f32.mrb[0].mxu0
        %v2102 = vpop.f32.mrb[0].mxu0
        %v2103 = vadd.f32 0.0, %v2102
        %v2104 = vpop.f32.mrb[0].mxu0
        %2105 = vdwg.mxu0
        %v2106 = vpack.c.bf16 %v2103, %v2100
        %s2107 = scalar_lea.vmem %s5, 32
        %v2108 = vld [vmem:[%s2107] sm:$0xf]
        %v2109 = vld [vmem:[%s2107 + $0x4] sm:$0xf]
        %v2110 = vld [vmem:[%s2107 + $0x8] sm:$0xf]
        %v2111 = vld [vmem:[%s2107 + $0xc] sm:$0xf]
        %v2116 = vunpack.c.l.b16 %v2108
        %v2117 = vunpack.c.l.b16 %v2109
        %v2118 = vunpack.c.l.b16 %v2110
        %v2119 = vunpack.c.l.b16 %v2111
        %v2120 = vpack.c.b16 %v2117, %v2116
        %v2121 = vpack.c.b16 %v2119, %v2118
        %v2125 = vsel %vm1953, %v2106, 0
        %2127 = vmatprep.subr.bf16.mxu0 0
        %2128 = vmatpush1.bf16.msra.mxu0 %v2120
        %2129 = vmatprep.subr.bf16.mxu0 0
        %2130 = vmatpush1.bf16.msra.mxu0 %v2121
        %2131 = vmatprep.subr.bf16.mxu0 0
        %2132 = vmatpush1.bf16.msra.mxu0 0
        %2133 = vmatprep.subr.bf16.mxu0 0
        %2134 = vmatpush1.bf16.msra.mxu0 0
        %2135 = vmatprep.subr.bf16.mxu0 0
        %2136 = vmatpush1.bf16.msra.mxu0 0
        %2137 = vmatprep.subr.bf16.mxu0 0
        %2138 = vmatpush1.bf16.msra.mxu0 0
        %2139 = vmatprep.subr.bf16.mxu0 0
        %2140 = vmatpush1.bf16.msra.mxu0 0
        %2141 = vmatprep.subr.bf16.mxu0 0
        %2142 = vmatpush1.bf16.msra.mxu0 0
        %2143 = vmatprep.subr.bf16.mxu0 0
        %2144 = vmatpush1.bf16.msra.mxu0 0
        %2145 = vmatprep.subr.bf16.mxu0 0
        %2146 = vmatpush1.bf16.msra.mxu0 0
        %2147 = vmatprep.subr.bf16.mxu0 0
        %2148 = vmatpush1.bf16.msra.mxu0 0
        %2149 = vmatprep.subr.bf16.mxu0 0
        %2150 = vmatpush1.bf16.msra.mxu0 0
        %2151 = vmatprep.subr.bf16.mxu0 0
        %2152 = vmatpush1.bf16.msra.mxu0 0
        %2153 = vmatprep.subr.bf16.mxu0 0
        %2154 = vmatpush1.bf16.msra.mxu0 0
        %2155 = vmatprep.subr.bf16.mxu0 0
        %2156 = vmatpush1.bf16.msra.mxu0 0
        %2157 = vmatprep.subr.bf16.mxu0 0
        %2158 = vmatpush1.bf16.msra.mxu0 0
        %2159 = vmatprep.mubr.bf16.mxu0 0
        %2160 = vmatmul.mubr.bf16.gmra.mrb[0].mxu0 %v2125
        %v2161 = vpop.f32.mrb[0].mxu0
        %v2162 = vadd.f32 0.0, %v2161
        %v2163 = vpop.f32.mrb[0].mxu0
        %v2164 = vpop.f32.mrb[0].mxu0
        %v2165 = vadd.f32 0.0, %v2164
        %v2166 = vpop.f32.mrb[0].mxu0
        %2167 = vdwg.mxu0
        %v2168 = vadd.f32 %v2048, %v2162
        %v2169 = vadd.f32 %v2051, %v2165
        %s2170 = scalar_lea.vmem %s4, 24
        %v2171 = vld [vmem:[%s2170] sm:$0xf]
        %v2172 = vld [vmem:[%s2170 + $0x4] sm:$0xf]
        %v2175 = vunpack.c.l.b16 %v2171
        %v2176 = vunpack.c.l.b16 %v2172
        %v2177 = vpack.c.b16 %v2176, %v2175
        %v2179 = vsel %vm1829, %v2177, 0
        %2181 = vmatprep.subr.bf16.mxu0 0
        %2182 = vmatpush1.bf16.msra.mxu0 %v1815
        %2183 = vmatprep.subr.bf16.mxu0 0
        %2184 = vmatpush1.bf16.msra.mxu0 %v1816
        %2185 = vmatprep.subr.bf16.mxu0 0
        %2186 = vmatpush1.bf16.msra.mxu0 %v1817
        %2187 = vmatprep.subr.bf16.mxu0 0
        %2188 = vmatpush1.bf16.msra.mxu0 %v1818
        %2189 = vmatprep.subr.bf16.mxu0 0
        %2190 = vmatpush1.bf16.msra.mxu0 %v1819
        %2191 = vmatprep.subr.bf16.mxu0 0
        %2192 = vmatpush1.bf16.msra.mxu0 %v1820
        %2193 = vmatprep.subr.bf16.mxu0 0
        %2194 = vmatpush1.bf16.msra.mxu0 %v1835
        %2195 = vmatprep.subr.bf16.mxu0 0
        %2196 = vmatpush1.bf16.msra.mxu0 0
        %2197 = vmatprep.subr.bf16.mxu0 0
        %2198 = vmatpush1.bf16.msra.mxu0 0
        %2199 = vmatprep.subr.bf16.mxu0 0
        %2200 = vmatpush1.bf16.msra.mxu0 0
        %2201 = vmatprep.subr.bf16.mxu0 0
        %2202 = vmatpush1.bf16.msra.mxu0 0
        %2203 = vmatprep.subr.bf16.mxu0 0
        %2204 = vmatpush1.bf16.msra.mxu0 0
        %2205 = vmatprep.subr.bf16.mxu0 0
        %2206 = vmatpush1.bf16.msra.mxu0 0
        %2207 = vmatprep.subr.bf16.mxu0 0
        %2208 = vmatpush1.bf16.msra.mxu0 0
        %2209 = vmatprep.subr.bf16.mxu0 0
        %2210 = vmatpush1.bf16.msra.mxu0 0
        %2211 = vmatprep.subr.bf16.mxu0 0
        %2212 = vmatpush1.bf16.msra.mxu0 0
        %2213 = vmatprep.mubr.bf16.mxu0 0
        %2214 = vmatmul.mubr.bf16.gmra.mrb[0].mxu0 %v2179
        %v2215 = vpop.f32.mrb[0].mxu0
        %v2216 = vadd.f32 0.0, %v2215
        %v2217 = vpop.f32.mrb[0].mxu0
        %v2218 = vpop.f32.mrb[0].mxu0
        %v2219 = vadd.f32 0.0, %v2218
        %v2220 = vpop.f32.mrb[0].mxu0
        %2221 = vdwg.mxu0
        %v2222 = vpack.c.bf16 %v2219, %v2216
        %s2223 = scalar_lea.vmem %s5, 48
        %v2224 = vld [vmem:[%s2223] sm:$0xf]
        %v2225 = vld [vmem:[%s2223 + $0x4] sm:$0xf]
        %v2226 = vld [vmem:[%s2223 + $0x8] sm:$0xf]
        %v2227 = vld [vmem:[%s2223 + $0xc] sm:$0xf]
        %v2232 = vunpack.c.l.b16 %v2224
        %v2233 = vunpack.c.l.b16 %v2225
        %v2234 = vunpack.c.l.b16 %v2226
        %v2235 = vunpack.c.l.b16 %v2227
        %v2236 = vpack.c.b16 %v2233, %v2232
        %v2237 = vpack.c.b16 %v2235, %v2234
        %v2241 = vsel %vm1953, %v2222, 0
        %2243 = vmatprep.subr.bf16.mxu0 0
        %2244 = vmatpush1.bf16.msra.mxu0 %v2236
        %2245 = vmatprep.subr.bf16.mxu0 0
        %2246 = vmatpush1.bf16.msra.mxu0 %v2237
        %2247 = vmatprep.subr.bf16.mxu0 0
        %2248 = vmatpush1.bf16.msra.mxu0 0
        %2249 = vmatprep.subr.bf16.mxu0 0
        %2250 = vmatpush1.bf16.msra.mxu0 0
        %2251 = vmatprep.subr.bf16.mxu0 0
        %2252 = vmatpush1.bf16.msra.mxu0 0
        %2253 = vmatprep.subr.bf16.mxu0 0
        %2254 = vmatpush1.bf16.msra.mxu0 0
        %2255 = vmatprep.subr.bf16.mxu0 0
        %2256 = vmatpush1.bf16.msra.mxu0 0
        %2257 = vmatprep.subr.bf16.mxu0 0
        %2258 = vmatpush1.bf16.msra.mxu0 0
        %2259 = vmatprep.subr.bf16.mxu0 0
        %2260 = vmatpush1.bf16.msra.mxu0 0
        %2261 = vmatprep.subr.bf16.mxu0 0
        %2262 = vmatpush1.bf16.msra.mxu0 0
        %2263 = vmatprep.subr.bf16.mxu0 0
        %2264 = vmatpush1.bf16.msra.mxu0 0
        %2265 = vmatprep.subr.bf16.mxu0 0
        %2266 = vmatpush1.bf16.msra.mxu0 0
        %2267 = vmatprep.subr.bf16.mxu0 0
        %2268 = vmatpush1.bf16.msra.mxu0 0
        %2269 = vmatprep.subr.bf16.mxu0 0
        %2270 = vmatpush1.bf16.msra.mxu0 0
        %2271 = vmatprep.subr.bf16.mxu0 0
        %2272 = vmatpush1.bf16.msra.mxu0 0
        %2273 = vmatprep.subr.bf16.mxu0 0
        %2274 = vmatpush1.bf16.msra.mxu0 0
        %2275 = vmatprep.mubr.bf16.mxu0 0
        %2276 = vmatmul.mubr.bf16.gmra.mrb[0].mxu0 %v2241
        %v2277 = vpop.f32.mrb[0].mxu0
        %v2278 = vadd.f32 0.0, %v2277
        %v2279 = vpop.f32.mrb[0].mxu0
        %v2280 = vpop.f32.mrb[0].mxu0
        %v2281 = vadd.f32 0.0, %v2280
        %v2282 = vpop.f32.mrb[0].mxu0
        %2283 = vdwg.mxu0
        %v2284 = vadd.f32 %v2168, %v2278
        %v2285 = vadd.f32 %v2169, %v2281
        %s2286 = scalar_lea.vmem %s4, 32
        %v2287 = vld [vmem:[%s2286] sm:$0xf]
        %v2288 = vld [vmem:[%s2286 + $0x4] sm:$0xf]
        %v2291 = vunpack.c.l.b16 %v2287
        %v2292 = vunpack.c.l.b16 %v2288
        %v2293 = vpack.c.b16 %v2292, %v2291
        %v2295 = vsel %vm1829, %v2293, 0
        %2297 = vmatprep.subr.bf16.mxu0 0
        %2298 = vmatpush1.bf16.msra.mxu0 %v1815
        %2299 = vmatprep.subr.bf16.mxu0 0
        %2300 = vmatpush1.bf16.msra.mxu0 %v1816
        %2301 = vmatprep.subr.bf16.mxu0 0
        %2302 = vmatpush1.bf16.msra.mxu0 %v1817
        %2303 = vmatprep.subr.bf16.mxu0 0
        %2304 = vmatpush1.bf16.msra.mxu0 %v1818
        %2305 = vmatprep.subr.bf16.mxu0 0
        %2306 = vmatpush1.bf16.msra.mxu0 %v1819
        %2307 = vmatprep.subr.bf16.mxu0 0
        %2308 = vmatpush1.bf16.msra.mxu0 %v1820
        %2309 = vmatprep.subr.bf16.mxu0 0
        %2310 = vmatpush1.bf16.msra.mxu0 %v1835
        %2311 = vmatprep.subr.bf16.mxu0 0
        %2312 = vmatpush1.bf16.msra.mxu0 0
        %2313 = vmatprep.subr.bf16.mxu0 0
        %2314 = vmatpush1.bf16.msra.mxu0 0
        %2315 = vmatprep.subr.bf16.mxu0 0
        %2316 = vmatpush1.bf16.msra.mxu0 0
        %2317 = vmatprep.subr.bf16.mxu0 0
        %2318 = vmatpush1.bf16.msra.mxu0 0
        %2319 = vmatprep.subr.bf16.mxu0 0
        %2320 = vmatpush1.bf16.msra.mxu0 0
        %2321 = vmatprep.subr.bf16.mxu0 0
        %2322 = vmatpush1.bf16.msra.mxu0 0
        %2323 = vmatprep.subr.bf16.mxu0 0
        %2324 = vmatpush1.bf16.msra.mxu0 0
        %2325 = vmatprep.subr.bf16.mxu0 0
        %2326 = vmatpush1.bf16.msra.mxu0 0
        %2327 = vmatprep.subr.bf16.mxu0 0
        %2328 = vmatpush1.bf16.msra.mxu0 0
        %2329 = vmatprep.mubr.bf16.mxu0 0
        %2330 = vmatmul.mubr.bf16.gmra.mrb[0].mxu0 %v2295
        %v2331 = vpop.f32.mrb[0].mxu0
        %v2332 = vadd.f32 0.0, %v2331
        %v2333 = vpop.f32.mrb[0].mxu0
        %v2334 = vpop.f32.mrb[0].mxu0
        %v2335 = vadd.f32 0.0, %v2334
        %v2336 = vpop.f32.mrb[0].mxu0
        %2337 = vdwg.mxu0
        %v2338 = vpack.c.bf16 %v2335, %v2332
        %s2339 = scalar_lea.vmem %s5, 64
        %v2340 = vld [vmem:[%s2339] sm:$0xf]
        %v2341 = vld [vmem:[%s2339 + $0x4] sm:$0xf]
        %v2342 = vld [vmem:[%s2339 + $0x8] sm:$0xf]
        %v2343 = vld [vmem:[%s2339 + $0xc] sm:$0xf]
        %v2348 = vunpack.c.l.b16 %v2340
        %v2349 = vunpack.c.l.b16 %v2341
        %v2350 = vunpack.c.l.b16 %v2342
        %v2351 = vunpack.c.l.b16 %v2343
        %v2352 = vpack.c.b16 %v2349, %v2348
        %v2353 = vpack.c.b16 %v2351, %v2350
        %v2357 = vsel %vm1953, %v2338, 0
        %2359 = vmatprep.subr.bf16.mxu0 0
        %2360 = vmatpush1.bf16.msra.mxu0 %v2352
        %2361 = vmatprep.subr.bf16.mxu0 0
        %2362 = vmatpush1.bf16.msra.mxu0 %v2353
        %2363 = vmatprep.subr.bf16.mxu0 0
        %2364 = vmatpush1.bf16.msra.mxu0 0
        %2365 = vmatprep.subr.bf16.mxu0 0
        %2366 = vmatpush1.bf16.msra.mxu0 0
        %2367 = vmatprep.subr.bf16.mxu0 0
        %2368 = vmatpush1.bf16.msra.mxu0 0
        %2369 = vmatprep.subr.bf16.mxu0 0
        %2370 = vmatpush1.bf16.msra.mxu0 0
        %2371 = vmatprep.subr.bf16.mxu0 0
        %2372 = vmatpush1.bf16.msra.mxu0 0
        %2373 = vmatprep.subr.bf16.mxu0 0
        %2374 = vmatpush1.bf16.msra.mxu0 0
        %2375 = vmatprep.subr.bf16.mxu0 0
        %2376 = vmatpush1.bf16.msra.mxu0 0
        %2377 = vmatprep.subr.bf16.mxu0 0
        %2378 = vmatpush1.bf16.msra.mxu0 0
        %2379 = vmatprep.subr.bf16.mxu0 0
        %2380 = vmatpush1.bf16.msra.mxu0 0
        %2381 = vmatprep.subr.bf16.mxu0 0
        %2382 = vmatpush1.bf16.msra.mxu0 0
        %2383 = vmatprep.subr.bf16.mxu0 0
        %2384 = vmatpush1.bf16.msra.mxu0 0
        %2385 = vmatprep.subr.bf16.mxu0 0
        %2386 = vmatpush1.bf16.msra.mxu0 0
        %2387 = vmatprep.subr.bf16.mxu0 0
        %2388 = vmatpush1.bf16.msra.mxu0 0
        %2389 = vmatprep.subr.bf16.mxu0 0
        %2390 = vmatpush1.bf16.msra.mxu0 0
        %2391 = vmatprep.mubr.bf16.mxu0 0
        %2392 = vmatmul.mubr.bf16.gmra.mrb[0].mxu0 %v2357
        %v2393 = vpop.f32.mrb[0].mxu0
        %v2394 = vadd.f32 0.0, %v2393
        %v2395 = vpop.f32.mrb[0].mxu0
        %v2396 = vpop.f32.mrb[0].mxu0
        %v2397 = vadd.f32 0.0, %v2396
        %v2398 = vpop.f32.mrb[0].mxu0
        %2399 = vdwg.mxu0
        %v2400 = vadd.f32 %v2284, %v2394
        %v2401 = vadd.f32 %v2285, %v2397
        %s2402 = scalar_lea.vmem %s4, 40
        %v2403 = vld [vmem:[%s2402] sm:$0xf]
        %v2404 = vld [vmem:[%s2402 + $0x4] sm:$0xf]
        %v2407 = vunpack.c.l.b16 %v2403
        %v2408 = vunpack.c.l.b16 %v2404
        %v2409 = vpack.c.b16 %v2408, %v2407
        %v2411 = vsel %vm1829, %v2409, 0
        %2413 = vmatprep.subr.bf16.mxu0 0
        %2414 = vmatpush1.bf16.msra.mxu0 %v1815
        %2415 = vmatprep.subr.bf16.mxu0 0
        %2416 = vmatpush1.bf16.msra.mxu0 %v1816
        %2417 = vmatprep.subr.bf16.mxu0 0
        %2418 = vmatpush1.bf16.msra.mxu0 %v1817
        %2419 = vmatprep.subr.bf16.mxu0 0
        %2420 = vmatpush1.bf16.msra.mxu0 %v1818
        %2421 = vmatprep.subr.bf16.mxu0 0
        %2422 = vmatpush1.bf16.msra.mxu0 %v1819
        %2423 = vmatprep.subr.bf16.mxu0 0
        %2424 = vmatpush1.bf16.msra.mxu0 %v1820
        %2425 = vmatprep.subr.bf16.mxu0 0
        %2426 = vmatpush1.bf16.msra.mxu0 %v1835
        %2427 = vmatprep.subr.bf16.mxu0 0
        %2428 = vmatpush1.bf16.msra.mxu0 0
        %2429 = vmatprep.subr.bf16.mxu0 0
        %2430 = vmatpush1.bf16.msra.mxu0 0
        %2431 = vmatprep.subr.bf16.mxu0 0
        %2432 = vmatpush1.bf16.msra.mxu0 0
        %2433 = vmatprep.subr.bf16.mxu0 0
        %2434 = vmatpush1.bf16.msra.mxu0 0
        %2435 = vmatprep.subr.bf16.mxu0 0
        %2436 = vmatpush1.bf16.msra.mxu0 0
        %2437 = vmatprep.subr.bf16.mxu0 0
        %2438 = vmatpush1.bf16.msra.mxu0 0
        %2439 = vmatprep.subr.bf16.mxu0 0
        %2440 = vmatpush1.bf16.msra.mxu0 0
        %2441 = vmatprep.subr.bf16.mxu0 0
        %2442 = vmatpush1.bf16.msra.mxu0 0
        %2443 = vmatprep.subr.bf16.mxu0 0
        %2444 = vmatpush1.bf16.msra.mxu0 0
        %2445 = vmatprep.mubr.bf16.mxu0 0
        %2446 = vmatmul.mubr.bf16.gmra.mrb[0].mxu0 %v2411
        %v2447 = vpop.f32.mrb[0].mxu0
        %v2448 = vadd.f32 0.0, %v2447
        %v2449 = vpop.f32.mrb[0].mxu0
        %v2450 = vpop.f32.mrb[0].mxu0
        %v2451 = vadd.f32 0.0, %v2450
        %v2452 = vpop.f32.mrb[0].mxu0
        %2453 = vdwg.mxu0
        %v2454 = vpack.c.bf16 %v2451, %v2448
        %s2455 = scalar_lea.vmem %s5, 80
        %v2456 = vld [vmem:[%s2455] sm:$0xf]
        %v2457 = vld [vmem:[%s2455 + $0x4] sm:$0xf]
        %v2458 = vld [vmem:[%s2455 + $0x8] sm:$0xf]
        %v2459 = vld [vmem:[%s2455 + $0xc] sm:$0xf]
        %v2464 = vunpack.c.l.b16 %v2456
        %v2465 = vunpack.c.l.b16 %v2457
        %v2466 = vunpack.c.l.b16 %v2458
        %v2467 = vunpack.c.l.b16 %v2459
        %v2468 = vpack.c.b16 %v2465, %v2464
        %v2469 = vpack.c.b16 %v2467, %v2466
        %v2473 = vsel %vm1953, %v2454, 0
        %2475 = vmatprep.subr.bf16.mxu0 0
        %2476 = vmatpush1.bf16.msra.mxu0 %v2468
        %2477 = vmatprep.subr.bf16.mxu0 0
        %2478 = vmatpush1.bf16.msra.mxu0 %v2469
        %2479 = vmatprep.subr.bf16.mxu0 0
        %2480 = vmatpush1.bf16.msra.mxu0 0
        %2481 = vmatprep.subr.bf16.mxu0 0
        %2482 = vmatpush1.bf16.msra.mxu0 0
        %2483 = vmatprep.subr.bf16.mxu0 0
        %2484 = vmatpush1.bf16.msra.mxu0 0
        %2485 = vmatprep.subr.bf16.mxu0 0
        %2486 = vmatpush1.bf16.msra.mxu0 0
        %2487 = vmatprep.subr.bf16.mxu0 0
        %2488 = vmatpush1.bf16.msra.mxu0 0
        %2489 = vmatprep.subr.bf16.mxu0 0
        %2490 = vmatpush1.bf16.msra.mxu0 0
        %2491 = vmatprep.subr.bf16.mxu0 0
        %2492 = vmatpush1.bf16.msra.mxu0 0
        %2493 = vmatprep.subr.bf16.mxu0 0
        %2494 = vmatpush1.bf16.msra.mxu0 0
        %2495 = vmatprep.subr.bf16.mxu0 0
        %2496 = vmatpush1.bf16.msra.mxu0 0
        %2497 = vmatprep.subr.bf16.mxu0 0
        %2498 = vmatpush1.bf16.msra.mxu0 0
        %2499 = vmatprep.subr.bf16.mxu0 0
        %2500 = vmatpush1.bf16.msra.mxu0 0
        %2501 = vmatprep.subr.bf16.mxu0 0
        %2502 = vmatpush1.bf16.msra.mxu0 0
        %2503 = vmatprep.subr.bf16.mxu0 0
        %2504 = vmatpush1.bf16.msra.mxu0 0
        %2505 = vmatprep.subr.bf16.mxu0 0
        %2506 = vmatpush1.bf16.msra.mxu0 0
        %2507 = vmatprep.mubr.bf16.mxu0 0
        %2508 = vmatmul.mubr.bf16.gmra.mrb[0].mxu0 %v2473
        %v2509 = vpop.f32.mrb[0].mxu0
        %v2510 = vadd.f32 0.0, %v2509
        %v2511 = vpop.f32.mrb[0].mxu0
        %v2512 = vpop.f32.mrb[0].mxu0
        %v2513 = vadd.f32 0.0, %v2512
        %v2514 = vpop.f32.mrb[0].mxu0
        %2515 = vdwg.mxu0
        %v2516 = vadd.f32 %v2400, %v2510
        %v2517 = vadd.f32 %v2401, %v2513
        %s2518 = scalar_lea.vmem %s4, 48
        %v2519 = vld [vmem:[%s2518] sm:$0xf]
        %v2520 = vld [vmem:[%s2518 + $0x4] sm:$0xf]
        %v2523 = vunpack.c.l.b16 %v2519
        %v2524 = vunpack.c.l.b16 %v2520
        %v2525 = vpack.c.b16 %v2524, %v2523
        %v2527 = vsel %vm1829, %v2525, 0
        %2529 = vmatprep.subr.bf16.mxu0 0
        %2530 = vmatpush1.bf16.msra.mxu0 %v1815
        %2531 = vmatprep.subr.bf16.mxu0 0
        %2532 = vmatpush1.bf16.msra.mxu0 %v1816
        %2533 = vmatprep.subr.bf16.mxu0 0
        %2534 = vmatpush1.bf16.msra.mxu0 %v1817
        %2535 = vmatprep.subr.bf16.mxu0 0
        %2536 = vmatpush1.bf16.msra.mxu0 %v1818
        %2537 = vmatprep.subr.bf16.mxu0 0
        %2538 = vmatpush1.bf16.msra.mxu0 %v1819
        %2539 = vmatprep.subr.bf16.mxu0 0
        %2540 = vmatpush1.bf16.msra.mxu0 %v1820
        %2541 = vmatprep.subr.bf16.mxu0 0
        %2542 = vmatpush1.bf16.msra.mxu0 %v1835
        %2543 = vmatprep.subr.bf16.mxu0 0
        %2544 = vmatpush1.bf16.msra.mxu0 0
        %2545 = vmatprep.subr.bf16.mxu0 0
        %2546 = vmatpush1.bf16.msra.mxu0 0
        %2547 = vmatprep.subr.bf16.mxu0 0
        %2548 = vmatpush1.bf16.msra.mxu0 0
        %2549 = vmatprep.subr.bf16.mxu0 0
        %2550 = vmatpush1.bf16.msra.mxu0 0
        %2551 = vmatprep.subr.bf16.mxu0 0
        %2552 = vmatpush1.bf16.msra.mxu0 0
        %2553 = vmatprep.subr.bf16.mxu0 0
        %2554 = vmatpush1.bf16.msra.mxu0 0
        %2555 = vmatprep.subr.bf16.mxu0 0
        %2556 = vmatpush1.bf16.msra.mxu0 0
        %2557 = vmatprep.subr.bf16.mxu0 0
        %2558 = vmatpush1.bf16.msra.mxu0 0
        %2559 = vmatprep.subr.bf16.mxu0 0
        %2560 = vmatpush1.bf16.msra.mxu0 0
        %2561 = vmatprep.mubr.bf16.mxu0 0
        %2562 = vmatmul.mubr.bf16.gmra.mrb[0].mxu0 %v2527
        %v2563 = vpop.f32.mrb[0].mxu0
        %v2564 = vadd.f32 0.0, %v2563
        %v2565 = vpop.f32.mrb[0].mxu0
        %v2566 = vpop.f32.mrb[0].mxu0
        %v2567 = vadd.f32 0.0, %v2566
        %v2568 = vpop.f32.mrb[0].mxu0
        %2569 = vdwg.mxu0
        %v2570 = vpack.c.bf16 %v2567, %v2564
        %s2571 = scalar_lea.vmem %s5, 96
        %v2572 = vld [vmem:[%s2571] sm:$0xf]
        %v2573 = vld [vmem:[%s2571 + $0x4] sm:$0xf]
        %v2574 = vld [vmem:[%s2571 + $0x8] sm:$0xf]
        %v2575 = vld [vmem:[%s2571 + $0xc] sm:$0xf]
        %v2580 = vunpack.c.l.b16 %v2572
        %v2581 = vunpack.c.l.b16 %v2573
        %v2582 = vunpack.c.l.b16 %v2574
        %v2583 = vunpack.c.l.b16 %v2575
        %v2584 = vpack.c.b16 %v2581, %v2580
        %v2585 = vpack.c.b16 %v2583, %v2582
        %v2589 = vsel %vm1953, %v2570, 0
        %2591 = vmatprep.subr.bf16.mxu0 0
        %2592 = vmatpush1.bf16.msra.mxu0 %v2584
        %2593 = vmatprep.subr.bf16.mxu0 0
        %2594 = vmatpush1.bf16.msra.mxu0 %v2585
        %2595 = vmatprep.subr.bf16.mxu0 0
        %2596 = vmatpush1.bf16.msra.mxu0 0
        %2597 = vmatprep.subr.bf16.mxu0 0
        %2598 = vmatpush1.bf16.msra.mxu0 0
        %2599 = vmatprep.subr.bf16.mxu0 0
        %2600 = vmatpush1.bf16.msra.mxu0 0
        %2601 = vmatprep.subr.bf16.mxu0 0
        %2602 = vmatpush1.bf16.msra.mxu0 0
        %2603 = vmatprep.subr.bf16.mxu0 0
        %2604 = vmatpush1.bf16.msra.mxu0 0
        %2605 = vmatprep.subr.bf16.mxu0 0
        %2606 = vmatpush1.bf16.msra.mxu0 0
        %2607 = vmatprep.subr.bf16.mxu0 0
        %2608 = vmatpush1.bf16.msra.mxu0 0
        %2609 = vmatprep.subr.bf16.mxu0 0
        %2610 = vmatpush1.bf16.msra.mxu0 0
        %2611 = vmatprep.subr.bf16.mxu0 0
        %2612 = vmatpush1.bf16.msra.mxu0 0
        %2613 = vmatprep.subr.bf16.mxu0 0
        %2614 = vmatpush1.bf16.msra.mxu0 0
        %2615 = vmatprep.subr.bf16.mxu0 0
        %2616 = vmatpush1.bf16.msra.mxu0 0
        %2617 = vmatprep.subr.bf16.mxu0 0
        %2618 = vmatpush1.bf16.msra.mxu0 0
        %2619 = vmatprep.subr.bf16.mxu0 0
        %2620 = vmatpush1.bf16.msra.mxu0 0
        %2621 = vmatprep.subr.bf16.mxu0 0
        %2622 = vmatpush1.bf16.msra.mxu0 0
        %2623 = vmatprep.mubr.bf16.mxu0 0
        %2624 = vmatmul.mubr.bf16.gmra.mrb[0].mxu0 %v2589
        %v2625 = vpop.f32.mrb[0].mxu0
        %v2626 = vadd.f32 0.0, %v2625
        %v2627 = vpop.f32.mrb[0].mxu0
        %v2628 = vpop.f32.mrb[0].mxu0
        %v2629 = vadd.f32 0.0, %v2628
        %v2630 = vpop.f32.mrb[0].mxu0
        %2631 = vdwg.mxu0
        %v2632 = vadd.f32 %v2516, %v2626
        %v2633 = vadd.f32 %v2517, %v2629
        %s2634 = scalar_lea.vmem %s4, 56
        %v2635 = vld [vmem:[%s2634] sm:$0xf]
        %v2636 = vld [vmem:[%s2634 + $0x4] sm:$0xf]
        %v2639 = vunpack.c.l.b16 %v2635
        %v2640 = vunpack.c.l.b16 %v2636
        %v2641 = vpack.c.b16 %v2640, %v2639
        %v2643 = vsel %vm1829, %v2641, 0
        %2645 = vmatprep.subr.bf16.mxu0 0
        %2646 = vmatpush1.bf16.msra.mxu0 %v1815
        %2647 = vmatprep.subr.bf16.mxu0 0
        %2648 = vmatpush1.bf16.msra.mxu0 %v1816
        %2649 = vmatprep.subr.bf16.mxu0 0
        %2650 = vmatpush1.bf16.msra.mxu0 %v1817
        %2651 = vmatprep.subr.bf16.mxu0 0
        %2652 = vmatpush1.bf16.msra.mxu0 %v1818
        %2653 = vmatprep.subr.bf16.mxu0 0
        %2654 = vmatpush1.bf16.msra.mxu0 %v1819
        %2655 = vmatprep.subr.bf16.mxu0 0
        %2656 = vmatpush1.bf16.msra.mxu0 %v1820
        %2657 = vmatprep.subr.bf16.mxu0 0
        %2658 = vmatpush1.bf16.msra.mxu0 %v1835
        %2659 = vmatprep.subr.bf16.mxu0 0
        %2660 = vmatpush1.bf16.msra.mxu0 0
        %2661 = vmatprep.subr.bf16.mxu0 0
        %2662 = vmatpush1.bf16.msra.mxu0 0
        %2663 = vmatprep.subr.bf16.mxu0 0
        %2664 = vmatpush1.bf16.msra.mxu0 0
        %2665 = vmatprep.subr.bf16.mxu0 0
        %2666 = vmatpush1.bf16.msra.mxu0 0
        %2667 = vmatprep.subr.bf16.mxu0 0
        %2668 = vmatpush1.bf16.msra.mxu0 0
        %2669 = vmatprep.subr.bf16.mxu0 0
        %2670 = vmatpush1.bf16.msra.mxu0 0
        %2671 = vmatprep.subr.bf16.mxu0 0
        %2672 = vmatpush1.bf16.msra.mxu0 0
        %2673 = vmatprep.subr.bf16.mxu0 0
        %2674 = vmatpush1.bf16.msra.mxu0 0
        %2675 = vmatprep.subr.bf16.mxu0 0
        %2676 = vmatpush1.bf16.msra.mxu0 0
        %2677 = vmatprep.mubr.bf16.mxu0 0
        %2678 = vmatmul.mubr.bf16.gmra.mrb[0].mxu0 %v2643
        %v2679 = vpop.f32.mrb[0].mxu0
        %v2680 = vadd.f32 0.0, %v2679
        %v2681 = vpop.f32.mrb[0].mxu0
        %v2682 = vpop.f32.mrb[0].mxu0
        %v2683 = vadd.f32 0.0, %v2682
        %v2684 = vpop.f32.mrb[0].mxu0
        %2685 = vdwg.mxu0
        %v2686 = vpack.c.bf16 %v2683, %v2680
        %s2687 = scalar_lea.vmem %s5, 112
        %v2688 = vld [vmem:[%s2687] sm:$0xf]
        %v2689 = vld [vmem:[%s2687 + $0x4] sm:$0xf]
        %v2690 = vld [vmem:[%s2687 + $0x8] sm:$0xf]
        %v2691 = vld [vmem:[%s2687 + $0xc] sm:$0xf]
        %v2696 = vunpack.c.l.b16 %v2688
        %v2697 = vunpack.c.l.b16 %v2689
        %v2698 = vunpack.c.l.b16 %v2690
        %v2699 = vunpack.c.l.b16 %v2691
        %v2700 = vpack.c.b16 %v2697, %v2696
        %v2701 = vpack.c.b16 %v2699, %v2698
        %v2705 = vsel %vm1953, %v2686, 0
        %2707 = vmatprep.subr.bf16.mxu0 0
        %2708 = vmatpush1.bf16.msra.mxu0 %v2700
        %2709 = vmatprep.subr.bf16.mxu0 0
        %2710 = vmatpush1.bf16.msra.mxu0 %v2701
        %2711 = vmatprep.subr.bf16.mxu0 0
        %2712 = vmatpush1.bf16.msra.mxu0 0
        %2713 = vmatprep.subr.bf16.mxu0 0
        %2714 = vmatpush1.bf16.msra.mxu0 0
        %2715 = vmatprep.subr.bf16.mxu0 0
        %2716 = vmatpush1.bf16.msra.mxu0 0
        %2717 = vmatprep.subr.bf16.mxu0 0
        %2718 = vmatpush1.bf16.msra.mxu0 0
        %2719 = vmatprep.subr.bf16.mxu0 0
        %2720 = vmatpush1.bf16.msra.mxu0 0
        %2721 = vmatprep.subr.bf16.mxu0 0
        %2722 = vmatpush1.bf16.msra.mxu0 0
        %2723 = vmatprep.subr.bf16.mxu0 0
        %2724 = vmatpush1.bf16.msra.mxu0 0
        %2725 = vmatprep.subr.bf16.mxu0 0
        %2726 = vmatpush1.bf16.msra.mxu0 0
        %2727 = vmatprep.subr.bf16.mxu0 0
        %2728 = vmatpush1.bf16.msra.mxu0 0
        %2729 = vmatprep.subr.bf16.mxu0 0
        %2730 = vmatpush1.bf16.msra.mxu0 0
        %2731 = vmatprep.subr.bf16.mxu0 0
        %2732 = vmatpush1.bf16.msra.mxu0 0
        %2733 = vmatprep.subr.bf16.mxu0 0
        %2734 = vmatpush1.bf16.msra.mxu0 0
        %2735 = vmatprep.subr.bf16.mxu0 0
        %2736 = vmatpush1.bf16.msra.mxu0 0
        %2737 = vmatprep.subr.bf16.mxu0 0
        %2738 = vmatpush1.bf16.msra.mxu0 0
        %2739 = vmatprep.mubr.bf16.mxu0 0
        %2740 = vmatmul.mubr.bf16.gmra.mrb[0].mxu0 %v2705
        %v2741 = vpop.f32.mrb[0].mxu0
        %v2742 = vadd.f32 0.0, %v2741
        %v2743 = vpop.f32.mrb[0].mxu0
        %v2744 = vpop.f32.mrb[0].mxu0
        %v2745 = vadd.f32 0.0, %v2744
        %v2746 = vpop.f32.mrb[0].mxu0
        %2747 = vdwg.mxu0
        %v2748 = vadd.f32 %v2632, %v2742
        %v2749 = vadd.f32 %v2633, %v2745
        %s2750 = scalar_lea.vmem %s4, 64
        %v2751 = vld [vmem:[%s2750] sm:$0xf]
        %v2752 = vld [vmem:[%s2750 + $0x4] sm:$0xf]
        %v2755 = vunpack.c.l.b16 %v2751
        %v2756 = vunpack.c.l.b16 %v2752
        %v2757 = vpack.c.b16 %v2756, %v2755
        %v2759 = vsel %vm1829, %v2757, 0
        %2761 = vmatprep.subr.bf16.mxu0 0
        %2762 = vmatpush1.bf16.msra.mxu0 %v1815
        %2763 = vmatprep.subr.bf16.mxu0 0
        %2764 = vmatpush1.bf16.msra.mxu0 %v1816
        %2765 = vmatprep.subr.bf16.mxu0 0
        %2766 = vmatpush1.bf16.msra.mxu0 %v1817
        %2767 = vmatprep.subr.bf16.mxu0 0
        %2768 = vmatpush1.bf16.msra.mxu0 %v1818
        %2769 = vmatprep.subr.bf16.mxu0 0
        %2770 = vmatpush1.bf16.msra.mxu0 %v1819
        %2771 = vmatprep.subr.bf16.mxu0 0
        %2772 = vmatpush1.bf16.msra.mxu0 %v1820
        %2773 = vmatprep.subr.bf16.mxu0 0
        %2774 = vmatpush1.bf16.msra.mxu0 %v1835
        %2775 = vmatprep.subr.bf16.mxu0 0
        %2776 = vmatpush1.bf16.msra.mxu0 0
        %2777 = vmatprep.subr.bf16.mxu0 0
        %2778 = vmatpush1.bf16.msra.mxu0 0
        %2779 = vmatprep.subr.bf16.mxu0 0
        %2780 = vmatpush1.bf16.msra.mxu0 0
        %2781 = vmatprep.subr.bf16.mxu0 0
        %2782 = vmatpush1.bf16.msra.mxu0 0
        %2783 = vmatprep.subr.bf16.mxu0 0
        %2784 = vmatpush1.bf16.msra.mxu0 0
        %2785 = vmatprep.subr.bf16.mxu0 0
        %2786 = vmatpush1.bf16.msra.mxu0 0
        %2787 = vmatprep.subr.bf16.mxu0 0
        %2788 = vmatpush1.bf16.msra.mxu0 0
        %2789 = vmatprep.subr.bf16.mxu0 0
        %2790 = vmatpush1.bf16.msra.mxu0 0
        %2791 = vmatprep.subr.bf16.mxu0 0
        %2792 = vmatpush1.bf16.msra.mxu0 0
        %2793 = vmatprep.mubr.bf16.mxu0 0
        %2794 = vmatmul.mubr.bf16.gmra.mrb[0].mxu0 %v2759
        %v2795 = vpop.f32.mrb[0].mxu0
        %v2796 = vadd.f32 0.0, %v2795
        %v2797 = vpop.f32.mrb[0].mxu0
        %v2798 = vpop.f32.mrb[0].mxu0
        %v2799 = vadd.f32 0.0, %v2798
        %v2800 = vpop.f32.mrb[0].mxu0
        %2801 = vdwg.mxu0
        %v2802 = vpack.c.bf16 %v2799, %v2796
        %s2803 = scalar_lea.vmem %s5, 128
        %v2804 = vld [vmem:[%s2803] sm:$0xf]
        %v2805 = vld [vmem:[%s2803 + $0x4] sm:$0xf]
        %v2806 = vld [vmem:[%s2803 + $0x8] sm:$0xf]
        %v2807 = vld [vmem:[%s2803 + $0xc] sm:$0xf]
        %v2812 = vunpack.c.l.b16 %v2804
        %v2813 = vunpack.c.l.b16 %v2805
        %v2814 = vunpack.c.l.b16 %v2806
        %v2815 = vunpack.c.l.b16 %v2807
        %v2816 = vpack.c.b16 %v2813, %v2812
        %v2817 = vpack.c.b16 %v2815, %v2814
        %v2821 = vsel %vm1953, %v2802, 0
        %2823 = vmatprep.subr.bf16.mxu0 0
        %2824 = vmatpush1.bf16.msra.mxu0 %v2816
        %2825 = vmatprep.subr.bf16.mxu0 0
        %2826 = vmatpush1.bf16.msra.mxu0 %v2817
        %2827 = vmatprep.subr.bf16.mxu0 0
        %2828 = vmatpush1.bf16.msra.mxu0 0
        %2829 = vmatprep.subr.bf16.mxu0 0
        %2830 = vmatpush1.bf16.msra.mxu0 0
        %2831 = vmatprep.subr.bf16.mxu0 0
        %2832 = vmatpush1.bf16.msra.mxu0 0
        %2833 = vmatprep.subr.bf16.mxu0 0
        %2834 = vmatpush1.bf16.msra.mxu0 0
        %2835 = vmatprep.subr.bf16.mxu0 0
        %2836 = vmatpush1.bf16.msra.mxu0 0
        %2837 = vmatprep.subr.bf16.mxu0 0
        %2838 = vmatpush1.bf16.msra.mxu0 0
        %2839 = vmatprep.subr.bf16.mxu0 0
        %2840 = vmatpush1.bf16.msra.mxu0 0
        %2841 = vmatprep.subr.bf16.mxu0 0
        %2842 = vmatpush1.bf16.msra.mxu0 0
        %2843 = vmatprep.subr.bf16.mxu0 0
        %2844 = vmatpush1.bf16.msra.mxu0 0
        %2845 = vmatprep.subr.bf16.mxu0 0
        %2846 = vmatpush1.bf16.msra.mxu0 0
        %2847 = vmatprep.subr.bf16.mxu0 0
        %2848 = vmatpush1.bf16.msra.mxu0 0
        %2849 = vmatprep.subr.bf16.mxu0 0
        %2850 = vmatpush1.bf16.msra.mxu0 0
        %2851 = vmatprep.subr.bf16.mxu0 0
        %2852 = vmatpush1.bf16.msra.mxu0 0
        %2853 = vmatprep.subr.bf16.mxu0 0
        %2854 = vmatpush1.bf16.msra.mxu0 0
        %2855 = vmatprep.mubr.bf16.mxu0 0
        %2856 = vmatmul.mubr.bf16.gmra.mrb[0].mxu0 %v2821
        %v2857 = vpop.f32.mrb[0].mxu0
        %v2858 = vadd.f32 0.0, %v2857
        %v2859 = vpop.f32.mrb[0].mxu0
        %v2860 = vpop.f32.mrb[0].mxu0
        %v2861 = vadd.f32 0.0, %v2860
        %v2862 = vpop.f32.mrb[0].mxu0
        %2863 = vdwg.mxu0
        %v2864 = vadd.f32 %v2748, %v2858
        %v2865 = vadd.f32 %v2749, %v2861
        %s2866 = scalar_lea.vmem %s4, 72
        %v2867 = vld [vmem:[%s2866] sm:$0xf]
        %v2868 = vld [vmem:[%s2866 + $0x4] sm:$0xf]
        %v2871 = vunpack.c.l.b16 %v2867
        %v2872 = vunpack.c.l.b16 %v2868
        %v2873 = vpack.c.b16 %v2872, %v2871
        %v2875 = vsel %vm1829, %v2873, 0
        %2877 = vmatprep.subr.bf16.mxu0 0
        %2878 = vmatpush1.bf16.msra.mxu0 %v1815
        %2879 = vmatprep.subr.bf16.mxu0 0
        %2880 = vmatpush1.bf16.msra.mxu0 %v1816
        %2881 = vmatprep.subr.bf16.mxu0 0
        %2882 = vmatpush1.bf16.msra.mxu0 %v1817
        %2883 = vmatprep.subr.bf16.mxu0 0
        %2884 = vmatpush1.bf16.msra.mxu0 %v1818
        %2885 = vmatprep.subr.bf16.mxu0 0
        %2886 = vmatpush1.bf16.msra.mxu0 %v1819
        %2887 = vmatprep.subr.bf16.mxu0 0
        %2888 = vmatpush1.bf16.msra.mxu0 %v1820
        %2889 = vmatprep.subr.bf16.mxu0 0
        %2890 = vmatpush1.bf16.msra.mxu0 %v1835
        %2891 = vmatprep.subr.bf16.mxu0 0
        %2892 = vmatpush1.bf16.msra.mxu0 0
        %2893 = vmatprep.subr.bf16.mxu0 0
        %2894 = vmatpush1.bf16.msra.mxu0 0
        %2895 = vmatprep.subr.bf16.mxu0 0
        %2896 = vmatpush1.bf16.msra.mxu0 0
        %2897 = vmatprep.subr.bf16.mxu0 0
        %2898 = vmatpush1.bf16.msra.mxu0 0
        %2899 = vmatprep.subr.bf16.mxu0 0
        %2900 = vmatpush1.bf16.msra.mxu0 0
        %2901 = vmatprep.subr.bf16.mxu0 0
        %2902 = vmatpush1.bf16.msra.mxu0 0
        %2903 = vmatprep.subr.bf16.mxu0 0
        %2904 = vmatpush1.bf16.msra.mxu0 0
        %2905 = vmatprep.subr.bf16.mxu0 0
        %2906 = vmatpush1.bf16.msra.mxu0 0
        %2907 = vmatprep.subr.bf16.mxu0 0
        %2908 = vmatpush1.bf16.msra.mxu0 0
        %2909 = vmatprep.mubr.bf16.mxu0 0
        %2910 = vmatmul.mubr.bf16.gmra.mrb[0].mxu0 %v2875
        %v2911 = vpop.f32.mrb[0].mxu0
        %v2912 = vadd.f32 0.0, %v2911
        %v2913 = vpop.f32.mrb[0].mxu0
        %v2914 = vpop.f32.mrb[0].mxu0
        %v2915 = vadd.f32 0.0, %v2914
        %v2916 = vpop.f32.mrb[0].mxu0
        %2917 = vdwg.mxu0
        %v2918 = vpack.c.bf16 %v2915, %v2912
        %s2919 = scalar_lea.vmem %s5, 144
        %v2920 = vld [vmem:[%s2919] sm:$0xf]
        %v2921 = vld [vmem:[%s2919 + $0x4] sm:$0xf]
        %v2922 = vld [vmem:[%s2919 + $0x8] sm:$0xf]
        %v2923 = vld [vmem:[%s2919 + $0xc] sm:$0xf]
        %v2928 = vunpack.c.l.b16 %v2920
        %v2929 = vunpack.c.l.b16 %v2921
        %v2930 = vunpack.c.l.b16 %v2922
        %v2931 = vunpack.c.l.b16 %v2923
        %v2932 = vpack.c.b16 %v2929, %v2928
        %v2933 = vpack.c.b16 %v2931, %v2930
        %v2937 = vsel %vm1953, %v2918, 0
        %2939 = vmatprep.subr.bf16.mxu0 0
        %2940 = vmatpush1.bf16.msra.mxu0 %v2932
        %2941 = vmatprep.subr.bf16.mxu0 0
        %2942 = vmatpush1.bf16.msra.mxu0 %v2933
        %2943 = vmatprep.subr.bf16.mxu0 0
        %2944 = vmatpush1.bf16.msra.mxu0 0
        %2945 = vmatprep.subr.bf16.mxu0 0
        %2946 = vmatpush1.bf16.msra.mxu0 0
        %2947 = vmatprep.subr.bf16.mxu0 0
        %2948 = vmatpush1.bf16.msra.mxu0 0
        %2949 = vmatprep.subr.bf16.mxu0 0
        %2950 = vmatpush1.bf16.msra.mxu0 0
        %2951 = vmatprep.subr.bf16.mxu0 0
        %2952 = vmatpush1.bf16.msra.mxu0 0
        %2953 = vmatprep.subr.bf16.mxu0 0
        %2954 = vmatpush1.bf16.msra.mxu0 0
        %2955 = vmatprep.subr.bf16.mxu0 0
        %2956 = vmatpush1.bf16.msra.mxu0 0
        %2957 = vmatprep.subr.bf16.mxu0 0
        %2958 = vmatpush1.bf16.msra.mxu0 0
        %2959 = vmatprep.subr.bf16.mxu0 0
        %2960 = vmatpush1.bf16.msra.mxu0 0
        %2961 = vmatprep.subr.bf16.mxu0 0
        %2962 = vmatpush1.bf16.msra.mxu0 0
        %2963 = vmatprep.subr.bf16.mxu0 0
        %2964 = vmatpush1.bf16.msra.mxu0 0
        %2965 = vmatprep.subr.bf16.mxu0 0
        %2966 = vmatpush1.bf16.msra.mxu0 0
        %2967 = vmatprep.subr.bf16.mxu0 0
        %2968 = vmatpush1.bf16.msra.mxu0 0
        %2969 = vmatprep.subr.bf16.mxu0 0
        %2970 = vmatpush1.bf16.msra.mxu0 0
        %2971 = vmatprep.mubr.bf16.mxu0 0
        %2972 = vmatmul.mubr.bf16.gmra.mrb[0].mxu0 %v2937
        %v2973 = vpop.f32.mrb[0].mxu0
        %v2974 = vadd.f32 0.0, %v2973
        %v2975 = vpop.f32.mrb[0].mxu0
        %v2976 = vpop.f32.mrb[0].mxu0
        %v2977 = vadd.f32 0.0, %v2976
        %v2978 = vpop.f32.mrb[0].mxu0
        %2979 = vdwg.mxu0
        %v2980 = vadd.f32 %v2864, %v2974
        %v2981 = vadd.f32 %v2865, %v2977
        %s2982 = scalar_lea.vmem %s4, 80
        %v2983 = vld [vmem:[%s2982] sm:$0xf]
        %v2984 = vld [vmem:[%s2982 + $0x4] sm:$0xf]
        %v2987 = vunpack.c.l.b16 %v2983
        %v2988 = vunpack.c.l.b16 %v2984
        %v2989 = vpack.c.b16 %v2988, %v2987
        %v2991 = vsel %vm1829, %v2989, 0
        %2993 = vmatprep.subr.bf16.mxu0 0
        %2994 = vmatpush1.bf16.msra.mxu0 %v1815
        %2995 = vmatprep.subr.bf16.mxu0 0
        %2996 = vmatpush1.bf16.msra.mxu0 %v1816
        %2997 = vmatprep.subr.bf16.mxu0 0
        %2998 = vmatpush1.bf16.msra.mxu0 %v1817
        %2999 = vmatprep.subr.bf16.mxu0 0
        %3000 = vmatpush1.bf16.msra.mxu0 %v1818
        %3001 = vmatprep.subr.bf16.mxu0 0
        %3002 = vmatpush1.bf16.msra.mxu0 %v1819
        %3003 = vmatprep.subr.bf16.mxu0 0
        %3004 = vmatpush1.bf16.msra.mxu0 %v1820
        %3005 = vmatprep.subr.bf16.mxu0 0
        %3006 = vmatpush1.bf16.msra.mxu0 %v1835
        %3007 = vmatprep.subr.bf16.mxu0 0
        %3008 = vmatpush1.bf16.msra.mxu0 0
        %3009 = vmatprep.subr.bf16.mxu0 0
        %3010 = vmatpush1.bf16.msra.mxu0 0
        %3011 = vmatprep.subr.bf16.mxu0 0
        %3012 = vmatpush1.bf16.msra.mxu0 0
        %3013 = vmatprep.subr.bf16.mxu0 0
        %3014 = vmatpush1.bf16.msra.mxu0 0
        %3015 = vmatprep.subr.bf16.mxu0 0
        %3016 = vmatpush1.bf16.msra.mxu0 0
        %3017 = vmatprep.subr.bf16.mxu0 0
        %3018 = vmatpush1.bf16.msra.mxu0 0
        %3019 = vmatprep.subr.bf16.mxu0 0
        %3020 = vmatpush1.bf16.msra.mxu0 0
        %3021 = vmatprep.subr.bf16.mxu0 0
        %3022 = vmatpush1.bf16.msra.mxu0 0
        %3023 = vmatprep.subr.bf16.mxu0 0
        %3024 = vmatpush1.bf16.msra.mxu0 0
        %3025 = vmatprep.mubr.bf16.mxu0 0
        %3026 = vmatmul.mubr.bf16.gmra.mrb[0].mxu0 %v2991
        %v3027 = vpop.f32.mrb[0].mxu0
        %v3028 = vadd.f32 0.0, %v3027
        %v3029 = vpop.f32.mrb[0].mxu0
        %v3030 = vpop.f32.mrb[0].mxu0
        %v3031 = vadd.f32 0.0, %v3030
        %v3032 = vpop.f32.mrb[0].mxu0
        %3033 = vdwg.mxu0
        %v3034 = vpack.c.bf16 %v3031, %v3028
        %s3035 = scalar_lea.vmem %s5, 160
        %v3036 = vld [vmem:[%s3035] sm:$0xf]
        %v3037 = vld [vmem:[%s3035 + $0x4] sm:$0xf]
        %v3038 = vld [vmem:[%s3035 + $0x8] sm:$0xf]
        %v3039 = vld [vmem:[%s3035 + $0xc] sm:$0xf]
        %v3044 = vunpack.c.l.b16 %v3036
        %v3045 = vunpack.c.l.b16 %v3037
        %v3046 = vunpack.c.l.b16 %v3038
        %v3047 = vunpack.c.l.b16 %v3039
        %v3048 = vpack.c.b16 %v3045, %v3044
        %v3049 = vpack.c.b16 %v3047, %v3046
        %v3053 = vsel %vm1953, %v3034, 0
        %3055 = vmatprep.subr.bf16.mxu0 0
        %3056 = vmatpush1.bf16.msra.mxu0 %v3048
        %3057 = vmatprep.subr.bf16.mxu0 0
        %3058 = vmatpush1.bf16.msra.mxu0 %v3049
        %3059 = vmatprep.subr.bf16.mxu0 0
        %3060 = vmatpush1.bf16.msra.mxu0 0
        %3061 = vmatprep.subr.bf16.mxu0 0
        %3062 = vmatpush1.bf16.msra.mxu0 0
        %3063 = vmatprep.subr.bf16.mxu0 0
        %3064 = vmatpush1.bf16.msra.mxu0 0
        %3065 = vmatprep.subr.bf16.mxu0 0
        %3066 = vmatpush1.bf16.msra.mxu0 0
        %3067 = vmatprep.subr.bf16.mxu0 0
        %3068 = vmatpush1.bf16.msra.mxu0 0
        %3069 = vmatprep.subr.bf16.mxu0 0
        %3070 = vmatpush1.bf16.msra.mxu0 0
        %3071 = vmatprep.subr.bf16.mxu0 0
        %3072 = vmatpush1.bf16.msra.mxu0 0
        %3073 = vmatprep.subr.bf16.mxu0 0
        %3074 = vmatpush1.bf16.msra.mxu0 0
        %3075 = vmatprep.subr.bf16.mxu0 0
        %3076 = vmatpush1.bf16.msra.mxu0 0
        %3077 = vmatprep.subr.bf16.mxu0 0
        %3078 = vmatpush1.bf16.msra.mxu0 0
        %3079 = vmatprep.subr.bf16.mxu0 0
        %3080 = vmatpush1.bf16.msra.mxu0 0
        %3081 = vmatprep.subr.bf16.mxu0 0
        %3082 = vmatpush1.bf16.msra.mxu0 0
        %3083 = vmatprep.subr.bf16.mxu0 0
        %3084 = vmatpush1.bf16.msra.mxu0 0
        %3085 = vmatprep.subr.bf16.mxu0 0
        %3086 = vmatpush1.bf16.msra.mxu0 0
        %3087 = vmatprep.mubr.bf16.mxu0 0
        %3088 = vmatmul.mubr.bf16.gmra.mrb[0].mxu0 %v3053
        %v3089 = vpop.f32.mrb[0].mxu0
        %v3090 = vadd.f32 0.0, %v3089
        %v3091 = vpop.f32.mrb[0].mxu0
        %v3092 = vpop.f32.mrb[0].mxu0
        %v3093 = vadd.f32 0.0, %v3092
        %v3094 = vpop.f32.mrb[0].mxu0
        %3095 = vdwg.mxu0
        %v3096 = vadd.f32 %v2980, %v3090
        %v3097 = vadd.f32 %v2981, %v3093
        %s3098 = scalar_lea.vmem %s4, 88
        %v3099 = vld [vmem:[%s3098] sm:$0xf]
        %v3100 = vld [vmem:[%s3098 + $0x4] sm:$0xf]
        %v3103 = vunpack.c.l.b16 %v3099
        %v3104 = vunpack.c.l.b16 %v3100
        %v3105 = vpack.c.b16 %v3104, %v3103
        %v3107 = vsel %vm1829, %v3105, 0
        %3109 = vmatprep.subr.bf16.mxu0 0
        %3110 = vmatpush1.bf16.msra.mxu0 %v1815
        %3111 = vmatprep.subr.bf16.mxu0 0
        %3112 = vmatpush1.bf16.msra.mxu0 %v1816
        %3113 = vmatprep.subr.bf16.mxu0 0
        %3114 = vmatpush1.bf16.msra.mxu0 %v1817
        %3115 = vmatprep.subr.bf16.mxu0 0
        %3116 = vmatpush1.bf16.msra.mxu0 %v1818
        %3117 = vmatprep.subr.bf16.mxu0 0
        %3118 = vmatpush1.bf16.msra.mxu0 %v1819
        %3119 = vmatprep.subr.bf16.mxu0 0
        %3120 = vmatpush1.bf16.msra.mxu0 %v1820
        %3121 = vmatprep.subr.bf16.mxu0 0
        %3122 = vmatpush1.bf16.msra.mxu0 %v1835
        %3123 = vmatprep.subr.bf16.mxu0 0
        %3124 = vmatpush1.bf16.msra.mxu0 0
        %3125 = vmatprep.subr.bf16.mxu0 0
        %3126 = vmatpush1.bf16.msra.mxu0 0
        %3127 = vmatprep.subr.bf16.mxu0 0
        %3128 = vmatpush1.bf16.msra.mxu0 0
        %3129 = vmatprep.subr.bf16.mxu0 0
        %3130 = vmatpush1.bf16.msra.mxu0 0
        %3131 = vmatprep.subr.bf16.mxu0 0
        %3132 = vmatpush1.bf16.msra.mxu0 0
        %3133 = vmatprep.subr.bf16.mxu0 0
        %3134 = vmatpush1.bf16.msra.mxu0 0
        %3135 = vmatprep.subr.bf16.mxu0 0
        %3136 = vmatpush1.bf16.msra.mxu0 0
        %3137 = vmatprep.subr.bf16.mxu0 0
        %3138 = vmatpush1.bf16.msra.mxu0 0
        %3139 = vmatprep.subr.bf16.mxu0 0
        %3140 = vmatpush1.bf16.msra.mxu0 0
        %3141 = vmatprep.mubr.bf16.mxu0 0
        %3142 = vmatmul.mubr.bf16.gmra.mrb[0].mxu0 %v3107
        %v3143 = vpop.f32.mrb[0].mxu0
        %v3144 = vadd.f32 0.0, %v3143
        %v3145 = vpop.f32.mrb[0].mxu0
        %v3146 = vpop.f32.mrb[0].mxu0
        %v3147 = vadd.f32 0.0, %v3146
        %v3148 = vpop.f32.mrb[0].mxu0
        %3149 = vdwg.mxu0
        %v3150 = vpack.c.bf16 %v3147, %v3144
        %s3151 = scalar_lea.vmem %s5, 176
        %v3152 = vld [vmem:[%s3151] sm:$0xf]
        %v3153 = vld [vmem:[%s3151 + $0x4] sm:$0xf]
        %v3154 = vld [vmem:[%s3151 + $0x8] sm:$0xf]
        %v3155 = vld [vmem:[%s3151 + $0xc] sm:$0xf]
        %v3160 = vunpack.c.l.b16 %v3152
        %v3161 = vunpack.c.l.b16 %v3153
        %v3162 = vunpack.c.l.b16 %v3154
        %v3163 = vunpack.c.l.b16 %v3155
        %v3164 = vpack.c.b16 %v3161, %v3160
        %v3165 = vpack.c.b16 %v3163, %v3162
        %v3169 = vsel %vm1953, %v3150, 0
        %3171 = vmatprep.subr.bf16.mxu0 0
        %3172 = vmatpush1.bf16.msra.mxu0 %v3164
        %3173 = vmatprep.subr.bf16.mxu0 0
        %3174 = vmatpush1.bf16.msra.mxu0 %v3165
        %3175 = vmatprep.subr.bf16.mxu0 0
        %3176 = vmatpush1.bf16.msra.mxu0 0
        %3177 = vmatprep.subr.bf16.mxu0 0
        %3178 = vmatpush1.bf16.msra.mxu0 0
        %3179 = vmatprep.subr.bf16.mxu0 0
        %3180 = vmatpush1.bf16.msra.mxu0 0
        %3181 = vmatprep.subr.bf16.mxu0 0
        %3182 = vmatpush1.bf16.msra.mxu0 0
        %3183 = vmatprep.subr.bf16.mxu0 0
        %3184 = vmatpush1.bf16.msra.mxu0 0
        %3185 = vmatprep.subr.bf16.mxu0 0
        %3186 = vmatpush1.bf16.msra.mxu0 0
        %3187 = vmatprep.subr.bf16.mxu0 0
        %3188 = vmatpush1.bf16.msra.mxu0 0
        %3189 = vmatprep.subr.bf16.mxu0 0
        %3190 = vmatpush1.bf16.msra.mxu0 0
        %3191 = vmatprep.subr.bf16.mxu0 0
        %3192 = vmatpush1.bf16.msra.mxu0 0
        %3193 = vmatprep.subr.bf16.mxu0 0
        %3194 = vmatpush1.bf16.msra.mxu0 0
        %3195 = vmatprep.subr.bf16.mxu0 0
        %3196 = vmatpush1.bf16.msra.mxu0 0
        %3197 = vmatprep.subr.bf16.mxu0 0
        %3198 = vmatpush1.bf16.msra.mxu0 0
        %3199 = vmatprep.subr.bf16.mxu0 0
        %3200 = vmatpush1.bf16.msra.mxu0 0
        %3201 = vmatprep.subr.bf16.mxu0 0
        %3202 = vmatpush1.bf16.msra.mxu0 0
        %3203 = vmatprep.mubr.bf16.mxu0 0
        %3204 = vmatmul.mubr.bf16.gmra.mrb[0].mxu0 %v3169
        %v3205 = vpop.f32.mrb[0].mxu0
        %v3206 = vadd.f32 0.0, %v3205
        %v3207 = vpop.f32.mrb[0].mxu0
        %v3208 = vpop.f32.mrb[0].mxu0
        %v3209 = vadd.f32 0.0, %v3208
        %v3210 = vpop.f32.mrb[0].mxu0
        %3211 = vdwg.mxu0
        %v3212 = vadd.f32 %v3096, %v3206
        %v3213 = vadd.f32 %v3097, %v3209
        %s3214 = scalar_lea.vmem %s4, 96
        %v3215 = vld [vmem:[%s3214] sm:$0xf]
        %v3216 = vld [vmem:[%s3214 + $0x4] sm:$0xf]
        %v3219 = vunpack.c.l.b16 %v3215
        %v3220 = vunpack.c.l.b16 %v3216
        %v3221 = vpack.c.b16 %v3220, %v3219
        %v3223 = vsel %vm1829, %v3221, 0
        %3225 = vmatprep.subr.bf16.mxu0 0
        %3226 = vmatpush1.bf16.msra.mxu0 %v1815
        %3227 = vmatprep.subr.bf16.mxu0 0
        %3228 = vmatpush1.bf16.msra.mxu0 %v1816
        %3229 = vmatprep.subr.bf16.mxu0 0
        %3230 = vmatpush1.bf16.msra.mxu0 %v1817
        %3231 = vmatprep.subr.bf16.mxu0 0
        %3232 = vmatpush1.bf16.msra.mxu0 %v1818
        %3233 = vmatprep.subr.bf16.mxu0 0
        %3234 = vmatpush1.bf16.msra.mxu0 %v1819
        %3235 = vmatprep.subr.bf16.mxu0 0
        %3236 = vmatpush1.bf16.msra.mxu0 %v1820
        %3237 = vmatprep.subr.bf16.mxu0 0
        %3238 = vmatpush1.bf16.msra.mxu0 %v1835
        %3239 = vmatprep.subr.bf16.mxu0 0
        %3240 = vmatpush1.bf16.msra.mxu0 0
        %3241 = vmatprep.subr.bf16.mxu0 0
        %3242 = vmatpush1.bf16.msra.mxu0 0
        %3243 = vmatprep.subr.bf16.mxu0 0
        %3244 = vmatpush1.bf16.msra.mxu0 0
        %3245 = vmatprep.subr.bf16.mxu0 0
        %3246 = vmatpush1.bf16.msra.mxu0 0
        %3247 = vmatprep.subr.bf16.mxu0 0
        %3248 = vmatpush1.bf16.msra.mxu0 0
        %3249 = vmatprep.subr.bf16.mxu0 0
        %3250 = vmatpush1.bf16.msra.mxu0 0
        %3251 = vmatprep.subr.bf16.mxu0 0
        %3252 = vmatpush1.bf16.msra.mxu0 0
        %3253 = vmatprep.subr.bf16.mxu0 0
        %3254 = vmatpush1.bf16.msra.mxu0 0
        %3255 = vmatprep.subr.bf16.mxu0 0
        %3256 = vmatpush1.bf16.msra.mxu0 0
        %3257 = vmatprep.mubr.bf16.mxu0 0
        %3258 = vmatmul.mubr.bf16.gmra.mrb[0].mxu0 %v3223
        %v3259 = vpop.f32.mrb[0].mxu0
        %v3260 = vadd.f32 0.0, %v3259
        %v3261 = vpop.f32.mrb[0].mxu0
        %v3262 = vpop.f32.mrb[0].mxu0
        %v3263 = vadd.f32 0.0, %v3262
        %v3264 = vpop.f32.mrb[0].mxu0
        %3265 = vdwg.mxu0
        %v3266 = vpack.c.bf16 %v3263, %v3260
        %s3267 = scalar_lea.vmem %s5, 192
        %v3268 = vld [vmem:[%s3267] sm:$0xf]
        %v3269 = vld [vmem:[%s3267 + $0x4] sm:$0xf]
        %v3270 = vld [vmem:[%s3267 + $0x8] sm:$0xf]
        %v3271 = vld [vmem:[%s3267 + $0xc] sm:$0xf]
        %v3276 = vunpack.c.l.b16 %v3268
        %v3277 = vunpack.c.l.b16 %v3269
        %v3278 = vunpack.c.l.b16 %v3270
        %v3279 = vunpack.c.l.b16 %v3271
        %v3280 = vpack.c.b16 %v3277, %v3276
        %v3281 = vpack.c.b16 %v3279, %v3278
        %v3285 = vsel %vm1953, %v3266, 0
        %3287 = vmatprep.subr.bf16.mxu0 0
        %3288 = vmatpush1.bf16.msra.mxu0 %v3280
        %3289 = vmatprep.subr.bf16.mxu0 0
        %3290 = vmatpush1.bf16.msra.mxu0 %v3281
        %3291 = vmatprep.subr.bf16.mxu0 0
        %3292 = vmatpush1.bf16.msra.mxu0 0
        %3293 = vmatprep.subr.bf16.mxu0 0
        %3294 = vmatpush1.bf16.msra.mxu0 0
        %3295 = vmatprep.subr.bf16.mxu0 0
        %3296 = vmatpush1.bf16.msra.mxu0 0
        %3297 = vmatprep.subr.bf16.mxu0 0
        %3298 = vmatpush1.bf16.msra.mxu0 0
        %3299 = vmatprep.subr.bf16.mxu0 0
        %3300 = vmatpush1.bf16.msra.mxu0 0
        %3301 = vmatprep.subr.bf16.mxu0 0
        %3302 = vmatpush1.bf16.msra.mxu0 0
        %3303 = vmatprep.subr.bf16.mxu0 0
        %3304 = vmatpush1.bf16.msra.mxu0 0
        %3305 = vmatprep.subr.bf16.mxu0 0
        %3306 = vmatpush1.bf16.msra.mxu0 0
        %3307 = vmatprep.subr.bf16.mxu0 0
        %3308 = vmatpush1.bf16.msra.mxu0 0
        %3309 = vmatprep.subr.bf16.mxu0 0
        %3310 = vmatpush1.bf16.msra.mxu0 0
        %3311 = vmatprep.subr.bf16.mxu0 0
        %3312 = vmatpush1.bf16.msra.mxu0 0
        %3313 = vmatprep.subr.bf16.mxu0 0
        %3314 = vmatpush1.bf16.msra.mxu0 0
        %3315 = vmatprep.subr.bf16.mxu0 0
        %3316 = vmatpush1.bf16.msra.mxu0 0
        %3317 = vmatprep.subr.bf16.mxu0 0
        %3318 = vmatpush1.bf16.msra.mxu0 0
        %3319 = vmatprep.mubr.bf16.mxu0 0
        %3320 = vmatmul.mubr.bf16.gmra.mrb[0].mxu0 %v3285
        %v3321 = vpop.f32.mrb[0].mxu0
        %v3322 = vadd.f32 0.0, %v3321
        %v3323 = vpop.f32.mrb[0].mxu0
        %v3324 = vpop.f32.mrb[0].mxu0
        %v3325 = vadd.f32 0.0, %v3324
        %v3326 = vpop.f32.mrb[0].mxu0
        %3327 = vdwg.mxu0
        %v3328 = vadd.f32 %v3212, %v3322
        %v3329 = vadd.f32 %v3213, %v3325
        %s3330 = scalar_lea.vmem %s4, 104
        %v3331 = vld [vmem:[%s3330] sm:$0xf]
        %v3332 = vld [vmem:[%s3330 + $0x4] sm:$0xf]
        %v3335 = vunpack.c.l.b16 %v3331
        %v3336 = vunpack.c.l.b16 %v3332
        %v3337 = vpack.c.b16 %v3336, %v3335
        %v3339 = vsel %vm1829, %v3337, 0
        %3341 = vmatprep.subr.bf16.mxu0 0
        %3342 = vmatpush1.bf16.msra.mxu0 %v1815
        %3343 = vmatprep.subr.bf16.mxu0 0
        %3344 = vmatpush1.bf16.msra.mxu0 %v1816
        %3345 = vmatprep.subr.bf16.mxu0 0
        %3346 = vmatpush1.bf16.msra.mxu0 %v1817
        %3347 = vmatprep.subr.bf16.mxu0 0
        %3348 = vmatpush1.bf16.msra.mxu0 %v1818
        %3349 = vmatprep.subr.bf16.mxu0 0
        %3350 = vmatpush1.bf16.msra.mxu0 %v1819
        %3351 = vmatprep.subr.bf16.mxu0 0
        %3352 = vmatpush1.bf16.msra.mxu0 %v1820
        %3353 = vmatprep.subr.bf16.mxu0 0
        %3354 = vmatpush1.bf16.msra.mxu0 %v1835
        %3355 = vmatprep.subr.bf16.mxu0 0
        %3356 = vmatpush1.bf16.msra.mxu0 0
        %3357 = vmatprep.subr.bf16.mxu0 0
        %3358 = vmatpush1.bf16.msra.mxu0 0
        %3359 = vmatprep.subr.bf16.mxu0 0
        %3360 = vmatpush1.bf16.msra.mxu0 0
        %3361 = vmatprep.subr.bf16.mxu0 0
        %3362 = vmatpush1.bf16.msra.mxu0 0
        %3363 = vmatprep.subr.bf16.mxu0 0
        %3364 = vmatpush1.bf16.msra.mxu0 0
        %3365 = vmatprep.subr.bf16.mxu0 0
        %3366 = vmatpush1.bf16.msra.mxu0 0
        %3367 = vmatprep.subr.bf16.mxu0 0
        %3368 = vmatpush1.bf16.msra.mxu0 0
        %3369 = vmatprep.subr.bf16.mxu0 0
        %3370 = vmatpush1.bf16.msra.mxu0 0
        %3371 = vmatprep.subr.bf16.mxu0 0
        %3372 = vmatpush1.bf16.msra.mxu0 0
        %3373 = vmatprep.mubr.bf16.mxu0 0
        %3374 = vmatmul.mubr.bf16.gmra.mrb[0].mxu0 %v3339
        %v3375 = vpop.f32.mrb[0].mxu0
        %v3376 = vadd.f32 0.0, %v3375
        %v3377 = vpop.f32.mrb[0].mxu0
        %v3378 = vpop.f32.mrb[0].mxu0
        %v3379 = vadd.f32 0.0, %v3378
        %v3380 = vpop.f32.mrb[0].mxu0
        %3381 = vdwg.mxu0
        %v3382 = vpack.c.bf16 %v3379, %v3376
        %s3383 = scalar_lea.vmem %s5, 208
        %v3384 = vld [vmem:[%s3383] sm:$0xf]
        %v3385 = vld [vmem:[%s3383 + $0x4] sm:$0xf]
        %v3386 = vld [vmem:[%s3383 + $0x8] sm:$0xf]
        %v3387 = vld [vmem:[%s3383 + $0xc] sm:$0xf]
        %v3392 = vunpack.c.l.b16 %v3384
        %v3393 = vunpack.c.l.b16 %v3385
        %v3394 = vunpack.c.l.b16 %v3386
        %v3395 = vunpack.c.l.b16 %v3387
        %v3396 = vpack.c.b16 %v3393, %v3392
        %v3397 = vpack.c.b16 %v3395, %v3394
        %v3401 = vsel %vm1953, %v3382, 0
        %3403 = vmatprep.subr.bf16.mxu0 0
        %3404 = vmatpush1.bf16.msra.mxu0 %v3396
        %3405 = vmatprep.subr.bf16.mxu0 0
        %3406 = vmatpush1.bf16.msra.mxu0 %v3397
        %3407 = vmatprep.subr.bf16.mxu0 0
        %3408 = vmatpush1.bf16.msra.mxu0 0
        %3409 = vmatprep.subr.bf16.mxu0 0
        %3410 = vmatpush1.bf16.msra.mxu0 0
        %3411 = vmatprep.subr.bf16.mxu0 0
        %3412 = vmatpush1.bf16.msra.mxu0 0
        %3413 = vmatprep.subr.bf16.mxu0 0
        %3414 = vmatpush1.bf16.msra.mxu0 0
        %3415 = vmatprep.subr.bf16.mxu0 0
        %3416 = vmatpush1.bf16.msra.mxu0 0
        %3417 = vmatprep.subr.bf16.mxu0 0
        %3418 = vmatpush1.bf16.msra.mxu0 0
        %3419 = vmatprep.subr.bf16.mxu0 0
        %3420 = vmatpush1.bf16.msra.mxu0 0
        %3421 = vmatprep.subr.bf16.mxu0 0
        %3422 = vmatpush1.bf16.msra.mxu0 0
        %3423 = vmatprep.subr.bf16.mxu0 0
        %3424 = vmatpush1.bf16.msra.mxu0 0
        %3425 = vmatprep.subr.bf16.mxu0 0
        %3426 = vmatpush1.bf16.msra.mxu0 0
        %3427 = vmatprep.subr.bf16.mxu0 0
        %3428 = vmatpush1.bf16.msra.mxu0 0
        %3429 = vmatprep.subr.bf16.mxu0 0
        %3430 = vmatpush1.bf16.msra.mxu0 0
        %3431 = vmatprep.subr.bf16.mxu0 0
        %3432 = vmatpush1.bf16.msra.mxu0 0
        %3433 = vmatprep.subr.bf16.mxu0 0
        %3434 = vmatpush1.bf16.msra.mxu0 0
        %3435 = vmatprep.mubr.bf16.mxu0 0
        %3436 = vmatmul.mubr.bf16.gmra.mrb[0].mxu0 %v3401
        %v3437 = vpop.f32.mrb[0].mxu0
        %v3438 = vadd.f32 0.0, %v3437
        %v3439 = vpop.f32.mrb[0].mxu0
        %v3440 = vpop.f32.mrb[0].mxu0
        %v3441 = vadd.f32 0.0, %v3440
        %v3442 = vpop.f32.mrb[0].mxu0
        %3443 = vdwg.mxu0
        %v3444 = vadd.f32 %v3328, %v3438
        %v3445 = vadd.f32 %v3329, %v3441
        %s3446 = scalar_lea.vmem %s4, 112
        %v3447 = vld [vmem:[%s3446] sm:$0xf]
        %v3448 = vld [vmem:[%s3446 + $0x4] sm:$0xf]
        %v3451 = vunpack.c.l.b16 %v3447
        %v3452 = vunpack.c.l.b16 %v3448
        %v3453 = vpack.c.b16 %v3452, %v3451
        %v3455 = vsel %vm1829, %v3453, 0
        %3457 = vmatprep.subr.bf16.mxu0 0
        %3458 = vmatpush1.bf16.msra.mxu0 %v1815
        %3459 = vmatprep.subr.bf16.mxu0 0
        %3460 = vmatpush1.bf16.msra.mxu0 %v1816
        %3461 = vmatprep.subr.bf16.mxu0 0
        %3462 = vmatpush1.bf16.msra.mxu0 %v1817
        %3463 = vmatprep.subr.bf16.mxu0 0
        %3464 = vmatpush1.bf16.msra.mxu0 %v1818
        %3465 = vmatprep.subr.bf16.mxu0 0
        %3466 = vmatpush1.bf16.msra.mxu0 %v1819
        %3467 = vmatprep.subr.bf16.mxu0 0
        %3468 = vmatpush1.bf16.msra.mxu0 %v1820
        %3469 = vmatprep.subr.bf16.mxu0 0
        %3470 = vmatpush1.bf16.msra.mxu0 %v1835
        %3471 = vmatprep.subr.bf16.mxu0 0
        %3472 = vmatpush1.bf16.msra.mxu0 0
        %3473 = vmatprep.subr.bf16.mxu0 0
        %3474 = vmatpush1.bf16.msra.mxu0 0
        %3475 = vmatprep.subr.bf16.mxu0 0
        %3476 = vmatpush1.bf16.msra.mxu0 0
        %3477 = vmatprep.subr.bf16.mxu0 0
        %3478 = vmatpush1.bf16.msra.mxu0 0
        %3479 = vmatprep.subr.bf16.mxu0 0
        %3480 = vmatpush1.bf16.msra.mxu0 0
        %3481 = vmatprep.subr.bf16.mxu0 0
        %3482 = vmatpush1.bf16.msra.mxu0 0
        %3483 = vmatprep.subr.bf16.mxu0 0
        %3484 = vmatpush1.bf16.msra.mxu0 0
        %3485 = vmatprep.subr.bf16.mxu0 0
        %3486 = vmatpush1.bf16.msra.mxu0 0
        %3487 = vmatprep.subr.bf16.mxu0 0
        %3488 = vmatpush1.bf16.msra.mxu0 0
        %3489 = vmatprep.mubr.bf16.mxu0 0
        %3490 = vmatmul.mubr.bf16.gmra.mrb[0].mxu0 %v3455
        %v3491 = vpop.f32.mrb[0].mxu0
        %v3492 = vadd.f32 0.0, %v3491
        %v3493 = vpop.f32.mrb[0].mxu0
        %v3494 = vpop.f32.mrb[0].mxu0
        %v3495 = vadd.f32 0.0, %v3494
        %v3496 = vpop.f32.mrb[0].mxu0
        %3497 = vdwg.mxu0
        %v3498 = vpack.c.bf16 %v3495, %v3492
        %s3499 = scalar_lea.vmem %s5, 224
        %v3500 = vld [vmem:[%s3499] sm:$0xf]
        %v3501 = vld [vmem:[%s3499 + $0x4] sm:$0xf]
        %v3502 = vld [vmem:[%s3499 + $0x8] sm:$0xf]
        %v3503 = vld [vmem:[%s3499 + $0xc] sm:$0xf]
        %v3508 = vunpack.c.l.b16 %v3500
        %v3509 = vunpack.c.l.b16 %v3501
        %v3510 = vunpack.c.l.b16 %v3502
        %v3511 = vunpack.c.l.b16 %v3503
        %v3512 = vpack.c.b16 %v3509, %v3508
        %v3513 = vpack.c.b16 %v3511, %v3510
        %v3517 = vsel %vm1953, %v3498, 0
        %3519 = vmatprep.subr.bf16.mxu0 0
        %3520 = vmatpush1.bf16.msra.mxu0 %v3512
        %3521 = vmatprep.subr.bf16.mxu0 0
        %3522 = vmatpush1.bf16.msra.mxu0 %v3513
        %3523 = vmatprep.subr.bf16.mxu0 0
        %3524 = vmatpush1.bf16.msra.mxu0 0
        %3525 = vmatprep.subr.bf16.mxu0 0
        %3526 = vmatpush1.bf16.msra.mxu0 0
        %3527 = vmatprep.subr.bf16.mxu0 0
        %3528 = vmatpush1.bf16.msra.mxu0 0
        %3529 = vmatprep.subr.bf16.mxu0 0
        %3530 = vmatpush1.bf16.msra.mxu0 0
        %3531 = vmatprep.subr.bf16.mxu0 0
        %3532 = vmatpush1.bf16.msra.mxu0 0
        %3533 = vmatprep.subr.bf16.mxu0 0
        %3534 = vmatpush1.bf16.msra.mxu0 0
        %3535 = vmatprep.subr.bf16.mxu0 0
        %3536 = vmatpush1.bf16.msra.mxu0 0
        %3537 = vmatprep.subr.bf16.mxu0 0
        %3538 = vmatpush1.bf16.msra.mxu0 0
        %3539 = vmatprep.subr.bf16.mxu0 0
        %3540 = vmatpush1.bf16.msra.mxu0 0
        %3541 = vmatprep.subr.bf16.mxu0 0
        %3542 = vmatpush1.bf16.msra.mxu0 0
        %3543 = vmatprep.subr.bf16.mxu0 0
        %3544 = vmatpush1.bf16.msra.mxu0 0
        %3545 = vmatprep.subr.bf16.mxu0 0
        %3546 = vmatpush1.bf16.msra.mxu0 0
        %3547 = vmatprep.subr.bf16.mxu0 0
        %3548 = vmatpush1.bf16.msra.mxu0 0
        %3549 = vmatprep.subr.bf16.mxu0 0
        %3550 = vmatpush1.bf16.msra.mxu0 0
        %3551 = vmatprep.mubr.bf16.mxu0 0
        %3552 = vmatmul.mubr.bf16.gmra.mrb[0].mxu0 %v3517
        %v3553 = vpop.f32.mrb[0].mxu0
        %v3554 = vadd.f32 0.0, %v3553
        %v3555 = vpop.f32.mrb[0].mxu0
        %v3556 = vpop.f32.mrb[0].mxu0
        %v3557 = vadd.f32 0.0, %v3556
        %v3558 = vpop.f32.mrb[0].mxu0
        %3559 = vdwg.mxu0
        %v3560 = vadd.f32 %v3444, %v3554
        %v3561 = vadd.f32 %v3445, %v3557
        %s3562 = scalar_lea.vmem %s4, 120
        %v3563 = vld [vmem:[%s3562] sm:$0xf]
        %v3564 = vld [vmem:[%s3562 + $0x4] sm:$0xf]
        %v3567 = vunpack.c.l.b16 %v3563
        %v3568 = vunpack.c.l.b16 %v3564
        %v3569 = vpack.c.b16 %v3568, %v3567
        %v3571 = vsel %vm1829, %v3569, 0
        %3573 = vmatprep.subr.bf16.mxu0 0
        %3574 = vmatpush1.bf16.msra.mxu0 %v1815
        %3575 = vmatprep.subr.bf16.mxu0 0
        %3576 = vmatpush1.bf16.msra.mxu0 %v1816
        %3577 = vmatprep.subr.bf16.mxu0 0
        %3578 = vmatpush1.bf16.msra.mxu0 %v1817
        %3579 = vmatprep.subr.bf16.mxu0 0
        %3580 = vmatpush1.bf16.msra.mxu0 %v1818
        %3581 = vmatprep.subr.bf16.mxu0 0
        %3582 = vmatpush1.bf16.msra.mxu0 %v1819
        %3583 = vmatprep.subr.bf16.mxu0 0
        %3584 = vmatpush1.bf16.msra.mxu0 %v1820
        %3585 = vmatprep.subr.bf16.mxu0 0
        %3586 = vmatpush1.bf16.msra.mxu0 %v1835
        %3587 = vmatprep.subr.bf16.mxu0 0
        %3588 = vmatpush1.bf16.msra.mxu0 0
        %3589 = vmatprep.subr.bf16.mxu0 0
        %3590 = vmatpush1.bf16.msra.mxu0 0
        %3591 = vmatprep.subr.bf16.mxu0 0
        %3592 = vmatpush1.bf16.msra.mxu0 0
        %3593 = vmatprep.subr.bf16.mxu0 0
        %3594 = vmatpush1.bf16.msra.mxu0 0
        %3595 = vmatprep.subr.bf16.mxu0 0
        %3596 = vmatpush1.bf16.msra.mxu0 0
        %3597 = vmatprep.subr.bf16.mxu0 0
        %3598 = vmatpush1.bf16.msra.mxu0 0
        %3599 = vmatprep.subr.bf16.mxu0 0
        %3600 = vmatpush1.bf16.msra.mxu0 0
        %3601 = vmatprep.subr.bf16.mxu0 0
        %3602 = vmatpush1.bf16.msra.mxu0 0
        %3603 = vmatprep.subr.bf16.mxu0 0
        %3604 = vmatpush1.bf16.msra.mxu0 0
        %3605 = vmatprep.mubr.bf16.mxu0 0
        %3606 = vmatmul.mubr.bf16.gmra.mrb[0].mxu0 %v3571
        %v3607 = vpop.f32.mrb[0].mxu0
        %v3608 = vadd.f32 0.0, %v3607
        %v3609 = vpop.f32.mrb[0].mxu0
        %v3610 = vpop.f32.mrb[0].mxu0
        %v3611 = vadd.f32 0.0, %v3610
        %v3612 = vpop.f32.mrb[0].mxu0
        %3613 = vdwg.mxu0
        %v3614 = vpack.c.bf16 %v3611, %v3608
        %s3615 = scalar_lea.vmem %s5, 240
        %v3616 = vld [vmem:[%s3615] sm:$0xf]
        %v3617 = vld [vmem:[%s3615 + $0x4] sm:$0xf]
        %v3618 = vld [vmem:[%s3615 + $0x8] sm:$0xf]
        %v3619 = vld [vmem:[%s3615 + $0xc] sm:$0xf]
        %v3624 = vunpack.c.l.b16 %v3616
        %v3625 = vunpack.c.l.b16 %v3617
        %v3626 = vunpack.c.l.b16 %v3618
        %v3627 = vunpack.c.l.b16 %v3619
        %v3628 = vpack.c.b16 %v3625, %v3624
        %v3629 = vpack.c.b16 %v3627, %v3626
        %v3633 = vsel %vm1953, %v3614, 0
        %3635 = vmatprep.subr.bf16.mxu0 0
        %3636 = vmatpush1.bf16.msra.mxu0 %v3628
        %3637 = vmatprep.subr.bf16.mxu0 0
        %3638 = vmatpush1.bf16.msra.mxu0 %v3629
        %3639 = vmatprep.subr.bf16.mxu0 0
        %3640 = vmatpush1.bf16.msra.mxu0 0
        %3641 = vmatprep.subr.bf16.mxu0 0
        %3642 = vmatpush1.bf16.msra.mxu0 0
        %3643 = vmatprep.subr.bf16.mxu0 0
        %3644 = vmatpush1.bf16.msra.mxu0 0
        %3645 = vmatprep.subr.bf16.mxu0 0
        %3646 = vmatpush1.bf16.msra.mxu0 0
        %3647 = vmatprep.subr.bf16.mxu0 0
        %3648 = vmatpush1.bf16.msra.mxu0 0
        %3649 = vmatprep.subr.bf16.mxu0 0
        %3650 = vmatpush1.bf16.msra.mxu0 0
        %3651 = vmatprep.subr.bf16.mxu0 0
        %3652 = vmatpush1.bf16.msra.mxu0 0
        %3653 = vmatprep.subr.bf16.mxu0 0
        %3654 = vmatpush1.bf16.msra.mxu0 0
        %3655 = vmatprep.subr.bf16.mxu0 0
        %3656 = vmatpush1.bf16.msra.mxu0 0
        %3657 = vmatprep.subr.bf16.mxu0 0
        %3658 = vmatpush1.bf16.msra.mxu0 0
        %3659 = vmatprep.subr.bf16.mxu0 0
        %3660 = vmatpush1.bf16.msra.mxu0 0
        %3661 = vmatprep.subr.bf16.mxu0 0
        %3662 = vmatpush1.bf16.msra.mxu0 0
        %3663 = vmatprep.subr.bf16.mxu0 0
        %3664 = vmatpush1.bf16.msra.mxu0 0
        %3665 = vmatprep.subr.bf16.mxu0 0
        %3666 = vmatpush1.bf16.msra.mxu0 0
        %3667 = vmatprep.mubr.bf16.mxu0 0
        %3668 = vmatmul.mubr.bf16.gmra.mrb[0].mxu0 %v3633
        %v3669 = vpop.f32.mrb[0].mxu0
        %v3670 = vadd.f32 0.0, %v3669
        %v3671 = vpop.f32.mrb[0].mxu0
        %v3672 = vpop.f32.mrb[0].mxu0
        %v3673 = vadd.f32 0.0, %v3672
        %v3674 = vpop.f32.mrb[0].mxu0
        %3675 = vdwg.mxu0
        %v3676 = vadd.f32 %v3560, %v3670
        %v3677 = vadd.f32 %v3561, %v3673
        %v3678 = vld [vmem:[%s6] sm:$0x1]
        %v3680 = vlaneseq
        %v3681 = vshrl.u32 %v3680, 7
        %v3682 = vsub.s32 0, %v3681
        %v3683 = vrot.slane %v3678, %v3682
        %v3685 = vadd.f32 %v3676, %v3683
        %v3686 = vadd.f32 %v3677, %v3683
        %v3687 = vmax.f32 %v3685, 0.0
        %v3688 = vmax.f32 %v3686, 0.0
        %v3689 = vpack.c.bf16 %v3688, %v3687
        %v3690 = vld [vmem:[%s7] sm:$0x3]
        %vm3691 = vcmask 130048
        %v3693 = vsel %vm3691, %v3690, 0
        %3695 = vmatprep.subr.bf16.mxu0 0
        %3696 = vmatpush1.bf16.msra.mxu0 %v3689
        %3697 = vmatprep.subr.bf16.mxu0 0
        %3698 = vmatpush1.bf16.msra.mxu0 0
        %3699 = vmatprep.subr.bf16.mxu0 0
        %3700 = vmatpush1.bf16.msra.mxu0 0
        %3701 = vmatprep.subr.bf16.mxu0 0
        %3702 = vmatpush1.bf16.msra.mxu0 0
        %3703 = vmatprep.subr.bf16.mxu0 0
        %3704 = vmatpush1.bf16.msra.mxu0 0
        %3705 = vmatprep.subr.bf16.mxu0 0
        %3706 = vmatpush1.bf16.msra.mxu0 0
        %3707 = vmatprep.subr.bf16.mxu0 0
        %3708 = vmatpush1.bf16.msra.mxu0 0
        %3709 = vmatprep.subr.bf16.mxu0 0
        %3710 = vmatpush1.bf16.msra.mxu0 0
        %3711 = vmatprep.subr.bf16.mxu0 0
        %3712 = vmatpush1.bf16.msra.mxu0 0
        %3713 = vmatprep.subr.bf16.mxu0 0
        %3714 = vmatpush1.bf16.msra.mxu0 0
        %3715 = vmatprep.subr.bf16.mxu0 0
        %3716 = vmatpush1.bf16.msra.mxu0 0
        %3717 = vmatprep.subr.bf16.mxu0 0
        %3718 = vmatpush1.bf16.msra.mxu0 0
        %3719 = vmatprep.subr.bf16.mxu0 0
        %3720 = vmatpush1.bf16.msra.mxu0 0
        %3721 = vmatprep.subr.bf16.mxu0 0
        %3722 = vmatpush1.bf16.msra.mxu0 0
        %3723 = vmatprep.subr.bf16.mxu0 0
        %3724 = vmatpush1.bf16.msra.mxu0 0
        %3725 = vmatprep.subr.bf16.mxu0 0
        %3726 = vmatpush1.bf16.msra.mxu0 0
        %3727 = vmatprep.mubr.bf16.mxu0 0
        %3728 = vmatmul.mubr.bf16.gmra.mrb[0].mxu0 %v3693
        %v3729 = vpop.f32.mrb[0].mxu0
        %v3730 = vadd.f32 0.0, %v3729
        %v3731 = vpop.f32.mrb[0].mxu0
        %v3732 = vpop.f32.mrb[0].mxu0
        %v3733 = vpop.f32.mrb[0].mxu0
        %3734 = vdwg.mxu0
        %v3735 = vpack.c.bf16 %v3730, %v3730
        %v3736 = vld [vmem:[%s8] sm:$0xf]
        %v3737 = vld [vmem:[%s8 + $0x4] sm:$0xf]
        %v3738 = vld [vmem:[%s8 + $0x8] sm:$0xf]
        %v3739 = vld [vmem:[%s8 + $0xc] sm:$0xf]
        %v3740 = vld [vmem:[%s8 + $0x10] sm:$0xf]
        %v3741 = vld [vmem:[%s8 + $0x14] sm:$0xf]
        %v3742 = vld [vmem:[%s8 + $0x18] sm:$0xf]
        %v3743 = vld [vmem:[%s8 + $0x1c] sm:$0xf]
        %s3744 = scalar_lea.vmem %s7, 2
        %v3745 = vld [vmem:[%s3744] sm:$0x3]
        %v3747 = vsel %vm3691, %v3745, 0
        %3749 = vmatprep.subr.bf16.mxu0 0
        %3750 = vmatpush1.bf16.msra.mxu0 %v3689
        %3751 = vmatprep.subr.bf16.mxu0 0
        %3752 = vmatpush1.bf16.msra.mxu0 0
        %3753 = vmatprep.subr.bf16.mxu0 0
        %3754 = vmatpush1.bf16.msra.mxu0 0
        %3755 = vmatprep.subr.bf16.mxu0 0
        %3756 = vmatpush1.bf16.msra.mxu0 0
        %3757 = vmatprep.subr.bf16.mxu0 0
        %3758 = vmatpush1.bf16.msra.mxu0 0
        %3759 = vmatprep.subr.bf16.mxu0 0
        %3760 = vmatpush1.bf16.msra.mxu0 0
        %3761 = vmatprep.subr.bf16.mxu0 0
        %3762 = vmatpush1.bf16.msra.mxu0 0
        %3763 = vmatprep.subr.bf16.mxu0 0
        %3764 = vmatpush1.bf16.msra.mxu0 0
        %3765 = vmatprep.subr.bf16.mxu0 0
        %3766 = vmatpush1.bf16.msra.mxu0 0
        %3767 = vmatprep.subr.bf16.mxu0 0
        %3768 = vmatpush1.bf16.msra.mxu0 0
        %3769 = vmatprep.subr.bf16.mxu0 0
        %3770 = vmatpush1.bf16.msra.mxu0 0
        %3771 = vmatprep.subr.bf16.mxu0 0
        %3772 = vmatpush1.bf16.msra.mxu0 0
        %3773 = vmatprep.subr.bf16.mxu0 0
        %3774 = vmatpush1.bf16.msra.mxu0 0
        %3775 = vmatprep.subr.bf16.mxu0 0
        %3776 = vmatpush1.bf16.msra.mxu0 0
        %3777 = vmatprep.subr.bf16.mxu0 0
        %3778 = vmatpush1.bf16.msra.mxu0 0
        %3779 = vmatprep.subr.bf16.mxu0 0
        %3780 = vmatpush1.bf16.msra.mxu0 0
        %3781 = vmatprep.mubr.bf16.mxu0 0
        %3782 = vmatmul.mubr.bf16.gmra.mrb[0].mxu0 %v3747
        %v3783 = vpop.f32.mrb[0].mxu0
        %v3784 = vadd.f32 0.0, %v3783
        %v3785 = vpop.f32.mrb[0].mxu0
        %v3786 = vpop.f32.mrb[0].mxu0
        %v3787 = vpop.f32.mrb[0].mxu0
        %3788 = vdwg.mxu0
        %v3789 = vpack.c.bf16 %v3784, %v3784
        %s3790 = scalar_lea.vmem %s8, 32
        %v3791 = vld [vmem:[%s3790] sm:$0xf]
        %v3792 = vld [vmem:[%s3790 + $0x4] sm:$0xf]
        %v3793 = vld [vmem:[%s3790 + $0x8] sm:$0xf]
        %v3794 = vld [vmem:[%s3790 + $0xc] sm:$0xf]
        %v3795 = vld [vmem:[%s3790 + $0x10] sm:$0xf]
        %v3796 = vld [vmem:[%s3790 + $0x14] sm:$0xf]
        %v3797 = vld [vmem:[%s3790 + $0x18] sm:$0xf]
        %v3798 = vld [vmem:[%s3790 + $0x1c] sm:$0xf]
        %v3807 = vunpack.c.l.b16 %v3791
        %v3808 = vunpack.c.l.b16 %v3792
        %v3809 = vunpack.c.l.b16 %v3793
        %v3810 = vunpack.c.l.b16 %v3794
        %v3811 = vunpack.c.l.b16 %v3795
        %v3812 = vunpack.c.l.b16 %v3796
        %v3813 = vunpack.c.l.b16 %v3797
        %v3814 = vunpack.c.l.b16 %v3798
        %v3815 = vpack.c.b16 %v3808, %v3807
        %v3816 = vpack.c.b16 %v3810, %v3809
        %v3817 = vpack.c.b16 %v3812, %v3811
        %v3818 = vpack.c.b16 %v3814, %v3813
        %v3824 = vsel %vm903, %v3789, 0
        %3826 = vmatprep.subr.bf16.mxu0 0
        %3827 = vmatpush1.bf16.msra.mxu0 %v3815
        %3828 = vmatprep.subr.bf16.mxu0 0
        %3829 = vmatpush1.bf16.msra.mxu0 %v3816
        %3830 = vmatprep.subr.bf16.mxu0 0
        %3831 = vmatpush1.bf16.msra.mxu0 %v3817
        %3832 = vmatprep.subr.bf16.mxu0 0
        %3833 = vmatpush1.bf16.msra.mxu0 %v3818
        %3834 = vmatprep.subr.bf16.mxu0 0
        %3835 = vmatpush1.bf16.msra.mxu0 0
        %3836 = vmatprep.subr.bf16.mxu0 0
        %3837 = vmatpush1.bf16.msra.mxu0 0
        %3838 = vmatprep.subr.bf16.mxu0 0
        %3839 = vmatpush1.bf16.msra.mxu0 0
        %3840 = vmatprep.subr.bf16.mxu0 0
        %3841 = vmatpush1.bf16.msra.mxu0 0
        %3842 = vmatprep.subr.bf16.mxu0 0
        %3843 = vmatpush1.bf16.msra.mxu0 0
        %3844 = vmatprep.subr.bf16.mxu0 0
        %3845 = vmatpush1.bf16.msra.mxu0 0
        %3846 = vmatprep.subr.bf16.mxu0 0
        %3847 = vmatpush1.bf16.msra.mxu0 0
        %3848 = vmatprep.subr.bf16.mxu0 0
        %3849 = vmatpush1.bf16.msra.mxu0 0
        %3850 = vmatprep.subr.bf16.mxu0 0
        %3851 = vmatpush1.bf16.msra.mxu0 0
        %3852 = vmatprep.subr.bf16.mxu0 0
        %3853 = vmatpush1.bf16.msra.mxu0 0
        %3854 = vmatprep.subr.bf16.mxu0 0
        %3855 = vmatpush1.bf16.msra.mxu0 0
        %3856 = vmatprep.subr.bf16.mxu0 0
        %3857 = vmatpush1.bf16.msra.mxu0 0
        %3858 = vmatprep.mubr.bf16.mxu0 0
        %3859 = vmatmul.mubr.bf16.gmra.mrb[0].mxu0 %v3824
        %v3860 = vpop.f32.mrb[0].mxu0
        %v3861 = vadd.f32 0.0, %v3860
        %v3862 = vpop.f32.mrb[0].mxu0
        %v3863 = vpop.f32.mrb[0].mxu0
        %v3864 = vpop.f32.mrb[0].mxu0
        %3865 = vdwg.mxu0
        %v3874 = vunpack.c.l.b16 %v3736
        %v3875 = vunpack.c.l.b16 %v3737
        %v3876 = vunpack.c.l.b16 %v3738
        %v3877 = vunpack.c.l.b16 %v3739
        %v3878 = vunpack.c.l.b16 %v3740
        %v3879 = vunpack.c.l.b16 %v3741
        %v3880 = vunpack.c.l.b16 %v3742
        %v3881 = vunpack.c.l.b16 %v3743
        %v3882 = vpack.c.b16 %v3875, %v3874
        %v3883 = vpack.c.b16 %v3877, %v3876
        %v3884 = vpack.c.b16 %v3879, %v3878
        %v3885 = vpack.c.b16 %v3881, %v3880
        %v3891 = vsel %vm903, %v3735, 0
        %3893 = vmatprep.subr.bf16.mxu0 0
        %3894 = vmatpush1.bf16.msra.mxu0 %v3882
        %3895 = vmatprep.subr.bf16.mxu0 0
        %3896 = vmatpush1.bf16.msra.mxu0 %v3883
        %3897 = vmatprep.subr.bf16.mxu0 0
        %3898 = vmatpush1.bf16.msra.mxu0 %v3884
        %3899 = vmatprep.subr.bf16.mxu0 0
        %3900 = vmatpush1.bf16.msra.mxu0 %v3885
        %3901 = vmatprep.subr.bf16.mxu0 0
        %3902 = vmatpush1.bf16.msra.mxu0 0
        %3903 = vmatprep.subr.bf16.mxu0 0
        %3904 = vmatpush1.bf16.msra.mxu0 0
        %3905 = vmatprep.subr.bf16.mxu0 0
        %3906 = vmatpush1.bf16.msra.mxu0 0
        %3907 = vmatprep.subr.bf16.mxu0 0
        %3908 = vmatpush1.bf16.msra.mxu0 0
        %3909 = vmatprep.subr.bf16.mxu0 0
        %3910 = vmatpush1.bf16.msra.mxu0 0
        %3911 = vmatprep.subr.bf16.mxu0 0
        %3912 = vmatpush1.bf16.msra.mxu0 0
        %3913 = vmatprep.subr.bf16.mxu0 0
        %3914 = vmatpush1.bf16.msra.mxu0 0
        %3915 = vmatprep.subr.bf16.mxu0 0
        %3916 = vmatpush1.bf16.msra.mxu0 0
        %3917 = vmatprep.subr.bf16.mxu0 0
        %3918 = vmatpush1.bf16.msra.mxu0 0
        %3919 = vmatprep.subr.bf16.mxu0 0
        %3920 = vmatpush1.bf16.msra.mxu0 0
        %3921 = vmatprep.subr.bf16.mxu0 0
        %3922 = vmatpush1.bf16.msra.mxu0 0
        %3923 = vmatprep.subr.bf16.mxu0 0
        %3924 = vmatpush1.bf16.msra.mxu0 0
        %3925 = vmatprep.mubr.bf16.mxu0 0
        %3926 = vmatmul.mubr.bf16.gmra.mrb[0].mxu0 %v3891
        %v3927 = vpop.f32.mrb[0].mxu0
        %v3928 = vadd.f32 %v3861, %v3927
        %v3929 = vpop.f32.mrb[0].mxu0
        %v3930 = vpop.f32.mrb[0].mxu0
        %v3931 = vpop.f32.mrb[0].mxu0
        %3932 = vdwg.mxu0
        %s3933 = scalar_lea.vmem %s7, 4
        %v3934 = vld [vmem:[%s3933] sm:$0x3]
        %v3936 = vsel %vm3691, %v3934, 0
        %3938 = vmatprep.subr.bf16.mxu0 0
        %3939 = vmatpush1.bf16.msra.mxu0 %v3689
        %3940 = vmatprep.subr.bf16.mxu0 0
        %3941 = vmatpush1.bf16.msra.mxu0 0
        %3942 = vmatprep.subr.bf16.mxu0 0
        %3943 = vmatpush1.bf16.msra.mxu0 0
        %3944 = vmatprep.subr.bf16.mxu0 0
        %3945 = vmatpush1.bf16.msra.mxu0 0
        %3946 = vmatprep.subr.bf16.mxu0 0
        %3947 = vmatpush1.bf16.msra.mxu0 0
        %3948 = vmatprep.subr.bf16.mxu0 0
        %3949 = vmatpush1.bf16.msra.mxu0 0
        %3950 = vmatprep.subr.bf16.mxu0 0
        %3951 = vmatpush1.bf16.msra.mxu0 0
        %3952 = vmatprep.subr.bf16.mxu0 0
        %3953 = vmatpush1.bf16.msra.mxu0 0
        %3954 = vmatprep.subr.bf16.mxu0 0
        %3955 = vmatpush1.bf16.msra.mxu0 0
        %3956 = vmatprep.subr.bf16.mxu0 0
        %3957 = vmatpush1.bf16.msra.mxu0 0
        %3958 = vmatprep.subr.bf16.mxu0 0
        %3959 = vmatpush1.bf16.msra.mxu0 0
        %3960 = vmatprep.subr.bf16.mxu0 0
        %3961 = vmatpush1.bf16.msra.mxu0 0
        %3962 = vmatprep.subr.bf16.mxu0 0
        %3963 = vmatpush1.bf16.msra.mxu0 0
        %3964 = vmatprep.subr.bf16.mxu0 0
        %3965 = vmatpush1.bf16.msra.mxu0 0
        %3966 = vmatprep.subr.bf16.mxu0 0
        %3967 = vmatpush1.bf16.msra.mxu0 0
        %3968 = vmatprep.subr.bf16.mxu0 0
        %3969 = vmatpush1.bf16.msra.mxu0 0
        %3970 = vmatprep.mubr.bf16.mxu0 0
        %3971 = vmatmul.mubr.bf16.gmra.mrb[0].mxu0 %v3936
        %v3972 = vpop.f32.mrb[0].mxu0
        %v3973 = vadd.f32 0.0, %v3972
        %v3974 = vpop.f32.mrb[0].mxu0
        %v3975 = vpop.f32.mrb[0].mxu0
        %v3976 = vpop.f32.mrb[0].mxu0
        %3977 = vdwg.mxu0
        %v3978 = vpack.c.bf16 %v3973, %v3973
        %s3979 = scalar_lea.vmem %s8, 64
        %v3980 = vld [vmem:[%s3979] sm:$0xf]
        %v3981 = vld [vmem:[%s3979 + $0x4] sm:$0xf]
        %v3982 = vld [vmem:[%s3979 + $0x8] sm:$0xf]
        %v3983 = vld [vmem:[%s3979 + $0xc] sm:$0xf]
        %v3984 = vld [vmem:[%s3979 + $0x10] sm:$0xf]
        %v3985 = vld [vmem:[%s3979 + $0x14] sm:$0xf]
        %v3986 = vld [vmem:[%s3979 + $0x18] sm:$0xf]
        %v3987 = vld [vmem:[%s3979 + $0x1c] sm:$0xf]
        %v3996 = vunpack.c.l.b16 %v3980
        %v3997 = vunpack.c.l.b16 %v3981
        %v3998 = vunpack.c.l.b16 %v3982
        %v3999 = vunpack.c.l.b16 %v3983
        %v4000 = vunpack.c.l.b16 %v3984
        %v4001 = vunpack.c.l.b16 %v3985
        %v4002 = vunpack.c.l.b16 %v3986
        %v4003 = vunpack.c.l.b16 %v3987
        %v4004 = vpack.c.b16 %v3997, %v3996
        %v4005 = vpack.c.b16 %v3999, %v3998
        %v4006 = vpack.c.b16 %v4001, %v4000
        %v4007 = vpack.c.b16 %v4003, %v4002
        %v4013 = vsel %vm903, %v3978, 0
        %4015 = vmatprep.subr.bf16.mxu0 0
        %4016 = vmatpush1.bf16.msra.mxu0 %v4004
        %4017 = vmatprep.subr.bf16.mxu0 0
        %4018 = vmatpush1.bf16.msra.mxu0 %v4005
        %4019 = vmatprep.subr.bf16.mxu0 0
        %4020 = vmatpush1.bf16.msra.mxu0 %v4006
        %4021 = vmatprep.subr.bf16.mxu0 0
        %4022 = vmatpush1.bf16.msra.mxu0 %v4007
        %4023 = vmatprep.subr.bf16.mxu0 0
        %4024 = vmatpush1.bf16.msra.mxu0 0
        %4025 = vmatprep.subr.bf16.mxu0 0
        %4026 = vmatpush1.bf16.msra.mxu0 0
        %4027 = vmatprep.subr.bf16.mxu0 0
        %4028 = vmatpush1.bf16.msra.mxu0 0
        %4029 = vmatprep.subr.bf16.mxu0 0
        %4030 = vmatpush1.bf16.msra.mxu0 0
        %4031 = vmatprep.subr.bf16.mxu0 0
        %4032 = vmatpush1.bf16.msra.mxu0 0
        %4033 = vmatprep.subr.bf16.mxu0 0
        %4034 = vmatpush1.bf16.msra.mxu0 0
        %4035 = vmatprep.subr.bf16.mxu0 0
        %4036 = vmatpush1.bf16.msra.mxu0 0
        %4037 = vmatprep.subr.bf16.mxu0 0
        %4038 = vmatpush1.bf16.msra.mxu0 0
        %4039 = vmatprep.subr.bf16.mxu0 0
        %4040 = vmatpush1.bf16.msra.mxu0 0
        %4041 = vmatprep.subr.bf16.mxu0 0
        %4042 = vmatpush1.bf16.msra.mxu0 0
        %4043 = vmatprep.subr.bf16.mxu0 0
        %4044 = vmatpush1.bf16.msra.mxu0 0
        %4045 = vmatprep.subr.bf16.mxu0 0
        %4046 = vmatpush1.bf16.msra.mxu0 0
        %4047 = vmatprep.mubr.bf16.mxu0 0
        %4048 = vmatmul.mubr.bf16.gmra.mrb[0].mxu0 %v4013
        %v4049 = vpop.f32.mrb[0].mxu0
        %v4050 = vadd.f32 0.0, %v4049
        %v4051 = vpop.f32.mrb[0].mxu0
        %v4052 = vpop.f32.mrb[0].mxu0
        %v4053 = vpop.f32.mrb[0].mxu0
        %4054 = vdwg.mxu0
        %v4055 = vadd.f32 %v3928, %v4050
        %s4056 = scalar_lea.vmem %s7, 6
        %v4057 = vld [vmem:[%s4056] sm:$0x3]
        %v4059 = vsel %vm3691, %v4057, 0
        %4061 = vmatprep.subr.bf16.mxu0 0
        %4062 = vmatpush1.bf16.msra.mxu0 %v3689
        %4063 = vmatprep.subr.bf16.mxu0 0
        %4064 = vmatpush1.bf16.msra.mxu0 0
        %4065 = vmatprep.subr.bf16.mxu0 0
        %4066 = vmatpush1.bf16.msra.mxu0 0
        %4067 = vmatprep.subr.bf16.mxu0 0
        %4068 = vmatpush1.bf16.msra.mxu0 0
        %4069 = vmatprep.subr.bf16.mxu0 0
        %4070 = vmatpush1.bf16.msra.mxu0 0
        %4071 = vmatprep.subr.bf16.mxu0 0
        %4072 = vmatpush1.bf16.msra.mxu0 0
        %4073 = vmatprep.subr.bf16.mxu0 0
        %4074 = vmatpush1.bf16.msra.mxu0 0
        %4075 = vmatprep.subr.bf16.mxu0 0
        %4076 = vmatpush1.bf16.msra.mxu0 0
        %4077 = vmatprep.subr.bf16.mxu0 0
        %4078 = vmatpush1.bf16.msra.mxu0 0
        %4079 = vmatprep.subr.bf16.mxu0 0
        %4080 = vmatpush1.bf16.msra.mxu0 0
        %4081 = vmatprep.subr.bf16.mxu0 0
        %4082 = vmatpush1.bf16.msra.mxu0 0
        %4083 = vmatprep.subr.bf16.mxu0 0
        %4084 = vmatpush1.bf16.msra.mxu0 0
        %4085 = vmatprep.subr.bf16.mxu0 0
        %4086 = vmatpush1.bf16.msra.mxu0 0
        %4087 = vmatprep.subr.bf16.mxu0 0
        %4088 = vmatpush1.bf16.msra.mxu0 0
        %4089 = vmatprep.subr.bf16.mxu0 0
        %4090 = vmatpush1.bf16.msra.mxu0 0
        %4091 = vmatprep.subr.bf16.mxu0 0
        %4092 = vmatpush1.bf16.msra.mxu0 0
        %4093 = vmatprep.mubr.bf16.mxu0 0
        %4094 = vmatmul.mubr.bf16.gmra.mrb[0].mxu0 %v4059
        %v4095 = vpop.f32.mrb[0].mxu0
        %v4096 = vadd.f32 0.0, %v4095
        %v4097 = vpop.f32.mrb[0].mxu0
        %v4098 = vpop.f32.mrb[0].mxu0
        %v4099 = vpop.f32.mrb[0].mxu0
        %4100 = vdwg.mxu0
        %v4101 = vpack.c.bf16 %v4096, %v4096
        %s4102 = scalar_lea.vmem %s8, 96
        %v4103 = vld [vmem:[%s4102] sm:$0xf]
        %v4104 = vld [vmem:[%s4102 + $0x4] sm:$0xf]
        %v4105 = vld [vmem:[%s4102 + $0x8] sm:$0xf]
        %v4106 = vld [vmem:[%s4102 + $0xc] sm:$0xf]
        %v4107 = vld [vmem:[%s4102 + $0x10] sm:$0xf]
        %v4108 = vld [vmem:[%s4102 + $0x14] sm:$0xf]
        %v4109 = vld [vmem:[%s4102 + $0x18] sm:$0xf]
        %v4110 = vld [vmem:[%s4102 + $0x1c] sm:$0xf]
        %v4119 = vunpack.c.l.b16 %v4103
        %v4120 = vunpack.c.l.b16 %v4104
        %v4121 = vunpack.c.l.b16 %v4105
        %v4122 = vunpack.c.l.b16 %v4106
        %v4123 = vunpack.c.l.b16 %v4107
        %v4124 = vunpack.c.l.b16 %v4108
        %v4125 = vunpack.c.l.b16 %v4109
        %v4126 = vunpack.c.l.b16 %v4110
        %v4127 = vpack.c.b16 %v4120, %v4119
        %v4128 = vpack.c.b16 %v4122, %v4121
        %v4129 = vpack.c.b16 %v4124, %v4123
        %v4130 = vpack.c.b16 %v4126, %v4125
        %v4136 = vsel %vm903, %v4101, 0
        %4138 = vmatprep.subr.bf16.mxu0 0
        %4139 = vmatpush1.bf16.msra.mxu0 %v4127
        %4140 = vmatprep.subr.bf16.mxu0 0
        %4141 = vmatpush1.bf16.msra.mxu0 %v4128
        %4142 = vmatprep.subr.bf16.mxu0 0
        %4143 = vmatpush1.bf16.msra.mxu0 %v4129
        %4144 = vmatprep.subr.bf16.mxu0 0
        %4145 = vmatpush1.bf16.msra.mxu0 %v4130
        %4146 = vmatprep.subr.bf16.mxu0 0
        %4147 = vmatpush1.bf16.msra.mxu0 0
        %4148 = vmatprep.subr.bf16.mxu0 0
        %4149 = vmatpush1.bf16.msra.mxu0 0
        %4150 = vmatprep.subr.bf16.mxu0 0
        %4151 = vmatpush1.bf16.msra.mxu0 0
        %4152 = vmatprep.subr.bf16.mxu0 0
        %4153 = vmatpush1.bf16.msra.mxu0 0
        %4154 = vmatprep.subr.bf16.mxu0 0
        %4155 = vmatpush1.bf16.msra.mxu0 0
        %4156 = vmatprep.subr.bf16.mxu0 0
        %4157 = vmatpush1.bf16.msra.mxu0 0
        %4158 = vmatprep.subr.bf16.mxu0 0
        %4159 = vmatpush1.bf16.msra.mxu0 0
        %4160 = vmatprep.subr.bf16.mxu0 0
        %4161 = vmatpush1.bf16.msra.mxu0 0
        %4162 = vmatprep.subr.bf16.mxu0 0
        %4163 = vmatpush1.bf16.msra.mxu0 0
        %4164 = vmatprep.subr.bf16.mxu0 0
        %4165 = vmatpush1.bf16.msra.mxu0 0
        %4166 = vmatprep.subr.bf16.mxu0 0
        %4167 = vmatpush1.bf16.msra.mxu0 0
        %4168 = vmatprep.subr.bf16.mxu0 0
        %4169 = vmatpush1.bf16.msra.mxu0 0
        %4170 = vmatprep.mubr.bf16.mxu0 0
        %4171 = vmatmul.mubr.bf16.gmra.mrb[0].mxu0 %v4136
        %v4172 = vpop.f32.mrb[0].mxu0
        %v4173 = vadd.f32 0.0, %v4172
        %v4174 = vpop.f32.mrb[0].mxu0
        %v4175 = vpop.f32.mrb[0].mxu0
        %v4176 = vpop.f32.mrb[0].mxu0
        %4177 = vdwg.mxu0
        %v4178 = vadd.f32 %v4055, %v4173
        %s4179 = scalar_lea.vmem %s7, 8
        %v4180 = vld [vmem:[%s4179] sm:$0x3]
        %v4182 = vsel %vm3691, %v4180, 0
        %4184 = vmatprep.subr.bf16.mxu0 0
        %4185 = vmatpush1.bf16.msra.mxu0 %v3689
        %4186 = vmatprep.subr.bf16.mxu0 0
        %4187 = vmatpush1.bf16.msra.mxu0 0
        %4188 = vmatprep.subr.bf16.mxu0 0
        %4189 = vmatpush1.bf16.msra.mxu0 0
        %4190 = vmatprep.subr.bf16.mxu0 0
        %4191 = vmatpush1.bf16.msra.mxu0 0
        %4192 = vmatprep.subr.bf16.mxu0 0
        %4193 = vmatpush1.bf16.msra.mxu0 0
        %4194 = vmatprep.subr.bf16.mxu0 0
        %4195 = vmatpush1.bf16.msra.mxu0 0
        %4196 = vmatprep.subr.bf16.mxu0 0
        %4197 = vmatpush1.bf16.msra.mxu0 0
        %4198 = vmatprep.subr.bf16.mxu0 0
        %4199 = vmatpush1.bf16.msra.mxu0 0
        %4200 = vmatprep.subr.bf16.mxu0 0
        %4201 = vmatpush1.bf16.msra.mxu0 0
        %4202 = vmatprep.subr.bf16.mxu0 0
        %4203 = vmatpush1.bf16.msra.mxu0 0
        %4204 = vmatprep.subr.bf16.mxu0 0
        %4205 = vmatpush1.bf16.msra.mxu0 0
        %4206 = vmatprep.subr.bf16.mxu0 0
        %4207 = vmatpush1.bf16.msra.mxu0 0
        %4208 = vmatprep.subr.bf16.mxu0 0
        %4209 = vmatpush1.bf16.msra.mxu0 0
        %4210 = vmatprep.subr.bf16.mxu0 0
        %4211 = vmatpush1.bf16.msra.mxu0 0
        %4212 = vmatprep.subr.bf16.mxu0 0
        %4213 = vmatpush1.bf16.msra.mxu0 0
        %4214 = vmatprep.subr.bf16.mxu0 0
        %4215 = vmatpush1.bf16.msra.mxu0 0
        %4216 = vmatprep.mubr.bf16.mxu0 0
        %4217 = vmatmul.mubr.bf16.gmra.mrb[0].mxu0 %v4182
        %v4218 = vpop.f32.mrb[0].mxu0
        %v4219 = vadd.f32 0.0, %v4218
        %v4220 = vpop.f32.mrb[0].mxu0
        %v4221 = vpop.f32.mrb[0].mxu0
        %v4222 = vpop.f32.mrb[0].mxu0
        %4223 = vdwg.mxu0
        %v4224 = vpack.c.bf16 %v4219, %v4219
        %s4225 = scalar_lea.vmem %s8, 128
        %v4226 = vld [vmem:[%s4225] sm:$0xf]
        %v4227 = vld [vmem:[%s4225 + $0x4] sm:$0xf]
        %v4228 = vld [vmem:[%s4225 + $0x8] sm:$0xf]
        %v4229 = vld [vmem:[%s4225 + $0xc] sm:$0xf]
        %v4230 = vld [vmem:[%s4225 + $0x10] sm:$0xf]
        %v4231 = vld [vmem:[%s4225 + $0x14] sm:$0xf]
        %v4232 = vld [vmem:[%s4225 + $0x18] sm:$0xf]
        %v4233 = vld [vmem:[%s4225 + $0x1c] sm:$0xf]
        %v4242 = vunpack.c.l.b16 %v4226
        %v4243 = vunpack.c.l.b16 %v4227
        %v4244 = vunpack.c.l.b16 %v4228
        %v4245 = vunpack.c.l.b16 %v4229
        %v4246 = vunpack.c.l.b16 %v4230
        %v4247 = vunpack.c.l.b16 %v4231
        %v4248 = vunpack.c.l.b16 %v4232
        %v4249 = vunpack.c.l.b16 %v4233
        %v4250 = vpack.c.b16 %v4243, %v4242
        %v4251 = vpack.c.b16 %v4245, %v4244
        %v4252 = vpack.c.b16 %v4247, %v4246
        %v4253 = vpack.c.b16 %v4249, %v4248
        %v4259 = vsel %vm903, %v4224, 0
        %4261 = vmatprep.subr.bf16.mxu0 0
        %4262 = vmatpush1.bf16.msra.mxu0 %v4250
        %4263 = vmatprep.subr.bf16.mxu0 0
        %4264 = vmatpush1.bf16.msra.mxu0 %v4251
        %4265 = vmatprep.subr.bf16.mxu0 0
        %4266 = vmatpush1.bf16.msra.mxu0 %v4252
        %4267 = vmatprep.subr.bf16.mxu0 0
        %4268 = vmatpush1.bf16.msra.mxu0 %v4253
        %4269 = vmatprep.subr.bf16.mxu0 0
        %4270 = vmatpush1.bf16.msra.mxu0 0
        %4271 = vmatprep.subr.bf16.mxu0 0
        %4272 = vmatpush1.bf16.msra.mxu0 0
        %4273 = vmatprep.subr.bf16.mxu0 0
        %4274 = vmatpush1.bf16.msra.mxu0 0
        %4275 = vmatprep.subr.bf16.mxu0 0
        %4276 = vmatpush1.bf16.msra.mxu0 0
        %4277 = vmatprep.subr.bf16.mxu0 0
        %4278 = vmatpush1.bf16.msra.mxu0 0
        %4279 = vmatprep.subr.bf16.mxu0 0
        %4280 = vmatpush1.bf16.msra.mxu0 0
        %4281 = vmatprep.subr.bf16.mxu0 0
        %4282 = vmatpush1.bf16.msra.mxu0 0
        %4283 = vmatprep.subr.bf16.mxu0 0
        %4284 = vmatpush1.bf16.msra.mxu0 0
        %4285 = vmatprep.subr.bf16.mxu0 0
        %4286 = vmatpush1.bf16.msra.mxu0 0
        %4287 = vmatprep.subr.bf16.mxu0 0
        %4288 = vmatpush1.bf16.msra.mxu0 0
        %4289 = vmatprep.subr.bf16.mxu0 0
        %4290 = vmatpush1.bf16.msra.mxu0 0
        %4291 = vmatprep.subr.bf16.mxu0 0
        %4292 = vmatpush1.bf16.msra.mxu0 0
        %4293 = vmatprep.mubr.bf16.mxu0 0
        %4294 = vmatmul.mubr.bf16.gmra.mrb[0].mxu0 %v4259
        %v4295 = vpop.f32.mrb[0].mxu0
        %v4296 = vadd.f32 0.0, %v4295
        %v4297 = vpop.f32.mrb[0].mxu0
        %v4298 = vpop.f32.mrb[0].mxu0
        %v4299 = vpop.f32.mrb[0].mxu0
        %4300 = vdwg.mxu0
        %v4301 = vadd.f32 %v4178, %v4296
        %s4302 = scalar_lea.vmem %s7, 10
        %v4303 = vld [vmem:[%s4302] sm:$0x3]
        %v4305 = vsel %vm3691, %v4303, 0
        %4307 = vmatprep.subr.bf16.mxu0 0
        %4308 = vmatpush1.bf16.msra.mxu0 %v3689
        %4309 = vmatprep.subr.bf16.mxu0 0
        %4310 = vmatpush1.bf16.msra.mxu0 0
        %4311 = vmatprep.subr.bf16.mxu0 0
        %4312 = vmatpush1.bf16.msra.mxu0 0
        %4313 = vmatprep.subr.bf16.mxu0 0
        %4314 = vmatpush1.bf16.msra.mxu0 0
        %4315 = vmatprep.subr.bf16.mxu0 0
        %4316 = vmatpush1.bf16.msra.mxu0 0
        %4317 = vmatprep.subr.bf16.mxu0 0
        %4318 = vmatpush1.bf16.msra.mxu0 0
        %4319 = vmatprep.subr.bf16.mxu0 0
        %4320 = vmatpush1.bf16.msra.mxu0 0
        %4321 = vmatprep.subr.bf16.mxu0 0
        %4322 = vmatpush1.bf16.msra.mxu0 0
        %4323 = vmatprep.subr.bf16.mxu0 0
        %4324 = vmatpush1.bf16.msra.mxu0 0
        %4325 = vmatprep.subr.bf16.mxu0 0
        %4326 = vmatpush1.bf16.msra.mxu0 0
        %4327 = vmatprep.subr.bf16.mxu0 0
        %4328 = vmatpush1.bf16.msra.mxu0 0
        %4329 = vmatprep.subr.bf16.mxu0 0
        %4330 = vmatpush1.bf16.msra.mxu0 0
        %4331 = vmatprep.subr.bf16.mxu0 0
        %4332 = vmatpush1.bf16.msra.mxu0 0
        %4333 = vmatprep.subr.bf16.mxu0 0
        %4334 = vmatpush1.bf16.msra.mxu0 0
        %4335 = vmatprep.subr.bf16.mxu0 0
        %4336 = vmatpush1.bf16.msra.mxu0 0
        %4337 = vmatprep.subr.bf16.mxu0 0
        %4338 = vmatpush1.bf16.msra.mxu0 0
        %4339 = vmatprep.mubr.bf16.mxu0 0
        %4340 = vmatmul.mubr.bf16.gmra.mrb[0].mxu0 %v4305
        %v4341 = vpop.f32.mrb[0].mxu0
        %v4342 = vadd.f32 0.0, %v4341
        %v4343 = vpop.f32.mrb[0].mxu0
        %v4344 = vpop.f32.mrb[0].mxu0
        %v4345 = vpop.f32.mrb[0].mxu0
        %4346 = vdwg.mxu0
        %v4347 = vpack.c.bf16 %v4342, %v4342
        %s4348 = scalar_lea.vmem %s8, 160
        %v4349 = vld [vmem:[%s4348] sm:$0xf]
        %v4350 = vld [vmem:[%s4348 + $0x4] sm:$0xf]
        %v4351 = vld [vmem:[%s4348 + $0x8] sm:$0xf]
        %v4352 = vld [vmem:[%s4348 + $0xc] sm:$0xf]
        %v4353 = vld [vmem:[%s4348 + $0x10] sm:$0xf]
        %v4354 = vld [vmem:[%s4348 + $0x14] sm:$0xf]
        %v4355 = vld [vmem:[%s4348 + $0x18] sm:$0xf]
        %v4356 = vld [vmem:[%s4348 + $0x1c] sm:$0xf]
        %v4365 = vunpack.c.l.b16 %v4349
        %v4366 = vunpack.c.l.b16 %v4350
        %v4367 = vunpack.c.l.b16 %v4351
        %v4368 = vunpack.c.l.b16 %v4352
        %v4369 = vunpack.c.l.b16 %v4353
        %v4370 = vunpack.c.l.b16 %v4354
        %v4371 = vunpack.c.l.b16 %v4355
        %v4372 = vunpack.c.l.b16 %v4356
        %v4373 = vpack.c.b16 %v4366, %v4365
        %v4374 = vpack.c.b16 %v4368, %v4367
        %v4375 = vpack.c.b16 %v4370, %v4369
        %v4376 = vpack.c.b16 %v4372, %v4371
        %v4382 = vsel %vm903, %v4347, 0
        %4384 = vmatprep.subr.bf16.mxu0 0
        %4385 = vmatpush1.bf16.msra.mxu0 %v4373
        %4386 = vmatprep.subr.bf16.mxu0 0
        %4387 = vmatpush1.bf16.msra.mxu0 %v4374
        %4388 = vmatprep.subr.bf16.mxu0 0
        %4389 = vmatpush1.bf16.msra.mxu0 %v4375
        %4390 = vmatprep.subr.bf16.mxu0 0
        %4391 = vmatpush1.bf16.msra.mxu0 %v4376
        %4392 = vmatprep.subr.bf16.mxu0 0
        %4393 = vmatpush1.bf16.msra.mxu0 0
        %4394 = vmatprep.subr.bf16.mxu0 0
        %4395 = vmatpush1.bf16.msra.mxu0 0
        %4396 = vmatprep.subr.bf16.mxu0 0
        %4397 = vmatpush1.bf16.msra.mxu0 0
        %4398 = vmatprep.subr.bf16.mxu0 0
        %4399 = vmatpush1.bf16.msra.mxu0 0
        %4400 = vmatprep.subr.bf16.mxu0 0
        %4401 = vmatpush1.bf16.msra.mxu0 0
        %4402 = vmatprep.subr.bf16.mxu0 0
        %4403 = vmatpush1.bf16.msra.mxu0 0
        %4404 = vmatprep.subr.bf16.mxu0 0
        %4405 = vmatpush1.bf16.msra.mxu0 0
        %4406 = vmatprep.subr.bf16.mxu0 0
        %4407 = vmatpush1.bf16.msra.mxu0 0
        %4408 = vmatprep.subr.bf16.mxu0 0
        %4409 = vmatpush1.bf16.msra.mxu0 0
        %4410 = vmatprep.subr.bf16.mxu0 0
        %4411 = vmatpush1.bf16.msra.mxu0 0
        %4412 = vmatprep.subr.bf16.mxu0 0
        %4413 = vmatpush1.bf16.msra.mxu0 0
        %4414 = vmatprep.subr.bf16.mxu0 0
        %4415 = vmatpush1.bf16.msra.mxu0 0
        %4416 = vmatprep.mubr.bf16.mxu0 0
        %4417 = vmatmul.mubr.bf16.gmra.mrb[0].mxu0 %v4382
        %v4418 = vpop.f32.mrb[0].mxu0
        %v4419 = vadd.f32 0.0, %v4418
        %v4420 = vpop.f32.mrb[0].mxu0
        %v4421 = vpop.f32.mrb[0].mxu0
        %v4422 = vpop.f32.mrb[0].mxu0
        %4423 = vdwg.mxu0
        %v4424 = vadd.f32 %v4301, %v4419
        %s4425 = scalar_lea.vmem %s7, 12
        %v4426 = vld [vmem:[%s4425] sm:$0x3]
        %v4428 = vsel %vm3691, %v4426, 0
        %4430 = vmatprep.subr.bf16.mxu0 0
        %4431 = vmatpush1.bf16.msra.mxu0 %v3689
        %4432 = vmatprep.subr.bf16.mxu0 0
        %4433 = vmatpush1.bf16.msra.mxu0 0
        %4434 = vmatprep.subr.bf16.mxu0 0
        %4435 = vmatpush1.bf16.msra.mxu0 0
        %4436 = vmatprep.subr.bf16.mxu0 0
        %4437 = vmatpush1.bf16.msra.mxu0 0
        %4438 = vmatprep.subr.bf16.mxu0 0
        %4439 = vmatpush1.bf16.msra.mxu0 0
        %4440 = vmatprep.subr.bf16.mxu0 0
        %4441 = vmatpush1.bf16.msra.mxu0 0
        %4442 = vmatprep.subr.bf16.mxu0 0
        %4443 = vmatpush1.bf16.msra.mxu0 0
        %4444 = vmatprep.subr.bf16.mxu0 0
        %4445 = vmatpush1.bf16.msra.mxu0 0
        %4446 = vmatprep.subr.bf16.mxu0 0
        %4447 = vmatpush1.bf16.msra.mxu0 0
        %4448 = vmatprep.subr.bf16.mxu0 0
        %4449 = vmatpush1.bf16.msra.mxu0 0
        %4450 = vmatprep.subr.bf16.mxu0 0
        %4451 = vmatpush1.bf16.msra.mxu0 0
        %4452 = vmatprep.subr.bf16.mxu0 0
        %4453 = vmatpush1.bf16.msra.mxu0 0
        %4454 = vmatprep.subr.bf16.mxu0 0
        %4455 = vmatpush1.bf16.msra.mxu0 0
        %4456 = vmatprep.subr.bf16.mxu0 0
        %4457 = vmatpush1.bf16.msra.mxu0 0
        %4458 = vmatprep.subr.bf16.mxu0 0
        %4459 = vmatpush1.bf16.msra.mxu0 0
        %4460 = vmatprep.subr.bf16.mxu0 0
        %4461 = vmatpush1.bf16.msra.mxu0 0
        %4462 = vmatprep.mubr.bf16.mxu0 0
        %4463 = vmatmul.mubr.bf16.gmra.mrb[0].mxu0 %v4428
        %v4464 = vpop.f32.mrb[0].mxu0
        %v4465 = vadd.f32 0.0, %v4464
        %v4466 = vpop.f32.mrb[0].mxu0
        %v4467 = vpop.f32.mrb[0].mxu0
        %v4468 = vpop.f32.mrb[0].mxu0
        %4469 = vdwg.mxu0
        %v4470 = vpack.c.bf16 %v4465, %v4465
        %s4471 = scalar_lea.vmem %s8, 192
        %v4472 = vld [vmem:[%s4471] sm:$0xf]
        %v4473 = vld [vmem:[%s4471 + $0x4] sm:$0xf]
        %v4474 = vld [vmem:[%s4471 + $0x8] sm:$0xf]
        %v4475 = vld [vmem:[%s4471 + $0xc] sm:$0xf]
        %v4476 = vld [vmem:[%s4471 + $0x10] sm:$0xf]
        %v4477 = vld [vmem:[%s4471 + $0x14] sm:$0xf]
        %v4478 = vld [vmem:[%s4471 + $0x18] sm:$0xf]
        %v4479 = vld [vmem:[%s4471 + $0x1c] sm:$0xf]
        %v4488 = vunpack.c.l.b16 %v4472
        %v4489 = vunpack.c.l.b16 %v4473
        %v4490 = vunpack.c.l.b16 %v4474
        %v4491 = vunpack.c.l.b16 %v4475
        %v4492 = vunpack.c.l.b16 %v4476
        %v4493 = vunpack.c.l.b16 %v4477
        %v4494 = vunpack.c.l.b16 %v4478
        %v4495 = vunpack.c.l.b16 %v4479
        %v4496 = vpack.c.b16 %v4489, %v4488
        %v4497 = vpack.c.b16 %v4491, %v4490
        %v4498 = vpack.c.b16 %v4493, %v4492
        %v4499 = vpack.c.b16 %v4495, %v4494
        %v4505 = vsel %vm903, %v4470, 0
        %4507 = vmatprep.subr.bf16.mxu0 0
        %4508 = vmatpush1.bf16.msra.mxu0 %v4496
        %4509 = vmatprep.subr.bf16.mxu0 0
        %4510 = vmatpush1.bf16.msra.mxu0 %v4497
        %4511 = vmatprep.subr.bf16.mxu0 0
        %4512 = vmatpush1.bf16.msra.mxu0 %v4498
        %4513 = vmatprep.subr.bf16.mxu0 0
        %4514 = vmatpush1.bf16.msra.mxu0 %v4499
        %4515 = vmatprep.subr.bf16.mxu0 0
        %4516 = vmatpush1.bf16.msra.mxu0 0
        %4517 = vmatprep.subr.bf16.mxu0 0
        %4518 = vmatpush1.bf16.msra.mxu0 0
        %4519 = vmatprep.subr.bf16.mxu0 0
        %4520 = vmatpush1.bf16.msra.mxu0 0
        %4521 = vmatprep.subr.bf16.mxu0 0
        %4522 = vmatpush1.bf16.msra.mxu0 0
        %4523 = vmatprep.subr.bf16.mxu0 0
        %4524 = vmatpush1.bf16.msra.mxu0 0
        %4525 = vmatprep.subr.bf16.mxu0 0
        %4526 = vmatpush1.bf16.msra.mxu0 0
        %4527 = vmatprep.subr.bf16.mxu0 0
        %4528 = vmatpush1.bf16.msra.mxu0 0
        %4529 = vmatprep.subr.bf16.mxu0 0
        %4530 = vmatpush1.bf16.msra.mxu0 0
        %4531 = vmatprep.subr.bf16.mxu0 0
        %4532 = vmatpush1.bf16.msra.mxu0 0
        %4533 = vmatprep.subr.bf16.mxu0 0
        %4534 = vmatpush1.bf16.msra.mxu0 0
        %4535 = vmatprep.subr.bf16.mxu0 0
        %4536 = vmatpush1.bf16.msra.mxu0 0
        %4537 = vmatprep.subr.bf16.mxu0 0
        %4538 = vmatpush1.bf16.msra.mxu0 0
        %4539 = vmatprep.mubr.bf16.mxu0 0
        %4540 = vmatmul.mubr.bf16.gmra.mrb[0].mxu0 %v4505
        %v4541 = vpop.f32.mrb[0].mxu0
        %v4542 = vadd.f32 0.0, %v4541
        %v4543 = vpop.f32.mrb[0].mxu0
        %v4544 = vpop.f32.mrb[0].mxu0
        %v4545 = vpop.f32.mrb[0].mxu0
        %4546 = vdwg.mxu0
        %v4547 = vadd.f32 %v4424, %v4542
        %s4548 = scalar_lea.vmem %s7, 14
        %v4549 = vld [vmem:[%s4548] sm:$0x3]
        %v4551 = vsel %vm3691, %v4549, 0
        %4553 = vmatprep.subr.bf16.mxu0 0
        %4554 = vmatpush1.bf16.msra.mxu0 %v3689
        %4555 = vmatprep.subr.bf16.mxu0 0
        %4556 = vmatpush1.bf16.msra.mxu0 0
        %4557 = vmatprep.subr.bf16.mxu0 0
        %4558 = vmatpush1.bf16.msra.mxu0 0
        %4559 = vmatprep.subr.bf16.mxu0 0
        %4560 = vmatpush1.bf16.msra.mxu0 0
        %4561 = vmatprep.subr.bf16.mxu0 0
        %4562 = vmatpush1.bf16.msra.mxu0 0
        %4563 = vmatprep.subr.bf16.mxu0 0
        %4564 = vmatpush1.bf16.msra.mxu0 0
        %4565 = vmatprep.subr.bf16.mxu0 0
        %4566 = vmatpush1.bf16.msra.mxu0 0
        %4567 = vmatprep.subr.bf16.mxu0 0
        %4568 = vmatpush1.bf16.msra.mxu0 0
        %4569 = vmatprep.subr.bf16.mxu0 0
        %4570 = vmatpush1.bf16.msra.mxu0 0
        %4571 = vmatprep.subr.bf16.mxu0 0
        %4572 = vmatpush1.bf16.msra.mxu0 0
        %4573 = vmatprep.subr.bf16.mxu0 0
        %4574 = vmatpush1.bf16.msra.mxu0 0
        %4575 = vmatprep.subr.bf16.mxu0 0
        %4576 = vmatpush1.bf16.msra.mxu0 0
        %4577 = vmatprep.subr.bf16.mxu0 0
        %4578 = vmatpush1.bf16.msra.mxu0 0
        %4579 = vmatprep.subr.bf16.mxu0 0
        %4580 = vmatpush1.bf16.msra.mxu0 0
        %4581 = vmatprep.subr.bf16.mxu0 0
        %4582 = vmatpush1.bf16.msra.mxu0 0
        %4583 = vmatprep.subr.bf16.mxu0 0
        %4584 = vmatpush1.bf16.msra.mxu0 0
        %4585 = vmatprep.mubr.bf16.mxu0 0
        %4586 = vmatmul.mubr.bf16.gmra.mrb[0].mxu0 %v4551
        %v4587 = vpop.f32.mrb[0].mxu0
        %v4588 = vadd.f32 0.0, %v4587
        %v4589 = vpop.f32.mrb[0].mxu0
        %v4590 = vpop.f32.mrb[0].mxu0
        %v4591 = vpop.f32.mrb[0].mxu0
        %4592 = vdwg.mxu0
        %v4593 = vpack.c.bf16 %v4588, %v4588
        %s4594 = scalar_lea.vmem %s8, 224
        %v4595 = vld [vmem:[%s4594] sm:$0xf]
        %v4596 = vld [vmem:[%s4594 + $0x4] sm:$0xf]
        %v4597 = vld [vmem:[%s4594 + $0x8] sm:$0xf]
        %v4598 = vld [vmem:[%s4594 + $0xc] sm:$0xf]
        %v4599 = vld [vmem:[%s4594 + $0x10] sm:$0xf]
        %v4600 = vld [vmem:[%s4594 + $0x14] sm:$0xf]
        %v4601 = vld [vmem:[%s4594 + $0x18] sm:$0xf]
        %v4602 = vld [vmem:[%s4594 + $0x1c] sm:$0xf]
        %v4611 = vunpack.c.l.b16 %v4595
        %v4612 = vunpack.c.l.b16 %v4596
        %v4613 = vunpack.c.l.b16 %v4597
        %v4614 = vunpack.c.l.b16 %v4598
        %v4615 = vunpack.c.l.b16 %v4599
        %v4616 = vunpack.c.l.b16 %v4600
        %v4617 = vunpack.c.l.b16 %v4601
        %v4618 = vunpack.c.l.b16 %v4602
        %v4619 = vpack.c.b16 %v4612, %v4611
        %v4620 = vpack.c.b16 %v4614, %v4613
        %v4621 = vpack.c.b16 %v4616, %v4615
        %v4622 = vpack.c.b16 %v4618, %v4617
        %v4628 = vsel %vm903, %v4593, 0
        %4630 = vmatprep.subr.bf16.mxu0 0
        %4631 = vmatpush1.bf16.msra.mxu0 %v4619
        %4632 = vmatprep.subr.bf16.mxu0 0
        %4633 = vmatpush1.bf16.msra.mxu0 %v4620
        %4634 = vmatprep.subr.bf16.mxu0 0
        %4635 = vmatpush1.bf16.msra.mxu0 %v4621
        %4636 = vmatprep.subr.bf16.mxu0 0
        %4637 = vmatpush1.bf16.msra.mxu0 %v4622
        %4638 = vmatprep.subr.bf16.mxu0 0
        %4639 = vmatpush1.bf16.msra.mxu0 0
        %4640 = vmatprep.subr.bf16.mxu0 0
        %4641 = vmatpush1.bf16.msra.mxu0 0
        %4642 = vmatprep.subr.bf16.mxu0 0
        %4643 = vmatpush1.bf16.msra.mxu0 0
        %4644 = vmatprep.subr.bf16.mxu0 0
        %4645 = vmatpush1.bf16.msra.mxu0 0
        %4646 = vmatprep.subr.bf16.mxu0 0
        %4647 = vmatpush1.bf16.msra.mxu0 0
        %4648 = vmatprep.subr.bf16.mxu0 0
        %4649 = vmatpush1.bf16.msra.mxu0 0
        %4650 = vmatprep.subr.bf16.mxu0 0
        %4651 = vmatpush1.bf16.msra.mxu0 0
        %4652 = vmatprep.subr.bf16.mxu0 0
        %4653 = vmatpush1.bf16.msra.mxu0 0
        %4654 = vmatprep.subr.bf16.mxu0 0
        %4655 = vmatpush1.bf16.msra.mxu0 0
        %4656 = vmatprep.subr.bf16.mxu0 0
        %4657 = vmatpush1.bf16.msra.mxu0 0
        %4658 = vmatprep.subr.bf16.mxu0 0
        %4659 = vmatpush1.bf16.msra.mxu0 0
        %4660 = vmatprep.subr.bf16.mxu0 0
        %4661 = vmatpush1.bf16.msra.mxu0 0
        %4662 = vmatprep.mubr.bf16.mxu0 0
        %4663 = vmatmul.mubr.bf16.gmra.mrb[0].mxu0 %v4628
        %v4664 = vpop.f32.mrb[0].mxu0
        %v4665 = vadd.f32 0.0, %v4664
        %v4666 = vpop.f32.mrb[0].mxu0
        %v4667 = vpop.f32.mrb[0].mxu0
        %v4668 = vpop.f32.mrb[0].mxu0
        %4669 = vdwg.mxu0
        %v4670 = vadd.f32 %v4547, %v4665
        %s4671 = scalar_lea.vmem %s7, 16
        %v4672 = vld [vmem:[%s4671] sm:$0x3]
        %v4674 = vsel %vm3691, %v4672, 0
        %4676 = vmatprep.subr.bf16.mxu0 0
        %4677 = vmatpush1.bf16.msra.mxu0 %v3689
        %4678 = vmatprep.subr.bf16.mxu0 0
        %4679 = vmatpush1.bf16.msra.mxu0 0
        %4680 = vmatprep.subr.bf16.mxu0 0
        %4681 = vmatpush1.bf16.msra.mxu0 0
        %4682 = vmatprep.subr.bf16.mxu0 0
        %4683 = vmatpush1.bf16.msra.mxu0 0
        %4684 = vmatprep.subr.bf16.mxu0 0
        %4685 = vmatpush1.bf16.msra.mxu0 0
        %4686 = vmatprep.subr.bf16.mxu0 0
        %4687 = vmatpush1.bf16.msra.mxu0 0
        %4688 = vmatprep.subr.bf16.mxu0 0
        %4689 = vmatpush1.bf16.msra.mxu0 0
        %4690 = vmatprep.subr.bf16.mxu0 0
        %4691 = vmatpush1.bf16.msra.mxu0 0
        %4692 = vmatprep.subr.bf16.mxu0 0
        %4693 = vmatpush1.bf16.msra.mxu0 0
        %4694 = vmatprep.subr.bf16.mxu0 0
        %4695 = vmatpush1.bf16.msra.mxu0 0
        %4696 = vmatprep.subr.bf16.mxu0 0
        %4697 = vmatpush1.bf16.msra.mxu0 0
        %4698 = vmatprep.subr.bf16.mxu0 0
        %4699 = vmatpush1.bf16.msra.mxu0 0
        %4700 = vmatprep.subr.bf16.mxu0 0
        %4701 = vmatpush1.bf16.msra.mxu0 0
        %4702 = vmatprep.subr.bf16.mxu0 0
        %4703 = vmatpush1.bf16.msra.mxu0 0
        %4704 = vmatprep.subr.bf16.mxu0 0
        %4705 = vmatpush1.bf16.msra.mxu0 0
        %4706 = vmatprep.subr.bf16.mxu0 0
        %4707 = vmatpush1.bf16.msra.mxu0 0
        %4708 = vmatprep.mubr.bf16.mxu0 0
        %4709 = vmatmul.mubr.bf16.gmra.mrb[0].mxu0 %v4674
        %v4710 = vpop.f32.mrb[0].mxu0
        %v4711 = vadd.f32 0.0, %v4710
        %v4712 = vpop.f32.mrb[0].mxu0
        %v4713 = vpop.f32.mrb[0].mxu0
        %v4714 = vpop.f32.mrb[0].mxu0
        %4715 = vdwg.mxu0
        %v4716 = vpack.c.bf16 %v4711, %v4711
        %s4717 = scalar_lea.vmem %s8, 256
        %v4718 = vld [vmem:[%s4717] sm:$0xf]
        %v4719 = vld [vmem:[%s4717 + $0x4] sm:$0xf]
        %v4720 = vld [vmem:[%s4717 + $0x8] sm:$0xf]
        %v4721 = vld [vmem:[%s4717 + $0xc] sm:$0xf]
        %v4722 = vld [vmem:[%s4717 + $0x10] sm:$0xf]
        %v4723 = vld [vmem:[%s4717 + $0x14] sm:$0xf]
        %v4724 = vld [vmem:[%s4717 + $0x18] sm:$0xf]
        %v4725 = vld [vmem:[%s4717 + $0x1c] sm:$0xf]
        %v4734 = vunpack.c.l.b16 %v4718
        %v4735 = vunpack.c.l.b16 %v4719
        %v4736 = vunpack.c.l.b16 %v4720
        %v4737 = vunpack.c.l.b16 %v4721
        %v4738 = vunpack.c.l.b16 %v4722
        %v4739 = vunpack.c.l.b16 %v4723
        %v4740 = vunpack.c.l.b16 %v4724
        %v4741 = vunpack.c.l.b16 %v4725
        %v4742 = vpack.c.b16 %v4735, %v4734
        %v4743 = vpack.c.b16 %v4737, %v4736
        %v4744 = vpack.c.b16 %v4739, %v4738
        %v4745 = vpack.c.b16 %v4741, %v4740
        %v4751 = vsel %vm903, %v4716, 0
        %4753 = vmatprep.subr.bf16.mxu0 0
        %4754 = vmatpush1.bf16.msra.mxu0 %v4742
        %4755 = vmatprep.subr.bf16.mxu0 0
        %4756 = vmatpush1.bf16.msra.mxu0 %v4743
        %4757 = vmatprep.subr.bf16.mxu0 0
        %4758 = vmatpush1.bf16.msra.mxu0 %v4744
        %4759 = vmatprep.subr.bf16.mxu0 0
        %4760 = vmatpush1.bf16.msra.mxu0 %v4745
        %4761 = vmatprep.subr.bf16.mxu0 0
        %4762 = vmatpush1.bf16.msra.mxu0 0
        %4763 = vmatprep.subr.bf16.mxu0 0
        %4764 = vmatpush1.bf16.msra.mxu0 0
        %4765 = vmatprep.subr.bf16.mxu0 0
        %4766 = vmatpush1.bf16.msra.mxu0 0
        %4767 = vmatprep.subr.bf16.mxu0 0
        %4768 = vmatpush1.bf16.msra.mxu0 0
        %4769 = vmatprep.subr.bf16.mxu0 0
        %4770 = vmatpush1.bf16.msra.mxu0 0
        %4771 = vmatprep.subr.bf16.mxu0 0
        %4772 = vmatpush1.bf16.msra.mxu0 0
        %4773 = vmatprep.subr.bf16.mxu0 0
        %4774 = vmatpush1.bf16.msra.mxu0 0
        %4775 = vmatprep.subr.bf16.mxu0 0
        %4776 = vmatpush1.bf16.msra.mxu0 0
        %4777 = vmatprep.subr.bf16.mxu0 0
        %4778 = vmatpush1.bf16.msra.mxu0 0
        %4779 = vmatprep.subr.bf16.mxu0 0
        %4780 = vmatpush1.bf16.msra.mxu0 0
        %4781 = vmatprep.subr.bf16.mxu0 0
        %4782 = vmatpush1.bf16.msra.mxu0 0
        %4783 = vmatprep.subr.bf16.mxu0 0
        %4784 = vmatpush1.bf16.msra.mxu0 0
        %4785 = vmatprep.mubr.bf16.mxu0 0
        %4786 = vmatmul.mubr.bf16.gmra.mrb[0].mxu0 %v4751
        %v4787 = vpop.f32.mrb[0].mxu0
        %v4788 = vadd.f32 0.0, %v4787
        %v4789 = vpop.f32.mrb[0].mxu0
        %v4790 = vpop.f32.mrb[0].mxu0
        %v4791 = vpop.f32.mrb[0].mxu0
        %4792 = vdwg.mxu0
        %v4793 = vadd.f32 %v4670, %v4788
        %v4794 = vld [vmem:[%s9] sm:$0x1]
        %v4796 = vlaneseq
        %v4797 = vshrl.u32 %v4796, 7
        %v4798 = vsub.s32 0, %v4797
        %v4799 = vrot.slane %v4794, %v4798
        %v4801 = vadd.f32 %v4793, %v4799
        %v4802 = vmax.f32 %v4801, 0.0
        %v4803 = vpack.c.bf16 %v4802, %v4802
        %v4804 = vld [vmem:[%s10] sm:$0xff]
        %v4805 = vld [vmem:[%s10 + $0x8] sm:$0xff]
        %v4806 = vld [vmem:[%s10 + $0x10] sm:$0xff]
        %v4807 = vld [vmem:[%s10 + $0x18] sm:$0xff]
        %v4808 = vld [vmem:[%s10 + $0x20] sm:$0xff]
        %v4809 = vld [vmem:[%s10 + $0x28] sm:$0xff]
        %v4810 = vld [vmem:[%s10 + $0x30] sm:$0xff]
        %v4811 = vld [vmem:[%s10 + $0x38] sm:$0xff]
        %v4812 = vld [vmem:[%s10 + $0x40] sm:$0xff]
        %v4813 = vld [vmem:[%s10 + $0x48] sm:$0xff]
        %v4814 = vld [vmem:[%s10 + $0x50] sm:$0xff]
        %v4815 = vld [vmem:[%s10 + $0x58] sm:$0xff]
        %v4816 = vld [vmem:[%s10 + $0x60] sm:$0xff]
        %v4817 = vld [vmem:[%s10 + $0x68] sm:$0xff]
        %v4818 = vld [vmem:[%s10 + $0x70] sm:$0xff]
        %v4819 = vld [vmem:[%s10 + $0x78] sm:$0xff]
        %s4820 = scalar_lea.vmem %s10, 128
        %v4821 = vld [vmem:[%s4820] sm:$0xff]
        %v4822 = vld [vmem:[%s4820 + $0x8] sm:$0xff]
        %v4823 = vld [vmem:[%s4820 + $0x10] sm:$0xff]
        %v4824 = vld [vmem:[%s4820 + $0x18] sm:$0xff]
        %v4825 = vld [vmem:[%s4820 + $0x20] sm:$0xff]
        %v4826 = vld [vmem:[%s4820 + $0x28] sm:$0xff]
        %v4827 = vld [vmem:[%s4820 + $0x30] sm:$0xff]
        %v4828 = vld [vmem:[%s4820 + $0x38] sm:$0xff]
        %v4829 = vld [vmem:[%s4820 + $0x40] sm:$0xff]
        %v4830 = vld [vmem:[%s4820 + $0x48] sm:$0xff]
        %v4831 = vld [vmem:[%s4820 + $0x50] sm:$0xff]
        %v4832 = vld [vmem:[%s4820 + $0x58] sm:$0xff]
        %v4833 = vld [vmem:[%s4820 + $0x60] sm:$0xff]
        %v4834 = vld [vmem:[%s4820 + $0x68] sm:$0xff]
        %v4835 = vld [vmem:[%s4820 + $0x70] sm:$0xff]
        %v4836 = vld [vmem:[%s4820 + $0x78] sm:$0xff]
        %v4838 = vshrl.u32 %v4803, 16
        %v4856 = vunpack.c.l.b16 %v4821
        %v4857 = vunpack.c.h.b16 %v4821
        %v4858 = vunpack.c.l.b16 %v4822
        %v4859 = vunpack.c.h.b16 %v4822
        %v4860 = vunpack.c.l.b16 %v4823
        %v4861 = vunpack.c.h.b16 %v4823
        %v4862 = vunpack.c.l.b16 %v4824
        %v4863 = vunpack.c.h.b16 %v4824
        %v4864 = vunpack.c.l.b16 %v4825
        %v4865 = vunpack.c.h.b16 %v4825
        %v4866 = vunpack.c.l.b16 %v4826
        %v4867 = vunpack.c.h.b16 %v4826
        %v4868 = vunpack.c.l.b16 %v4827
        %v4869 = vunpack.c.h.b16 %v4827
        %v4870 = vunpack.c.l.b16 %v4828
        %v4871 = vunpack.c.h.b16 %v4828
        %v4872 = vunpack.c.l.b16 %v4829
        %v4873 = vunpack.c.h.b16 %v4829
        %v4874 = vunpack.c.l.b16 %v4830
        %v4875 = vunpack.c.h.b16 %v4830
        %v4876 = vunpack.c.l.b16 %v4831
        %v4877 = vunpack.c.h.b16 %v4831
        %v4878 = vunpack.c.l.b16 %v4832
        %v4879 = vunpack.c.h.b16 %v4832
        %v4880 = vunpack.c.l.b16 %v4833
        %v4881 = vunpack.c.h.b16 %v4833
        %v4882 = vunpack.c.l.b16 %v4834
        %v4883 = vunpack.c.h.b16 %v4834
        %v4884 = vunpack.c.l.b16 %v4835
        %v4885 = vunpack.c.h.b16 %v4835
        %v4886 = vunpack.c.l.b16 %v4836
        %v4887 = vunpack.c.h.b16 %v4836
        %v4888 = vpack.c.b16 %v4860, %v4856
        %v4889 = vpack.c.b16 %v4861, %v4857
        %v4890 = vpack.c.b16 %v4862, %v4858
        %v4891 = vpack.c.b16 %v4863, %v4859
        %v4892 = vpack.c.b16 %v4868, %v4864
        %v4893 = vpack.c.b16 %v4869, %v4865
        %v4894 = vpack.c.b16 %v4870, %v4866
        %v4895 = vpack.c.b16 %v4871, %v4867
        %v4896 = vpack.c.b16 %v4876, %v4872
        %v4897 = vpack.c.b16 %v4877, %v4873
        %v4898 = vpack.c.b16 %v4878, %v4874
        %v4899 = vpack.c.b16 %v4879, %v4875
        %v4900 = vpack.c.b16 %v4884, %v4880
        %v4901 = vpack.c.b16 %v4885, %v4881
        %v4902 = vpack.c.b16 %v4886, %v4882
        %v4903 = vpack.c.b16 %v4887, %v4883
        %v4921 = vsel %vm903, %v4838, 0
        %4923 = vmatprep.subr.bf16.mxu0 %v4889
        %4924 = vmatpush1.bf16.msra.mxu0 %v4888
        %4925 = vmatprep.subr.bf16.mxu0 %v4893
        %4926 = vmatpush1.bf16.msra.mxu0 %v4892
        %4927 = vmatprep.subr.bf16.mxu0 %v4897
        %4928 = vmatpush1.bf16.msra.mxu0 %v4896
        %4929 = vmatprep.subr.bf16.mxu0 %v4901
        %4930 = vmatpush1.bf16.msra.mxu0 %v4900
        %4931 = vmatprep.subr.bf16.mxu0 0
        %4932 = vmatpush1.bf16.msra.mxu0 0
        %4933 = vmatprep.subr.bf16.mxu0 0
        %4934 = vmatpush1.bf16.msra.mxu0 0
        %4935 = vmatprep.subr.bf16.mxu0 0
        %4936 = vmatpush1.bf16.msra.mxu0 0
        %4937 = vmatprep.subr.bf16.mxu0 0
        %4938 = vmatpush1.bf16.msra.mxu0 0
        %4939 = vmatprep.subr.bf16.mxu0 0
        %4940 = vmatpush1.bf16.msra.mxu0 0
        %4941 = vmatprep.subr.bf16.mxu0 0
        %4942 = vmatpush1.bf16.msra.mxu0 0
        %4943 = vmatprep.subr.bf16.mxu0 0
        %4944 = vmatpush1.bf16.msra.mxu0 0
        %4945 = vmatprep.subr.bf16.mxu0 0
        %4946 = vmatpush1.bf16.msra.mxu0 0
        %4947 = vmatprep.subr.bf16.mxu0 0
        %4948 = vmatpush1.bf16.msra.mxu0 0
        %4949 = vmatprep.subr.bf16.mxu0 0
        %4950 = vmatpush1.bf16.msra.mxu0 0
        %4951 = vmatprep.subr.bf16.mxu0 0
        %4952 = vmatpush1.bf16.msra.mxu0 0
        %4953 = vmatprep.subr.bf16.mxu0 0
        %4954 = vmatpush1.bf16.msra.mxu0 0
        %4955 = vmatprep.mubr.bf16.mxu0 0
        %4956 = vmatmul.mubr.bf16.gmra.mrb[0].mxu0 %v4921
        %v4957 = vpop.f32.mrb[0].mxu0
        %v4958 = vadd.f32 0.0, %v4957
        %v4959 = vpop.f32.mrb[0].mxu0
        %v4960 = vadd.f32 0.0, %v4959
        %v4961 = vpop.f32.mrb[0].mxu0
        %v4962 = vpop.f32.mrb[0].mxu0
        %4963 = vdwg.mxu0
        %4964 = vmatprep.subr.bf16.mxu0 %v4891
        %4965 = vmatpush1.bf16.msra.mxu0 %v4890
        %4966 = vmatprep.subr.bf16.mxu0 %v4895
        %4967 = vmatpush1.bf16.msra.mxu0 %v4894
        %4968 = vmatprep.subr.bf16.mxu0 %v4899
        %4969 = vmatpush1.bf16.msra.mxu0 %v4898
        %4970 = vmatprep.subr.bf16.mxu0 %v4903
        %4971 = vmatpush1.bf16.msra.mxu0 %v4902
        %4972 = vmatprep.subr.bf16.mxu0 0
        %4973 = vmatpush1.bf16.msra.mxu0 0
        %4974 = vmatprep.subr.bf16.mxu0 0
        %4975 = vmatpush1.bf16.msra.mxu0 0
        %4976 = vmatprep.subr.bf16.mxu0 0
        %4977 = vmatpush1.bf16.msra.mxu0 0
        %4978 = vmatprep.subr.bf16.mxu0 0
        %4979 = vmatpush1.bf16.msra.mxu0 0
        %4980 = vmatprep.subr.bf16.mxu0 0
        %4981 = vmatpush1.bf16.msra.mxu0 0
        %4982 = vmatprep.subr.bf16.mxu0 0
        %4983 = vmatpush1.bf16.msra.mxu0 0
        %4984 = vmatprep.subr.bf16.mxu0 0
        %4985 = vmatpush1.bf16.msra.mxu0 0
        %4986 = vmatprep.subr.bf16.mxu0 0
        %4987 = vmatpush1.bf16.msra.mxu0 0
        %4988 = vmatprep.subr.bf16.mxu0 0
        %4989 = vmatpush1.bf16.msra.mxu0 0
        %4990 = vmatprep.subr.bf16.mxu0 0
        %4991 = vmatpush1.bf16.msra.mxu0 0
        %4992 = vmatprep.subr.bf16.mxu0 0
        %4993 = vmatpush1.bf16.msra.mxu0 0
        %4994 = vmatprep.subr.bf16.mxu0 0
        %4995 = vmatpush1.bf16.msra.mxu0 0
        %4996 = vmatprep.mubr.bf16.mxu0 0
        %4997 = vmatmul.mubr.bf16.gmra.mrb[0].mxu0 %v4921
        %v4998 = vpop.f32.mrb[0].mxu0
        %v4999 = vadd.f32 0.0, %v4998
        %v5000 = vpop.f32.mrb[0].mxu0
        %v5001 = vadd.f32 0.0, %v5000
        %v5002 = vpop.f32.mrb[0].mxu0
        %v5003 = vpop.f32.mrb[0].mxu0
        %5004 = vdwg.mxu0
        %v5021 = vunpack.c.l.b16 %v4804
        %v5022 = vunpack.c.h.b16 %v4804
        %v5023 = vunpack.c.l.b16 %v4805
        %v5024 = vunpack.c.h.b16 %v4805
        %v5025 = vunpack.c.l.b16 %v4806
        %v5026 = vunpack.c.h.b16 %v4806
        %v5027 = vunpack.c.l.b16 %v4807
        %v5028 = vunpack.c.h.b16 %v4807
        %v5029 = vunpack.c.l.b16 %v4808
        %v5030 = vunpack.c.h.b16 %v4808
        %v5031 = vunpack.c.l.b16 %v4809
        %v5032 = vunpack.c.h.b16 %v4809
        %v5033 = vunpack.c.l.b16 %v4810
        %v5034 = vunpack.c.h.b16 %v4810
        %v5035 = vunpack.c.l.b16 %v4811
        %v5036 = vunpack.c.h.b16 %v4811
        %v5037 = vunpack.c.l.b16 %v4812
        %v5038 = vunpack.c.h.b16 %v4812
        %v5039 = vunpack.c.l.b16 %v4813
        %v5040 = vunpack.c.h.b16 %v4813
        %v5041 = vunpack.c.l.b16 %v4814
        %v5042 = vunpack.c.h.b16 %v4814
        %v5043 = vunpack.c.l.b16 %v4815
        %v5044 = vunpack.c.h.b16 %v4815
        %v5045 = vunpack.c.l.b16 %v4816
        %v5046 = vunpack.c.h.b16 %v4816
        %v5047 = vunpack.c.l.b16 %v4817
        %v5048 = vunpack.c.h.b16 %v4817
        %v5049 = vunpack.c.l.b16 %v4818
        %v5050 = vunpack.c.h.b16 %v4818
        %v5051 = vunpack.c.l.b16 %v4819
        %v5052 = vunpack.c.h.b16 %v4819
        %v5053 = vpack.c.b16 %v5025, %v5021
        %v5054 = vpack.c.b16 %v5026, %v5022
        %v5055 = vpack.c.b16 %v5027, %v5023
        %v5056 = vpack.c.b16 %v5028, %v5024
        %v5057 = vpack.c.b16 %v5033, %v5029
        %v5058 = vpack.c.b16 %v5034, %v5030
        %v5059 = vpack.c.b16 %v5035, %v5031
        %v5060 = vpack.c.b16 %v5036, %v5032
        %v5061 = vpack.c.b16 %v5041, %v5037
        %v5062 = vpack.c.b16 %v5042, %v5038
        %v5063 = vpack.c.b16 %v5043, %v5039
        %v5064 = vpack.c.b16 %v5044, %v5040
        %v5065 = vpack.c.b16 %v5049, %v5045
        %v5066 = vpack.c.b16 %v5050, %v5046
        %v5067 = vpack.c.b16 %v5051, %v5047
        %v5068 = vpack.c.b16 %v5052, %v5048
        %v5085 = vsel %vm903, %v4803, 0
        %5087 = vmatprep.subr.bf16.mxu0 %v5054
        %5088 = vmatpush1.bf16.msra.mxu0 %v5053
        %5089 = vmatprep.subr.bf16.mxu0 %v5058
        %5090 = vmatpush1.bf16.msra.mxu0 %v5057
        %5091 = vmatprep.subr.bf16.mxu0 %v5062
        %5092 = vmatpush1.bf16.msra.mxu0 %v5061
        %5093 = vmatprep.subr.bf16.mxu0 %v5066
        %5094 = vmatpush1.bf16.msra.mxu0 %v5065
        %5095 = vmatprep.subr.bf16.mxu0 0
        %5096 = vmatpush1.bf16.msra.mxu0 0
        %5097 = vmatprep.subr.bf16.mxu0 0
        %5098 = vmatpush1.bf16.msra.mxu0 0
        %5099 = vmatprep.subr.bf16.mxu0 0
        %5100 = vmatpush1.bf16.msra.mxu0 0
        %5101 = vmatprep.subr.bf16.mxu0 0
        %5102 = vmatpush1.bf16.msra.mxu0 0
        %5103 = vmatprep.subr.bf16.mxu0 0
        %5104 = vmatpush1.bf16.msra.mxu0 0
        %5105 = vmatprep.subr.bf16.mxu0 0
        %5106 = vmatpush1.bf16.msra.mxu0 0
        %5107 = vmatprep.subr.bf16.mxu0 0
        %5108 = vmatpush1.bf16.msra.mxu0 0
        %5109 = vmatprep.subr.bf16.mxu0 0
        %5110 = vmatpush1.bf16.msra.mxu0 0
        %5111 = vmatprep.subr.bf16.mxu0 0
        %5112 = vmatpush1.bf16.msra.mxu0 0
        %5113 = vmatprep.subr.bf16.mxu0 0
        %5114 = vmatpush1.bf16.msra.mxu0 0
        %5115 = vmatprep.subr.bf16.mxu0 0
        %5116 = vmatpush1.bf16.msra.mxu0 0
        %5117 = vmatprep.subr.bf16.mxu0 0
        %5118 = vmatpush1.bf16.msra.mxu0 0
        %5119 = vmatprep.mubr.bf16.mxu0 0
        %5120 = vmatmul.mubr.bf16.gmra.mrb[0].mxu0 %v5085
        %v5121 = vpop.f32.mrb[0].mxu0
        %v5122 = vadd.f32 %v4958, %v5121
        %v5123 = vpop.f32.mrb[0].mxu0
        %v5124 = vadd.f32 %v4960, %v5123
        %v5125 = vpop.f32.mrb[0].mxu0
        %v5126 = vpop.f32.mrb[0].mxu0
        %5127 = vdwg.mxu0
        %5128 = vmatprep.subr.bf16.mxu0 %v5056
        %5129 = vmatpush1.bf16.msra.mxu0 %v5055
        %5130 = vmatprep.subr.bf16.mxu0 %v5060
        %5131 = vmatpush1.bf16.msra.mxu0 %v5059
        %5132 = vmatprep.subr.bf16.mxu0 %v5064
        %5133 = vmatpush1.bf16.msra.mxu0 %v5063
        %5134 = vmatprep.subr.bf16.mxu0 %v5068
        %5135 = vmatpush1.bf16.msra.mxu0 %v5067
        %5136 = vmatprep.subr.bf16.mxu0 0
        %5137 = vmatpush1.bf16.msra.mxu0 0
        %5138 = vmatprep.subr.bf16.mxu0 0
        %5139 = vmatpush1.bf16.msra.mxu0 0
        %5140 = vmatprep.subr.bf16.mxu0 0
        %5141 = vmatpush1.bf16.msra.mxu0 0
        %5142 = vmatprep.subr.bf16.mxu0 0
        %5143 = vmatpush1.bf16.msra.mxu0 0
        %5144 = vmatprep.subr.bf16.mxu0 0
        %5145 = vmatpush1.bf16.msra.mxu0 0
        %5146 = vmatprep.subr.bf16.mxu0 0
        %5147 = vmatpush1.bf16.msra.mxu0 0
        %5148 = vmatprep.subr.bf16.mxu0 0
        %5149 = vmatpush1.bf16.msra.mxu0 0
        %5150 = vmatprep.subr.bf16.mxu0 0
        %5151 = vmatpush1.bf16.msra.mxu0 0
        %5152 = vmatprep.subr.bf16.mxu0 0
        %5153 = vmatpush1.bf16.msra.mxu0 0
        %5154 = vmatprep.subr.bf16.mxu0 0
        %5155 = vmatpush1.bf16.msra.mxu0 0
        %5156 = vmatprep.subr.bf16.mxu0 0
        %5157 = vmatpush1.bf16.msra.mxu0 0
        %5158 = vmatprep.subr.bf16.mxu0 0
        %5159 = vmatpush1.bf16.msra.mxu0 0
        %5160 = vmatprep.mubr.bf16.mxu0 0
        %5161 = vmatmul.mubr.bf16.gmra.mrb[0].mxu0 %v5085
        %v5162 = vpop.f32.mrb[0].mxu0
        %v5163 = vadd.f32 %v4999, %v5162
        %v5164 = vpop.f32.mrb[0].mxu0
        %v5165 = vadd.f32 %v5001, %v5164
        %v5166 = vpop.f32.mrb[0].mxu0
        %v5167 = vpop.f32.mrb[0].mxu0
        %5168 = vdwg.mxu0
        %s5169 = scalar_lea.vmem %s10, 256
        %v5170 = vld [vmem:[%s5169] sm:$0xff]
        %v5171 = vld [vmem:[%s5169 + $0x8] sm:$0xff]
        %v5172 = vld [vmem:[%s5169 + $0x10] sm:$0xff]
        %v5173 = vld [vmem:[%s5169 + $0x18] sm:$0xff]
        %v5174 = vld [vmem:[%s5169 + $0x20] sm:$0xff]
        %v5175 = vld [vmem:[%s5169 + $0x28] sm:$0xff]
        %v5176 = vld [vmem:[%s5169 + $0x30] sm:$0xff]
        %v5177 = vld [vmem:[%s5169 + $0x38] sm:$0xff]
        %v5178 = vld [vmem:[%s5169 + $0x40] sm:$0xff]
        %v5179 = vld [vmem:[%s5169 + $0x48] sm:$0xff]
        %v5180 = vld [vmem:[%s5169 + $0x50] sm:$0xff]
        %v5181 = vld [vmem:[%s5169 + $0x58] sm:$0xff]
        %v5182 = vld [vmem:[%s5169 + $0x60] sm:$0xff]
        %v5183 = vld [vmem:[%s5169 + $0x68] sm:$0xff]
        %v5184 = vld [vmem:[%s5169 + $0x70] sm:$0xff]
        %v5185 = vld [vmem:[%s5169 + $0x78] sm:$0xff]
        %v5187 = vrot.slane %v4803, 1
        %v5204 = vunpack.c.l.b16 %v5170
        %v5205 = vunpack.c.h.b16 %v5170
        %v5206 = vunpack.c.l.b16 %v5171
        %v5207 = vunpack.c.h.b16 %v5171
        %v5208 = vunpack.c.l.b16 %v5172
        %v5209 = vunpack.c.h.b16 %v5172
        %v5210 = vunpack.c.l.b16 %v5173
        %v5211 = vunpack.c.h.b16 %v5173
        %v5212 = vunpack.c.l.b16 %v5174
        %v5213 = vunpack.c.h.b16 %v5174
        %v5214 = vunpack.c.l.b16 %v5175
        %v5215 = vunpack.c.h.b16 %v5175
        %v5216 = vunpack.c.l.b16 %v5176
        %v5217 = vunpack.c.h.b16 %v5176
        %v5218 = vunpack.c.l.b16 %v5177
        %v5219 = vunpack.c.h.b16 %v5177
        %v5220 = vunpack.c.l.b16 %v5178
        %v5221 = vunpack.c.h.b16 %v5178
        %v5222 = vunpack.c.l.b16 %v5179
        %v5223 = vunpack.c.h.b16 %v5179
        %v5224 = vunpack.c.l.b16 %v5180
        %v5225 = vunpack.c.h.b16 %v5180
        %v5226 = vunpack.c.l.b16 %v5181
        %v5227 = vunpack.c.h.b16 %v5181
        %v5228 = vunpack.c.l.b16 %v5182
        %v5229 = vunpack.c.h.b16 %v5182
        %v5230 = vunpack.c.l.b16 %v5183
        %v5231 = vunpack.c.h.b16 %v5183
        %v5232 = vunpack.c.l.b16 %v5184
        %v5233 = vunpack.c.h.b16 %v5184
        %v5234 = vunpack.c.l.b16 %v5185
        %v5235 = vunpack.c.h.b16 %v5185
        %v5236 = vpack.c.b16 %v5208, %v5204
        %v5237 = vpack.c.b16 %v5209, %v5205
        %v5238 = vpack.c.b16 %v5210, %v5206
        %v5239 = vpack.c.b16 %v5211, %v5207
        %v5240 = vpack.c.b16 %v5216, %v5212
        %v5241 = vpack.c.b16 %v5217, %v5213
        %v5242 = vpack.c.b16 %v5218, %v5214
        %v5243 = vpack.c.b16 %v5219, %v5215
        %v5244 = vpack.c.b16 %v5224, %v5220
        %v5245 = vpack.c.b16 %v5225, %v5221
        %v5246 = vpack.c.b16 %v5226, %v5222
        %v5247 = vpack.c.b16 %v5227, %v5223
        %v5248 = vpack.c.b16 %v5232, %v5228
        %v5249 = vpack.c.b16 %v5233, %v5229
        %v5250 = vpack.c.b16 %v5234, %v5230
        %v5251 = vpack.c.b16 %v5235, %v5231
        %v5269 = vsel %vm903, %v5187, 0
        %5271 = vmatprep.subr.bf16.mxu0 %v5237
        %5272 = vmatpush1.bf16.msra.mxu0 %v5236
        %5273 = vmatprep.subr.bf16.mxu0 %v5241
        %5274 = vmatpush1.bf16.msra.mxu0 %v5240
        %5275 = vmatprep.subr.bf16.mxu0 %v5245
        %5276 = vmatpush1.bf16.msra.mxu0 %v5244
        %5277 = vmatprep.subr.bf16.mxu0 %v5249
        %5278 = vmatpush1.bf16.msra.mxu0 %v5248
        %5279 = vmatprep.subr.bf16.mxu0 0
        %5280 = vmatpush1.bf16.msra.mxu0 0
        %5281 = vmatprep.subr.bf16.mxu0 0
        %5282 = vmatpush1.bf16.msra.mxu0 0
        %5283 = vmatprep.subr.bf16.mxu0 0
        %5284 = vmatpush1.bf16.msra.mxu0 0
        %5285 = vmatprep.subr.bf16.mxu0 0
        %5286 = vmatpush1.bf16.msra.mxu0 0
        %5287 = vmatprep.subr.bf16.mxu0 0
        %5288 = vmatpush1.bf16.msra.mxu0 0
        %5289 = vmatprep.subr.bf16.mxu0 0
        %5290 = vmatpush1.bf16.msra.mxu0 0
        %5291 = vmatprep.subr.bf16.mxu0 0
        %5292 = vmatpush1.bf16.msra.mxu0 0
        %5293 = vmatprep.subr.bf16.mxu0 0
        %5294 = vmatpush1.bf16.msra.mxu0 0
        %5295 = vmatprep.subr.bf16.mxu0 0
        %5296 = vmatpush1.bf16.msra.mxu0 0
        %5297 = vmatprep.subr.bf16.mxu0 0
        %5298 = vmatpush1.bf16.msra.mxu0 0
        %5299 = vmatprep.subr.bf16.mxu0 0
        %5300 = vmatpush1.bf16.msra.mxu0 0
        %5301 = vmatprep.subr.bf16.mxu0 0
        %5302 = vmatpush1.bf16.msra.mxu0 0
        %5303 = vmatprep.mubr.bf16.mxu0 0
        %5304 = vmatmul.mubr.bf16.gmra.mrb[0].mxu0 %v5269
        %v5305 = vpop.f32.mrb[0].mxu0
        %v5306 = vadd.f32 0.0, %v5305
        %v5307 = vpop.f32.mrb[0].mxu0
        %v5308 = vadd.f32 0.0, %v5307
        %v5309 = vpop.f32.mrb[0].mxu0
        %v5310 = vpop.f32.mrb[0].mxu0
        %5311 = vdwg.mxu0
        %5312 = vmatprep.subr.bf16.mxu0 %v5239
        %5313 = vmatpush1.bf16.msra.mxu0 %v5238
        %5314 = vmatprep.subr.bf16.mxu0 %v5243
        %5315 = vmatpush1.bf16.msra.mxu0 %v5242
        %5316 = vmatprep.subr.bf16.mxu0 %v5247
        %5317 = vmatpush1.bf16.msra.mxu0 %v5246
        %5318 = vmatprep.subr.bf16.mxu0 %v5251
        %5319 = vmatpush1.bf16.msra.mxu0 %v5250
        %5320 = vmatprep.subr.bf16.mxu0 0
        %5321 = vmatpush1.bf16.msra.mxu0 0
        %5322 = vmatprep.subr.bf16.mxu0 0
        %5323 = vmatpush1.bf16.msra.mxu0 0
        %5324 = vmatprep.subr.bf16.mxu0 0
        %5325 = vmatpush1.bf16.msra.mxu0 0
        %5326 = vmatprep.subr.bf16.mxu0 0
        %5327 = vmatpush1.bf16.msra.mxu0 0
        %5328 = vmatprep.subr.bf16.mxu0 0
        %5329 = vmatpush1.bf16.msra.mxu0 0
        %5330 = vmatprep.subr.bf16.mxu0 0
        %5331 = vmatpush1.bf16.msra.mxu0 0
        %5332 = vmatprep.subr.bf16.mxu0 0
        %5333 = vmatpush1.bf16.msra.mxu0 0
        %5334 = vmatprep.subr.bf16.mxu0 0
        %5335 = vmatpush1.bf16.msra.mxu0 0
        %5336 = vmatprep.subr.bf16.mxu0 0
        %5337 = vmatpush1.bf16.msra.mxu0 0
        %5338 = vmatprep.subr.bf16.mxu0 0
        %5339 = vmatpush1.bf16.msra.mxu0 0
        %5340 = vmatprep.subr.bf16.mxu0 0
        %5341 = vmatpush1.bf16.msra.mxu0 0
        %5342 = vmatprep.subr.bf16.mxu0 0
        %5343 = vmatpush1.bf16.msra.mxu0 0
        %5344 = vmatprep.mubr.bf16.mxu0 0
        %5345 = vmatmul.mubr.bf16.gmra.mrb[0].mxu0 %v5269
        %v5346 = vpop.f32.mrb[0].mxu0
        %v5347 = vadd.f32 0.0, %v5346
        %v5348 = vpop.f32.mrb[0].mxu0
        %v5349 = vadd.f32 0.0, %v5348
        %v5350 = vpop.f32.mrb[0].mxu0
        %v5351 = vpop.f32.mrb[0].mxu0
        %5352 = vdwg.mxu0
        %v5353 = vadd.f32 %v5122, %v5306
        %v5354 = vadd.f32 %v5124, %v5308
        %v5355 = vadd.f32 %v5163, %v5347
        %v5356 = vadd.f32 %v5165, %v5349
        %s5357 = scalar_lea.vmem %s10, 384
        %v5358 = vld [vmem:[%s5357] sm:$0xff]
        %v5359 = vld [vmem:[%s5357 + $0x8] sm:$0xff]
        %v5360 = vld [vmem:[%s5357 + $0x10] sm:$0xff]
        %v5361 = vld [vmem:[%s5357 + $0x18] sm:$0xff]
        %v5362 = vld [vmem:[%s5357 + $0x20] sm:$0xff]
        %v5363 = vld [vmem:[%s5357 + $0x28] sm:$0xff]
        %v5364 = vld [vmem:[%s5357 + $0x30] sm:$0xff]
        %v5365 = vld [vmem:[%s5357 + $0x38] sm:$0xff]
        %v5366 = vld [vmem:[%s5357 + $0x40] sm:$0xff]
        %v5367 = vld [vmem:[%s5357 + $0x48] sm:$0xff]
        %v5368 = vld [vmem:[%s5357 + $0x50] sm:$0xff]
        %v5369 = vld [vmem:[%s5357 + $0x58] sm:$0xff]
        %v5370 = vld [vmem:[%s5357 + $0x60] sm:$0xff]
        %v5371 = vld [vmem:[%s5357 + $0x68] sm:$0xff]
        %v5372 = vld [vmem:[%s5357 + $0x70] sm:$0xff]
        %v5373 = vld [vmem:[%s5357 + $0x78] sm:$0xff]
        %v5374 = vrot.slane %v4838, 1
        %v5391 = vunpack.c.l.b16 %v5358
        %v5392 = vunpack.c.h.b16 %v5358
        %v5393 = vunpack.c.l.b16 %v5359
        %v5394 = vunpack.c.h.b16 %v5359
        %v5395 = vunpack.c.l.b16 %v5360
        %v5396 = vunpack.c.h.b16 %v5360
        %v5397 = vunpack.c.l.b16 %v5361
        %v5398 = vunpack.c.h.b16 %v5361
        %v5399 = vunpack.c.l.b16 %v5362
        %v5400 = vunpack.c.h.b16 %v5362
        %v5401 = vunpack.c.l.b16 %v5363
        %v5402 = vunpack.c.h.b16 %v5363
        %v5403 = vunpack.c.l.b16 %v5364
        %v5404 = vunpack.c.h.b16 %v5364
        %v5405 = vunpack.c.l.b16 %v5365
        %v5406 = vunpack.c.h.b16 %v5365
        %v5407 = vunpack.c.l.b16 %v5366
        %v5408 = vunpack.c.h.b16 %v5366
        %v5409 = vunpack.c.l.b16 %v5367
        %v5410 = vunpack.c.h.b16 %v5367
        %v5411 = vunpack.c.l.b16 %v5368
        %v5412 = vunpack.c.h.b16 %v5368
        %v5413 = vunpack.c.l.b16 %v5369
        %v5414 = vunpack.c.h.b16 %v5369
        %v5415 = vunpack.c.l.b16 %v5370
        %v5416 = vunpack.c.h.b16 %v5370
        %v5417 = vunpack.c.l.b16 %v5371
        %v5418 = vunpack.c.h.b16 %v5371
        %v5419 = vunpack.c.l.b16 %v5372
        %v5420 = vunpack.c.h.b16 %v5372
        %v5421 = vunpack.c.l.b16 %v5373
        %v5422 = vunpack.c.h.b16 %v5373
        %v5423 = vpack.c.b16 %v5395, %v5391
        %v5424 = vpack.c.b16 %v5396, %v5392
        %v5425 = vpack.c.b16 %v5397, %v5393
        %v5426 = vpack.c.b16 %v5398, %v5394
        %v5427 = vpack.c.b16 %v5403, %v5399
        %v5428 = vpack.c.b16 %v5404, %v5400
        %v5429 = vpack.c.b16 %v5405, %v5401
        %v5430 = vpack.c.b16 %v5406, %v5402
        %v5431 = vpack.c.b16 %v5411, %v5407
        %v5432 = vpack.c.b16 %v5412, %v5408
        %v5433 = vpack.c.b16 %v5413, %v5409
        %v5434 = vpack.c.b16 %v5414, %v5410
        %v5435 = vpack.c.b16 %v5419, %v5415
        %v5436 = vpack.c.b16 %v5420, %v5416
        %v5437 = vpack.c.b16 %v5421, %v5417
        %v5438 = vpack.c.b16 %v5422, %v5418
        %v5456 = vsel %vm903, %v5374, 0
        %5458 = vmatprep.subr.bf16.mxu0 %v5424
        %5459 = vmatpush1.bf16.msra.mxu0 %v5423
        %5460 = vmatprep.subr.bf16.mxu0 %v5428
        %5461 = vmatpush1.bf16.msra.mxu0 %v5427
        %5462 = vmatprep.subr.bf16.mxu0 %v5432
        %5463 = vmatpush1.bf16.msra.mxu0 %v5431
        %5464 = vmatprep.subr.bf16.mxu0 %v5436
        %5465 = vmatpush1.bf16.msra.mxu0 %v5435
        %5466 = vmatprep.subr.bf16.mxu0 0
        %5467 = vmatpush1.bf16.msra.mxu0 0
        %5468 = vmatprep.subr.bf16.mxu0 0
        %5469 = vmatpush1.bf16.msra.mxu0 0
        %5470 = vmatprep.subr.bf16.mxu0 0
        %5471 = vmatpush1.bf16.msra.mxu0 0
        %5472 = vmatprep.subr.bf16.mxu0 0
        %5473 = vmatpush1.bf16.msra.mxu0 0
        %5474 = vmatprep.subr.bf16.mxu0 0
        %5475 = vmatpush1.bf16.msra.mxu0 0
        %5476 = vmatprep.subr.bf16.mxu0 0
        %5477 = vmatpush1.bf16.msra.mxu0 0
        %5478 = vmatprep.subr.bf16.mxu0 0
        %5479 = vmatpush1.bf16.msra.mxu0 0
        %5480 = vmatprep.subr.bf16.mxu0 0
        %5481 = vmatpush1.bf16.msra.mxu0 0
        %5482 = vmatprep.subr.bf16.mxu0 0
        %5483 = vmatpush1.bf16.msra.mxu0 0
        %5484 = vmatprep.subr.bf16.mxu0 0
        %5485 = vmatpush1.bf16.msra.mxu0 0
        %5486 = vmatprep.subr.bf16.mxu0 0
        %5487 = vmatpush1.bf16.msra.mxu0 0
        %5488 = vmatprep.subr.bf16.mxu0 0
        %5489 = vmatpush1.bf16.msra.mxu0 0
        %5490 = vmatprep.mubr.bf16.mxu0 0
        %5491 = vmatmul.mubr.bf16.gmra.mrb[0].mxu0 %v5456
        %v5492 = vpop.f32.mrb[0].mxu0
        %v5493 = vadd.f32 0.0, %v5492
        %v5494 = vpop.f32.mrb[0].mxu0
        %v5495 = vadd.f32 0.0, %v5494
        %v5496 = vpop.f32.mrb[0].mxu0
        %v5497 = vpop.f32.mrb[0].mxu0
        %5498 = vdwg.mxu0
        %5499 = vmatprep.subr.bf16.mxu0 %v5426
        %5500 = vmatpush1.bf16.msra.mxu0 %v5425
        %5501 = vmatprep.subr.bf16.mxu0 %v5430
        %5502 = vmatpush1.bf16.msra.mxu0 %v5429
        %5503 = vmatprep.subr.bf16.mxu0 %v5434
        %5504 = vmatpush1.bf16.msra.mxu0 %v5433
        %5505 = vmatprep.subr.bf16.mxu0 %v5438
        %5506 = vmatpush1.bf16.msra.mxu0 %v5437
        %5507 = vmatprep.subr.bf16.mxu0 0
        %5508 = vmatpush1.bf16.msra.mxu0 0
        %5509 = vmatprep.subr.bf16.mxu0 0
        %5510 = vmatpush1.bf16.msra.mxu0 0
        %5511 = vmatprep.subr.bf16.mxu0 0
        %5512 = vmatpush1.bf16.msra.mxu0 0
        %5513 = vmatprep.subr.bf16.mxu0 0
        %5514 = vmatpush1.bf16.msra.mxu0 0
        %5515 = vmatprep.subr.bf16.mxu0 0
        %5516 = vmatpush1.bf16.msra.mxu0 0
        %5517 = vmatprep.subr.bf16.mxu0 0
        %5518 = vmatpush1.bf16.msra.mxu0 0
        %5519 = vmatprep.subr.bf16.mxu0 0
        %5520 = vmatpush1.bf16.msra.mxu0 0
        %5521 = vmatprep.subr.bf16.mxu0 0
        %5522 = vmatpush1.bf16.msra.mxu0 0
        %5523 = vmatprep.subr.bf16.mxu0 0
        %5524 = vmatpush1.bf16.msra.mxu0 0
        %5525 = vmatprep.subr.bf16.mxu0 0
        %5526 = vmatpush1.bf16.msra.mxu0 0
        %5527 = vmatprep.subr.bf16.mxu0 0
        %5528 = vmatpush1.bf16.msra.mxu0 0
        %5529 = vmatprep.subr.bf16.mxu0 0
        %5530 = vmatpush1.bf16.msra.mxu0 0
        %5531 = vmatprep.mubr.bf16.mxu0 0
        %5532 = vmatmul.mubr.bf16.gmra.mrb[0].mxu0 %v5456
        %v5533 = vpop.f32.mrb[0].mxu0
        %v5534 = vadd.f32 0.0, %v5533
        %v5535 = vpop.f32.mrb[0].mxu0
        %v5536 = vadd.f32 0.0, %v5535
        %v5537 = vpop.f32.mrb[0].mxu0
        %v5538 = vpop.f32.mrb[0].mxu0
        %5539 = vdwg.mxu0
        %v5540 = vadd.f32 %v5353, %v5493
        %v5541 = vadd.f32 %v5354, %v5495
        %v5542 = vadd.f32 %v5355, %v5534
        %v5543 = vadd.f32 %v5356, %v5536
        %v5544 = vld [vmem:[%s11] sm:$0xf]
        %v5546 = vlaneseq
        %v5547 = vshrl.u32 %v5546, 7
        %v5548 = vsub.s32 0, %v5547
        %v5549 = vrot.slane %v5544, %v5548
        %v5550 = vlaneseq
        %v5551 = vshrl.u32 %v5550, 7
        %v5552 = vsub.s32 1, %v5551
        %v5553 = vrot.slane %v5544, %v5552
        %v5554 = vlaneseq
        %v5555 = vshrl.u32 %v5554, 7
        %v5556 = vsub.s32 2, %v5555
        %v5557 = vrot.slane %v5544, %v5556
        %v5558 = vlaneseq
        %v5559 = vshrl.u32 %v5558, 7
        %v5560 = vsub.s32 3, %v5559
        %v5561 = vrot.slane %v5544, %v5560
        %v5566 = vadd.f32 %v5540, %v5549
        %v5567 = vadd.f32 %v5541, %v5553
        %v5568 = vadd.f32 %v5542, %v5557
        %v5569 = vadd.f32 %v5543, %v5561
        %v5570 = vmax.f32 %v5566, 0.0
        %v5571 = vmax.f32 %v5567, 0.0
        %v5572 = vmax.f32 %v5568, 0.0
        %v5573 = vmax.f32 %v5569, 0.0
        %v5574 = vpack.c.bf16 %v5570, %v5570
        %v5575 = vpack.c.bf16 %v5571, %v5571
        %v5576 = vpack.c.bf16 %v5572, %v5572
        %v5577 = vpack.c.bf16 %v5573, %v5573
        %v5578 = vld [vmem:[%s12] sm:$0xf]
        %v5579 = vld [vmem:[%s12 + $0x4] sm:$0xf]
        %v5580 = vld [vmem:[%s12 + $0x8] sm:$0xf]
        %v5581 = vld [vmem:[%s12 + $0xc] sm:$0xf]
        %v5582 = vld [vmem:[%s12 + $0x10] sm:$0xf]
        %v5583 = vld [vmem:[%s12 + $0x14] sm:$0xf]
        %v5584 = vld [vmem:[%s12 + $0x18] sm:$0xf]
        %v5585 = vld [vmem:[%s12 + $0x1c] sm:$0xf]
        %v5586 = vld [vmem:[%s12 + $0x20] sm:$0xf]
        %v5587 = vld [vmem:[%s12 + $0x24] sm:$0xf]
        %v5588 = vld [vmem:[%s12 + $0x28] sm:$0xf]
        %v5589 = vld [vmem:[%s12 + $0x2c] sm:$0xf]
        %v5590 = vld [vmem:[%s12 + $0x30] sm:$0xf]
        %v5591 = vld [vmem:[%s12 + $0x34] sm:$0xf]
        %v5592 = vld [vmem:[%s12 + $0x38] sm:$0xf]
        %v5593 = vld [vmem:[%s12 + $0x3c] sm:$0xf]
        %v5594 = vld [vmem:[%s12 + $0x40] sm:$0xf]
        %v5595 = vld [vmem:[%s12 + $0x44] sm:$0xf]
        %v5596 = vld [vmem:[%s12 + $0x48] sm:$0xf]
        %v5597 = vld [vmem:[%s12 + $0x4c] sm:$0xf]
        %v5598 = vld [vmem:[%s12 + $0x50] sm:$0xf]
        %v5599 = vld [vmem:[%s12 + $0x54] sm:$0xf]
        %v5600 = vld [vmem:[%s12 + $0x58] sm:$0xf]
        %v5601 = vld [vmem:[%s12 + $0x5c] sm:$0xf]
        %v5602 = vld [vmem:[%s12 + $0x60] sm:$0xf]
        %v5603 = vld [vmem:[%s12 + $0x64] sm:$0xf]
        %v5604 = vld [vmem:[%s12 + $0x68] sm:$0xf]
        %v5605 = vld [vmem:[%s12 + $0x6c] sm:$0xf]
        %v5606 = vld [vmem:[%s12 + $0x70] sm:$0xf]
        %v5607 = vld [vmem:[%s12 + $0x74] sm:$0xf]
        %v5608 = vld [vmem:[%s12 + $0x78] sm:$0xf]
        %v5609 = vld [vmem:[%s12 + $0x7c] sm:$0xf]
        %v5610 = vld [vmem:[%s12 + $0x80] sm:$0xf]
        %v5611 = vld [vmem:[%s12 + $0x84] sm:$0xf]
        %v5612 = vld [vmem:[%s12 + $0x88] sm:$0xf]
        %v5613 = vld [vmem:[%s12 + $0x8c] sm:$0xf]
        %v5614 = vld [vmem:[%s12 + $0x90] sm:$0xf]
        %v5615 = vld [vmem:[%s12 + $0x94] sm:$0xf]
        %v5616 = vld [vmem:[%s12 + $0x98] sm:$0xf]
        %v5617 = vld [vmem:[%s12 + $0x9c] sm:$0xf]
        %v5618 = vld [vmem:[%s12 + $0xa0] sm:$0xf]
        %v5619 = vld [vmem:[%s12 + $0xa4] sm:$0xf]
        %v5620 = vld [vmem:[%s12 + $0xa8] sm:$0xf]
        %v5621 = vld [vmem:[%s12 + $0xac] sm:$0xf]
        %v5622 = vld [vmem:[%s12 + $0xb0] sm:$0xf]
        %v5623 = vld [vmem:[%s12 + $0xb4] sm:$0xf]
        %v5624 = vld [vmem:[%s12 + $0xb8] sm:$0xf]
        %v5625 = vld [vmem:[%s12 + $0xbc] sm:$0xf]
        %v5626 = vld [vmem:[%s12 + $0xc0] sm:$0xf]
        %v5627 = vld [vmem:[%s12 + $0xc4] sm:$0xf]
        %v5628 = vld [vmem:[%s12 + $0xc8] sm:$0xf]
        %v5629 = vld [vmem:[%s12 + $0xcc] sm:$0xf]
        %v5630 = vld [vmem:[%s12 + $0xd0] sm:$0xf]
        %v5631 = vld [vmem:[%s12 + $0xd4] sm:$0xf]
        %v5632 = vld [vmem:[%s12 + $0xd8] sm:$0xf]
        %v5633 = vld [vmem:[%s12 + $0xdc] sm:$0xf]
        %v5634 = vld [vmem:[%s12 + $0xe0] sm:$0xf]
        %v5635 = vld [vmem:[%s12 + $0xe4] sm:$0xf]
        %v5636 = vld [vmem:[%s12 + $0xe8] sm:$0xf]
        %v5637 = vld [vmem:[%s12 + $0xec] sm:$0xf]
        %v5638 = vld [vmem:[%s12 + $0xf0] sm:$0xf]
        %v5639 = vld [vmem:[%s12 + $0xf4] sm:$0xf]
        %v5640 = vld [vmem:[%s12 + $0xf8] sm:$0xf]
        %v5641 = vld [vmem:[%s12 + $0xfc] sm:$0xf]
        %v5642 = vld [vmem:[%s13] sm:$0x1]
        %v5707 = vunpack.c.l.b16 %v5578
        %v5708 = vunpack.c.l.b16 %v5579
        %v5709 = vunpack.c.l.b16 %v5580
        %v5710 = vunpack.c.l.b16 %v5581
        %v5711 = vunpack.c.l.b16 %v5582
        %v5712 = vunpack.c.l.b16 %v5583
        %v5713 = vunpack.c.l.b16 %v5584
        %v5714 = vunpack.c.l.b16 %v5585
        %v5715 = vunpack.c.l.b16 %v5586
        %v5716 = vunpack.c.l.b16 %v5587
        %v5717 = vunpack.c.l.b16 %v5588
        %v5718 = vunpack.c.l.b16 %v5589
        %v5719 = vunpack.c.l.b16 %v5590
        %v5720 = vunpack.c.l.b16 %v5591
        %v5721 = vunpack.c.l.b16 %v5592
        %v5722 = vunpack.c.l.b16 %v5593
        %v5723 = vunpack.c.l.b16 %v5594
        %v5724 = vunpack.c.l.b16 %v5595
        %v5725 = vunpack.c.l.b16 %v5596
        %v5726 = vunpack.c.l.b16 %v5597
        %v5727 = vunpack.c.l.b16 %v5598
        %v5728 = vunpack.c.l.b16 %v5599
        %v5729 = vunpack.c.l.b16 %v5600
        %v5730 = vunpack.c.l.b16 %v5601
        %v5731 = vunpack.c.l.b16 %v5602
        %v5732 = vunpack.c.l.b16 %v5603
        %v5733 = vunpack.c.l.b16 %v5604
        %v5734 = vunpack.c.l.b16 %v5605
        %v5735 = vunpack.c.l.b16 %v5606
        %v5736 = vunpack.c.l.b16 %v5607
        %v5737 = vunpack.c.l.b16 %v5608
        %v5738 = vunpack.c.l.b16 %v5609
        %v5739 = vunpack.c.l.b16 %v5610
        %v5740 = vunpack.c.l.b16 %v5611
        %v5741 = vunpack.c.l.b16 %v5612
        %v5742 = vunpack.c.l.b16 %v5613
        %v5743 = vunpack.c.l.b16 %v5614
        %v5744 = vunpack.c.l.b16 %v5615
        %v5745 = vunpack.c.l.b16 %v5616
        %v5746 = vunpack.c.l.b16 %v5617
        %v5747 = vunpack.c.l.b16 %v5618
        %v5748 = vunpack.c.l.b16 %v5619
        %v5749 = vunpack.c.l.b16 %v5620
        %v5750 = vunpack.c.l.b16 %v5621
        %v5751 = vunpack.c.l.b16 %v5622
        %v5752 = vunpack.c.l.b16 %v5623
        %v5753 = vunpack.c.l.b16 %v5624
        %v5754 = vunpack.c.l.b16 %v5625
        %v5755 = vunpack.c.l.b16 %v5626
        %v5756 = vunpack.c.l.b16 %v5627
        %v5757 = vunpack.c.l.b16 %v5628
        %v5758 = vunpack.c.l.b16 %v5629
        %v5759 = vunpack.c.l.b16 %v5630
        %v5760 = vunpack.c.l.b16 %v5631
        %v5761 = vunpack.c.l.b16 %v5632
        %v5762 = vunpack.c.l.b16 %v5633
        %v5763 = vunpack.c.l.b16 %v5634
        %v5764 = vunpack.c.l.b16 %v5635
        %v5765 = vunpack.c.l.b16 %v5636
        %v5766 = vunpack.c.l.b16 %v5637
        %v5767 = vunpack.c.l.b16 %v5638
        %v5768 = vunpack.c.l.b16 %v5639
        %v5769 = vunpack.c.l.b16 %v5640
        %v5770 = vunpack.c.l.b16 %v5641
        %v5771 = vpack.c.b16 %v5708, %v5707
        %v5772 = vpack.c.b16 %v5710, %v5709
        %v5773 = vpack.c.b16 %v5712, %v5711
        %v5774 = vpack.c.b16 %v5714, %v5713
        %v5775 = vpack.c.b16 %v5716, %v5715
        %v5776 = vpack.c.b16 %v5718, %v5717
        %v5777 = vpack.c.b16 %v5720, %v5719
        %v5778 = vpack.c.b16 %v5722, %v5721
        %v5779 = vpack.c.b16 %v5724, %v5723
        %v5780 = vpack.c.b16 %v5726, %v5725
        %v5781 = vpack.c.b16 %v5728, %v5727
        %v5782 = vpack.c.b16 %v5730, %v5729
        %v5783 = vpack.c.b16 %v5732, %v5731
        %v5784 = vpack.c.b16 %v5734, %v5733
        %v5785 = vpack.c.b16 %v5736, %v5735
        %v5786 = vpack.c.b16 %v5738, %v5737
        %v5787 = vpack.c.b16 %v5740, %v5739
        %v5788 = vpack.c.b16 %v5742, %v5741
        %v5789 = vpack.c.b16 %v5744, %v5743
        %v5790 = vpack.c.b16 %v5746, %v5745
        %v5791 = vpack.c.b16 %v5748, %v5747
        %v5792 = vpack.c.b16 %v5750, %v5749
        %v5793 = vpack.c.b16 %v5752, %v5751
        %v5794 = vpack.c.b16 %v5754, %v5753
        %v5795 = vpack.c.b16 %v5756, %v5755
        %v5796 = vpack.c.b16 %v5758, %v5757
        %v5797 = vpack.c.b16 %v5760, %v5759
        %v5798 = vpack.c.b16 %v5762, %v5761
        %v5799 = vpack.c.b16 %v5764, %v5763
        %v5800 = vpack.c.b16 %v5766, %v5765
        %v5801 = vpack.c.b16 %v5768, %v5767
        %v5802 = vpack.c.b16 %v5770, %v5769
        %5835 = vmatprep.subr.bf16.mxu0 0
        %5836 = vmatpush1.bf16.msra.mxu0 %v5771
        %5837 = vmatprep.subr.bf16.mxu0 0
        %5838 = vmatpush1.bf16.msra.mxu0 %v5772
        %5839 = vmatprep.subr.bf16.mxu0 0
        %5840 = vmatpush1.bf16.msra.mxu0 %v5773
        %5841 = vmatprep.subr.bf16.mxu0 0
        %5842 = vmatpush1.bf16.msra.mxu0 %v5774
        %5843 = vmatprep.subr.bf16.mxu0 0
        %5844 = vmatpush1.bf16.msra.mxu0 %v5775
        %5845 = vmatprep.subr.bf16.mxu0 0
        %5846 = vmatpush1.bf16.msra.mxu0 %v5776
        %5847 = vmatprep.subr.bf16.mxu0 0
        %5848 = vmatpush1.bf16.msra.mxu0 %v5777
        %5849 = vmatprep.subr.bf16.mxu0 0
        %5850 = vmatpush1.bf16.msra.mxu0 %v5778
        %5851 = vmatprep.subr.bf16.mxu0 0
        %5852 = vmatpush1.bf16.msra.mxu0 %v5779
        %5853 = vmatprep.subr.bf16.mxu0 0
        %5854 = vmatpush1.bf16.msra.mxu0 %v5780
        %5855 = vmatprep.subr.bf16.mxu0 0
        %5856 = vmatpush1.bf16.msra.mxu0 %v5781
        %5857 = vmatprep.subr.bf16.mxu0 0
        %5858 = vmatpush1.bf16.msra.mxu0 %v5782
        %5859 = vmatprep.subr.bf16.mxu0 0
        %5860 = vmatpush1.bf16.msra.mxu0 %v5783
        %5861 = vmatprep.subr.bf16.mxu0 0
        %5862 = vmatpush1.bf16.msra.mxu0 %v5784
        %5863 = vmatprep.subr.bf16.mxu0 0
        %5864 = vmatpush1.bf16.msra.mxu0 %v5785
        %5865 = vmatprep.subr.bf16.mxu0 0
        %5866 = vmatpush1.bf16.msra.mxu0 %v5786
        %5867 = vmatprep.mubr.bf16.mxu0 %v5575
        %5868 = vmatmul.mubr.bf16.gmra.mrb[0].mxu0 %v5574
        %v5869 = vpop.f32.mrb[0].mxu0
        %v5870 = vadd.f32 %v5642, %v5869
        %v5871 = vpop.f32.mrb[0].mxu0
        %v5872 = vpop.f32.mrb[0].mxu0
        %v5873 = vpop.f32.mrb[0].mxu0
        %5874 = vdwg.mxu0
        %5875 = vmatprep.subr.bf16.mxu0 0
        %5876 = vmatpush1.bf16.msra.mxu0 %v5787
        %5877 = vmatprep.subr.bf16.mxu0 0
        %5878 = vmatpush1.bf16.msra.mxu0 %v5788
        %5879 = vmatprep.subr.bf16.mxu0 0
        %5880 = vmatpush1.bf16.msra.mxu0 %v5789
        %5881 = vmatprep.subr.bf16.mxu0 0
        %5882 = vmatpush1.bf16.msra.mxu0 %v5790
        %5883 = vmatprep.subr.bf16.mxu0 0
        %5884 = vmatpush1.bf16.msra.mxu0 %v5791
        %5885 = vmatprep.subr.bf16.mxu0 0
        %5886 = vmatpush1.bf16.msra.mxu0 %v5792
        %5887 = vmatprep.subr.bf16.mxu0 0
        %5888 = vmatpush1.bf16.msra.mxu0 %v5793
        %5889 = vmatprep.subr.bf16.mxu0 0
        %5890 = vmatpush1.bf16.msra.mxu0 %v5794
        %5891 = vmatprep.subr.bf16.mxu0 0
        %5892 = vmatpush1.bf16.msra.mxu0 %v5795
        %5893 = vmatprep.subr.bf16.mxu0 0
        %5894 = vmatpush1.bf16.msra.mxu0 %v5796
        %5895 = vmatprep.subr.bf16.mxu0 0
        %5896 = vmatpush1.bf16.msra.mxu0 %v5797
        %5897 = vmatprep.subr.bf16.mxu0 0
        %5898 = vmatpush1.bf16.msra.mxu0 %v5798
        %5899 = vmatprep.subr.bf16.mxu0 0
        %5900 = vmatpush1.bf16.msra.mxu0 %v5799
        %5901 = vmatprep.subr.bf16.mxu0 0
        %5902 = vmatpush1.bf16.msra.mxu0 %v5800
        %5903 = vmatprep.subr.bf16.mxu0 0
        %5904 = vmatpush1.bf16.msra.mxu0 %v5801
        %5905 = vmatprep.subr.bf16.mxu0 0
        %5906 = vmatpush1.bf16.msra.mxu0 %v5802
        %5907 = vmatprep.mubr.bf16.mxu0 %v5577
        %5908 = vmatmul.mubr.bf16.gmra.mrb[0].mxu0 %v5576
        %v5909 = vpop.f32.mrb[0].mxu0
        %v5910 = vadd.f32 %v5870, %v5909
        %v5911 = vpop.f32.mrb[0].mxu0
        %v5912 = vpop.f32.mrb[0].mxu0
        %v5913 = vpop.f32.mrb[0].mxu0
        %5914 = vdwg.mxu0
        %5915 = vst [vmem:[%s459] sm:$0x1] %v5910
        %s5916 = sand.u32 %s335, 1
        %s5917 = scalar_lea.sflag [#allocation3], %s5916
        %s5918 = sand.u32 %s335, 1
        %s5919 = scalar_lea.vmem [#allocation2], %s5918
        // Predicated region
        $region77: #{dqn_forward.1} parent=75 // pred_check
          %p5920 = pneg %p345
        $region78: #{dqn_forward.1} parent=75 // pred_check_branch
          %5922 = sbr.rel (%p5920) target = $region80
        $region79: #{dqn_forward.1} parent=75 // pred_region
          %s5924 = ssub.s32 16, 16
          %5925 = vsyncadd %s5917, %s5924
          %s5926 = smul.addr %s28, 16
          %s5927 = scalar_lea.hbm %s14, %s5926
          %s5929 = sshll.u32 %s5919, 4
          %s5930 = int_to_ptr.vmem [resolvable:$true] %s5929
          %5932 = dma.vmem_to_hbm [thread:$0]  %s5930, 16, %s5927, %s5917
        $region80: #{dqn_forward.1} parent=75 // pred_fallthru
          _
      $region76: #{dqn_forward.1} parent=5 // pred_fallthru
        _
      %p5933 = scmp.le.s32.totalorder 2, %s23
      // Predicated region
      $region81: #{dqn_forward.1} parent=5 // pred_check
        %p5934 = pneg %p5933
      $region82: #{dqn_forward.1} parent=5 // pred_check_branch
        %5936 = sbr.rel (%p5934) target = $region84
      $region83: #{dqn_forward.1} parent=5 // pred_region
        %s5937 = ssub.s32 %s23, 2
        // Predicated region
        $region85: #{dqn_forward.1} parent=83 // pred_check
          %p5938 = pneg %p351
        $region86: #{dqn_forward.1} parent=83 // pred_check_branch
          %5940 = sbr.rel (%p5938) target = $region88
        $region87: #{dqn_forward.1} parent=83 // pred_region
          %s5941 = sand.u32 %s336, 1
          %s5942 = scalar_lea.sflag [#allocation3], %s5941
          %s5943 = sand.u32 %s336, 1
          %s5944 = scalar_lea.vmem [#allocation2], %s5943
          %5945 = dma.done %s5942, 16
        $region88: #{dqn_forward.1} parent=83 // pred_fallthru
          _
      $region84: #{dqn_forward.1} parent=5 // pred_fallthru
        _
    $region6: #{dqn_forward.1} parent=1 // loop_footer
      %s27 = sadd.s32 1, %s23
    $region7: #{dqn_forward.1} parent=1 // loop_footer_branch
      %22 = sbr.rel target = $region3
    $region8: #{dqn_forward.1} parent=1 // loop_exit
      _
    %5946 = vsyncpa [#allocation3], 1
    %s5947 = scalar_lea.sflag [#allocation3], 1
    %5948 = vsyncpa %s5947, 1

</llo_original>
